<compile_context>
chip_gen: v5e
topology: v5e:2x2
jax: 0.10.0
libtpu: 0.0.40
codegen_flags: <defaults>
</compile_context>

<pallas_src>
import functools

import jax
import jax.numpy as jnp
from jax import lax
from jax.experimental import pallas as pl
from jax.experimental.pallas import tpu as pltpu

_BN_EPS = 1e-5


# ----------------------------------------------------------------------------- #
# Generation-aware knobs
# ----------------------------------------------------------------------------- #
def _tpu_generation_config():
    """bf16 elementwise only on chips with a bf16 VPU (v6e/v7x); VMEM scoped
    limit sized under the physical budget (v7x: 64 MiB/core, earlier: 128 MiB)."""
    kind = jax.devices()[0].device_kind.lower()
    is_v7 = ("v7" in kind) or ("tpu7" in kind)
    old_gen = any(f"v{n}" in kind for n in (2, 3, 4, 5))
    bf16_ew = not old_gen
    vmem_limit_bytes = (48 if is_v7 else 96) * 1024 * 1024
    return bf16_ew, vmem_limit_bytes


# ----------------------------------------------------------------------------- #
# Kernels
# ----------------------------------------------------------------------------- #
def _apply_scale_shift_relu(y, scale_ref, shift_ref, bf16_ew):
    """Folded BatchNorm (precomputed global scale/shift) + ReLU on a feature-major
    (C, T) tile.  scale/shift are (C, 1).  On bf16-VPU chips the per-element apply
    runs in bf16; the statistics and the scale/shift themselves stay f32."""
    if bf16_ew:
        a = (y.astype(jnp.bfloat16) * scale_ref[...].astype(jnp.bfloat16)
             + shift_ref[...].astype(jnp.bfloat16))
    else:
        a = y.astype(jnp.float32) * scale_ref[...] + shift_ref[...]
    return jnp.maximum(a, 0.0)


def _conv_pass_kernel(x_ref, scale_ref, shift_ref, w_ref, y_ref, s_ref, sq_ref,
                      *, first_layer, bf16_ew):
    """One (B, L-tile) grid step of a 1x1 Conv1d layer, feature-major.

    Applies the previous layer's folded BN + ReLU (skipped for the raw input),
    runs the MXU matmul (Cout, Cin) @ (Cin, tile_l), stores the pre-BN activation
    tile and this tile's per-channel partial sum / sum-of-squares (f32)."""
    x = x_ref[0]                                           # (Cin, tile_l)
    if first_layer:
        a = x.astype(jnp.bfloat16)                         # no BN/ReLU before conv1
    else:
        a = _apply_scale_shift_relu(x, scale_ref, shift_ref, bf16_ew)
        a = a.astype(jnp.bfloat16)
    y = jnp.dot(w_ref[...], a, preferred_element_type=jnp.float32)  # (Cout, tile_l)
    y_ref[0] = y.astype(y_ref.dtype)
    s_ref[0, 0] = jnp.sum(y, axis=1, keepdims=True)
    sq_ref[0, 0] = jnp.sum(y * y, axis=1, keepdims=True)


def _bn_relu_maxpool_kernel(y_ref, scale_ref, shift_ref, out_ref, *, bf16_ew):
    """BN3-apply + ReLU + MaxPool1d over one (batch, pooling-window) group."""
    a = _apply_scale_shift_relu(y_ref[0], scale_ref, shift_ref, bf16_ew)
    out_ref[0, 0] = jnp.max(a.astype(jnp.float32), axis=1, keepdims=True)


def _head_kernel(p_ref, w1_ref, g1_ref, b1_ref, w2_ref, g2_ref, b2_ref,
                 wo_ref, bo_ref, out_ref, *, bf16_ew):
    """MLP head on the pooled features, feature-major (channels x samples).
    BN statistics over the (tiny) sample axis are computed in-kernel."""
    def bn_relu(y, g_ref, b_ref):
        n = y.shape[1]
        mean = jnp.sum(y, axis=1, keepdims=True) * (1.0 / n)
        var = jnp.maximum(
            jnp.sum(y * y, axis=1, keepdims=True) * (1.0 / n) - mean * mean, 0.0)
        scale = g_ref[...] * lax.rsqrt(var + _BN_EPS)
        shift = b_ref[...] - mean * scale
        if bf16_ew:
            a = (y.astype(jnp.bfloat16) * scale.astype(jnp.bfloat16)
                 + shift.astype(jnp.bfloat16))
        else:
            a = y * scale + shift
        return jnp.maximum(a, 0.0).astype(jnp.bfloat16)

    x = p_ref[...].astype(jnp.bfloat16)                                # (16c1, M)
    h = jnp.dot(w1_ref[...], x, preferred_element_type=jnp.float32)    # (8c1, M)
    h = bn_relu(h, g1_ref, b1_ref)
    h = jnp.dot(w2_ref[...], h, preferred_element_type=jnp.float32)    # (4c1, M)
    h = bn_relu(h, g2_ref, b2_ref)
    out = jnp.dot(wo_ref[...], h, preferred_element_type=jnp.float32)  # (dd_pad, M)
    out_ref[...] = out + bo_ref[...]


# ----------------------------------------------------------------------------- #
# pallas_call wrappers
# ----------------------------------------------------------------------------- #
def _conv_pass(x, scale, shift, w, *, tile_l, out_dtype, first_layer, bf16_ew,
               vmem_limit_bytes):
    B, cin, L = x.shape
    cout = w.shape[0]
    nlt = L // tile_l
    kernel = functools.partial(_conv_pass_kernel, first_layer=first_layer,
                               bf16_ew=bf16_ew)
    flops = 2 * B * L * cin * cout + 8 * B * L * cout
    bytes_accessed = (x.size * x.dtype.itemsize + w.size * w.dtype.itemsize
                      + B * L * cout * jnp.dtype(out_dtype).itemsize
                      + 2 * B * nlt * cout * 4)
    return pl.pallas_call(
        kernel,
        grid=(B, nlt),
        in_specs=[
            pl.BlockSpec((1, cin, tile_l), lambda b, t: (b, 0, t)),
            pl.BlockSpec((cin, 1), lambda b, t: (0, 0)),
            pl.BlockSpec((cin, 1), lambda b, t: (0, 0)),
            pl.BlockSpec((cout, cin), lambda b, t: (0, 0)),
        ],
        out_specs=(
            pl.BlockSpec((1, cout, tile_l), lambda b, t: (b, 0, t)),
            pl.BlockSpec((1, 1, cout, 1), lambda b, t: (b, t, 0, 0)),
            pl.BlockSpec((1, 1, cout, 1), lambda b, t: (b, t, 0, 0)),
        ),
        out_shape=(
            jax.ShapeDtypeStruct((B, cout, L), out_dtype),
            jax.ShapeDtypeStruct((B, nlt, cout, 1), jnp.float32),
            jax.ShapeDtypeStruct((B, nlt, cout, 1), jnp.float32),
        ),
        compiler_params=pltpu.CompilerParams(
            dimension_semantics=("parallel", "parallel"),
            vmem_limit_bytes=vmem_limit_bytes),
        cost_estimate=pl.CostEstimate(flops=int(flops), transcendentals=0,
                                      bytes_accessed=int(bytes_accessed)),
    )(x, scale, shift, w)


def _fold_bn(part_s, part_sq, n, gamma, beta):
    """Tiny host-side glue: per-tile partial sums -> folded BN scale/shift.
    Keeping this outside the kernels lets every grid axis stay 'parallel'."""
    s = jnp.sum(part_s, axis=(0, 1))                 # (C, 1)
    sq = jnp.sum(part_sq, axis=(0, 1))               # (C, 1)
    mean = s / n
    var = jnp.maximum(sq / n - mean * mean, 0.0)     # single-pass (biased) variance
    scale = gamma.reshape(-1, 1) * lax.rsqrt(var + _BN_EPS)
    shift = beta.reshape(-1, 1) - mean * scale
    return scale, shift


def _bn_relu_maxpool(y3, scale, shift, *, pool_k, bf16_ew, vmem_limit_bytes):
    B, c3, L = y3.shape
    l_out = L // pool_k
    kernel = functools.partial(_bn_relu_maxpool_kernel, bf16_ew=bf16_ew)
    bytes_accessed = y3.size * y3.dtype.itemsize + B * l_out * c3 * 4
    return pl.pallas_call(
        kernel,
        grid=(B, l_out),
        in_specs=[
            pl.BlockSpec((1, c3, pool_k), lambda b, g: (b, 0, g)),
            pl.BlockSpec((c3, 1), lambda b, g: (0, 0)),
            pl.BlockSpec((c3, 1), lambda b, g: (0, 0)),
        ],
        out_specs=pl.BlockSpec((1, 1, c3, 1), lambda b, g: (b, g, 0, 0)),
        out_shape=jax.ShapeDtypeStruct((B, l_out, c3, 1), jnp.float32),
        compiler_params=pltpu.CompilerParams(
            dimension_semantics=("parallel", "parallel"),
            vmem_limit_bytes=vmem_limit_bytes),
        cost_estimate=pl.CostEstimate(flops=4 * B * L * c3, transcendentals=0,
                                      bytes_accessed=int(bytes_accessed)),
    )(y3, scale, shift)


def _head(pooled_fm, wm1, g1, b1, wm2, g2, b2, wo_pad, bo_pad, *, bf16_ew,
          vmem_limit_bytes):
    _, M = pooled_fm.shape
    dd_pad = wo_pad.shape[0]
    kernel = functools.partial(_head_kernel, bf16_ew=bf16_ew)
    return pl.pallas_call(
        kernel,
        out_shape=jax.ShapeDtypeStruct((dd_pad, M), jnp.float32),
        in_specs=[pl.BlockSpec(memory_space=pltpu.MemorySpace.VMEM)] * 9,
        out_specs=pl.BlockSpec(memory_space=pltpu.MemorySpace.VMEM),
        compiler_params=pltpu.CompilerParams(vmem_limit_bytes=vmem_limit_bytes),
    )(pooled_fm, wm1, g1, b1, wm2, g2, b2, wo_pad, bo_pad)


# ----------------------------------------------------------------------------- #
# Forward pass
# ----------------------------------------------------------------------------- #
def transform_net_forward(h_ncl, params, *, input_dims, conv1_dim, tile_l=None,
                          bf16_ew=None, vmem_limit_bytes=None):
    """h_ncl: (B, input_dims, L) f32, same axis convention as the PyTorch module."""
    B, C, L = h_ncl.shape
    assert C == input_dims
    c1 = conv1_dim
    assert c1 % 8 == 0, "conv1_dim must be a multiple of 8"
    pool_k = 16 * c1
    # TODO(synk): L % pool_k != 0 (PyTorch MaxPool1d floor behaviour) is not handled.
    assert L % pool_k == 0, "MaxPool1d(kernel=16*conv1_dim) needs L % kernel == 0"
    l_out = L // pool_k
    # TODO(synk): for l_out > 1 the original PyTorch .view(-1, pool_feat_len) mixes
    # channels across rows (and its identity-add would fail); pooled rows here are
    # sample-major, identical to PyTorch for the usual l_out == 1 case.
    rows = B * L
    M = B * l_out
    dd = input_dims * input_dims

    if tile_l is None:
        tile_l = next((t for t in (1024, 512, 256, 128) if L % t == 0), None)
    assert tile_l is not None and L % tile_l == 0 and tile_l % 128 == 0, \
        "need a point tile that is a multiple of 128 and divides L"
    if bf16_ew is None or vmem_limit_bytes is None:
        auto_bf16, auto_vmem = _tpu_generation_config()
        bf16_ew = auto_bf16 if bf16_ew is None else bf16_ew
        vmem_limit_bytes = auto_vmem if vmem_limit_bytes is None else vmem_limit_bytes

    (w1, _b1, g1, be1), (w2, _b2, g2, be2), (w3, _b3, g3, be3), \
        (wm1, _bm1, gm1, bem1), (wm2, _bm2, gm2, bem2) = params["bn_layers"]
    wo, bo = params["out"]

    # Biases of BN-preceded layers are dropped: training-mode BN subtracts the
    # batch mean, which cancels them exactly.
    w1b, w2b, w3b = (w.astype(jnp.bfloat16) for w in (w1, w2, w3))
    wm1b, wm2b = wm1.astype(jnp.bfloat16), wm2.astype(jnp.bfloat16)
    col = lambda v: v.reshape(-1, 1).astype(jnp.float32)

    dd_pad = -(-dd // 8) * 8                         # sublane-pad mlp_out rows
    iden = jnp.eye(input_dims, dtype=jnp.float32).reshape(dd)
    wo_pad = (jnp.zeros((dd_pad, wo.shape[1]), jnp.float32).at[:dd].set(wo)
              .astype(jnp.bfloat16))
    bo_pad = jnp.zeros((dd_pad, 1), jnp.float32).at[:dd, 0].set(bo + iden)

    common = dict(tile_l=tile_l, bf16_ew=bf16_ew, vmem_limit_bytes=vmem_limit_bytes)
    ones_c = jnp.ones((C, 1), jnp.float32)
    zeros_c = jnp.zeros((C, 1), jnp.float32)

    # conv1 / conv2 / conv3: streamed row-tiled passes; BN-apply of layer i is
    # fused into the layer-(i+1) pass.
    y1, s1, q1 = _conv_pass(h_ncl.astype(jnp.float32), ones_c, zeros_c, w1b,
                            out_dtype=jnp.float32, first_layer=True, **common)
    sc1, sh1 = _fold_bn(s1, q1, rows, g1, be1)
    y2, s2, q2 = _conv_pass(y1, sc1, sh1, w2b,
                            out_dtype=jnp.float32, first_layer=False, **common)
    sc2, sh2 = _fold_bn(s2, q2, rows, g2, be2)
    # conv3's output is the only large intermediate: stage it in HBM as bf16
    # (statistics are taken from the f32 matmul result before the cast).
    y3, s3, q3 = _conv_pass(y2, sc2, sh2, w3b,
                            out_dtype=jnp.bfloat16, first_layer=False, **common)
    sc3, sh3 = _fold_bn(s3, q3, rows, g3, be3)

    pooled = _bn_relu_maxpool(y3, sc3, sh3, pool_k=pool_k, bf16_ew=bf16_ew,
                              vmem_limit_bytes=vmem_limit_bytes)  # (B, l_out, 16c1, 1)

    # Tiny host-side relayout of the pooled features to feature-major (16c1, M).
    pooled_fm = jnp.transpose(pooled[..., 0], (2, 0, 1)).reshape(16 * c1, M)
    # TODO(synk): for very large B*l_out the head should also be row-tiled; here it
    # is a single VMEM-resident call (one pooled row per sample).
    out_fm = _head(pooled_fm, wm1b, col(gm1), col(bem1), wm2b, col(gm2), col(bem2),
                   wo_pad, bo_pad, bf16_ew=bf16_ew,
                   vmem_limit_bytes=vmem_limit_bytes)             # (dd_pad, M)
    return out_fm[:dd, :].T.reshape(M, input_dims, input_dims)


# ----------------------------------------------------------------------------- #
# Parameters and pure-JAX reference
# ----------------------------------------------------------------------------- #
def init_params(key, *, input_dims, conv1_dim):
    """Synthetic parameters in PyTorch layout: Conv1d/Linear weights are
    (out_features, in_features); every layer has a bias (those of BN-preceded
    layers are provably inert in training mode); BN gamma=1, beta=0."""
    c1 = conv1_dim
    layer_dims = [
        (input_dims, c1),      # conv1 (1x1)
        (c1, 2 * c1),          # conv2 (1x1)
        (2 * c1, 16 * c1),     # conv3 (1x1)
        (16 * c1, 8 * c1),     # mlp2[0]
        (8 * c1, 4 * c1),      # mlp2[1]
    ]
    dd = input_dims * input_dims
    keys = jax.random.split(key, 2 * len(layer_dims) + 2)
    bn_layers = []
    for i, (cin, cout) in enumerate(layer_dims):
        w = jax.random.normal(keys[2 * i], (cout, cin), jnp.float32) * 0.1
        b = jax.random.normal(keys[2 * i + 1], (cout,), jnp.float32) * 0.1
        bn_layers.append((w, b, jnp.ones((cout,), jnp.float32),
                          jnp.zeros((cout,), jnp.float32)))
    wo = jax.random.normal(keys[-2], (dd, 4 * c1), jnp.float32) * 0.1
    bo = jax.random.normal(keys[-1], (dd,), jnp.float32) * 0.1
    return {"bn_layers": bn_layers, "out": (wo, bo)}


def transform_net_reference(h_ncl, params, *, input_dims, conv1_dim, bf16_ew):
    """Pure-JAX mirror of the PyTorch TransformNet forward (training-mode BN,
    two-pass statistics, channels-last math).  It mirrors the kernel's numeric
    policy — bf16 matmul operands with f32 accumulation, BN-preceded biases folded
    away (exactly equivalent in real arithmetic), bf16 staging of the conv3
    activation, same elementwise-apply dtype — so the comparison isolates
    wiring/layout/pooling errors rather than quantization noise."""
    B, C, L = h_ncl.shape
    c1 = conv1_dim
    pool_k = 16 * c1
    l_out = L // pool_k

    def bn_relu_layer(x, w, gamma, beta, stage_bf16=False):
        y = jnp.dot(x.astype(jnp.bfloat16), w.T.astype(jnp.bfloat16),
                    preferred_element_type=jnp.float32)
        mean = jnp.mean(y, axis=0, keepdims=True)
        var = jnp.mean((y - mean) ** 2, axis=0, keepdims=True)     # two-pass stats
        scale = gamma[None, :] / jnp.sqrt(var + _BN_EPS)
        shift = beta[None, :] - mean * scale
        if stage_bf16:
            y = y.astype(jnp.bfloat16).astype(jnp.float32)
        if bf16_ew:
            a = (y.astype(jnp.bfloat16) * scale.astype(jnp.bfloat16)
                 + shift.astype(jnp.bfloat16)).astype(jnp.float32)
        else:
            a = y * scale + shift
        return jnp.maximum(a, 0.0)

    (w1, _b1, g1, be1), (w2, _b2, g2, be2), (w3, _b3, g3, be3), \
        (wm1, _bm1, gm1, bem1), (wm2, _bm2, gm2, bem2) = params["bn_layers"]
    wo, bo = params["out"]

    x = jnp.transpose(h_ncl, (0, 2, 1)).reshape(B * L, C)
    x = bn_relu_layer(x, w1, g1, be1)
    x = bn_relu_layer(x, w2, g2, be2)
    x = bn_relu_layer(x, w3, g3, be3, stage_bf16=True)
    c3 = x.shape[-1]
    x = jnp.max(x.reshape(B, l_out, pool_k, c3), axis=2).reshape(B * l_out, c3)
    x = bn_relu_layer(x, wm1, gm1, bem1)
    x = bn_relu_layer(x, wm2, gm2, bem2)
    out = jnp.dot(x.astype(jnp.bfloat16), wo.T.astype(jnp.bfloat16),
                  preferred_element_type=jnp.float32) + bo[None, :]
    out = out + jnp.eye(input_dims, dtype=jnp.float32).reshape(1, -1)
    return out.reshape(-1, input_dims, input_dims)


# ----------------------------------------------------------------------------- #
if __name__ == "__main__":
    input_dims = 3
    conv1_dim = 16          # channels 16/32/256, head 256 -> 128 -> 64 -> 9
    B, L = 8, 256           # 8 clouds x 256 points; pool kernel = 16*16 = 256

    key = jax.random.PRNGKey(0)
    k_h, k_p = jax.random.split(key)
    h = jax.random.normal(k_h, (B, input_dims, L), jnp.float32)   # PyTorch NCL layout
    params = init_params(k_p, input_dims=input_dims, conv1_dim=conv1_dim)

    bf16_ew, vmem_limit_bytes = _tpu_generation_config()
    fwd = jax.jit(functools.partial(
        transform_net_forward, input_dims=input_dims, conv1_dim=conv1_dim,
        tile_l=128, bf16_ew=bf16_ew, vmem_limit_bytes=vmem_limit_bytes))

    out = jax.block_until_ready(fwd(h, params))
    assert out.shape == (B, input_dims, input_dims)
    assert bool(jnp.all(jnp.isfinite(out)))

    ref = transform_net_reference(h, params, input_dims=input_dims,
                                  conv1_dim=conv1_dim, bf16_ew=bf16_ew)
    err = float(jnp.max(jnp.abs(out - ref)))
    assert err < 5e-2, f"kernel vs reference max abs err too large: {err}"
    print("KERNEL_OK")
</pallas_src>

<mosaic_0001>
module attributes {stable_mosaic.version = 11 : i64} {
  func.func @_conv_pass_kernel(%arg0: i32, %arg1: i32, %arg2: memref<1x3x128xf32, #tpu.memory_space<vmem>>, %arg3: memref<3x1xf32, #tpu.memory_space<vmem>>, %arg4: memref<3x1xf32, #tpu.memory_space<vmem>>, %arg5: memref<16x3xbf16, #tpu.memory_space<vmem>>, %arg6: memref<1x16x128xf32, #tpu.memory_space<vmem>>, %arg7: memref<1x1x16x1xf32, #tpu.memory_space<vmem>>, %arg8: memref<1x1x16x1xf32, #tpu.memory_space<vmem>>) attributes {dimension_semantics = [#tpu.dimension_semantics<parallel>, #tpu.dimension_semantics<parallel>], iteration_bounds = array<i64: 8, 2>, scalar_prefetch = 0 : i64, scratch_operands = 0 : i64, tpu.core_type = #tpu.core_type<tc>, window_params = [{transform_indices = @transform_0, window_bounds = array<i64: 1, 3, 128>}, {pipeline_mode = #tpu.pipeline_mode<synchronous>, transform_indices = @transform_1, window_bounds = array<i64: 3, 1>}, {pipeline_mode = #tpu.pipeline_mode<synchronous>, transform_indices = @transform_2, window_bounds = array<i64: 3, 1>}, {pipeline_mode = #tpu.pipeline_mode<synchronous>, transform_indices = @transform_3, window_bounds = array<i64: 16, 3>}, {transform_indices = @transform_4, window_bounds = array<i64: 1, 16, 128>}, {transform_indices = @transform_5, window_bounds = array<i64: 1, 1, 16, 1>}, {transform_indices = @transform_6, window_bounds = array<i64: 1, 1, 16, 1>}]} {
    %c0 = arith.constant 0 : index
    %c0_0 = arith.constant 0 : index
    %c0_1 = arith.constant 0 : index
    %0 = vector.load %arg2[%c0, %c0_0, %c0_1] : memref<1x3x128xf32, #tpu.memory_space<vmem>>, vector<1x3x128xf32>
    %1 = vector.shape_cast %0 : vector<1x3x128xf32> to vector<3x128xf32>
    %2 = arith.truncf %1 : vector<3x128xf32> to vector<3x128xbf16>
    %c0_2 = arith.constant 0 : index
    %c0_3 = arith.constant 0 : index
    %3 = vector.load %arg5[%c0_2, %c0_3] : memref<16x3xbf16, #tpu.memory_space<vmem>>, vector<16x3xbf16>
    %cst = arith.constant dense<0.000000e+00> : vector<16x128xf32>
    %4 = tpu.matmul %3, %2, %cst {dimension_numbers = #tpu.dot_dimension_numbers<[1], [0], [0], [1], [0, 0, 1, 1], [], []>} : vector<16x3xbf16>, vector<3x128xbf16>, vector<16x128xf32> -> vector<16x128xf32>
    %c0_4 = arith.constant 0 : index
    %c0_5 = arith.constant 0 : index
    %c0_6 = arith.constant 0 : index
    %5 = vector.load %arg6[%c0_4, %c0_5, %c0_6] : memref<1x16x128xf32, #tpu.memory_space<vmem>>, vector<1x16x128xf32>
    %6 = vector.shape_cast %5 : vector<1x16x128xf32> to vector<16x128xf32>
    %7 = vector.shape_cast %4 : vector<16x128xf32> to vector<1x16x128xf32>
    tpu.vector_store %arg6[%c0_4, %c0_5, %c0_6], %7 {strides = array<i32>} : memref<1x16x128xf32, #tpu.memory_space<vmem>>, vector<1x16x128xf32>,
    %cst_7 = arith.constant dense<0.000000e+00> : vector<16xf32>
    %8 = vector.multi_reduction <add>, %4, %cst_7 [1] : vector<16x128xf32> to vector<16xf32>
    %9 = vector.shape_cast %8 : vector<16xf32> to vector<16x1xf32>
    %c0_8 = arith.constant 0 : index
    %c0_9 = arith.constant 0 : index
    %c0_10 = arith.constant 0 : index
    %c0_11 = arith.constant 0 : index
    %10 = vector.load %arg7[%c0_8, %c0_9, %c0_10, %c0_11] : memref<1x1x16x1xf32, #tpu.memory_space<vmem>>, vector<1x1x16x1xf32>
    %11 = vector.shape_cast %10 : vector<1x1x16x1xf32> to vector<16x1xf32>
    %12 = vector.shape_cast %9 : vector<16x1xf32> to vector<1x1x16x1xf32>
    tpu.vector_store %arg7[%c0_8, %c0_9, %c0_10, %c0_11], %12 {strides = array<i32>} : memref<1x1x16x1xf32, #tpu.memory_space<vmem>>, vector<1x1x16x1xf32>,
    %13 = arith.mulf %4, %4 : vector<16x128xf32>
    %cst_12 = arith.constant dense<0.000000e+00> : vector<16xf32>
    %14 = vector.multi_reduction <add>, %13, %cst_12 [1] : vector<16x128xf32> to vector<16xf32>
    %15 = vector.shape_cast %14 : vector<16xf32> to vector<16x1xf32>
    %c0_13 = arith.constant 0 : index
    %c0_14 = arith.constant 0 : index
    %c0_15 = arith.constant 0 : index
    %c0_16 = arith.constant 0 : index
    %16 = vector.load %arg8[%c0_13, %c0_14, %c0_15, %c0_16] : memref<1x1x16x1xf32, #tpu.memory_space<vmem>>, vector<1x1x16x1xf32>
    %17 = vector.shape_cast %16 : vector<1x1x16x1xf32> to vector<16x1xf32>
    %18 = vector.shape_cast %15 : vector<16x1xf32> to vector<1x1x16x1xf32>
    tpu.vector_store %arg8[%c0_13, %c0_14, %c0_15, %c0_16], %18 {strides = array<i32>} : memref<1x1x16x1xf32, #tpu.memory_space<vmem>>, vector<1x1x16x1xf32>,
    return
  }
  func.func @transform_0(%arg0: i32, %arg1: i32) -> (i32, i32, i32) {
    %c0_i32 = arith.constant 0 : i32
    %c0_i32_0 = arith.constant 0 : i32
    return %arg0, %c0_i32, %arg1 : i32, i32, i32
  }
  func.func @transform_1(%arg0: i32, %arg1: i32) -> (i32, i32) {
    %c0_i32 = arith.constant 0 : i32
    %c0_i32_0 = arith.constant 0 : i32
    %c0_i32_1 = arith.constant 0 : i32
    return %c0_i32, %c0_i32_0 : i32, i32
  }
  func.func @transform_2(%arg0: i32, %arg1: i32) -> (i32, i32) {
    %c0_i32 = arith.constant 0 : i32
    %c0_i32_0 = arith.constant 0 : i32
    %c0_i32_1 = arith.constant 0 : i32
    return %c0_i32, %c0_i32_0 : i32, i32
  }
  func.func @transform_3(%arg0: i32, %arg1: i32) -> (i32, i32) {
    %c0_i32 = arith.constant 0 : i32
    %c0_i32_0 = arith.constant 0 : i32
    %c0_i32_1 = arith.constant 0 : i32
    return %c0_i32, %c0_i32_0 : i32, i32
  }
  func.func @transform_4(%arg0: i32, %arg1: i32) -> (i32, i32, i32) {
    %c0_i32 = arith.constant 0 : i32
    %c0_i32_0 = arith.constant 0 : i32
    return %arg0, %c0_i32, %arg1 : i32, i32, i32
  }
  func.func @transform_5(%arg0: i32, %arg1: i32) -> (i32, i32, i32, i32) {
    %c0_i32 = arith.constant 0 : i32
    %c0_i32_0 = arith.constant 0 : i32
    %c0_i32_1 = arith.constant 0 : i32
    return %arg0, %arg1, %c0_i32, %c0_i32_0 : i32, i32, i32, i32
  }
  func.func @transform_6(%arg0: i32, %arg1: i32) -> (i32, i32, i32, i32) {
    %c0_i32 = arith.constant 0 : i32
    %c0_i32_0 = arith.constant 0 : i32
    %c0_i32_1 = arith.constant 0 : i32
    return %arg0, %arg1, %c0_i32, %c0_i32_0 : i32, i32, i32, i32
  }
}

module attributes {stable_mosaic.version = 11 : i64} {
  func.func @_conv_pass_kernel(%arg0: i32, %arg1: i32, %arg2: memref<1x16x128xf32, #tpu.memory_space<vmem>>, %arg3: memref<16x1xf32, #tpu.memory_space<vmem>>, %arg4: memref<16x1xf32, #tpu.memory_space<vmem>>, %arg5: memref<32x16xbf16, #tpu.memory_space<vmem>>, %arg6: memref<1x32x128xf32, #tpu.memory_space<vmem>>, %arg7: memref<1x1x32x1xf32, #tpu.memory_space<vmem>>, %arg8: memref<1x1x32x1xf32, #tpu.memory_space<vmem>>) attributes {dimension_semantics = [#tpu.dimension_semantics<parallel>, #tpu.dimension_semantics<parallel>], iteration_bounds = array<i64: 8, 2>, scalar_prefetch = 0 : i64, scratch_operands = 0 : i64, tpu.core_type = #tpu.core_type<tc>, window_params = [{transform_indices = @transform_0, window_bounds = array<i64: 1, 16, 128>}, {pipeline_mode = #tpu.pipeline_mode<synchronous>, transform_indices = @transform_1, window_bounds = array<i64: 16, 1>}, {pipeline_mode = #tpu.pipeline_mode<synchronous>, transform_indices = @transform_2, window_bounds = array<i64: 16, 1>}, {pipeline_mode = #tpu.pipeline_mode<synchronous>, transform_indices = @transform_3, window_bounds = array<i64: 32, 16>}, {transform_indices = @transform_4, window_bounds = array<i64: 1, 32, 128>}, {transform_indices = @transform_5, window_bounds = array<i64: 1, 1, 32, 1>}, {transform_indices = @transform_6, window_bounds = array<i64: 1, 1, 32, 1>}]} {
    %c0 = arith.constant 0 : index
    %c0_0 = arith.constant 0 : index
    %c0_1 = arith.constant 0 : index
    %0 = vector.load %arg2[%c0, %c0_0, %c0_1] : memref<1x16x128xf32, #tpu.memory_space<vmem>>, vector<1x16x128xf32>
    %1 = vector.shape_cast %0 : vector<1x16x128xf32> to vector<16x128xf32>
    %2 = arith.truncf %1 : vector<16x128xf32> to vector<16x128xbf16>
    %c0_2 = arith.constant 0 : index
    %c0_3 = arith.constant 0 : index
    %3 = vector.load %arg3[%c0_2, %c0_3] : memref<16x1xf32, #tpu.memory_space<vmem>>, vector<16x1xf32>
    %4 = arith.truncf %3 : vector<16x1xf32> to vector<16x1xbf16>
    %5 = vector.broadcast %4 : vector<16x1xbf16> to vector<16x128xbf16>
    %6 = arith.mulf %2, %5 : vector<16x128xbf16>
    %c0_4 = arith.constant 0 : index
    %c0_5 = arith.constant 0 : index
    %7 = vector.load %arg4[%c0_4, %c0_5] : memref<16x1xf32, #tpu.memory_space<vmem>>, vector<16x1xf32>
    %8 = arith.truncf %7 : vector<16x1xf32> to vector<16x1xbf16>
    %9 = vector.broadcast %8 : vector<16x1xbf16> to vector<16x128xbf16>
    %10 = arith.addf %6, %9 : vector<16x128xbf16>
    %cst = arith.constant 0.000000e+00 : bf16
    %11 = vector.broadcast %cst : bf16 to vector<16x128xbf16>
    %12 = arith.maximumf %10, %11 : vector<16x128xbf16>
    %c0_6 = arith.constant 0 : index
    %c0_7 = arith.constant 0 : index
    %13 = vector.load %arg5[%c0_6, %c0_7] : memref<32x16xbf16, #tpu.memory_space<vmem>>, vector<32x16xbf16>
    %cst_8 = arith.constant dense<0.000000e+00> : vector<32x128xf32>
    %14 = tpu.matmul %13, %12, %cst_8 {dimension_numbers = #tpu.dot_dimension_numbers<[1], [0], [0], [1], [0, 0, 1, 1], [], []>} : vector<32x16xbf16>, vector<16x128xbf16>, vector<32x128xf32> -> vector<32x128xf32>
    %c0_9 = arith.constant 0 : index
    %c0_10 = arith.constant 0 : index
    %c0_11 = arith.constant 0 : index
    %15 = vector.load %arg6[%c0_9, %c0_10, %c0_11] : memref<1x32x128xf32, #tpu.memory_space<vmem>>, vector<1x32x128xf32>
    %16 = vector.shape_cast %15 : vector<1x32x128xf32> to vector<32x128xf32>
    %17 = vector.shape_cast %14 : vector<32x128xf32> to vector<1x32x128xf32>
    tpu.vector_store %arg6[%c0_9, %c0_10, %c0_11], %17 {strides = array<i32>} : memref<1x32x128xf32, #tpu.memory_space<vmem>>, vector<1x32x128xf32>,
    %cst_12 = arith.constant dense<0.000000e+00> : vector<32xf32>
    %18 = vector.multi_reduction <add>, %14, %cst_12 [1] : vector<32x128xf32> to vector<32xf32>
    %19 = vector.shape_cast %18 : vector<32xf32> to vector<32x1xf32>
    %c0_13 = arith.constant 0 : index
    %c0_14 = arith.constant 0 : index
    %c0_15 = arith.constant 0 : index
    %c0_16 = arith.constant 0 : index
    %20 = vector.load %arg7[%c0_13, %c0_14, %c0_15, %c0_16] : memref<1x1x32x1xf32, #tpu.memory_space<vmem>>, vector<1x1x32x1xf32>
    %21 = vector.shape_cast %20 : vector<1x1x32x1xf32> to vector<32x1xf32>
    %22 = vector.shape_cast %19 : vector<32x1xf32> to vector<1x1x32x1xf32>
    tpu.vector_store %arg7[%c0_13, %c0_14, %c0_15, %c0_16], %22 {strides = array<i32>} : memref<1x1x32x1xf32, #tpu.memory_space<vmem>>, vector<1x1x32x1xf32>,
    %23 = arith.mulf %14, %14 : vector<32x128xf32>
    %cst_17 = arith.constant dense<0.000000e+00> : vector<32xf32>
    %24 = vector.multi_reduction <add>, %23, %cst_17 [1] : vector<32x128xf32> to vector<32xf32>
    %25 = vector.shape_cast %24 : vector<32xf32> to vector<32x1xf32>
    %c0_18 = arith.constant 0 : index
    %c0_19 = arith.constant 0 : index
    %c0_20 = arith.constant 0 : index
    %c0_21 = arith.constant 0 : index
    %26 = vector.load %arg8[%c0_18, %c0_19, %c0_20, %c0_21] : memref<1x1x32x1xf32, #tpu.memory_space<vmem>>, vector<1x1x32x1xf32>
    %27 = vector.shape_cast %26 : vector<1x1x32x1xf32> to vector<32x1xf32>
    %28 = vector.shape_cast %25 : vector<32x1xf32> to vector<1x1x32x1xf32>
    tpu.vector_store %arg8[%c0_18, %c0_19, %c0_20, %c0_21], %28 {strides = array<i32>} : memref<1x1x32x1xf32, #tpu.memory_space<vmem>>, vector<1x1x32x1xf32>,
    return
  }
  func.func @transform_0(%arg0: i32, %arg1: i32) -> (i32, i32, i32) {
    %c0_i32 = arith.constant 0 : i32
    %c0_i32_0 = arith.constant 0 : i32
    return %arg0, %c0_i32, %arg1 : i32, i32, i32
  }
  func.func @transform_1(%arg0: i32, %arg1: i32) -> (i32, i32) {
    %c0_i32 = arith.constant 0 : i32
    %c0_i32_0 = arith.constant 0 : i32
    %c0_i32_1 = arith.constant 0 : i32
    return %c0_i32, %c0_i32_0 : i32, i32
  }
  func.func @transform_2(%arg0: i32, %arg1: i32) -> (i32, i32) {
    %c0_i32 = arith.constant 0 : i32
    %c0_i32_0 = arith.constant 0 : i32
    %c0_i32_1 = arith.constant 0 : i32
    return %c0_i32, %c0_i32_0 : i32, i32
  }
  func.func @transform_3(%arg0: i32, %arg1: i32) -> (i32, i32) {
    %c0_i32 = arith.constant 0 : i32
    %c0_i32_0 = arith.constant 0 : i32
    %c0_i32_1 = arith.constant 0 : i32
    return %c0_i32, %c0_i32_0 : i32, i32
  }
  func.func @transform_4(%arg0: i32, %arg1: i32) -> (i32, i32, i32) {
    %c0_i32 = arith.constant 0 : i32
    %c0_i32_0 = arith.constant 0 : i32
    return %arg0, %c0_i32, %arg1 : i32, i32, i32
  }
  func.func @transform_5(%arg0: i32, %arg1: i32) -> (i32, i32, i32, i32) {
    %c0_i32 = arith.constant 0 : i32
    %c0_i32_0 = arith.constant 0 : i32
    %c0_i32_1 = arith.constant 0 : i32
    return %arg0, %arg1, %c0_i32, %c0_i32_0 : i32, i32, i32, i32
  }
  func.func @transform_6(%arg0: i32, %arg1: i32) -> (i32, i32, i32, i32) {
    %c0_i32 = arith.constant 0 : i32
    %c0_i32_0 = arith.constant 0 : i32
    %c0_i32_1 = arith.constant 0 : i32
    return %arg0, %arg1, %c0_i32, %c0_i32_0 : i32, i32, i32, i32
  }
}

module attributes {stable_mosaic.version = 11 : i64} {
  func.func @_conv_pass_kernel(%arg0: i32, %arg1: i32, %arg2: memref<1x32x128xf32, #tpu.memory_space<vmem>>, %arg3: memref<32x1xf32, #tpu.memory_space<vmem>>, %arg4: memref<32x1xf32, #tpu.memory_space<vmem>>, %arg5: memref<256x32xbf16, #tpu.memory_space<vmem>>, %arg6: memref<1x256x128xbf16, #tpu.memory_space<vmem>>, %arg7: memref<1x1x256x1xf32, #tpu.memory_space<vmem>>, %arg8: memref<1x1x256x1xf32, #tpu.memory_space<vmem>>) attributes {dimension_semantics = [#tpu.dimension_semantics<parallel>, #tpu.dimension_semantics<parallel>], iteration_bounds = array<i64: 8, 2>, scalar_prefetch = 0 : i64, scratch_operands = 0 : i64, tpu.core_type = #tpu.core_type<tc>, window_params = [{transform_indices = @transform_0, window_bounds = array<i64: 1, 32, 128>}, {pipeline_mode = #tpu.pipeline_mode<synchronous>, transform_indices = @transform_1, window_bounds = array<i64: 32, 1>}, {pipeline_mode = #tpu.pipeline_mode<synchronous>, transform_indices = @transform_2, window_bounds = array<i64: 32, 1>}, {pipeline_mode = #tpu.pipeline_mode<synchronous>, transform_indices = @transform_3, window_bounds = array<i64: 256, 32>}, {transform_indices = @transform_4, window_bounds = array<i64: 1, 256, 128>}, {transform_indices = @transform_5, window_bounds = array<i64: 1, 1, 256, 1>}, {transform_indices = @transform_6, window_bounds = array<i64: 1, 1, 256, 1>}]} {
    %c0 = arith.constant 0 : index
    %c0_0 = arith.constant 0 : index
    %c0_1 = arith.constant 0 : index
    %0 = vector.load %arg2[%c0, %c0_0, %c0_1] : memref<1x32x128xf32, #tpu.memory_space<vmem>>, vector<1x32x128xf32>
    %1 = vector.shape_cast %0 : vector<1x32x128xf32> to vector<32x128xf32>
    %2 = arith.truncf %1 : vector<32x128xf32> to vector<32x128xbf16>
    %c0_2 = arith.constant 0 : index
    %c0_3 = arith.constant 0 : index
    %3 = vector.load %arg3[%c0_2, %c0_3] : memref<32x1xf32, #tpu.memory_space<vmem>>, vector<32x1xf32>
    %4 = arith.truncf %3 : vector<32x1xf32> to vector<32x1xbf16>
    %5 = vector.broadcast %4 : vector<32x1xbf16> to vector<32x128xbf16>
    %6 = arith.mulf %2, %5 : vector<32x128xbf16>
    %c0_4 = arith.constant 0 : index
    %c0_5 = arith.constant 0 : index
    %7 = vector.load %arg4[%c0_4, %c0_5] : memref<32x1xf32, #tpu.memory_space<vmem>>, vector<32x1xf32>
    %8 = arith.truncf %7 : vector<32x1xf32> to vector<32x1xbf16>
    %9 = vector.broadcast %8 : vector<32x1xbf16> to vector<32x128xbf16>
    %10 = arith.addf %6, %9 : vector<32x128xbf16>
    %cst = arith.constant 0.000000e+00 : bf16
    %11 = vector.broadcast %cst : bf16 to vector<32x128xbf16>
    %12 = arith.maximumf %10, %11 : vector<32x128xbf16>
    %c0_6 = arith.constant 0 : index
    %c0_7 = arith.constant 0 : index
    %13 = vector.load %arg5[%c0_6, %c0_7] : memref<256x32xbf16, #tpu.memory_space<vmem>>, vector<256x32xbf16>
    %cst_8 = arith.constant dense<0.000000e+00> : vector<256x128xf32>
    %14 = tpu.matmul %13, %12, %cst_8 {dimension_numbers = #tpu.dot_dimension_numbers<[1], [0], [0], [1], [0, 0, 1, 1], [], []>} : vector<256x32xbf16>, vector<32x128xbf16>, vector<256x128xf32> -> vector<256x128xf32>
    %15 = arith.truncf %14 : vector<256x128xf32> to vector<256x128xbf16>
    %c0_9 = arith.constant 0 : index
    %c0_10 = arith.constant 0 : index
    %c0_11 = arith.constant 0 : index
    %16 = vector.load %arg6[%c0_9, %c0_10, %c0_11] : memref<1x256x128xbf16, #tpu.memory_space<vmem>>, vector<1x256x128xbf16>
    %17 = vector.shape_cast %16 : vector<1x256x128xbf16> to vector<256x128xbf16>
    %18 = vector.shape_cast %15 : vector<256x128xbf16> to vector<1x256x128xbf16>
    tpu.vector_store %arg6[%c0_9, %c0_10, %c0_11], %18 {strides = array<i32>} : memref<1x256x128xbf16, #tpu.memory_space<vmem>>, vector<1x256x128xbf16>,
    %cst_12 = arith.constant dense<0.000000e+00> : vector<256xf32>
    %19 = vector.multi_reduction <add>, %14, %cst_12 [1] : vector<256x128xf32> to vector<256xf32>
    %20 = vector.shape_cast %19 : vector<256xf32> to vector<256x1xf32>
    %c0_13 = arith.constant 0 : index
    %c0_14 = arith.constant 0 : index
    %c0_15 = arith.constant 0 : index
    %c0_16 = arith.constant 0 : index
    %21 = vector.load %arg7[%c0_13, %c0_14, %c0_15, %c0_16] : memref<1x1x256x1xf32, #tpu.memory_space<vmem>>, vector<1x1x256x1xf32>
    %22 = vector.shape_cast %21 : vector<1x1x256x1xf32> to vector<256x1xf32>
    %23 = vector.shape_cast %20 : vector<256x1xf32> to vector<1x1x256x1xf32>
    tpu.vector_store %arg7[%c0_13, %c0_14, %c0_15, %c0_16], %23 {strides = array<i32>} : memref<1x1x256x1xf32, #tpu.memory_space<vmem>>, vector<1x1x256x1xf32>,
    %24 = arith.mulf %14, %14 : vector<256x128xf32>
    %cst_17 = arith.constant dense<0.000000e+00> : vector<256xf32>
    %25 = vector.multi_reduction <add>, %24, %cst_17 [1] : vector<256x128xf32> to vector<256xf32>
    %26 = vector.shape_cast %25 : vector<256xf32> to vector<256x1xf32>
    %c0_18 = arith.constant 0 : index
    %c0_19 = arith.constant 0 : index
    %c0_20 = arith.constant 0 : index
    %c0_21 = arith.constant 0 : index
    %27 = vector.load %arg8[%c0_18, %c0_19, %c0_20, %c0_21] : memref<1x1x256x1xf32, #tpu.memory_space<vmem>>, vector<1x1x256x1xf32>
    %28 = vector.shape_cast %27 : vector<1x1x256x1xf32> to vector<256x1xf32>
    %29 = vector.shape_cast %26 : vector<256x1xf32> to vector<1x1x256x1xf32>
    tpu.vector_store %arg8[%c0_18, %c0_19, %c0_20, %c0_21], %29 {strides = array<i32>} : memref<1x1x256x1xf32, #tpu.memory_space<vmem>>, vector<1x1x256x1xf32>,
    return
  }
  func.func @transform_0(%arg0: i32, %arg1: i32) -> (i32, i32, i32) {
    %c0_i32 = arith.constant 0 : i32
    %c0_i32_0 = arith.constant 0 : i32
    return %arg0, %c0_i32, %arg1 : i32, i32, i32
  }
  func.func @transform_1(%arg0: i32, %arg1: i32) -> (i32, i32) {
    %c0_i32 = arith.constant 0 : i32
    %c0_i32_0 = arith.constant 0 : i32
    %c0_i32_1 = arith.constant 0 : i32
    return %c0_i32, %c0_i32_0 : i32, i32
  }
  func.func @transform_2(%arg0: i32, %arg1: i32) -> (i32, i32) {
    %c0_i32 = arith.constant 0 : i32
    %c0_i32_0 = arith.constant 0 : i32
    %c0_i32_1 = arith.constant 0 : i32
    return %c0_i32, %c0_i32_0 : i32, i32
  }
  func.func @transform_3(%arg0: i32, %arg1: i32) -> (i32, i32) {
    %c0_i32 = arith.constant 0 : i32
    %c0_i32_0 = arith.constant 0 : i32
    %c0_i32_1 = arith.constant 0 : i32
    return %c0_i32, %c0_i32_0 : i32, i32
  }
  func.func @transform_4(%arg0: i32, %arg1: i32) -> (i32, i32, i32) {
    %c0_i32 = arith.constant 0 : i32
    %c0_i32_0 = arith.constant 0 : i32
    return %arg0, %c0_i32, %arg1 : i32, i32, i32
  }
  func.func @transform_5(%arg0: i32, %arg1: i32) -> (i32, i32, i32, i32) {
    %c0_i32 = arith.constant 0 : i32
    %c0_i32_0 = arith.constant 0 : i32
    %c0_i32_1 = arith.constant 0 : i32
    return %arg0, %arg1, %c0_i32, %c0_i32_0 : i32, i32, i32, i32
  }
  func.func @transform_6(%arg0: i32, %arg1: i32) -> (i32, i32, i32, i32) {
    %c0_i32 = arith.constant 0 : i32
    %c0_i32_0 = arith.constant 0 : i32
    %c0_i32_1 = arith.constant 0 : i32
    return %arg0, %arg1, %c0_i32, %c0_i32_0 : i32, i32, i32, i32
  }
}

module attributes {stable_mosaic.version = 11 : i64} {
  func.func @_bn_relu_maxpool_kernel(%arg0: i32, %arg1: i32, %arg2: memref<1x256x256xbf16, #tpu.memory_space<vmem>>, %arg3: memref<256x1xf32, #tpu.memory_space<vmem>>, %arg4: memref<256x1xf32, #tpu.memory_space<vmem>>, %arg5: memref<1x1x256x1xf32, #tpu.memory_space<vmem>>) attributes {dimension_semantics = [#tpu.dimension_semantics<parallel>, #tpu.dimension_semantics<parallel>], iteration_bounds = array<i64: 8, 1>, scalar_prefetch = 0 : i64, scratch_operands = 0 : i64, tpu.core_type = #tpu.core_type<tc>, window_params = [{transform_indices = @transform_0, window_bounds = array<i64: 1, 256, 256>}, {pipeline_mode = #tpu.pipeline_mode<synchronous>, transform_indices = @transform_1, window_bounds = array<i64: 256, 1>}, {pipeline_mode = #tpu.pipeline_mode<synchronous>, transform_indices = @transform_2, window_bounds = array<i64: 256, 1>}, {transform_indices = @transform_3, window_bounds = array<i64: 1, 1, 256, 1>}]} {
    %c0 = arith.constant 0 : index
    %c0_0 = arith.constant 0 : index
    %c0_1 = arith.constant 0 : index
    %0 = vector.load %arg2[%c0, %c0_0, %c0_1] : memref<1x256x256xbf16, #tpu.memory_space<vmem>>, vector<1x256x256xbf16>
    %1 = vector.shape_cast %0 : vector<1x256x256xbf16> to vector<256x256xbf16>
    %c0_2 = arith.constant 0 : index
    %c0_3 = arith.constant 0 : index
    %2 = vector.load %arg3[%c0_2, %c0_3] : memref<256x1xf32, #tpu.memory_space<vmem>>, vector<256x1xf32>
    %3 = arith.truncf %2 : vector<256x1xf32> to vector<256x1xbf16>
    %4 = vector.broadcast %3 : vector<256x1xbf16> to vector<256x256xbf16>
    %5 = arith.mulf %1, %4 : vector<256x256xbf16>
    %c0_4 = arith.constant 0 : index
    %c0_5 = arith.constant 0 : index
    %6 = vector.load %arg4[%c0_4, %c0_5] : memref<256x1xf32, #tpu.memory_space<vmem>>, vector<256x1xf32>
    %7 = arith.truncf %6 : vector<256x1xf32> to vector<256x1xbf16>
    %8 = vector.broadcast %7 : vector<256x1xbf16> to vector<256x256xbf16>
    %9 = arith.addf %5, %8 : vector<256x256xbf16>
    %cst = arith.constant 0.000000e+00 : bf16
    %10 = vector.broadcast %cst : bf16 to vector<256x256xbf16>
    %11 = arith.maximumf %9, %10 : vector<256x256xbf16>
    %12 = arith.extf %11 : vector<256x256xbf16> to vector<256x256xf32>
    %cst_6 = arith.constant dense<0xFF800000> : vector<256xf32>
    %13 = vector.multi_reduction <maximumf>, %12, %cst_6 [1] : vector<256x256xf32> to vector<256xf32>
    %14 = vector.shape_cast %13 : vector<256xf32> to vector<256x1xf32>
    %c0_7 = arith.constant 0 : index
    %c0_8 = arith.constant 0 : index
    %c0_9 = arith.constant 0 : index
    %c0_10 = arith.constant 0 : index
    %15 = vector.load %arg5[%c0_7, %c0_8, %c0_9, %c0_10] : memref<1x1x256x1xf32, #tpu.memory_space<vmem>>, vector<1x1x256x1xf32>
    %16 = vector.shape_cast %15 : vector<1x1x256x1xf32> to vector<256x1xf32>
    %17 = vector.shape_cast %14 : vector<256x1xf32> to vector<1x1x256x1xf32>
    tpu.vector_store %arg5[%c0_7, %c0_8, %c0_9, %c0_10], %17 {strides = array<i32>} : memref<1x1x256x1xf32, #tpu.memory_space<vmem>>, vector<1x1x256x1xf32>,
    return
  }
  func.func @transform_0(%arg0: i32, %arg1: i32) -> (i32, i32, i32) {
    %c0_i32 = arith.constant 0 : i32
    %c0_i32_0 = arith.constant 0 : i32
    return %arg0, %c0_i32, %arg1 : i32, i32, i32
  }
  func.func @transform_1(%arg0: i32, %arg1: i32) -> (i32, i32) {
    %c0_i32 = arith.constant 0 : i32
    %c0_i32_0 = arith.constant 0 : i32
    %c0_i32_1 = arith.constant 0 : i32
    return %c0_i32, %c0_i32_0 : i32, i32
  }
  func.func @transform_2(%arg0: i32, %arg1: i32) -> (i32, i32) {
    %c0_i32 = arith.constant 0 : i32
    %c0_i32_0 = arith.constant 0 : i32
    %c0_i32_1 = arith.constant 0 : i32
    return %c0_i32, %c0_i32_0 : i32, i32
  }
  func.func @transform_3(%arg0: i32, %arg1: i32) -> (i32, i32, i32, i32) {
    %c0_i32 = arith.constant 0 : i32
    %c0_i32_0 = arith.constant 0 : i32
    %c0_i32_1 = arith.constant 0 : i32
    return %arg0, %arg1, %c0_i32, %c0_i32_0 : i32, i32, i32, i32
  }
}

module attributes {stable_mosaic.version = 11 : i64} {
  func.func @_head_kernel(%arg0: memref<256x8xf32, #tpu.memory_space<vmem>>, %arg1: memref<128x256xbf16, #tpu.memory_space<vmem>>, %arg2: memref<128x1xf32, #tpu.memory_space<vmem>>, %arg3: memref<128x1xf32, #tpu.memory_space<vmem>>, %arg4: memref<64x128xbf16, #tpu.memory_space<vmem>>, %arg5: memref<64x1xf32, #tpu.memory_space<vmem>>, %arg6: memref<64x1xf32, #tpu.memory_space<vmem>>, %arg7: memref<16x64xbf16, #tpu.memory_space<vmem>>, %arg8: memref<16x1xf32, #tpu.memory_space<vmem>>, %arg9: memref<16x8xf32, #tpu.memory_space<vmem>>) attributes {dimension_semantics = [], scalar_prefetch = 0 : i64, scratch_operands = 0 : i64, tpu.core_type = #tpu.core_type<tc>} {
    %c0 = arith.constant 0 : index
    %c0_0 = arith.constant 0 : index
    %0 = vector.load %arg0[%c0, %c0_0] : memref<256x8xf32, #tpu.memory_space<vmem>>, vector<256x8xf32>
    %1 = arith.truncf %0 : vector<256x8xf32> to vector<256x8xbf16>
    %c0_1 = arith.constant 0 : index
    %c0_2 = arith.constant 0 : index
    %2 = vector.load %arg1[%c0_1, %c0_2] : memref<128x256xbf16, #tpu.memory_space<vmem>>, vector<128x256xbf16>
    %cst = arith.constant dense<0.000000e+00> : vector<128x8xf32>
    %3 = tpu.matmul %2, %1, %cst {dimension_numbers = #tpu.dot_dimension_numbers<[1], [0], [0], [1], [0, 0, 1, 1], [], []>} : vector<128x256xbf16>, vector<256x8xbf16>, vector<128x8xf32> -> vector<128x8xf32>
    %cst_3 = arith.constant dense<0.000000e+00> : vector<128xf32>
    %4 = vector.multi_reduction <add>, %3, %cst_3 [1] : vector<128x8xf32> to vector<128xf32>
    %5 = vector.shape_cast %4 : vector<128xf32> to vector<128x1xf32>
    %cst_4 = arith.constant 1.250000e-01 : f32
    %6 = vector.broadcast %cst_4 : f32 to vector<128x1xf32>
    %7 = arith.mulf %5, %6 : vector<128x1xf32>
    %8 = arith.mulf %3, %3 : vector<128x8xf32>
    %cst_5 = arith.constant dense<0.000000e+00> : vector<128xf32>
    %9 = vector.multi_reduction <add>, %8, %cst_5 [1] : vector<128x8xf32> to vector<128xf32>
    %10 = vector.shape_cast %9 : vector<128xf32> to vector<128x1xf32>
    %cst_6 = arith.constant 1.250000e-01 : f32
    %11 = vector.broadcast %cst_6 : f32 to vector<128x1xf32>
    %12 = arith.mulf %10, %11 : vector<128x1xf32>
    %13 = arith.mulf %7, %7 : vector<128x1xf32>
    %14 = arith.subf %12, %13 : vector<128x1xf32>
    %cst_7 = arith.constant 0.000000e+00 : f32
    %15 = vector.broadcast %cst_7 : f32 to vector<128x1xf32>
    %16 = arith.maximumf %14, %15 : vector<128x1xf32>
    %c0_8 = arith.constant 0 : index
    %c0_9 = arith.constant 0 : index
    %17 = vector.load %arg2[%c0_8, %c0_9] : memref<128x1xf32, #tpu.memory_space<vmem>>, vector<128x1xf32>
    %cst_10 = arith.constant 9.99999974E-6 : f32
    %18 = vector.broadcast %cst_10 : f32 to vector<128x1xf32>
    %19 = arith.addf %16, %18 : vector<128x1xf32>
    %20 = math.rsqrt %19 : vector<128x1xf32>
    %21 = arith.mulf %17, %20 : vector<128x1xf32>
    %c0_11 = arith.constant 0 : index
    %c0_12 = arith.constant 0 : index
    %22 = vector.load %arg3[%c0_11, %c0_12] : memref<128x1xf32, #tpu.memory_space<vmem>>, vector<128x1xf32>
    %23 = arith.mulf %7, %21 : vector<128x1xf32>
    %24 = arith.subf %22, %23 : vector<128x1xf32>
    %25 = arith.truncf %3 : vector<128x8xf32> to vector<128x8xbf16>
    %26 = arith.truncf %21 : vector<128x1xf32> to vector<128x1xbf16>
    %27 = vector.broadcast %26 : vector<128x1xbf16> to vector<128x8xbf16>
    %28 = arith.mulf %25, %27 : vector<128x8xbf16>
    %29 = arith.truncf %24 : vector<128x1xf32> to vector<128x1xbf16>
    %30 = vector.broadcast %29 : vector<128x1xbf16> to vector<128x8xbf16>
    %31 = arith.addf %28, %30 : vector<128x8xbf16>
    %cst_13 = arith.constant 0.000000e+00 : bf16
    %32 = vector.broadcast %cst_13 : bf16 to vector<128x8xbf16>
    %33 = arith.maximumf %31, %32 : vector<128x8xbf16>
    %c0_14 = arith.constant 0 : index
    %c0_15 = arith.constant 0 : index
    %34 = vector.load %arg4[%c0_14, %c0_15] : memref<64x128xbf16, #tpu.memory_space<vmem>>, vector<64x128xbf16>
    %cst_16 = arith.constant dense<0.000000e+00> : vector<64x8xf32>
    %35 = tpu.matmul %34, %33, %cst_16 {dimension_numbers = #tpu.dot_dimension_numbers<[1], [0], [0], [1], [0, 0, 1, 1], [], []>} : vector<64x128xbf16>, vector<128x8xbf16>, vector<64x8xf32> -> vector<64x8xf32>
    %cst_17 = arith.constant dense<0.000000e+00> : vector<64xf32>
    %36 = vector.multi_reduction <add>, %35, %cst_17 [1] : vector<64x8xf32> to vector<64xf32>
    %37 = vector.shape_cast %36 : vector<64xf32> to vector<64x1xf32>
    %cst_18 = arith.constant 1.250000e-01 : f32
    %38 = vector.broadcast %cst_18 : f32 to vector<64x1xf32>
    %39 = arith.mulf %37, %38 : vector<64x1xf32>
    %40 = arith.mulf %35, %35 : vector<64x8xf32>
    %cst_19 = arith.constant dense<0.000000e+00> : vector<64xf32>
    %41 = vector.multi_reduction <add>, %40, %cst_19 [1] : vector<64x8xf32> to vector<64xf32>
    %42 = vector.shape_cast %41 : vector<64xf32> to vector<64x1xf32>
    %cst_20 = arith.constant 1.250000e-01 : f32
    %43 = vector.broadcast %cst_20 : f32 to vector<64x1xf32>
    %44 = arith.mulf %42, %43 : vector<64x1xf32>
    %45 = arith.mulf %39, %39 : vector<64x1xf32>
    %46 = arith.subf %44, %45 : vector<64x1xf32>
    %cst_21 = arith.constant 0.000000e+00 : f32
    %47 = vector.broadcast %cst_21 : f32 to vector<64x1xf32>
    %48 = arith.maximumf %46, %47 : vector<64x1xf32>
    %c0_22 = arith.constant 0 : index
    %c0_23 = arith.constant 0 : index
    %49 = vector.load %arg5[%c0_22, %c0_23] : memref<64x1xf32, #tpu.memory_space<vmem>>, vector<64x1xf32>
    %cst_24 = arith.constant 9.99999974E-6 : f32
    %50 = vector.broadcast %cst_24 : f32 to vector<64x1xf32>
    %51 = arith.addf %48, %50 : vector<64x1xf32>
    %52 = math.rsqrt %51 : vector<64x1xf32>
    %53 = arith.mulf %49, %52 : vector<64x1xf32>
    %c0_25 = arith.constant 0 : index
    %c0_26 = arith.constant 0 : index
    %54 = vector.load %arg6[%c0_25, %c0_26] : memref<64x1xf32, #tpu.memory_space<vmem>>, vector<64x1xf32>
    %55 = arith.mulf %39, %53 : vector<64x1xf32>
    %56 = arith.subf %54, %55 : vector<64x1xf32>
    %57 = arith.truncf %35 : vector<64x8xf32> to vector<64x8xbf16>
    %58 = arith.truncf %53 : vector<64x1xf32> to vector<64x1xbf16>
    %59 = vector.broadcast %58 : vector<64x1xbf16> to vector<64x8xbf16>
    %60 = arith.mulf %57, %59 : vector<64x8xbf16>
    %61 = arith.truncf %56 : vector<64x1xf32> to vector<64x1xbf16>
    %62 = vector.broadcast %61 : vector<64x1xbf16> to vector<64x8xbf16>
    %63 = arith.addf %60, %62 : vector<64x8xbf16>
    %cst_27 = arith.constant 0.000000e+00 : bf16
    %64 = vector.broadcast %cst_27 : bf16 to vector<64x8xbf16>
    %65 = arith.maximumf %63, %64 : vector<64x8xbf16>
    %c0_28 = arith.constant 0 : index
    %c0_29 = arith.constant 0 : index
    %66 = vector.load %arg7[%c0_28, %c0_29] : memref<16x64xbf16, #tpu.memory_space<vmem>>, vector<16x64xbf16>
    %cst_30 = arith.constant dense<0.000000e+00> : vector<16x8xf32>
    %67 = tpu.matmul %66, %65, %cst_30 {dimension_numbers = #tpu.dot_dimension_numbers<[1], [0], [0], [1], [0, 0, 1, 1], [], []>} : vector<16x64xbf16>, vector<64x8xbf16>, vector<16x8xf32> -> vector<16x8xf32>
    %c0_31 = arith.constant 0 : index
    %c0_32 = arith.constant 0 : index
    %68 = vector.load %arg8[%c0_31, %c0_32] : memref<16x1xf32, #tpu.memory_space<vmem>>, vector<16x1xf32>
    %69 = vector.broadcast %68 : vector<16x1xf32> to vector<16x8xf32>
    %70 = arith.addf %67, %69 : vector<16x8xf32>
    %c0_33 = arith.constant 0 : index
    %c0_34 = arith.constant 0 : index
    %71 = vector.load %arg9[%c0_33, %c0_34] : memref<16x8xf32, #tpu.memory_space<vmem>>, vector<16x8xf32>
    tpu.vector_store %arg9[%c0_33, %c0_34], %70 {strides = array<i32>} : memref<16x8xf32, #tpu.memory_space<vmem>>, vector<16x8xf32>,
    return
  }
}

</mosaic_0001>

<llo_original>
// kernel: transform_net_forward.5
$region0: #{transform_net_forward.5}
  #allocation0 [shape = 'u32[]', space=smem, size = 0x4, offset = 0x4, fixed_abs, tag = 'smem constant byte address 0x4 - core index']
  #allocation1 [shape = 'u32[72,128]{1,0:T(1,128)}', space=vmem, size = 0x9000, scoped, tag = 'internal scratch']
  %s0 = inlined_call_operand.vmem [shape: f32[8,3,256], index: 0, kind: input, shape index: {}]
  %s1 = inlined_call_operand.vmem [shape: f32[3,1], index: 1, kind: input, shape index: {}]
  %s2 = inlined_call_operand.vmem [shape: f32[3,1], index: 2, kind: input, shape index: {}]
  %s3 = inlined_call_operand.vmem [shape: bf16[16,3], index: 3, kind: input, shape index: {}]
  %s4 = inlined_call_operand.vmem [shape: f32[8,16,256], index: 4, kind: output, shape index: {0}]
  %s5 = inlined_call_operand.vmem [shape: f32[8,2,16,1], index: 5, kind: output, shape index: {1}]
  %s6 = inlined_call_operand.vmem [shape: f32[8,2,16,1], index: 6, kind: output, shape index: {2}]
  %7 = xla_tuple %s4, %s5, %s6
  %s8 = sld [smem:[#allocation0]]
  $region99: #{transform_net_forward.5} parent=0
    _
  %s10 = ssub.s32 1, %s8
  %s11 = scalar_select 0, %s10, %s8
  $region1: #{transform_net_forward.5} parent=0
    #allocation2 [shape = 'u8[16384]{0}', space=vmem, size = 0x4000, scoped, tag = 'output window, operand 0']
    loop: start=0, step=1, limit=18
    $region2: #{transform_net_forward.5} parent=1 // loop_pre_header
      _
    $region3: #{transform_net_forward.5} parent=1 // loop_header
      %s13 = sphi 0, %s17
      %p14 = scmp.ge.s32.totalorder %s13, 18
      %s20 = sphi 0, %s32
      %s21 = sphi 0, %s28
      %s22 = sphi 0, %s20
      %s23 = sphi 0, %s21
      %s24 = sphi 0, %s22
      %s25 = sphi 0, %s23
      %s37 = sphi 0, %s39
      %s40 = sphi 0, %s37
      %s41 = sphi 0, %s40
      %s57 = sphi 0, %s41
      %s61 = sphi 0, %s61
      %s63 = sphi 0, %s61
      %s64 = sphi 0, %s63
      %s78 = sphi 0, %s64
      %s82 = sphi 0, %s82
      %s84 = sphi 0, %s82
      %s85 = sphi 0, %s84
      %s99 = sphi 0, %s85
      %s103 = sphi 0, %s103
      %s105 = sphi 0, %s103
      %s106 = sphi 0, %s105
      %s120 = sphi 0, %s106
      %s128 = sphi 0, %s130
      %s131 = sphi 0, %s128
      %s132 = sphi 0, %s131
      %s148 = sphi 0, %s132
      %s156 = sphi 0, %s158
      %s159 = sphi 0, %s156
      %s160 = sphi 0, %s159
      %s176 = sphi 0, %s160
      %s184 = sphi 0, %s186
      %s187 = sphi 0, %s184
      %s188 = sphi 0, %s187
      %s204 = sphi 0, %s188
    $region4: #{transform_net_forward.5} parent=1 // loop_header_branch
      %16 = sbr.rel (%p14) target = $region8
    $region5: #{transform_net_forward.5} parent=1 // loop_body
      %s18 = ssub.s32 %s13, 1
      %s19 = ssub.s32 %s13, 2
      %s26 = sadd.s32 1, %s21
      %p27 = scmp.ge.s32.totalorder %s26, 2
      %s28 = scalar_select %p27, 0, %s26
      %s29 = sadd.s32 1, %s20
      %s30 = scalar_select %p27, %s29, %s20
      %p31 = scmp.ge.s32.totalorder %s30, 8
      %s32 = scalar_select %p31, 0, %s30
      %s33 = ssub.s32 %s20, %s32
      %s34 = ssub.s32 %s21, %s28
      %s35 = sor.u32 %s33, %s34
      %p36 = scmp.eq.s32.totalorder %s35, 0
      %s38 = sadd.s32 %s37, 1
      %s39 = scalar_select %p36, %s37, %s38
      %p42 = pneg %p36
      %p43 = scmp.eq.s32.totalorder %s13, 15
      %p44 = por %p42, %p43
      %p45 = scmp.ne.s32.totalorder %s37, %s40
      %p46 = scmp.eq.s32.totalorder %s13, 0
      %p47 = por %p45, %p46
      %p48 = scmp.ne.s32.totalorder %s37, %s40
      %p49 = scmp.eq.s32.totalorder %s18, 15
      %p50 = por %p48, %p49
      %p51 = scmp.ne.s32.totalorder %s40, %s41
      %p52 = scmp.eq.s32.totalorder %s18, 0
      %p53 = por %p51, %p52
      %p54 = scmp.ne.s32.totalorder %s40, %s41
      %p55 = scmp.eq.s32.totalorder %s19, 15
      %p56 = por %p54, %p55
      %p58 = scmp.ne.s32.totalorder %s41, %s57
      %p59 = scmp.eq.s32.totalorder %s19, 0
      %p60 = por %p58, %p59
      %s62 = sadd.s32 %s61, 1
      %p65 = scmp.eq.s32.totalorder %s13, 15
      %p66 = scmp.ne.s32.totalorder %s61, %s63
      %p67 = scmp.eq.s32.totalorder %s13, 0
      %p68 = por %p66, %p67
      %p69 = scmp.ne.s32.totalorder %s61, %s63
      %p70 = scmp.eq.s32.totalorder %s18, 15
      %p71 = por %p69, %p70
      %p72 = scmp.ne.s32.totalorder %s63, %s64
      %p73 = scmp.eq.s32.totalorder %s18, 0
      %p74 = por %p72, %p73
      %p75 = scmp.ne.s32.totalorder %s63, %s64
      %p76 = scmp.eq.s32.totalorder %s19, 15
      %p77 = por %p75, %p76
      %p79 = scmp.ne.s32.totalorder %s64, %s78
      %p80 = scmp.eq.s32.totalorder %s19, 0
      %p81 = por %p79, %p80
      %s83 = sadd.s32 %s82, 1
      %p86 = scmp.eq.s32.totalorder %s13, 15
      %p87 = scmp.ne.s32.totalorder %s82, %s84
      %p88 = scmp.eq.s32.totalorder %s13, 0
      %p89 = por %p87, %p88
      %p90 = scmp.ne.s32.totalorder %s82, %s84
      %p91 = scmp.eq.s32.totalorder %s18, 15
      %p92 = por %p90, %p91
      %p93 = scmp.ne.s32.totalorder %s84, %s85
      %p94 = scmp.eq.s32.totalorder %s18, 0
      %p95 = por %p93, %p94
      %p96 = scmp.ne.s32.totalorder %s84, %s85
      %p97 = scmp.eq.s32.totalorder %s19, 15
      %p98 = por %p96, %p97
      %p100 = scmp.ne.s32.totalorder %s85, %s99
      %p101 = scmp.eq.s32.totalorder %s19, 0
      %p102 = por %p100, %p101
      %s104 = sadd.s32 %s103, 1
      %p107 = scmp.eq.s32.totalorder %s13, 15
      %p108 = scmp.ne.s32.totalorder %s103, %s105
      %p109 = scmp.eq.s32.totalorder %s13, 0
      %p110 = por %p108, %p109
      %p111 = scmp.ne.s32.totalorder %s103, %s105
      %p112 = scmp.eq.s32.totalorder %s18, 15
      %p113 = por %p111, %p112
      %p114 = scmp.ne.s32.totalorder %s105, %s106
      %p115 = scmp.eq.s32.totalorder %s18, 0
      %p116 = por %p114, %p115
      %p117 = scmp.ne.s32.totalorder %s105, %s106
      %p118 = scmp.eq.s32.totalorder %s19, 15
      %p119 = por %p117, %p118
      %p121 = scmp.ne.s32.totalorder %s106, %s120
      %p122 = scmp.eq.s32.totalorder %s19, 0
      %p123 = por %p121, %p122
      %s124 = ssub.s32 %s20, %s32
      %s125 = ssub.s32 %s21, %s28
      %s126 = sor.u32 %s124, %s125
      %p127 = scmp.eq.s32.totalorder %s126, 0
      %s129 = sadd.s32 %s128, 1
      %s130 = scalar_select %p127, %s128, %s129
      %p133 = pneg %p127
      %p134 = scmp.eq.s32.totalorder %s13, 15
      %p135 = por %p133, %p134
      %p136 = scmp.ne.s32.totalorder %s128, %s131
      %p137 = scmp.eq.s32.totalorder %s13, 0
      %p138 = por %p136, %p137
      %p139 = scmp.ne.s32.totalorder %s128, %s131
      %p140 = scmp.eq.s32.totalorder %s18, 15
      %p141 = por %p139, %p140
      %p142 = scmp.ne.s32.totalorder %s131, %s132
      %p143 = scmp.eq.s32.totalorder %s18, 0
      %p144 = por %p142, %p143
      %p145 = scmp.ne.s32.totalorder %s131, %s132
      %p146 = scmp.eq.s32.totalorder %s19, 15
      %p147 = por %p145, %p146
      %p149 = scmp.ne.s32.totalorder %s132, %s148
      %p150 = scmp.eq.s32.totalorder %s19, 0
      %p151 = por %p149, %p150
      %s152 = ssub.s32 %s20, %s32
      %s153 = ssub.s32 %s21, %s28
      %s154 = sor.u32 %s152, %s153
      %p155 = scmp.eq.s32.totalorder %s154, 0
      %s157 = sadd.s32 %s156, 1
      %s158 = scalar_select %p155, %s156, %s157
      %p161 = pneg %p155
      %p162 = scmp.eq.s32.totalorder %s13, 15
      %p163 = por %p161, %p162
      %p164 = scmp.ne.s32.totalorder %s156, %s159
      %p165 = scmp.eq.s32.totalorder %s13, 0
      %p166 = por %p164, %p165
      %p167 = scmp.ne.s32.totalorder %s156, %s159
      %p168 = scmp.eq.s32.totalorder %s18, 15
      %p169 = por %p167, %p168
      %p170 = scmp.ne.s32.totalorder %s159, %s160
      %p171 = scmp.eq.s32.totalorder %s18, 0
      %p172 = por %p170, %p171
      %p173 = scmp.ne.s32.totalorder %s159, %s160
      %p174 = scmp.eq.s32.totalorder %s19, 15
      %p175 = por %p173, %p174
      %p177 = scmp.ne.s32.totalorder %s160, %s176
      %p178 = scmp.eq.s32.totalorder %s19, 0
      %p179 = por %p177, %p178
      %s180 = ssub.s32 %s20, %s32
      %s181 = ssub.s32 %s21, %s28
      %s182 = sor.u32 %s180, %s181
      %p183 = scmp.eq.s32.totalorder %s182, 0
      %s185 = sadd.s32 %s184, 1
      %s186 = scalar_select %p183, %s184, %s185
      %p189 = pneg %p183
      %p190 = scmp.eq.s32.totalorder %s13, 15
      %p191 = por %p189, %p190
      %p192 = scmp.ne.s32.totalorder %s184, %s187
      %p193 = scmp.eq.s32.totalorder %s13, 0
      %p194 = por %p192, %p193
      %p195 = scmp.ne.s32.totalorder %s184, %s187
      %p196 = scmp.eq.s32.totalorder %s18, 15
      %p197 = por %p195, %p196
      %p198 = scmp.ne.s32.totalorder %s187, %s188
      %p199 = scmp.eq.s32.totalorder %s18, 0
      %p200 = por %p198, %p199
      %p201 = scmp.ne.s32.totalorder %s187, %s188
      %p202 = scmp.eq.s32.totalorder %s19, 15
      %p203 = por %p201, %p202
      %p205 = scmp.ne.s32.totalorder %s188, %s204
      %p206 = scmp.eq.s32.totalorder %s19, 0
      %p207 = por %p205, %p206
      %p208 = scmp.le.s32.totalorder 1, %s13
      %p209 = scmp.lt.s32.totalorder %s13, 17
      %p210 = pnand %p208, %p209
      %p211 = pneg %p210
      // Predicated region
      $region9: #{transform_net_forward.5} parent=5 // pred_check
        _
      $region10: #{transform_net_forward.5} parent=5 // pred_check_branch
        %213 = sbr.rel (%p210) target = $region12
      $region11: #{transform_net_forward.5} parent=5 // pred_region
        %s214 = ssub.s32 %s13, 1
        // Predicated region
        $region13: #{transform_net_forward.5} parent=11 // pred_check
          %p215 = pneg %p74
        $region14: #{transform_net_forward.5} parent=11 // pred_check_branch
          %217 = sbr.rel (%p215) target = $region16
        $region15: #{transform_net_forward.5} parent=11 // pred_region
          _
        $region16: #{transform_net_forward.5} parent=11 // pred_fallthru
          _
        // Predicated region
        $region17: #{transform_net_forward.5} parent=11 // pred_check
          %p218 = pneg %p95
        $region18: #{transform_net_forward.5} parent=11 // pred_check_branch
          %220 = sbr.rel (%p218) target = $region20
        $region19: #{transform_net_forward.5} parent=11 // pred_region
          _
        $region20: #{transform_net_forward.5} parent=11 // pred_fallthru
          _
        // Predicated region
        $region21: #{transform_net_forward.5} parent=11 // pred_check
          %p221 = pneg %p116
        $region22: #{transform_net_forward.5} parent=11 // pred_check_branch
          %223 = sbr.rel (%p221) target = $region24
        $region23: #{transform_net_forward.5} parent=11 // pred_region
          _
        $region24: #{transform_net_forward.5} parent=11 // pred_fallthru
          _
      $region12: #{transform_net_forward.5} parent=5 // pred_fallthru
        _
      %p224 = scmp.lt.s32.totalorder %s13, 16
      // Predicated region
      $region25: #{transform_net_forward.5} parent=5 // pred_check
        %p225 = pneg %p224
      $region26: #{transform_net_forward.5} parent=5 // pred_check_branch
        %227 = sbr.rel (%p225) target = $region28
      $region27: #{transform_net_forward.5} parent=5 // pred_region
        // Predicated region
        $region29: #{transform_net_forward.5} parent=27 // pred_check
          %p228 = pneg %p47
        $region30: #{transform_net_forward.5} parent=27 // pred_check_branch
          %230 = sbr.rel (%p228) target = $region32
        $region31: #{transform_net_forward.5} parent=27 // pred_region
          %p231 = scmp.lt.s32.totalorder %s20, 7
          %s232 = scalar_select %p231, %s20, 7
          %p233 = scmp.lt.s32.totalorder %s21, 1
          %s234 = scalar_select %p233, %s21, 1
          %s235 = smul.addr %s232, 2
          %s236 = sadd.s32 %s234, %s235
          %s237 = smul.addr %s236, 4
          %s238 = scalar_lea.vmem %s0, %s237
        $region32: #{transform_net_forward.5} parent=27 // pred_fallthru
          _
      $region28: #{transform_net_forward.5} parent=5 // pred_fallthru
        _
      %p239 = scmp.le.s32.totalorder 1, %s13
      %p240 = scmp.lt.s32.totalorder %s13, 17
      %p241 = pnand %p239, %p240
      %p242 = pneg %p241
      // Predicated region
      $region33: #{transform_net_forward.5} parent=5 // pred_check
        _
      $region34: #{transform_net_forward.5} parent=5 // pred_check_branch
        %244 = sbr.rel (%p241) target = $region36
      $region35: #{transform_net_forward.5} parent=5 // pred_region
        %s245 = ssub.s32 %s13, 1
        %p246 = scmp.lt.s32.totalorder %s22, 7
        %s247 = scalar_select %p246, %s22, 7
        %p248 = scmp.lt.s32.totalorder %s23, 1
        %s249 = scalar_select %p248, %s23, 1
        %s250 = smul.addr %s247, 2
        %s251 = sadd.s32 %s249, %s250
        %s252 = smul.addr %s251, 4
        %s253 = scalar_lea.vmem %s0, %s252
        %p254 = pneg %p53
        %p255 = pneg %p50
        %p256 = pneg %p74
        %p257 = pneg %p71
        %p258 = pneg %p95
        %p259 = pneg %p92
        %p260 = pneg %p116
        %p261 = pneg %p113
        %p262 = pneg %p144
        %p263 = pneg %p141
        %s264 = sand.u32 %s131, 1
        %s265 = sand.u32 %s131, 1
        %s266 = smul.addr %s265, 16
        %s267 = scalar_lea.vmem [#allocation2], %s266
        %p268 = pneg %p172
        %p269 = pneg %p169
        %p270 = scmp.lt.s32.totalorder %s22, 7
        %s271 = scalar_select %p270, %s22, 7
        %p272 = scmp.lt.s32.totalorder %s23, 1
        %s273 = scalar_select %p272, %s23, 1
        %s274 = smul.addr %s273, 2
        %s275 = smul.addr %s271, 4
        %s276 = sadd.s32 %s274, %s275
        %s277 = smul.addr %s276, 8
        %s278 = scalar_lea.vmem %s5, %s277
        %p279 = pneg %p200
        %p280 = pneg %p197
        %p281 = scmp.lt.s32.totalorder %s22, 7
        %s282 = scalar_select %p281, %s22, 7
        %p283 = scmp.lt.s32.totalorder %s23, 1
        %s284 = scalar_select %p283, %s23, 1
        %s285 = smul.addr %s284, 2
        %s286 = smul.addr %s282, 4
        %s287 = sadd.s32 %s285, %s286
        %s288 = smul.addr %s287, 8
        %s289 = scalar_lea.vmem %s6, %s288
        %p290 = scmp.lt.s32.totalorder %s22, 7
        %s291 = scalar_select %p290, %s22, 7
        %p292 = scmp.lt.s32.totalorder %s23, 1
        %s293 = scalar_select %p292, %s23, 1
        %s294 = smul.addr %s291, 2
        %s295 = sadd.s32 %s293, %s294
        %s296 = smul.addr %s295, 4
        %s297 = scalar_lea.vmem %s0, %s296
        %p298 = scmp.lt.s32.totalorder %s22, 7
        %s299 = scalar_select %p298, %s22, 7
        %p300 = scmp.lt.s32.totalorder %s23, 1
        %s301 = scalar_select %p300, %s23, 1
        %s302 = smul.addr %s301, 2
        %s303 = smul.addr %s299, 4
        %s304 = sadd.s32 %s302, %s303
        %s305 = smul.addr %s304, 8
        %s306 = scalar_lea.vmem %s5, %s305
        %p307 = scmp.lt.s32.totalorder %s22, 7
        %s308 = scalar_select %p307, %s22, 7
        %p309 = scmp.lt.s32.totalorder %s23, 1
        %s310 = scalar_select %p309, %s23, 1
        %s311 = smul.addr %s310, 2
        %s312 = smul.addr %s308, 4
        %s313 = sadd.s32 %s311, %s312
        %s314 = smul.addr %s313, 8
        %s315 = scalar_lea.vmem %s6, %s314
        %v317 = vld [vmem:[%s297] sm:$0x7]
        %v318 = vpack.c.bf16 %v317, %v317
        %v319 = vld [vmem:[%s3] sm:$0xf]
        %v320 = vld [vmem:[%s3 + $0x4] sm:$0xf]
        %v323 = vunpack.c.l.b16 %v319
        %v324 = vunpack.c.l.b16 %v320
        %v325 = vpack.c.b16 %v324, %v323
        %vm326 = vcmask 23552
        %v328 = vsel %vm326, %v325, 0
        %vm330 = vcmask 1040384
        %vm331 = vcmask 1041408
        %v332 = vsel %vm330, 4294967295, 65535
        %v333 = vsel %vm331, %v332, 0
        %v335 = vand.u32 %v318, %v333
        %337 = vmatpush.bf16.msra.mxu0 0
        %338 = vmatpush.bf16.msra.mxu0 0
        %339 = vmatpush.bf16.msra.mxu0 0
        %340 = vmatpush.bf16.msra.mxu0 0
        %341 = vmatpush.bf16.msra.mxu0 0
        %342 = vmatpush.bf16.msra.mxu0 0
        %343 = vmatpush.bf16.msra.mxu0 0
        %344 = vmatpush.bf16.msra.mxu0 %v335
        %345 = vmatmul.bf16.gmra.mxu0 %v328
        %v346 = vpop.f32.mrf.mxu0
        %v347 = vadd.f32 0.0, %v346
        %v348 = vpop.f32.mrf.mxu0
        %v349 = vadd.f32 0.0, %v348
        %350 = vdwg.mxu0
        %351 = vst [vmem:[%s267] sm:$0xff] %v347
        %352 = vst [vmem:[%s267 + $0x8] sm:$0xff] %v349
        %353 = vadd.xlane.f32.xlu0 %v347
        %v354 = vpop.xlane.xlu0 %353
        %355 = vadd.xlane.f32.xlu0 %v349
        %v356 = vpop.xlane.xlu0 %355
        %vm357 = vcmask 7168
        %358 = vst.msk [vmem:[%s306] sm:$0xff] %vm357, %v354
        %359 = vst.msk [vmem:[%s306 + $0x8] sm:$0xff] %vm357, %v356
        %v360 = vmul.f32 %v347, %v347
        %v361 = vmul.f32 %v349, %v349
        %362 = vadd.xlane.f32.xlu0 %v360
        %v363 = vpop.xlane.xlu0 %362
        %364 = vadd.xlane.f32.xlu0 %v361
        %v365 = vpop.xlane.xlu0 %364
        %366 = vst.msk [vmem:[%s315] sm:$0xff] %vm357, %v363
        %367 = vst.msk [vmem:[%s315 + $0x8] sm:$0xff] %vm357, %v365
        %s368 = sand.u32 %s131, 1
        %s369 = sand.u32 %s131, 1
        %s370 = smul.addr %s369, 16
        %s371 = scalar_lea.vmem [#allocation2], %s370
        %p372 = scmp.lt.s32.totalorder %s22, 7
        %s373 = scalar_select %p372, %s22, 7
        %p374 = scmp.lt.s32.totalorder %s23, 1
        %s375 = scalar_select %p374, %s23, 1
        %s376 = smul.addr %s375, 2
        %s377 = smul.addr %s373, 4
        %s378 = sadd.s32 %s376, %s377
        %s379 = smul.addr %s378, 8
        %s380 = scalar_lea.vmem %s5, %s379
        %p381 = scmp.lt.s32.totalorder %s22, 7
        %s382 = scalar_select %p381, %s22, 7
        %p383 = scmp.lt.s32.totalorder %s23, 1
        %s384 = scalar_select %p383, %s23, 1
        %s385 = smul.addr %s384, 2
        %s386 = smul.addr %s382, 4
        %s387 = sadd.s32 %s385, %s386
        %s388 = smul.addr %s387, 8
        %s389 = scalar_lea.vmem %s6, %s388
        // Predicated region
        $region37: #{transform_net_forward.5} parent=35 // pred_check
          %p390 = pneg %p141
        $region38: #{transform_net_forward.5} parent=35 // pred_check_branch
          %392 = sbr.rel (%p390) target = $region40
        $region39: #{transform_net_forward.5} parent=35 // pred_region
          %s393 = smul.addr %s22, 4
          %s394 = sadd.s32 %s23, %s393
          %s395 = smul.addr %s394, 8
          %s396 = scalar_lea.vmem %s4, %s395
          // Predicated region
          $region41: #{transform_net_forward.5} parent=39 // pred_check
            _
          $region42: #{transform_net_forward.5} parent=39 // pred_check_branch
            %398 = sbr.rel (0) target = $region44
          $region43: #{transform_net_forward.5} parent=39 // pred_region
            // Predicated region
            $region45: #{transform_net_forward.5} parent=43 // pred_check
              _
            $region46: #{transform_net_forward.5} parent=43 // pred_check_branch
              %400 = sbr.rel (0) target = $region48
            $region47: #{transform_net_forward.5} parent=43 // pred_region
              // Predicated region
              $region60: #{transform_net_forward.5} parent=47 // pred_check
                _
              $region61: #{transform_net_forward.5} parent=47 // pred_check_branch
                %418 = sbr.rel (0) target = $region63
              $region62: #{transform_net_forward.5} parent=47 // pred_region
                loop: start=0, step=1, limit=1
                $region64: #{transform_net_forward.5} parent=62 // loop_pre_header
                  _
                $region65: #{transform_net_forward.5} parent=62 // loop_header
                  %s420 = sphi 0, %s424
                  %p421 = scmp.ge.s32.totalorder %s420, 1
                  %s425 = sphi %s371, %s371
                  %s426 = sphi %s396, %s396
                $region66: #{transform_net_forward.5} parent=62 // loop_header_branch
                  %423 = sbr.rel (%p421) target = $region70
                $region67: #{transform_net_forward.5} parent=62 // loop_body
                  %v427 = vld [vmem:[%s425] sm:$0xff]
                  %428 = vst [vmem:[%s426] sm:$0xff] %v427
                  %v429 = vld [vmem:[%s425 + $0x8] sm:$0xff]
                  %430 = vst [vmem:[%s426 + $0x10] sm:$0xff] %v429
                $region68: #{transform_net_forward.5} parent=62 // loop_footer
                  %s424 = sadd.s32 1, %s420
                $region69: #{transform_net_forward.5} parent=62 // loop_footer_branch
                  %419 = sbr.rel target = $region65
                $region70: #{transform_net_forward.5} parent=62 // loop_exit
                  _
              $region63: #{transform_net_forward.5} parent=47 // pred_fallthru
                _
              // Predicated region
              $region71: #{transform_net_forward.5} parent=47 // pred_check
                _
              $region72: #{transform_net_forward.5} parent=47 // pred_check_branch
                %432 = sbr.rel target = $region74
              $region73: #{transform_net_forward.5} parent=47 // pred_region
                _
              $region74: #{transform_net_forward.5} parent=47 // pred_fallthru
                _
            $region48: #{transform_net_forward.5} parent=43 // pred_fallthru
              _
            // Predicated region
            $region49: #{transform_net_forward.5} parent=43 // pred_check
              _
            $region50: #{transform_net_forward.5} parent=43 // pred_check_branch
              %402 = sbr.rel target = $region52
            $region51: #{transform_net_forward.5} parent=43 // pred_region
              %s404 = ssub.s32 256, 1
              loop: start=0, step=1, limit=1
              $region53: #{transform_net_forward.5} parent=51 // loop_pre_header
                _
              $region54: #{transform_net_forward.5} parent=51 // loop_header
                %s406 = sphi 0, %s410
                %p407 = scmp.ge.s32.totalorder %s406, 1
                %s411 = sphi %s371, %s371
                %s412 = sphi %s396, %s396
              $region55: #{transform_net_forward.5} parent=51 // loop_header_branch
                %409 = sbr.rel (%p407) target = $region59
              $region56: #{transform_net_forward.5} parent=51 // loop_body
                %v413 = vld [vmem:[%s411] sm:%s404]
                %414 = vst [vmem:[%s412] sm:%s404] %v413
                %v415 = vld [vmem:[%s411 + $0x8] sm:%s404]
                %416 = vst [vmem:[%s412 + $0x10] sm:%s404] %v415
              $region57: #{transform_net_forward.5} parent=51 // loop_footer
                %s410 = sadd.s32 1, %s406
              $region58: #{transform_net_forward.5} parent=51 // loop_footer_branch
                %405 = sbr.rel target = $region54
              $region59: #{transform_net_forward.5} parent=51 // loop_exit
                _
            $region52: #{transform_net_forward.5} parent=43 // pred_fallthru
              _
          $region44: #{transform_net_forward.5} parent=39 // pred_fallthru
            _
          %433 = vnop
        $region40: #{transform_net_forward.5} parent=35 // pred_fallthru
          _
        // Predicated region
        $region75: #{transform_net_forward.5} parent=35 // pred_check
          %p434 = pneg %p169
        $region76: #{transform_net_forward.5} parent=35 // pred_check_branch
          %436 = sbr.rel (%p434) target = $region78
        $region77: #{transform_net_forward.5} parent=35 // pred_region
          _
        $region78: #{transform_net_forward.5} parent=35 // pred_fallthru
          _
        // Predicated region
        $region79: #{transform_net_forward.5} parent=35 // pred_check
          %p437 = pneg %p197
        $region80: #{transform_net_forward.5} parent=35 // pred_check_branch
          %439 = sbr.rel (%p437) target = $region82
        $region81: #{transform_net_forward.5} parent=35 // pred_region
          _
        $region82: #{transform_net_forward.5} parent=35 // pred_fallthru
          _
      $region36: #{transform_net_forward.5} parent=5 // pred_fallthru
        _
      %p440 = scmp.le.s32.totalorder 2, %s13
      // Predicated region
      $region83: #{transform_net_forward.5} parent=5 // pred_check
        %p441 = pneg %p440
      $region84: #{transform_net_forward.5} parent=5 // pred_check_branch
        %443 = sbr.rel (%p441) target = $region86
      $region85: #{transform_net_forward.5} parent=5 // pred_region
        %s444 = ssub.s32 %s13, 2
        // Predicated region
        $region87: #{transform_net_forward.5} parent=85 // pred_check
          %p445 = pneg %p147
        $region88: #{transform_net_forward.5} parent=85 // pred_check_branch
          %447 = sbr.rel (%p445) target = $region90
        $region89: #{transform_net_forward.5} parent=85 // pred_region
          %s448 = sand.u32 %s132, 1
          %s449 = sand.u32 %s132, 1
          %s450 = smul.addr %s449, 16
          %s451 = scalar_lea.vmem [#allocation2], %s450
        $region90: #{transform_net_forward.5} parent=85 // pred_fallthru
          _
        // Predicated region
        $region91: #{transform_net_forward.5} parent=85 // pred_check
          %p452 = pneg %p175
        $region92: #{transform_net_forward.5} parent=85 // pred_check_branch
          %454 = sbr.rel (%p452) target = $region94
        $region93: #{transform_net_forward.5} parent=85 // pred_region
          %p455 = scmp.lt.s32.totalorder %s24, 7
          %s456 = scalar_select %p455, %s24, 7
          %p457 = scmp.lt.s32.totalorder %s25, 1
          %s458 = scalar_select %p457, %s25, 1
          %s459 = smul.addr %s458, 2
          %s460 = smul.addr %s456, 4
          %s461 = sadd.s32 %s459, %s460
          %s462 = smul.addr %s461, 8
          %s463 = scalar_lea.vmem %s5, %s462
        $region94: #{transform_net_forward.5} parent=85 // pred_fallthru
          _
        // Predicated region
        $region95: #{transform_net_forward.5} parent=85 // pred_check
          %p464 = pneg %p203
        $region96: #{transform_net_forward.5} parent=85 // pred_check_branch
          %466 = sbr.rel (%p464) target = $region98
        $region97: #{transform_net_forward.5} parent=85 // pred_region
          %p467 = scmp.lt.s32.totalorder %s24, 7
          %s468 = scalar_select %p467, %s24, 7
          %p469 = scmp.lt.s32.totalorder %s25, 1
          %s470 = scalar_select %p469, %s25, 1
          %s471 = smul.addr %s470, 2
          %s472 = smul.addr %s468, 4
          %s473 = sadd.s32 %s471, %s472
          %s474 = smul.addr %s473, 8
          %s475 = scalar_lea.vmem %s6, %s474
        $region98: #{transform_net_forward.5} parent=85 // pred_fallthru
          _
      $region86: #{transform_net_forward.5} parent=5 // pred_fallthru
        _
    $region6: #{transform_net_forward.5} parent=1 // loop_footer
      %s17 = sadd.s32 1, %s13
    $region7: #{transform_net_forward.5} parent=1 // loop_footer_branch
      %12 = sbr.rel target = $region3
    $region8: #{transform_net_forward.5} parent=1 // loop_exit
      _

// kernel: transform_net_forward.6
$region0: #{transform_net_forward.6}
  #allocation0 [shape = 'u32[]', space=smem, size = 0x4, offset = 0x4, fixed_abs, tag = 'smem constant byte address 0x4 - core index']
  #allocation1 [shape = 'u32[72,128]{1,0:T(1,128)}', space=vmem, size = 0x9000, scoped, tag = 'internal scratch']
  %s0 = inlined_call_operand.vmem [shape: f32[8,16,256], index: 0, kind: input, shape index: {}]
  %s1 = inlined_call_operand.vmem [shape: f32[16,1], index: 1, kind: input, shape index: {}]
  %s2 = inlined_call_operand.vmem [shape: f32[16,1], index: 2, kind: input, shape index: {}]
  %s3 = inlined_call_operand.vmem [shape: bf16[32,16], index: 3, kind: input, shape index: {}]
  %s4 = inlined_call_operand.vmem [shape: f32[8,32,256], index: 4, kind: output, shape index: {0}]
  %s5 = inlined_call_operand.vmem [shape: f32[8,2,32,1], index: 5, kind: output, shape index: {1}]
  %s6 = inlined_call_operand.vmem [shape: f32[8,2,32,1], index: 6, kind: output, shape index: {2}]
  %7 = xla_tuple %s4, %s5, %s6
  %s8 = sld [smem:[#allocation0]]
  $region137: #{transform_net_forward.6} parent=0
    _
  %s10 = ssub.s32 1, %s8
  %s11 = scalar_select 0, %s10, %s8
  $region1: #{transform_net_forward.6} parent=0
    #allocation2 [shape = 'u8[16384]{0}', space=vmem, size = 0x4000, scoped, tag = 'input window, operand 0']
    #allocation3 [shape = 'u8[32768]{0}', space=vmem, size = 0x8000, scoped, tag = 'output window, operand 0']
    loop: start=0, step=1, limit=18
    $region2: #{transform_net_forward.6} parent=1 // loop_pre_header
      _
    $region3: #{transform_net_forward.6} parent=1 // loop_header
      %s13 = sphi 0, %s17
      %p14 = scmp.ge.s32.totalorder %s13, 18
      %s20 = sphi 0, %s32
      %s21 = sphi 0, %s28
      %s22 = sphi 0, %s20
      %s23 = sphi 0, %s21
      %s24 = sphi 0, %s22
      %s25 = sphi 0, %s23
      %s37 = sphi 0, %s39
      %s40 = sphi 0, %s37
      %s41 = sphi 0, %s40
      %s57 = sphi 0, %s41
      %s61 = sphi 0, %s61
      %s63 = sphi 0, %s61
      %s64 = sphi 0, %s63
      %s78 = sphi 0, %s64
      %s82 = sphi 0, %s82
      %s84 = sphi 0, %s82
      %s85 = sphi 0, %s84
      %s99 = sphi 0, %s85
      %s103 = sphi 0, %s103
      %s105 = sphi 0, %s103
      %s106 = sphi 0, %s105
      %s120 = sphi 0, %s106
      %s128 = sphi 0, %s130
      %s131 = sphi 0, %s128
      %s132 = sphi 0, %s131
      %s148 = sphi 0, %s132
      %s156 = sphi 0, %s158
      %s159 = sphi 0, %s156
      %s160 = sphi 0, %s159
      %s176 = sphi 0, %s160
      %s184 = sphi 0, %s186
      %s187 = sphi 0, %s184
      %s188 = sphi 0, %s187
      %s204 = sphi 0, %s188
    $region4: #{transform_net_forward.6} parent=1 // loop_header_branch
      %16 = sbr.rel (%p14) target = $region8
    $region5: #{transform_net_forward.6} parent=1 // loop_body
      %s18 = ssub.s32 %s13, 1
      %s19 = ssub.s32 %s13, 2
      %s26 = sadd.s32 1, %s21
      %p27 = scmp.ge.s32.totalorder %s26, 2
      %s28 = scalar_select %p27, 0, %s26
      %s29 = sadd.s32 1, %s20
      %s30 = scalar_select %p27, %s29, %s20
      %p31 = scmp.ge.s32.totalorder %s30, 8
      %s32 = scalar_select %p31, 0, %s30
      %s33 = ssub.s32 %s20, %s32
      %s34 = ssub.s32 %s21, %s28
      %s35 = sor.u32 %s33, %s34
      %p36 = scmp.eq.s32.totalorder %s35, 0
      %s38 = sadd.s32 %s37, 1
      %s39 = scalar_select %p36, %s37, %s38
      %p42 = pneg %p36
      %p43 = scmp.eq.s32.totalorder %s13, 15
      %p44 = por %p42, %p43
      %p45 = scmp.ne.s32.totalorder %s37, %s40
      %p46 = scmp.eq.s32.totalorder %s13, 0
      %p47 = por %p45, %p46
      %p48 = scmp.ne.s32.totalorder %s37, %s40
      %p49 = scmp.eq.s32.totalorder %s18, 15
      %p50 = por %p48, %p49
      %p51 = scmp.ne.s32.totalorder %s40, %s41
      %p52 = scmp.eq.s32.totalorder %s18, 0
      %p53 = por %p51, %p52
      %p54 = scmp.ne.s32.totalorder %s40, %s41
      %p55 = scmp.eq.s32.totalorder %s19, 15
      %p56 = por %p54, %p55
      %p58 = scmp.ne.s32.totalorder %s41, %s57
      %p59 = scmp.eq.s32.totalorder %s19, 0
      %p60 = por %p58, %p59
      %s62 = sadd.s32 %s61, 1
      %p65 = scmp.eq.s32.totalorder %s13, 15
      %p66 = scmp.ne.s32.totalorder %s61, %s63
      %p67 = scmp.eq.s32.totalorder %s13, 0
      %p68 = por %p66, %p67
      %p69 = scmp.ne.s32.totalorder %s61, %s63
      %p70 = scmp.eq.s32.totalorder %s18, 15
      %p71 = por %p69, %p70
      %p72 = scmp.ne.s32.totalorder %s63, %s64
      %p73 = scmp.eq.s32.totalorder %s18, 0
      %p74 = por %p72, %p73
      %p75 = scmp.ne.s32.totalorder %s63, %s64
      %p76 = scmp.eq.s32.totalorder %s19, 15
      %p77 = por %p75, %p76
      %p79 = scmp.ne.s32.totalorder %s64, %s78
      %p80 = scmp.eq.s32.totalorder %s19, 0
      %p81 = por %p79, %p80
      %s83 = sadd.s32 %s82, 1
      %p86 = scmp.eq.s32.totalorder %s13, 15
      %p87 = scmp.ne.s32.totalorder %s82, %s84
      %p88 = scmp.eq.s32.totalorder %s13, 0
      %p89 = por %p87, %p88
      %p90 = scmp.ne.s32.totalorder %s82, %s84
      %p91 = scmp.eq.s32.totalorder %s18, 15
      %p92 = por %p90, %p91
      %p93 = scmp.ne.s32.totalorder %s84, %s85
      %p94 = scmp.eq.s32.totalorder %s18, 0
      %p95 = por %p93, %p94
      %p96 = scmp.ne.s32.totalorder %s84, %s85
      %p97 = scmp.eq.s32.totalorder %s19, 15
      %p98 = por %p96, %p97
      %p100 = scmp.ne.s32.totalorder %s85, %s99
      %p101 = scmp.eq.s32.totalorder %s19, 0
      %p102 = por %p100, %p101
      %s104 = sadd.s32 %s103, 1
      %p107 = scmp.eq.s32.totalorder %s13, 15
      %p108 = scmp.ne.s32.totalorder %s103, %s105
      %p109 = scmp.eq.s32.totalorder %s13, 0
      %p110 = por %p108, %p109
      %p111 = scmp.ne.s32.totalorder %s103, %s105
      %p112 = scmp.eq.s32.totalorder %s18, 15
      %p113 = por %p111, %p112
      %p114 = scmp.ne.s32.totalorder %s105, %s106
      %p115 = scmp.eq.s32.totalorder %s18, 0
      %p116 = por %p114, %p115
      %p117 = scmp.ne.s32.totalorder %s105, %s106
      %p118 = scmp.eq.s32.totalorder %s19, 15
      %p119 = por %p117, %p118
      %p121 = scmp.ne.s32.totalorder %s106, %s120
      %p122 = scmp.eq.s32.totalorder %s19, 0
      %p123 = por %p121, %p122
      %s124 = ssub.s32 %s20, %s32
      %s125 = ssub.s32 %s21, %s28
      %s126 = sor.u32 %s124, %s125
      %p127 = scmp.eq.s32.totalorder %s126, 0
      %s129 = sadd.s32 %s128, 1
      %s130 = scalar_select %p127, %s128, %s129
      %p133 = pneg %p127
      %p134 = scmp.eq.s32.totalorder %s13, 15
      %p135 = por %p133, %p134
      %p136 = scmp.ne.s32.totalorder %s128, %s131
      %p137 = scmp.eq.s32.totalorder %s13, 0
      %p138 = por %p136, %p137
      %p139 = scmp.ne.s32.totalorder %s128, %s131
      %p140 = scmp.eq.s32.totalorder %s18, 15
      %p141 = por %p139, %p140
      %p142 = scmp.ne.s32.totalorder %s131, %s132
      %p143 = scmp.eq.s32.totalorder %s18, 0
      %p144 = por %p142, %p143
      %p145 = scmp.ne.s32.totalorder %s131, %s132
      %p146 = scmp.eq.s32.totalorder %s19, 15
      %p147 = por %p145, %p146
      %p149 = scmp.ne.s32.totalorder %s132, %s148
      %p150 = scmp.eq.s32.totalorder %s19, 0
      %p151 = por %p149, %p150
      %s152 = ssub.s32 %s20, %s32
      %s153 = ssub.s32 %s21, %s28
      %s154 = sor.u32 %s152, %s153
      %p155 = scmp.eq.s32.totalorder %s154, 0
      %s157 = sadd.s32 %s156, 1
      %s158 = scalar_select %p155, %s156, %s157
      %p161 = pneg %p155
      %p162 = scmp.eq.s32.totalorder %s13, 15
      %p163 = por %p161, %p162
      %p164 = scmp.ne.s32.totalorder %s156, %s159
      %p165 = scmp.eq.s32.totalorder %s13, 0
      %p166 = por %p164, %p165
      %p167 = scmp.ne.s32.totalorder %s156, %s159
      %p168 = scmp.eq.s32.totalorder %s18, 15
      %p169 = por %p167, %p168
      %p170 = scmp.ne.s32.totalorder %s159, %s160
      %p171 = scmp.eq.s32.totalorder %s18, 0
      %p172 = por %p170, %p171
      %p173 = scmp.ne.s32.totalorder %s159, %s160
      %p174 = scmp.eq.s32.totalorder %s19, 15
      %p175 = por %p173, %p174
      %p177 = scmp.ne.s32.totalorder %s160, %s176
      %p178 = scmp.eq.s32.totalorder %s19, 0
      %p179 = por %p177, %p178
      %s180 = ssub.s32 %s20, %s32
      %s181 = ssub.s32 %s21, %s28
      %s182 = sor.u32 %s180, %s181
      %p183 = scmp.eq.s32.totalorder %s182, 0
      %s185 = sadd.s32 %s184, 1
      %s186 = scalar_select %p183, %s184, %s185
      %p189 = pneg %p183
      %p190 = scmp.eq.s32.totalorder %s13, 15
      %p191 = por %p189, %p190
      %p192 = scmp.ne.s32.totalorder %s184, %s187
      %p193 = scmp.eq.s32.totalorder %s13, 0
      %p194 = por %p192, %p193
      %p195 = scmp.ne.s32.totalorder %s184, %s187
      %p196 = scmp.eq.s32.totalorder %s18, 15
      %p197 = por %p195, %p196
      %p198 = scmp.ne.s32.totalorder %s187, %s188
      %p199 = scmp.eq.s32.totalorder %s18, 0
      %p200 = por %p198, %p199
      %p201 = scmp.ne.s32.totalorder %s187, %s188
      %p202 = scmp.eq.s32.totalorder %s19, 15
      %p203 = por %p201, %p202
      %p205 = scmp.ne.s32.totalorder %s188, %s204
      %p206 = scmp.eq.s32.totalorder %s19, 0
      %p207 = por %p205, %p206
      %p208 = scmp.le.s32.totalorder 1, %s13
      %p209 = scmp.lt.s32.totalorder %s13, 17
      %p210 = pnand %p208, %p209
      %p211 = pneg %p210
      // Predicated region
      $region9: #{transform_net_forward.6} parent=5 // pred_check
        _
      $region10: #{transform_net_forward.6} parent=5 // pred_check_branch
        %213 = sbr.rel (%p210) target = $region12
      $region11: #{transform_net_forward.6} parent=5 // pred_region
        %s214 = ssub.s32 %s13, 1
        // Predicated region
        $region13: #{transform_net_forward.6} parent=11 // pred_check
          %p215 = pneg %p74
        $region14: #{transform_net_forward.6} parent=11 // pred_check_branch
          %217 = sbr.rel (%p215) target = $region16
        $region15: #{transform_net_forward.6} parent=11 // pred_region
          _
        $region16: #{transform_net_forward.6} parent=11 // pred_fallthru
          _
        // Predicated region
        $region17: #{transform_net_forward.6} parent=11 // pred_check
          %p218 = pneg %p95
        $region18: #{transform_net_forward.6} parent=11 // pred_check_branch
          %220 = sbr.rel (%p218) target = $region20
        $region19: #{transform_net_forward.6} parent=11 // pred_region
          _
        $region20: #{transform_net_forward.6} parent=11 // pred_fallthru
          _
        // Predicated region
        $region21: #{transform_net_forward.6} parent=11 // pred_check
          %p221 = pneg %p116
        $region22: #{transform_net_forward.6} parent=11 // pred_check_branch
          %223 = sbr.rel (%p221) target = $region24
        $region23: #{transform_net_forward.6} parent=11 // pred_region
          _
        $region24: #{transform_net_forward.6} parent=11 // pred_fallthru
          _
      $region12: #{transform_net_forward.6} parent=5 // pred_fallthru
        _
      %p224 = scmp.lt.s32.totalorder %s13, 16
      // Predicated region
      $region25: #{transform_net_forward.6} parent=5 // pred_check
        %p225 = pneg %p224
      $region26: #{transform_net_forward.6} parent=5 // pred_check_branch
        %227 = sbr.rel (%p225) target = $region28
      $region27: #{transform_net_forward.6} parent=5 // pred_region
        // Predicated region
        $region29: #{transform_net_forward.6} parent=27 // pred_check
          %p228 = pneg %p47
        $region30: #{transform_net_forward.6} parent=27 // pred_check_branch
          %230 = sbr.rel (%p228) target = $region32
        $region31: #{transform_net_forward.6} parent=27 // pred_region
          %s231 = sand.u32 %s37, 1
          %s232 = sand.u32 %s37, 1
          %s233 = smul.addr %s232, 16
          %s234 = scalar_lea.vmem [#allocation2], %s233
          %s235 = smul.addr %s20, 4
          %s236 = sadd.s32 %s21, %s235
          %s237 = smul.addr %s236, 8
          %s238 = scalar_lea.vmem %s0, %s237
          // Predicated region
          $region33: #{transform_net_forward.6} parent=31 // pred_check
            _
          $region34: #{transform_net_forward.6} parent=31 // pred_check_branch
            %240 = sbr.rel (0) target = $region36
          $region35: #{transform_net_forward.6} parent=31 // pred_region
            // Predicated region
            $region37: #{transform_net_forward.6} parent=35 // pred_check
              _
            $region38: #{transform_net_forward.6} parent=35 // pred_check_branch
              %242 = sbr.rel (0) target = $region40
            $region39: #{transform_net_forward.6} parent=35 // pred_region
              // Predicated region
              $region52: #{transform_net_forward.6} parent=39 // pred_check
                _
              $region53: #{transform_net_forward.6} parent=39 // pred_check_branch
                %260 = sbr.rel (0) target = $region55
              $region54: #{transform_net_forward.6} parent=39 // pred_region
                loop: start=0, step=1, limit=1
                $region56: #{transform_net_forward.6} parent=54 // loop_pre_header
                  _
                $region57: #{transform_net_forward.6} parent=54 // loop_header
                  %s262 = sphi 0, %s266
                  %p263 = scmp.ge.s32.totalorder %s262, 1
                  %s267 = sphi %s238, %s238
                  %s268 = sphi %s234, %s234
                $region58: #{transform_net_forward.6} parent=54 // loop_header_branch
                  %265 = sbr.rel (%p263) target = $region62
                $region59: #{transform_net_forward.6} parent=54 // loop_body
                  %v269 = vld [vmem:[%s267] sm:$0xff]
                  %270 = vst [vmem:[%s268] sm:$0xff] %v269
                  %v271 = vld [vmem:[%s267 + $0x10] sm:$0xff]
                  %272 = vst [vmem:[%s268 + $0x8] sm:$0xff] %v271
                $region60: #{transform_net_forward.6} parent=54 // loop_footer
                  %s266 = sadd.s32 1, %s262
                $region61: #{transform_net_forward.6} parent=54 // loop_footer_branch
                  %261 = sbr.rel target = $region57
                $region62: #{transform_net_forward.6} parent=54 // loop_exit
                  _
              $region55: #{transform_net_forward.6} parent=39 // pred_fallthru
                _
              // Predicated region
              $region63: #{transform_net_forward.6} parent=39 // pred_check
                _
              $region64: #{transform_net_forward.6} parent=39 // pred_check_branch
                %274 = sbr.rel target = $region66
              $region65: #{transform_net_forward.6} parent=39 // pred_region
                _
              $region66: #{transform_net_forward.6} parent=39 // pred_fallthru
                _
            $region40: #{transform_net_forward.6} parent=35 // pred_fallthru
              _
            // Predicated region
            $region41: #{transform_net_forward.6} parent=35 // pred_check
              _
            $region42: #{transform_net_forward.6} parent=35 // pred_check_branch
              %244 = sbr.rel target = $region44
            $region43: #{transform_net_forward.6} parent=35 // pred_region
              %s246 = ssub.s32 256, 1
              loop: start=0, step=1, limit=1
              $region45: #{transform_net_forward.6} parent=43 // loop_pre_header
                _
              $region46: #{transform_net_forward.6} parent=43 // loop_header
                %s248 = sphi 0, %s252
                %p249 = scmp.ge.s32.totalorder %s248, 1
                %s253 = sphi %s238, %s238
                %s254 = sphi %s234, %s234
              $region47: #{transform_net_forward.6} parent=43 // loop_header_branch
                %251 = sbr.rel (%p249) target = $region51
              $region48: #{transform_net_forward.6} parent=43 // loop_body
                %v255 = vld [vmem:[%s253] sm:%s246]
                %256 = vst [vmem:[%s254] sm:%s246] %v255
                %v257 = vld [vmem:[%s253 + $0x10] sm:%s246]
                %258 = vst [vmem:[%s254 + $0x8] sm:%s246] %v257
              $region49: #{transform_net_forward.6} parent=43 // loop_footer
                %s252 = sadd.s32 1, %s248
              $region50: #{transform_net_forward.6} parent=43 // loop_footer_branch
                %247 = sbr.rel target = $region46
              $region51: #{transform_net_forward.6} parent=43 // loop_exit
                _
            $region44: #{transform_net_forward.6} parent=35 // pred_fallthru
              _
          $region36: #{transform_net_forward.6} parent=31 // pred_fallthru
            _
          %275 = vnop
        $region32: #{transform_net_forward.6} parent=27 // pred_fallthru
          _
      $region28: #{transform_net_forward.6} parent=5 // pred_fallthru
        _
      %p276 = scmp.le.s32.totalorder 1, %s13
      %p277 = scmp.lt.s32.totalorder %s13, 17
      %p278 = pnand %p276, %p277
      %p279 = pneg %p278
      // Predicated region
      $region67: #{transform_net_forward.6} parent=5 // pred_check
        _
      $region68: #{transform_net_forward.6} parent=5 // pred_check_branch
        %281 = sbr.rel (%p278) target = $region70
      $region69: #{transform_net_forward.6} parent=5 // pred_region
        %s282 = ssub.s32 %s13, 1
        %s283 = sand.u32 %s40, 1
        %s284 = sand.u32 %s40, 1
        %s285 = smul.addr %s284, 16
        %s286 = scalar_lea.vmem [#allocation2], %s285
        // Predicated region
        $region71: #{transform_net_forward.6} parent=69 // pred_check
          %p287 = pneg %p53
        $region72: #{transform_net_forward.6} parent=69 // pred_check_branch
          %289 = sbr.rel (%p287) target = $region74
        $region73: #{transform_net_forward.6} parent=69 // pred_region
          _
        $region74: #{transform_net_forward.6} parent=69 // pred_fallthru
          _
        %s290 = sand.u32 %s40, 1
        %s291 = sand.u32 %s40, 1
        %s292 = smul.addr %s291, 16
        %s293 = scalar_lea.vmem [#allocation2], %s292
        %p294 = pneg %p53
        %p295 = pneg %p50
        %p296 = pneg %p74
        %p297 = pneg %p71
        %p298 = pneg %p95
        %p299 = pneg %p92
        %p300 = pneg %p116
        %p301 = pneg %p113
        %p302 = pneg %p144
        %p303 = pneg %p141
        %s304 = sand.u32 %s131, 1
        %s305 = sand.u32 %s131, 1
        %s306 = smul.addr %s305, 32
        %s307 = scalar_lea.vmem [#allocation3], %s306
        %p308 = pneg %p172
        %p309 = pneg %p169
        %p310 = scmp.lt.s32.totalorder %s22, 7
        %s311 = scalar_select %p310, %s22, 7
        %p312 = scmp.lt.s32.totalorder %s23, 1
        %s313 = scalar_select %p312, %s23, 1
        %s314 = smul.addr %s313, 4
        %s315 = smul.addr %s311, 8
        %s316 = sadd.s32 %s314, %s315
        %s317 = smul.addr %s316, 8
        %s318 = scalar_lea.vmem %s5, %s317
        %p319 = pneg %p200
        %p320 = pneg %p197
        %p321 = scmp.lt.s32.totalorder %s22, 7
        %s322 = scalar_select %p321, %s22, 7
        %p323 = scmp.lt.s32.totalorder %s23, 1
        %s324 = scalar_select %p323, %s23, 1
        %s325 = smul.addr %s324, 4
        %s326 = smul.addr %s322, 8
        %s327 = sadd.s32 %s325, %s326
        %s328 = smul.addr %s327, 8
        %s329 = scalar_lea.vmem %s6, %s328
        %p330 = scmp.lt.s32.totalorder %s22, 7
        %s331 = scalar_select %p330, %s22, 7
        %p332 = scmp.lt.s32.totalorder %s23, 1
        %s333 = scalar_select %p332, %s23, 1
        %s334 = smul.addr %s333, 4
        %s335 = smul.addr %s331, 8
        %s336 = sadd.s32 %s334, %s335
        %s337 = smul.addr %s336, 8
        %s338 = scalar_lea.vmem %s5, %s337
        %p339 = scmp.lt.s32.totalorder %s22, 7
        %s340 = scalar_select %p339, %s22, 7
        %p341 = scmp.lt.s32.totalorder %s23, 1
        %s342 = scalar_select %p341, %s23, 1
        %s343 = smul.addr %s342, 4
        %s344 = smul.addr %s340, 8
        %s345 = sadd.s32 %s343, %s344
        %s346 = smul.addr %s345, 8
        %s347 = scalar_lea.vmem %s6, %s346
        %v349 = vld [vmem:[%s286] sm:$0xff]
        %v350 = vld [vmem:[%s286 + $0x8] sm:$0xff]
        %v351 = vpack.c.bf16 %v349, %v349
        %v352 = vpack.c.bf16 %v350, %v350
        %v353 = vld [vmem:[%s1] sm:$0xff]
        %v354 = vld [vmem:[%s1 + $0x8] sm:$0xff]
        %v355 = vpack.c.bf16 %v353, %v353
        %v356 = vpack.c.bf16 %v354, %v354
        %358 = vset.pattern.permute.xlu0 0
        %359 = vperm.xlu0 %358, %v355
        %v360 = vpop.permute.xlu0 %359
        %v363 = vunpack.c.l.s4 839922192
        %v364 = vunpack.c.0.s8 %v363
        %v365 = vperm.slane %v360, %v364
        %367 = vset.pattern.permute.xlu0 0
        %368 = vperm.xlu0 %367, %v356
        %v369 = vpop.permute.xlu0 %368
        %v372 = vunpack.c.l.s4 839922192
        %v373 = vunpack.c.0.s8 %v372
        %v374 = vperm.slane %v369, %v373
        %v375 = vunpack.c.l.bf16 %v351
        %v376 = vunpack.c.l.bf16 %v352
        %v377 = vunpack.c.l.bf16 %v365
        %v378 = vunpack.c.l.bf16 %v374
        %v379 = vmul.f32 %v375, %v377
        %v380 = vmul.f32 %v376, %v378
        %v381 = vpack.c.bf16 %v379, %v379
        %v382 = vpack.c.bf16 %v380, %v380
        %v383 = vld [vmem:[%s2] sm:$0xff]
        %v384 = vld [vmem:[%s2 + $0x8] sm:$0xff]
        %v385 = vpack.c.bf16 %v383, %v383
        %v386 = vpack.c.bf16 %v384, %v384
        %388 = vset.pattern.permute.xlu0 0
        %389 = vperm.xlu0 %388, %v385
        %v390 = vpop.permute.xlu0 %389
        %v393 = vunpack.c.l.s4 839922192
        %v394 = vunpack.c.0.s8 %v393
        %v395 = vperm.slane %v390, %v394
        %397 = vset.pattern.permute.xlu0 0
        %398 = vperm.xlu0 %397, %v386
        %v399 = vpop.permute.xlu0 %398
        %v402 = vunpack.c.l.s4 839922192
        %v403 = vunpack.c.0.s8 %v402
        %v404 = vperm.slane %v399, %v403
        %v405 = vunpack.c.l.bf16 %v381
        %v406 = vunpack.c.l.bf16 %v382
        %v407 = vunpack.c.l.bf16 %v395
        %v408 = vunpack.c.l.bf16 %v404
        %v409 = vadd.f32 %v405, %v407
        %v410 = vadd.f32 %v406, %v408
        %v411 = vpack.c.bf16 %v409, %v409
        %v412 = vpack.c.bf16 %v410, %v410
        %v413 = vunpack.c.l.bf16 %v411
        %v414 = vunpack.c.l.bf16 %v412
        %v415 = vmax.f32 %v413, 0.0
        %v416 = vmax.f32 %v414, 0.0
        %v417 = vpack.c.bf16 %v416, %v415
        %v418 = vld [vmem:[%s3] sm:$0xf]
        %v419 = vld [vmem:[%s3 + $0x4] sm:$0xf]
        %v420 = vld [vmem:[%s3 + $0x8] sm:$0xf]
        %v421 = vld [vmem:[%s3 + $0xc] sm:$0xf]
        %v426 = vunpack.c.l.b16 %v418
        %v427 = vunpack.c.l.b16 %v419
        %v428 = vunpack.c.l.b16 %v420
        %v429 = vunpack.c.l.b16 %v421
        %v430 = vpack.c.b16 %v427, %v426
        %v431 = vpack.c.b16 %v429, %v428
        %vm432 = vcmask 130048
        %v434 = vsel %vm432, %v430, 0
        %v437 = vsel %vm432, %v431, 0
        %439 = vmatpush.bf16.msra.mxu0 0
        %440 = vmatpush.bf16.msra.mxu0 0
        %441 = vmatpush.bf16.msra.mxu0 0
        %442 = vmatpush.bf16.msra.mxu0 0
        %443 = vmatpush.bf16.msra.mxu0 0
        %444 = vmatpush.bf16.msra.mxu0 0
        %445 = vmatpush.bf16.msra.mxu0 0
        %446 = vmatpush.bf16.msra.mxu0 %v417
        %447 = vmatmul.bf16.gmra.mxu0 %v434
        %v448 = vpop.f32.mrf.mxu0
        %v449 = vadd.f32 0.0, %v448
        %v450 = vpop.f32.mrf.mxu0
        %v451 = vadd.f32 0.0, %v450
        %452 = vmatmul.bf16.gmra.mxu0 %v437
        %v453 = vpop.f32.mrf.mxu0
        %v454 = vadd.f32 0.0, %v453
        %v455 = vpop.f32.mrf.mxu0
        %v456 = vadd.f32 0.0, %v455
        %457 = vdwg.mxu0
        %458 = vst [vmem:[%s307] sm:$0xff] %v449
        %459 = vst [vmem:[%s307 + $0x8] sm:$0xff] %v451
        %460 = vst [vmem:[%s307 + $0x10] sm:$0xff] %v454
        %461 = vst [vmem:[%s307 + $0x18] sm:$0xff] %v456
        %462 = vadd.xlane.f32.xlu0 %v449
        %v463 = vpop.xlane.xlu0 %462
        %464 = vadd.xlane.f32.xlu0 %v451
        %v465 = vpop.xlane.xlu0 %464
        %466 = vadd.xlane.f32.xlu0 %v454
        %v467 = vpop.xlane.xlu0 %466
        %468 = vadd.xlane.f32.xlu0 %v456
        %v469 = vpop.xlane.xlu0 %468
        %vm470 = vcmask 7168
        %471 = vst.msk [vmem:[%s338] sm:$0xff] %vm470, %v463
        %472 = vst.msk [vmem:[%s338 + $0x8] sm:$0xff] %vm470, %v465
        %473 = vst.msk [vmem:[%s338 + $0x10] sm:$0xff] %vm470, %v467
        %474 = vst.msk [vmem:[%s338 + $0x18] sm:$0xff] %vm470, %v469
        %v475 = vmul.f32 %v449, %v449
        %v476 = vmul.f32 %v451, %v451
        %v477 = vmul.f32 %v454, %v454
        %v478 = vmul.f32 %v456, %v456
        %479 = vadd.xlane.f32.xlu0 %v475
        %v480 = vpop.xlane.xlu0 %479
        %481 = vadd.xlane.f32.xlu0 %v476
        %v482 = vpop.xlane.xlu0 %481
        %483 = vadd.xlane.f32.xlu0 %v477
        %v484 = vpop.xlane.xlu0 %483
        %485 = vadd.xlane.f32.xlu0 %v478
        %v486 = vpop.xlane.xlu0 %485
        %487 = vst.msk [vmem:[%s347] sm:$0xff] %vm470, %v480
        %488 = vst.msk [vmem:[%s347 + $0x8] sm:$0xff] %vm470, %v482
        %489 = vst.msk [vmem:[%s347 + $0x10] sm:$0xff] %vm470, %v484
        %490 = vst.msk [vmem:[%s347 + $0x18] sm:$0xff] %vm470, %v486
        %s491 = sand.u32 %s131, 1
        %s492 = sand.u32 %s131, 1
        %s493 = smul.addr %s492, 32
        %s494 = scalar_lea.vmem [#allocation3], %s493
        %p495 = scmp.lt.s32.totalorder %s22, 7
        %s496 = scalar_select %p495, %s22, 7
        %p497 = scmp.lt.s32.totalorder %s23, 1
        %s498 = scalar_select %p497, %s23, 1
        %s499 = smul.addr %s498, 4
        %s500 = smul.addr %s496, 8
        %s501 = sadd.s32 %s499, %s500
        %s502 = smul.addr %s501, 8
        %s503 = scalar_lea.vmem %s5, %s502
        %p504 = scmp.lt.s32.totalorder %s22, 7
        %s505 = scalar_select %p504, %s22, 7
        %p506 = scmp.lt.s32.totalorder %s23, 1
        %s507 = scalar_select %p506, %s23, 1
        %s508 = smul.addr %s507, 4
        %s509 = smul.addr %s505, 8
        %s510 = sadd.s32 %s508, %s509
        %s511 = smul.addr %s510, 8
        %s512 = scalar_lea.vmem %s6, %s511
        // Predicated region
        $region75: #{transform_net_forward.6} parent=69 // pred_check
          %p513 = pneg %p141
        $region76: #{transform_net_forward.6} parent=69 // pred_check_branch
          %515 = sbr.rel (%p513) target = $region78
        $region77: #{transform_net_forward.6} parent=69 // pred_region
          %s516 = smul.addr %s22, 8
          %s517 = sadd.s32 %s23, %s516
          %s518 = smul.addr %s517, 8
          %s519 = scalar_lea.vmem %s4, %s518
          // Predicated region
          $region79: #{transform_net_forward.6} parent=77 // pred_check
            _
          $region80: #{transform_net_forward.6} parent=77 // pred_check_branch
            %521 = sbr.rel (0) target = $region82
          $region81: #{transform_net_forward.6} parent=77 // pred_region
            // Predicated region
            $region83: #{transform_net_forward.6} parent=81 // pred_check
              _
            $region84: #{transform_net_forward.6} parent=81 // pred_check_branch
              %523 = sbr.rel (0) target = $region86
            $region85: #{transform_net_forward.6} parent=81 // pred_region
              // Predicated region
              $region98: #{transform_net_forward.6} parent=85 // pred_check
                _
              $region99: #{transform_net_forward.6} parent=85 // pred_check_branch
                %545 = sbr.rel (0) target = $region101
              $region100: #{transform_net_forward.6} parent=85 // pred_region
                loop: start=0, step=1, limit=1
                $region102: #{transform_net_forward.6} parent=100 // loop_pre_header
                  _
                $region103: #{transform_net_forward.6} parent=100 // loop_header
                  %s547 = sphi 0, %s551
                  %p548 = scmp.ge.s32.totalorder %s547, 1
                  %s552 = sphi %s494, %s494
                  %s553 = sphi %s519, %s519
                $region104: #{transform_net_forward.6} parent=100 // loop_header_branch
                  %550 = sbr.rel (%p548) target = $region108
                $region105: #{transform_net_forward.6} parent=100 // loop_body
                  %v554 = vld [vmem:[%s552] sm:$0xff]
                  %555 = vst [vmem:[%s553] sm:$0xff] %v554
                  %v556 = vld [vmem:[%s552 + $0x8] sm:$0xff]
                  %557 = vst [vmem:[%s553 + $0x10] sm:$0xff] %v556
                  %v558 = vld [vmem:[%s552 + $0x10] sm:$0xff]
                  %559 = vst [vmem:[%s553 + $0x20] sm:$0xff] %v558
                  %v560 = vld [vmem:[%s552 + $0x18] sm:$0xff]
                  %561 = vst [vmem:[%s553 + $0x30] sm:$0xff] %v560
                $region106: #{transform_net_forward.6} parent=100 // loop_footer
                  %s551 = sadd.s32 1, %s547
                $region107: #{transform_net_forward.6} parent=100 // loop_footer_branch
                  %546 = sbr.rel target = $region103
                $region108: #{transform_net_forward.6} parent=100 // loop_exit
                  _
              $region101: #{transform_net_forward.6} parent=85 // pred_fallthru
                _
              // Predicated region
              $region109: #{transform_net_forward.6} parent=85 // pred_check
                _
              $region110: #{transform_net_forward.6} parent=85 // pred_check_branch
                %563 = sbr.rel target = $region112
              $region111: #{transform_net_forward.6} parent=85 // pred_region
                _
              $region112: #{transform_net_forward.6} parent=85 // pred_fallthru
                _
            $region86: #{transform_net_forward.6} parent=81 // pred_fallthru
              _
            // Predicated region
            $region87: #{transform_net_forward.6} parent=81 // pred_check
              _
            $region88: #{transform_net_forward.6} parent=81 // pred_check_branch
              %525 = sbr.rel target = $region90
            $region89: #{transform_net_forward.6} parent=81 // pred_region
              %s527 = ssub.s32 256, 1
              loop: start=0, step=1, limit=1
              $region91: #{transform_net_forward.6} parent=89 // loop_pre_header
                _
              $region92: #{transform_net_forward.6} parent=89 // loop_header
                %s529 = sphi 0, %s533
                %p530 = scmp.ge.s32.totalorder %s529, 1
                %s534 = sphi %s494, %s494
                %s535 = sphi %s519, %s519
              $region93: #{transform_net_forward.6} parent=89 // loop_header_branch
                %532 = sbr.rel (%p530) target = $region97
              $region94: #{transform_net_forward.6} parent=89 // loop_body
                %v536 = vld [vmem:[%s534] sm:%s527]
                %537 = vst [vmem:[%s535] sm:%s527] %v536
                %v538 = vld [vmem:[%s534 + $0x8] sm:%s527]
                %539 = vst [vmem:[%s535 + $0x10] sm:%s527] %v538
                %v540 = vld [vmem:[%s534 + $0x10] sm:%s527]
                %541 = vst [vmem:[%s535 + $0x20] sm:%s527] %v540
                %v542 = vld [vmem:[%s534 + $0x18] sm:%s527]
                %543 = vst [vmem:[%s535 + $0x30] sm:%s527] %v542
              $region95: #{transform_net_forward.6} parent=89 // loop_footer
                %s533 = sadd.s32 1, %s529
              $region96: #{transform_net_forward.6} parent=89 // loop_footer_branch
                %528 = sbr.rel target = $region92
              $region97: #{transform_net_forward.6} parent=89 // loop_exit
                _
            $region90: #{transform_net_forward.6} parent=81 // pred_fallthru
              _
          $region82: #{transform_net_forward.6} parent=77 // pred_fallthru
            _
          %564 = vnop
        $region78: #{transform_net_forward.6} parent=69 // pred_fallthru
          _
        // Predicated region
        $region113: #{transform_net_forward.6} parent=69 // pred_check
          %p565 = pneg %p169
        $region114: #{transform_net_forward.6} parent=69 // pred_check_branch
          %567 = sbr.rel (%p565) target = $region116
        $region115: #{transform_net_forward.6} parent=69 // pred_region
          _
        $region116: #{transform_net_forward.6} parent=69 // pred_fallthru
          _
        // Predicated region
        $region117: #{transform_net_forward.6} parent=69 // pred_check
          %p568 = pneg %p197
        $region118: #{transform_net_forward.6} parent=69 // pred_check_branch
          %570 = sbr.rel (%p568) target = $region120
        $region119: #{transform_net_forward.6} parent=69 // pred_region
          _
        $region120: #{transform_net_forward.6} parent=69 // pred_fallthru
          _
      $region70: #{transform_net_forward.6} parent=5 // pred_fallthru
        _
      %p571 = scmp.le.s32.totalorder 2, %s13
      // Predicated region
      $region121: #{transform_net_forward.6} parent=5 // pred_check
        %p572 = pneg %p571
      $region122: #{transform_net_forward.6} parent=5 // pred_check_branch
        %574 = sbr.rel (%p572) target = $region124
      $region123: #{transform_net_forward.6} parent=5 // pred_region
        %s575 = ssub.s32 %s13, 2
        // Predicated region
        $region125: #{transform_net_forward.6} parent=123 // pred_check
          %p576 = pneg %p147
        $region126: #{transform_net_forward.6} parent=123 // pred_check_branch
          %578 = sbr.rel (%p576) target = $region128
        $region127: #{transform_net_forward.6} parent=123 // pred_region
          %s579 = sand.u32 %s132, 1
          %s580 = sand.u32 %s132, 1
          %s581 = smul.addr %s580, 32
          %s582 = scalar_lea.vmem [#allocation3], %s581
        $region128: #{transform_net_forward.6} parent=123 // pred_fallthru
          _
        // Predicated region
        $region129: #{transform_net_forward.6} parent=123 // pred_check
          %p583 = pneg %p175
        $region130: #{transform_net_forward.6} parent=123 // pred_check_branch
          %585 = sbr.rel (%p583) target = $region132
        $region131: #{transform_net_forward.6} parent=123 // pred_region
          %p586 = scmp.lt.s32.totalorder %s24, 7
          %s587 = scalar_select %p586, %s24, 7
          %p588 = scmp.lt.s32.totalorder %s25, 1
          %s589 = scalar_select %p588, %s25, 1
          %s590 = smul.addr %s589, 4
          %s591 = smul.addr %s587, 8
          %s592 = sadd.s32 %s590, %s591
          %s593 = smul.addr %s592, 8
          %s594 = scalar_lea.vmem %s5, %s593
        $region132: #{transform_net_forward.6} parent=123 // pred_fallthru
          _
        // Predicated region
        $region133: #{transform_net_forward.6} parent=123 // pred_check
          %p595 = pneg %p203
        $region134: #{transform_net_forward.6} parent=123 // pred_check_branch
          %597 = sbr.rel (%p595) target = $region136
        $region135: #{transform_net_forward.6} parent=123 // pred_region
          %p598 = scmp.lt.s32.totalorder %s24, 7
          %s599 = scalar_select %p598, %s24, 7
          %p600 = scmp.lt.s32.totalorder %s25, 1
          %s601 = scalar_select %p600, %s25, 1
          %s602 = smul.addr %s601, 4
          %s603 = smul.addr %s599, 8
          %s604 = sadd.s32 %s602, %s603
          %s605 = smul.addr %s604, 8
          %s606 = scalar_lea.vmem %s6, %s605
        $region136: #{transform_net_forward.6} parent=123 // pred_fallthru
          _
      $region124: #{transform_net_forward.6} parent=5 // pred_fallthru
        _
    $region6: #{transform_net_forward.6} parent=1 // loop_footer
      %s17 = sadd.s32 1, %s13
    $region7: #{transform_net_forward.6} parent=1 // loop_footer_branch
      %12 = sbr.rel target = $region3
    $region8: #{transform_net_forward.6} parent=1 // loop_exit
      _

// kernel: mul.15
$region0: #{mul.15}
  #allocation0 [shape = 's32[1]{0}', space=sflag, size = 0x4, scoped, tag = 'scoped memory for mul.15']
  %s0 = inlined_call_operand.vmem [shape: f32[256,1], index: 0, kind: input, shape index: {}, may-alias: {0,1}]
  %s1 = inlined_call_operand.vmem [shape: f32[256,1], index: 1, kind: input, shape index: {}, may-alias: {0,1}]
  %s2 = inlined_call_operand.vmem [shape: f32[256,1], index: 2, kind: output, shape index: {}]
  %v3 = vld [vmem:[%s0] sm:$0x1]
  %v4 = vld [vmem:[%s1] sm:$0x1]
  %5 = xla_tuple %v3, %v4
  %6 = xla_tuple %5
  %v7 = vmul.f32 %v3, %v4
  %8 = xla_tuple %v7
  %9 = vst [vmem:[%s2] sm:$0x1] %v7
  %s10 = scalar_lea.vmem %s0, 1
  %v11 = vld [vmem:[%s10] sm:$0x1]
  %s12 = scalar_lea.vmem %s1, 1
  %v13 = vld [vmem:[%s12] sm:$0x1]
  %14 = xla_tuple %v11, %v13
  %15 = xla_tuple %14
  %v16 = vmul.f32 %v11, %v13
  %17 = xla_tuple %v16
  %s18 = scalar_lea.vmem %s2, 1
  %19 = vst [vmem:[%s18] sm:$0x1] %v16

// kernel: transform_net_forward.7
$region0: #{transform_net_forward.7}
  #allocation0 [shape = 'u32[]', space=smem, size = 0x4, offset = 0x4, fixed_abs, tag = 'smem constant byte address 0x4 - core index']
  #allocation1 [shape = 'u32[72,128]{1,0:T(1,128)}', space=vmem, size = 0x9000, scoped, tag = 'internal scratch']
  %s0 = inlined_call_operand.vmem [shape: f32[8,32,256], index: 0, kind: input, shape index: {}]
  %s1 = inlined_call_operand.vmem [shape: f32[32,1], index: 1, kind: input, shape index: {}]
  %s2 = inlined_call_operand.vmem [shape: f32[32,1], index: 2, kind: input, shape index: {}]
  %s3 = inlined_call_operand.vmem [shape: bf16[256,32], index: 3, kind: input, shape index: {}]
  %s4 = inlined_call_operand.vmem [shape: bf16[8,256,256], index: 4, kind: output, shape index: {0}]
  %s5 = inlined_call_operand.vmem [shape: f32[8,2,256,1], index: 5, kind: output, shape index: {1}]
  %s6 = inlined_call_operand.vmem [shape: f32[8,2,256,1], index: 6, kind: output, shape index: {2}]
  %7 = xla_tuple %s4, %s5, %s6
  %s8 = sld [smem:[#allocation0]]
  $region140: #{transform_net_forward.7} parent=0
    _
  %s10 = ssub.s32 1, %s8
  %s11 = scalar_select 0, %s10, %s8
  $region1: #{transform_net_forward.7} parent=0
    #allocation2 [shape = 'u8[32768]{0}', space=vmem, size = 0x8000, scoped, tag = 'input window, operand 0']
    #allocation3 [shape = 'u8[131072]{0}', space=vmem, size = 0x20000, scoped, tag = 'output window, operand 0']
    loop: start=0, step=1, limit=18
    $region2: #{transform_net_forward.7} parent=1 // loop_pre_header
      _
    $region3: #{transform_net_forward.7} parent=1 // loop_header
      %s13 = sphi 0, %s17
      %p14 = scmp.ge.s32.totalorder %s13, 18
      %s20 = sphi 0, %s32
      %s21 = sphi 0, %s28
      %s22 = sphi 0, %s20
      %s23 = sphi 0, %s21
      %s24 = sphi 0, %s22
      %s25 = sphi 0, %s23
      %s37 = sphi 0, %s39
      %s40 = sphi 0, %s37
      %s41 = sphi 0, %s40
      %s57 = sphi 0, %s41
      %s61 = sphi 0, %s61
      %s63 = sphi 0, %s61
      %s64 = sphi 0, %s63
      %s78 = sphi 0, %s64
      %s82 = sphi 0, %s82
      %s84 = sphi 0, %s82
      %s85 = sphi 0, %s84
      %s99 = sphi 0, %s85
      %s103 = sphi 0, %s103
      %s105 = sphi 0, %s103
      %s106 = sphi 0, %s105
      %s120 = sphi 0, %s106
      %s128 = sphi 0, %s130
      %s131 = sphi 0, %s128
      %s132 = sphi 0, %s131
      %s148 = sphi 0, %s132
      %s156 = sphi 0, %s158
      %s159 = sphi 0, %s156
      %s160 = sphi 0, %s159
      %s176 = sphi 0, %s160
      %s184 = sphi 0, %s186
      %s187 = sphi 0, %s184
      %s188 = sphi 0, %s187
      %s204 = sphi 0, %s188
    $region4: #{transform_net_forward.7} parent=1 // loop_header_branch
      %16 = sbr.rel (%p14) target = $region8
    $region5: #{transform_net_forward.7} parent=1 // loop_body
      %s18 = ssub.s32 %s13, 1
      %s19 = ssub.s32 %s13, 2
      %s26 = sadd.s32 1, %s21
      %p27 = scmp.ge.s32.totalorder %s26, 2
      %s28 = scalar_select %p27, 0, %s26
      %s29 = sadd.s32 1, %s20
      %s30 = scalar_select %p27, %s29, %s20
      %p31 = scmp.ge.s32.totalorder %s30, 8
      %s32 = scalar_select %p31, 0, %s30
      %s33 = ssub.s32 %s20, %s32
      %s34 = ssub.s32 %s21, %s28
      %s35 = sor.u32 %s33, %s34
      %p36 = scmp.eq.s32.totalorder %s35, 0
      %s38 = sadd.s32 %s37, 1
      %s39 = scalar_select %p36, %s37, %s38
      %p42 = pneg %p36
      %p43 = scmp.eq.s32.totalorder %s13, 15
      %p44 = por %p42, %p43
      %p45 = scmp.ne.s32.totalorder %s37, %s40
      %p46 = scmp.eq.s32.totalorder %s13, 0
      %p47 = por %p45, %p46
      %p48 = scmp.ne.s32.totalorder %s37, %s40
      %p49 = scmp.eq.s32.totalorder %s18, 15
      %p50 = por %p48, %p49
      %p51 = scmp.ne.s32.totalorder %s40, %s41
      %p52 = scmp.eq.s32.totalorder %s18, 0
      %p53 = por %p51, %p52
      %p54 = scmp.ne.s32.totalorder %s40, %s41
      %p55 = scmp.eq.s32.totalorder %s19, 15
      %p56 = por %p54, %p55
      %p58 = scmp.ne.s32.totalorder %s41, %s57
      %p59 = scmp.eq.s32.totalorder %s19, 0
      %p60 = por %p58, %p59
      %s62 = sadd.s32 %s61, 1
      %p65 = scmp.eq.s32.totalorder %s13, 15
      %p66 = scmp.ne.s32.totalorder %s61, %s63
      %p67 = scmp.eq.s32.totalorder %s13, 0
      %p68 = por %p66, %p67
      %p69 = scmp.ne.s32.totalorder %s61, %s63
      %p70 = scmp.eq.s32.totalorder %s18, 15
      %p71 = por %p69, %p70
      %p72 = scmp.ne.s32.totalorder %s63, %s64
      %p73 = scmp.eq.s32.totalorder %s18, 0
      %p74 = por %p72, %p73
      %p75 = scmp.ne.s32.totalorder %s63, %s64
      %p76 = scmp.eq.s32.totalorder %s19, 15
      %p77 = por %p75, %p76
      %p79 = scmp.ne.s32.totalorder %s64, %s78
      %p80 = scmp.eq.s32.totalorder %s19, 0
      %p81 = por %p79, %p80
      %s83 = sadd.s32 %s82, 1
      %p86 = scmp.eq.s32.totalorder %s13, 15
      %p87 = scmp.ne.s32.totalorder %s82, %s84
      %p88 = scmp.eq.s32.totalorder %s13, 0
      %p89 = por %p87, %p88
      %p90 = scmp.ne.s32.totalorder %s82, %s84
      %p91 = scmp.eq.s32.totalorder %s18, 15
      %p92 = por %p90, %p91
      %p93 = scmp.ne.s32.totalorder %s84, %s85
      %p94 = scmp.eq.s32.totalorder %s18, 0
      %p95 = por %p93, %p94
      %p96 = scmp.ne.s32.totalorder %s84, %s85
      %p97 = scmp.eq.s32.totalorder %s19, 15
      %p98 = por %p96, %p97
      %p100 = scmp.ne.s32.totalorder %s85, %s99
      %p101 = scmp.eq.s32.totalorder %s19, 0
      %p102 = por %p100, %p101
      %s104 = sadd.s32 %s103, 1
      %p107 = scmp.eq.s32.totalorder %s13, 15
      %p108 = scmp.ne.s32.totalorder %s103, %s105
      %p109 = scmp.eq.s32.totalorder %s13, 0
      %p110 = por %p108, %p109
      %p111 = scmp.ne.s32.totalorder %s103, %s105
      %p112 = scmp.eq.s32.totalorder %s18, 15
      %p113 = por %p111, %p112
      %p114 = scmp.ne.s32.totalorder %s105, %s106
      %p115 = scmp.eq.s32.totalorder %s18, 0
      %p116 = por %p114, %p115
      %p117 = scmp.ne.s32.totalorder %s105, %s106
      %p118 = scmp.eq.s32.totalorder %s19, 15
      %p119 = por %p117, %p118
      %p121 = scmp.ne.s32.totalorder %s106, %s120
      %p122 = scmp.eq.s32.totalorder %s19, 0
      %p123 = por %p121, %p122
      %s124 = ssub.s32 %s20, %s32
      %s125 = ssub.s32 %s21, %s28
      %s126 = sor.u32 %s124, %s125
      %p127 = scmp.eq.s32.totalorder %s126, 0
      %s129 = sadd.s32 %s128, 1
      %s130 = scalar_select %p127, %s128, %s129
      %p133 = pneg %p127
      %p134 = scmp.eq.s32.totalorder %s13, 15
      %p135 = por %p133, %p134
      %p136 = scmp.ne.s32.totalorder %s128, %s131
      %p137 = scmp.eq.s32.totalorder %s13, 0
      %p138 = por %p136, %p137
      %p139 = scmp.ne.s32.totalorder %s128, %s131
      %p140 = scmp.eq.s32.totalorder %s18, 15
      %p141 = por %p139, %p140
      %p142 = scmp.ne.s32.totalorder %s131, %s132
      %p143 = scmp.eq.s32.totalorder %s18, 0
      %p144 = por %p142, %p143
      %p145 = scmp.ne.s32.totalorder %s131, %s132
      %p146 = scmp.eq.s32.totalorder %s19, 15
      %p147 = por %p145, %p146
      %p149 = scmp.ne.s32.totalorder %s132, %s148
      %p150 = scmp.eq.s32.totalorder %s19, 0
      %p151 = por %p149, %p150
      %s152 = ssub.s32 %s20, %s32
      %s153 = ssub.s32 %s21, %s28
      %s154 = sor.u32 %s152, %s153
      %p155 = scmp.eq.s32.totalorder %s154, 0
      %s157 = sadd.s32 %s156, 1
      %s158 = scalar_select %p155, %s156, %s157
      %p161 = pneg %p155
      %p162 = scmp.eq.s32.totalorder %s13, 15
      %p163 = por %p161, %p162
      %p164 = scmp.ne.s32.totalorder %s156, %s159
      %p165 = scmp.eq.s32.totalorder %s13, 0
      %p166 = por %p164, %p165
      %p167 = scmp.ne.s32.totalorder %s156, %s159
      %p168 = scmp.eq.s32.totalorder %s18, 15
      %p169 = por %p167, %p168
      %p170 = scmp.ne.s32.totalorder %s159, %s160
      %p171 = scmp.eq.s32.totalorder %s18, 0
      %p172 = por %p170, %p171
      %p173 = scmp.ne.s32.totalorder %s159, %s160
      %p174 = scmp.eq.s32.totalorder %s19, 15
      %p175 = por %p173, %p174
      %p177 = scmp.ne.s32.totalorder %s160, %s176
      %p178 = scmp.eq.s32.totalorder %s19, 0
      %p179 = por %p177, %p178
      %s180 = ssub.s32 %s20, %s32
      %s181 = ssub.s32 %s21, %s28
      %s182 = sor.u32 %s180, %s181
      %p183 = scmp.eq.s32.totalorder %s182, 0
      %s185 = sadd.s32 %s184, 1
      %s186 = scalar_select %p183, %s184, %s185
      %p189 = pneg %p183
      %p190 = scmp.eq.s32.totalorder %s13, 15
      %p191 = por %p189, %p190
      %p192 = scmp.ne.s32.totalorder %s184, %s187
      %p193 = scmp.eq.s32.totalorder %s13, 0
      %p194 = por %p192, %p193
      %p195 = scmp.ne.s32.totalorder %s184, %s187
      %p196 = scmp.eq.s32.totalorder %s18, 15
      %p197 = por %p195, %p196
      %p198 = scmp.ne.s32.totalorder %s187, %s188
      %p199 = scmp.eq.s32.totalorder %s18, 0
      %p200 = por %p198, %p199
      %p201 = scmp.ne.s32.totalorder %s187, %s188
      %p202 = scmp.eq.s32.totalorder %s19, 15
      %p203 = por %p201, %p202
      %p205 = scmp.ne.s32.totalorder %s188, %s204
      %p206 = scmp.eq.s32.totalorder %s19, 0
      %p207 = por %p205, %p206
      %p208 = scmp.le.s32.totalorder 1, %s13
      %p209 = scmp.lt.s32.totalorder %s13, 17
      %p210 = pnand %p208, %p209
      %p211 = pneg %p210
      // Predicated region
      $region9: #{transform_net_forward.7} parent=5 // pred_check
        _
      $region10: #{transform_net_forward.7} parent=5 // pred_check_branch
        %213 = sbr.rel (%p210) target = $region12
      $region11: #{transform_net_forward.7} parent=5 // pred_region
        %s214 = ssub.s32 %s13, 1
        // Predicated region
        $region13: #{transform_net_forward.7} parent=11 // pred_check
          %p215 = pneg %p74
        $region14: #{transform_net_forward.7} parent=11 // pred_check_branch
          %217 = sbr.rel (%p215) target = $region16
        $region15: #{transform_net_forward.7} parent=11 // pred_region
          _
        $region16: #{transform_net_forward.7} parent=11 // pred_fallthru
          _
        // Predicated region
        $region17: #{transform_net_forward.7} parent=11 // pred_check
          %p218 = pneg %p95
        $region18: #{transform_net_forward.7} parent=11 // pred_check_branch
          %220 = sbr.rel (%p218) target = $region20
        $region19: #{transform_net_forward.7} parent=11 // pred_region
          _
        $region20: #{transform_net_forward.7} parent=11 // pred_fallthru
          _
        // Predicated region
        $region21: #{transform_net_forward.7} parent=11 // pred_check
          %p221 = pneg %p116
        $region22: #{transform_net_forward.7} parent=11 // pred_check_branch
          %223 = sbr.rel (%p221) target = $region24
        $region23: #{transform_net_forward.7} parent=11 // pred_region
          _
        $region24: #{transform_net_forward.7} parent=11 // pred_fallthru
          _
      $region12: #{transform_net_forward.7} parent=5 // pred_fallthru
        _
      %p224 = scmp.lt.s32.totalorder %s13, 16
      // Predicated region
      $region25: #{transform_net_forward.7} parent=5 // pred_check
        %p225 = pneg %p224
      $region26: #{transform_net_forward.7} parent=5 // pred_check_branch
        %227 = sbr.rel (%p225) target = $region28
      $region27: #{transform_net_forward.7} parent=5 // pred_region
        // Predicated region
        $region29: #{transform_net_forward.7} parent=27 // pred_check
          %p228 = pneg %p47
        $region30: #{transform_net_forward.7} parent=27 // pred_check_branch
          %230 = sbr.rel (%p228) target = $region32
        $region31: #{transform_net_forward.7} parent=27 // pred_region
          %s231 = sand.u32 %s37, 1
          %s232 = sand.u32 %s37, 1
          %s233 = smul.addr %s232, 32
          %s234 = scalar_lea.vmem [#allocation2], %s233
          %s235 = smul.addr %s20, 8
          %s236 = sadd.s32 %s21, %s235
          %s237 = smul.addr %s236, 8
          %s238 = scalar_lea.vmem %s0, %s237
          // Predicated region
          $region33: #{transform_net_forward.7} parent=31 // pred_check
            _
          $region34: #{transform_net_forward.7} parent=31 // pred_check_branch
            %240 = sbr.rel (0) target = $region36
          $region35: #{transform_net_forward.7} parent=31 // pred_region
            // Predicated region
            $region37: #{transform_net_forward.7} parent=35 // pred_check
              _
            $region38: #{transform_net_forward.7} parent=35 // pred_check_branch
              %242 = sbr.rel (0) target = $region40
            $region39: #{transform_net_forward.7} parent=35 // pred_region
              // Predicated region
              $region52: #{transform_net_forward.7} parent=39 // pred_check
                _
              $region53: #{transform_net_forward.7} parent=39 // pred_check_branch
                %264 = sbr.rel (0) target = $region55
              $region54: #{transform_net_forward.7} parent=39 // pred_region
                loop: start=0, step=1, limit=1
                $region56: #{transform_net_forward.7} parent=54 // loop_pre_header
                  _
                $region57: #{transform_net_forward.7} parent=54 // loop_header
                  %s266 = sphi 0, %s270
                  %p267 = scmp.ge.s32.totalorder %s266, 1
                  %s271 = sphi %s238, %s238
                  %s272 = sphi %s234, %s234
                $region58: #{transform_net_forward.7} parent=54 // loop_header_branch
                  %269 = sbr.rel (%p267) target = $region62
                $region59: #{transform_net_forward.7} parent=54 // loop_body
                  %v273 = vld [vmem:[%s271] sm:$0xff]
                  %274 = vst [vmem:[%s272] sm:$0xff] %v273
                  %v275 = vld [vmem:[%s271 + $0x10] sm:$0xff]
                  %276 = vst [vmem:[%s272 + $0x8] sm:$0xff] %v275
                  %v277 = vld [vmem:[%s271 + $0x20] sm:$0xff]
                  %278 = vst [vmem:[%s272 + $0x10] sm:$0xff] %v277
                  %v279 = vld [vmem:[%s271 + $0x30] sm:$0xff]
                  %280 = vst [vmem:[%s272 + $0x18] sm:$0xff] %v279
                $region60: #{transform_net_forward.7} parent=54 // loop_footer
                  %s270 = sadd.s32 1, %s266
                $region61: #{transform_net_forward.7} parent=54 // loop_footer_branch
                  %265 = sbr.rel target = $region57
                $region62: #{transform_net_forward.7} parent=54 // loop_exit
                  _
              $region55: #{transform_net_forward.7} parent=39 // pred_fallthru
                _
              // Predicated region
              $region63: #{transform_net_forward.7} parent=39 // pred_check
                _
              $region64: #{transform_net_forward.7} parent=39 // pred_check_branch
                %282 = sbr.rel target = $region66
              $region65: #{transform_net_forward.7} parent=39 // pred_region
                _
              $region66: #{transform_net_forward.7} parent=39 // pred_fallthru
                _
            $region40: #{transform_net_forward.7} parent=35 // pred_fallthru
              _
            // Predicated region
            $region41: #{transform_net_forward.7} parent=35 // pred_check
              _
            $region42: #{transform_net_forward.7} parent=35 // pred_check_branch
              %244 = sbr.rel target = $region44
            $region43: #{transform_net_forward.7} parent=35 // pred_region
              %s246 = ssub.s32 256, 1
              loop: start=0, step=1, limit=1
              $region45: #{transform_net_forward.7} parent=43 // loop_pre_header
                _
              $region46: #{transform_net_forward.7} parent=43 // loop_header
                %s248 = sphi 0, %s252
                %p249 = scmp.ge.s32.totalorder %s248, 1
                %s253 = sphi %s238, %s238
                %s254 = sphi %s234, %s234
              $region47: #{transform_net_forward.7} parent=43 // loop_header_branch
                %251 = sbr.rel (%p249) target = $region51
              $region48: #{transform_net_forward.7} parent=43 // loop_body
                %v255 = vld [vmem:[%s253] sm:%s246]
                %256 = vst [vmem:[%s254] sm:%s246] %v255
                %v257 = vld [vmem:[%s253 + $0x10] sm:%s246]
                %258 = vst [vmem:[%s254 + $0x8] sm:%s246] %v257
                %v259 = vld [vmem:[%s253 + $0x20] sm:%s246]
                %260 = vst [vmem:[%s254 + $0x10] sm:%s246] %v259
                %v261 = vld [vmem:[%s253 + $0x30] sm:%s246]
                %262 = vst [vmem:[%s254 + $0x18] sm:%s246] %v261
              $region49: #{transform_net_forward.7} parent=43 // loop_footer
                %s252 = sadd.s32 1, %s248
              $region50: #{transform_net_forward.7} parent=43 // loop_footer_branch
                %247 = sbr.rel target = $region46
              $region51: #{transform_net_forward.7} parent=43 // loop_exit
                _
            $region44: #{transform_net_forward.7} parent=35 // pred_fallthru
              _
          $region36: #{transform_net_forward.7} parent=31 // pred_fallthru
            _
          %283 = vnop
        $region32: #{transform_net_forward.7} parent=27 // pred_fallthru
          _
      $region28: #{transform_net_forward.7} parent=5 // pred_fallthru
        _
      %p284 = scmp.le.s32.totalorder 1, %s13
      %p285 = scmp.lt.s32.totalorder %s13, 17
      %p286 = pnand %p284, %p285
      %p287 = pneg %p286
      // Predicated region
      $region67: #{transform_net_forward.7} parent=5 // pred_check
        _
      $region68: #{transform_net_forward.7} parent=5 // pred_check_branch
        %289 = sbr.rel (%p286) target = $region70
      $region69: #{transform_net_forward.7} parent=5 // pred_region
        %s290 = ssub.s32 %s13, 1
        %s291 = sand.u32 %s40, 1
        %s292 = sand.u32 %s40, 1
        %s293 = smul.addr %s292, 32
        %s294 = scalar_lea.vmem [#allocation2], %s293
        // Predicated region
        $region71: #{transform_net_forward.7} parent=69 // pred_check
          %p295 = pneg %p53
        $region72: #{transform_net_forward.7} parent=69 // pred_check_branch
          %297 = sbr.rel (%p295) target = $region74
        $region73: #{transform_net_forward.7} parent=69 // pred_region
          _
        $region74: #{transform_net_forward.7} parent=69 // pred_fallthru
          _
        %s298 = sand.u32 %s40, 1
        %s299 = sand.u32 %s40, 1
        %s300 = smul.addr %s299, 32
        %s301 = scalar_lea.vmem [#allocation2], %s300
        %p302 = pneg %p53
        %p303 = pneg %p50
        %p304 = pneg %p74
        %p305 = pneg %p71
        %p306 = pneg %p95
        %p307 = pneg %p92
        %p308 = pneg %p116
        %p309 = pneg %p113
        %p310 = pneg %p144
        %p311 = pneg %p141
        %s312 = sand.u32 %s131, 1
        %s313 = sand.u32 %s131, 1
        %s314 = smul.addr %s313, 128
        %s315 = scalar_lea.vmem [#allocation3], %s314
        %p316 = pneg %p172
        %p317 = pneg %p169
        %p318 = scmp.lt.s32.totalorder %s22, 7
        %s319 = scalar_select %p318, %s22, 7
        %p320 = scmp.lt.s32.totalorder %s23, 1
        %s321 = scalar_select %p320, %s23, 1
        %s322 = smul.addr %s321, 32
        %s323 = smul.addr %s319, 64
        %s324 = sadd.s32 %s322, %s323
        %s325 = smul.addr %s324, 8
        %s326 = scalar_lea.vmem %s5, %s325
        %p327 = pneg %p200
        %p328 = pneg %p197
        %p329 = scmp.lt.s32.totalorder %s22, 7
        %s330 = scalar_select %p329, %s22, 7
        %p331 = scmp.lt.s32.totalorder %s23, 1
        %s332 = scalar_select %p331, %s23, 1
        %s333 = smul.addr %s332, 32
        %s334 = smul.addr %s330, 64
        %s335 = sadd.s32 %s333, %s334
        %s336 = smul.addr %s335, 8
        %s337 = scalar_lea.vmem %s6, %s336
        %p338 = scmp.lt.s32.totalorder %s22, 7
        %s339 = scalar_select %p338, %s22, 7
        %p340 = scmp.lt.s32.totalorder %s23, 1
        %s341 = scalar_select %p340, %s23, 1
        %s342 = smul.addr %s341, 32
        %s343 = smul.addr %s339, 64
        %s344 = sadd.s32 %s342, %s343
        %s345 = smul.addr %s344, 8
        %s346 = scalar_lea.vmem %s5, %s345
        %p347 = scmp.lt.s32.totalorder %s22, 7
        %s348 = scalar_select %p347, %s22, 7
        %p349 = scmp.lt.s32.totalorder %s23, 1
        %s350 = scalar_select %p349, %s23, 1
        %s351 = smul.addr %s350, 32
        %s352 = smul.addr %s348, 64
        %s353 = sadd.s32 %s351, %s352
        %s354 = smul.addr %s353, 8
        %s355 = scalar_lea.vmem %s6, %s354
        %v357 = vld [vmem:[%s294] sm:$0xff]
        %v358 = vld [vmem:[%s294 + $0x8] sm:$0xff]
        %v359 = vld [vmem:[%s294 + $0x10] sm:$0xff]
        %v360 = vld [vmem:[%s294 + $0x18] sm:$0xff]
        %v361 = vpack.c.bf16 %v357, %v357
        %v362 = vpack.c.bf16 %v358, %v358
        %v363 = vpack.c.bf16 %v359, %v359
        %v364 = vpack.c.bf16 %v360, %v360
        %v365 = vld [vmem:[%s1] sm:$0xff]
        %v366 = vld [vmem:[%s1 + $0x8] sm:$0xff]
        %v367 = vld [vmem:[%s1 + $0x10] sm:$0xff]
        %v368 = vld [vmem:[%s1 + $0x18] sm:$0xff]
        %v369 = vpack.c.bf16 %v365, %v365
        %v370 = vpack.c.bf16 %v366, %v366
        %v371 = vpack.c.bf16 %v367, %v367
        %v372 = vpack.c.bf16 %v368, %v368
        %374 = vset.pattern.permute.xlu0 0
        %375 = vperm.xlu0 %374, %v369
        %v376 = vpop.permute.xlu0 %375
        %v379 = vunpack.c.l.s4 839922192
        %v380 = vunpack.c.0.s8 %v379
        %v381 = vperm.slane %v376, %v380
        %383 = vset.pattern.permute.xlu0 0
        %384 = vperm.xlu0 %383, %v370
        %v385 = vpop.permute.xlu0 %384
        %v388 = vunpack.c.l.s4 839922192
        %v389 = vunpack.c.0.s8 %v388
        %v390 = vperm.slane %v385, %v389
        %392 = vset.pattern.permute.xlu0 0
        %393 = vperm.xlu0 %392, %v371
        %v394 = vpop.permute.xlu0 %393
        %v397 = vunpack.c.l.s4 839922192
        %v398 = vunpack.c.0.s8 %v397
        %v399 = vperm.slane %v394, %v398
        %401 = vset.pattern.permute.xlu0 0
        %402 = vperm.xlu0 %401, %v372
        %v403 = vpop.permute.xlu0 %402
        %v406 = vunpack.c.l.s4 839922192
        %v407 = vunpack.c.0.s8 %v406
        %v408 = vperm.slane %v403, %v407
        %v409 = vunpack.c.l.bf16 %v361
        %v410 = vunpack.c.l.bf16 %v362
        %v411 = vunpack.c.l.bf16 %v363
        %v412 = vunpack.c.l.bf16 %v364
        %v413 = vunpack.c.l.bf16 %v381
        %v414 = vunpack.c.l.bf16 %v390
        %v415 = vunpack.c.l.bf16 %v399
        %v416 = vunpack.c.l.bf16 %v408
        %v417 = vmul.f32 %v409, %v413
        %v418 = vmul.f32 %v410, %v414
        %v419 = vmul.f32 %v411, %v415
        %v420 = vmul.f32 %v412, %v416
        %v421 = vpack.c.bf16 %v417, %v417
        %v422 = vpack.c.bf16 %v418, %v418
        %v423 = vpack.c.bf16 %v419, %v419
        %v424 = vpack.c.bf16 %v420, %v420
        %v425 = vld [vmem:[%s2] sm:$0xff]
        %v426 = vld [vmem:[%s2 + $0x8] sm:$0xff]
        %v427 = vld [vmem:[%s2 + $0x10] sm:$0xff]
        %v428 = vld [vmem:[%s2 + $0x18] sm:$0xff]
        %v429 = vpack.c.bf16 %v425, %v425
        %v430 = vpack.c.bf16 %v426, %v426
        %v431 = vpack.c.bf16 %v427, %v427
        %v432 = vpack.c.bf16 %v428, %v428
        %434 = vset.pattern.permute.xlu0 0
        %435 = vperm.xlu0 %434, %v429
        %v436 = vpop.permute.xlu0 %435
        %v439 = vunpack.c.l.s4 839922192
        %v440 = vunpack.c.0.s8 %v439
        %v441 = vperm.slane %v436, %v440
        %443 = vset.pattern.permute.xlu0 0
        %444 = vperm.xlu0 %443, %v430
        %v445 = vpop.permute.xlu0 %444
        %v448 = vunpack.c.l.s4 839922192
        %v449 = vunpack.c.0.s8 %v448
        %v450 = vperm.slane %v445, %v449
        %452 = vset.pattern.permute.xlu0 0
        %453 = vperm.xlu0 %452, %v431
        %v454 = vpop.permute.xlu0 %453
        %v457 = vunpack.c.l.s4 839922192
        %v458 = vunpack.c.0.s8 %v457
        %v459 = vperm.slane %v454, %v458
        %461 = vset.pattern.permute.xlu0 0
        %462 = vperm.xlu0 %461, %v432
        %v463 = vpop.permute.xlu0 %462
        %v466 = vunpack.c.l.s4 839922192
        %v467 = vunpack.c.0.s8 %v466
        %v468 = vperm.slane %v463, %v467
        %v469 = vunpack.c.l.bf16 %v421
        %v470 = vunpack.c.l.bf16 %v422
        %v471 = vunpack.c.l.bf16 %v423
        %v472 = vunpack.c.l.bf16 %v424
        %v473 = vunpack.c.l.bf16 %v441
        %v474 = vunpack.c.l.bf16 %v450
        %v475 = vunpack.c.l.bf16 %v459
        %v476 = vunpack.c.l.bf16 %v468
        %v477 = vadd.f32 %v469, %v473
        %v478 = vadd.f32 %v470, %v474
        %v479 = vadd.f32 %v471, %v475
        %v480 = vadd.f32 %v472, %v476
        %v481 = vpack.c.bf16 %v477, %v477
        %v482 = vpack.c.bf16 %v478, %v478
        %v483 = vpack.c.bf16 %v479, %v479
        %v484 = vpack.c.bf16 %v480, %v480
        %v485 = vunpack.c.l.bf16 %v481
        %v486 = vunpack.c.l.bf16 %v482
        %v487 = vunpack.c.l.bf16 %v483
        %v488 = vunpack.c.l.bf16 %v484
        %v489 = vmax.f32 %v485, 0.0
        %v490 = vmax.f32 %v486, 0.0
        %v491 = vmax.f32 %v487, 0.0
        %v492 = vmax.f32 %v488, 0.0
        %v493 = vpack.c.bf16 %v490, %v489
        %v494 = vpack.c.bf16 %v492, %v491
        %v495 = vld [vmem:[%s3] sm:$0xf]
        %v496 = vld [vmem:[%s3 + $0x4] sm:$0xf]
        %v497 = vld [vmem:[%s3 + $0x8] sm:$0xf]
        %v498 = vld [vmem:[%s3 + $0xc] sm:$0xf]
        %v499 = vld [vmem:[%s3 + $0x10] sm:$0xf]
        %v500 = vld [vmem:[%s3 + $0x14] sm:$0xf]
        %v501 = vld [vmem:[%s3 + $0x18] sm:$0xf]
        %v502 = vld [vmem:[%s3 + $0x1c] sm:$0xf]
        %v503 = vld [vmem:[%s3 + $0x20] sm:$0xf]
        %v504 = vld [vmem:[%s3 + $0x24] sm:$0xf]
        %v505 = vld [vmem:[%s3 + $0x28] sm:$0xf]
        %v506 = vld [vmem:[%s3 + $0x2c] sm:$0xf]
        %v507 = vld [vmem:[%s3 + $0x30] sm:$0xf]
        %v508 = vld [vmem:[%s3 + $0x34] sm:$0xf]
        %v509 = vld [vmem:[%s3 + $0x38] sm:$0xf]
        %v510 = vld [vmem:[%s3 + $0x3c] sm:$0xf]
        %v511 = vld [vmem:[%s3 + $0x40] sm:$0xf]
        %v512 = vld [vmem:[%s3 + $0x44] sm:$0xf]
        %v513 = vld [vmem:[%s3 + $0x48] sm:$0xf]
        %v514 = vld [vmem:[%s3 + $0x4c] sm:$0xf]
        %v515 = vld [vmem:[%s3 + $0x50] sm:$0xf]
        %v516 = vld [vmem:[%s3 + $0x54] sm:$0xf]
        %v517 = vld [vmem:[%s3 + $0x58] sm:$0xf]
        %v518 = vld [vmem:[%s3 + $0x5c] sm:$0xf]
        %v519 = vld [vmem:[%s3 + $0x60] sm:$0xf]
        %v520 = vld [vmem:[%s3 + $0x64] sm:$0xf]
        %v521 = vld [vmem:[%s3 + $0x68] sm:$0xf]
        %v522 = vld [vmem:[%s3 + $0x6c] sm:$0xf]
        %v523 = vld [vmem:[%s3 + $0x70] sm:$0xf]
        %v524 = vld [vmem:[%s3 + $0x74] sm:$0xf]
        %v525 = vld [vmem:[%s3 + $0x78] sm:$0xf]
        %v526 = vld [vmem:[%s3 + $0x7c] sm:$0xf]
        %v559 = vunpack.c.l.b16 %v495
        %v560 = vunpack.c.l.b16 %v496
        %v561 = vunpack.c.l.b16 %v497
        %v562 = vunpack.c.l.b16 %v498
        %v563 = vunpack.c.l.b16 %v499
        %v564 = vunpack.c.l.b16 %v500
        %v565 = vunpack.c.l.b16 %v501
        %v566 = vunpack.c.l.b16 %v502
        %v567 = vunpack.c.l.b16 %v503
        %v568 = vunpack.c.l.b16 %v504
        %v569 = vunpack.c.l.b16 %v505
        %v570 = vunpack.c.l.b16 %v506
        %v571 = vunpack.c.l.b16 %v507
        %v572 = vunpack.c.l.b16 %v508
        %v573 = vunpack.c.l.b16 %v509
        %v574 = vunpack.c.l.b16 %v510
        %v575 = vunpack.c.l.b16 %v511
        %v576 = vunpack.c.l.b16 %v512
        %v577 = vunpack.c.l.b16 %v513
        %v578 = vunpack.c.l.b16 %v514
        %v579 = vunpack.c.l.b16 %v515
        %v580 = vunpack.c.l.b16 %v516
        %v581 = vunpack.c.l.b16 %v517
        %v582 = vunpack.c.l.b16 %v518
        %v583 = vunpack.c.l.b16 %v519
        %v584 = vunpack.c.l.b16 %v520
        %v585 = vunpack.c.l.b16 %v521
        %v586 = vunpack.c.l.b16 %v522
        %v587 = vunpack.c.l.b16 %v523
        %v588 = vunpack.c.l.b16 %v524
        %v589 = vunpack.c.l.b16 %v525
        %v590 = vunpack.c.l.b16 %v526
        %v591 = vpack.c.b16 %v560, %v559
        %v592 = vpack.c.b16 %v562, %v561
        %v593 = vpack.c.b16 %v564, %v563
        %v594 = vpack.c.b16 %v566, %v565
        %v595 = vpack.c.b16 %v568, %v567
        %v596 = vpack.c.b16 %v570, %v569
        %v597 = vpack.c.b16 %v572, %v571
        %v598 = vpack.c.b16 %v574, %v573
        %v599 = vpack.c.b16 %v576, %v575
        %v600 = vpack.c.b16 %v578, %v577
        %v601 = vpack.c.b16 %v580, %v579
        %v602 = vpack.c.b16 %v582, %v581
        %v603 = vpack.c.b16 %v584, %v583
        %v604 = vpack.c.b16 %v586, %v585
        %v605 = vpack.c.b16 %v588, %v587
        %v606 = vpack.c.b16 %v590, %v589
        %vm607 = vcmask 261120
        %v609 = vsel %vm607, %v591, 0
        %v612 = vsel %vm607, %v592, 0
        %v615 = vsel %vm607, %v593, 0
        %v618 = vsel %vm607, %v594, 0
        %v621 = vsel %vm607, %v595, 0
        %v624 = vsel %vm607, %v596, 0
        %v627 = vsel %vm607, %v597, 0
        %v630 = vsel %vm607, %v598, 0
        %v633 = vsel %vm607, %v599, 0
        %v636 = vsel %vm607, %v600, 0
        %v639 = vsel %vm607, %v601, 0
        %v642 = vsel %vm607, %v602, 0
        %v645 = vsel %vm607, %v603, 0
        %v648 = vsel %vm607, %v604, 0
        %v651 = vsel %vm607, %v605, 0
        %v654 = vsel %vm607, %v606, 0
        %656 = vmatpush.bf16.msra.mxu0 0
        %657 = vmatpush.bf16.msra.mxu0 0
        %658 = vmatpush.bf16.msra.mxu0 0
        %659 = vmatpush.bf16.msra.mxu0 0
        %660 = vmatpush.bf16.msra.mxu0 0
        %661 = vmatpush.bf16.msra.mxu0 0
        %662 = vmatpush.bf16.msra.mxu0 %v494
        %663 = vmatpush.bf16.msra.mxu0 %v493
        %664 = vmatmul.bf16.gmra.mxu0 %v609
        %v665 = vpop.f32.mrf.mxu0
        %v666 = vadd.f32 0.0, %v665
        %v667 = vpop.f32.mrf.mxu0
        %v668 = vadd.f32 0.0, %v667
        %669 = vmatmul.bf16.gmra.mxu0 %v612
        %v670 = vpop.f32.mrf.mxu0
        %v671 = vadd.f32 0.0, %v670
        %v672 = vpop.f32.mrf.mxu0
        %v673 = vadd.f32 0.0, %v672
        %674 = vmatmul.bf16.gmra.mxu0 %v615
        %v675 = vpop.f32.mrf.mxu0
        %v676 = vadd.f32 0.0, %v675
        %v677 = vpop.f32.mrf.mxu0
        %v678 = vadd.f32 0.0, %v677
        %679 = vmatmul.bf16.gmra.mxu0 %v618
        %v680 = vpop.f32.mrf.mxu0
        %v681 = vadd.f32 0.0, %v680
        %v682 = vpop.f32.mrf.mxu0
        %v683 = vadd.f32 0.0, %v682
        %684 = vmatmul.bf16.gmra.mxu0 %v621
        %v685 = vpop.f32.mrf.mxu0
        %v686 = vadd.f32 0.0, %v685
        %v687 = vpop.f32.mrf.mxu0
        %v688 = vadd.f32 0.0, %v687
        %689 = vmatmul.bf16.gmra.mxu0 %v624
        %v690 = vpop.f32.mrf.mxu0
        %v691 = vadd.f32 0.0, %v690
        %v692 = vpop.f32.mrf.mxu0
        %v693 = vadd.f32 0.0, %v692
        %694 = vmatmul.bf16.gmra.mxu0 %v627
        %v695 = vpop.f32.mrf.mxu0
        %v696 = vadd.f32 0.0, %v695
        %v697 = vpop.f32.mrf.mxu0
        %v698 = vadd.f32 0.0, %v697
        %699 = vmatmul.bf16.gmra.mxu0 %v630
        %v700 = vpop.f32.mrf.mxu0
        %v701 = vadd.f32 0.0, %v700
        %v702 = vpop.f32.mrf.mxu0
        %v703 = vadd.f32 0.0, %v702
        %704 = vmatmul.bf16.gmra.mxu0 %v633
        %v705 = vpop.f32.mrf.mxu0
        %v706 = vadd.f32 0.0, %v705
        %v707 = vpop.f32.mrf.mxu0
        %v708 = vadd.f32 0.0, %v707
        %709 = vmatmul.bf16.gmra.mxu0 %v636
        %v710 = vpop.f32.mrf.mxu0
        %v711 = vadd.f32 0.0, %v710
        %v712 = vpop.f32.mrf.mxu0
        %v713 = vadd.f32 0.0, %v712
        %714 = vmatmul.bf16.gmra.mxu0 %v639
        %v715 = vpop.f32.mrf.mxu0
        %v716 = vadd.f32 0.0, %v715
        %v717 = vpop.f32.mrf.mxu0
        %v718 = vadd.f32 0.0, %v717
        %719 = vmatmul.bf16.gmra.mxu0 %v642
        %v720 = vpop.f32.mrf.mxu0
        %v721 = vadd.f32 0.0, %v720
        %v722 = vpop.f32.mrf.mxu0
        %v723 = vadd.f32 0.0, %v722
        %724 = vmatmul.bf16.gmra.mxu0 %v645
        %v725 = vpop.f32.mrf.mxu0
        %v726 = vadd.f32 0.0, %v725
        %v727 = vpop.f32.mrf.mxu0
        %v728 = vadd.f32 0.0, %v727
        %729 = vmatmul.bf16.gmra.mxu0 %v648
        %v730 = vpop.f32.mrf.mxu0
        %v731 = vadd.f32 0.0, %v730
        %v732 = vpop.f32.mrf.mxu0
        %v733 = vadd.f32 0.0, %v732
        %734 = vmatmul.bf16.gmra.mxu0 %v651
        %v735 = vpop.f32.mrf.mxu0
        %v736 = vadd.f32 0.0, %v735
        %v737 = vpop.f32.mrf.mxu0
        %v738 = vadd.f32 0.0, %v737
        %739 = vmatmul.bf16.gmra.mxu0 %v654
        %v740 = vpop.f32.mrf.mxu0
        %v741 = vadd.f32 0.0, %v740
        %v742 = vpop.f32.mrf.mxu0
        %v743 = vadd.f32 0.0, %v742
        %744 = vdwg.mxu0
        %v745 = vpack.c.bf16 %v666, %v666
        %v746 = vpack.c.bf16 %v668, %v668
        %v747 = vpack.c.bf16 %v671, %v671
        %v748 = vpack.c.bf16 %v673, %v673
        %v749 = vpack.c.bf16 %v676, %v676
        %v750 = vpack.c.bf16 %v678, %v678
        %v751 = vpack.c.bf16 %v681, %v681
        %v752 = vpack.c.bf16 %v683, %v683
        %v753 = vpack.c.bf16 %v686, %v686
        %v754 = vpack.c.bf16 %v688, %v688
        %v755 = vpack.c.bf16 %v691, %v691
        %v756 = vpack.c.bf16 %v693, %v693
        %v757 = vpack.c.bf16 %v696, %v696
        %v758 = vpack.c.bf16 %v698, %v698
        %v759 = vpack.c.bf16 %v701, %v701
        %v760 = vpack.c.bf16 %v703, %v703
        %v761 = vpack.c.bf16 %v706, %v706
        %v762 = vpack.c.bf16 %v708, %v708
        %v763 = vpack.c.bf16 %v711, %v711
        %v764 = vpack.c.bf16 %v713, %v713
        %v765 = vpack.c.bf16 %v716, %v716
        %v766 = vpack.c.bf16 %v718, %v718
        %v767 = vpack.c.bf16 %v721, %v721
        %v768 = vpack.c.bf16 %v723, %v723
        %v769 = vpack.c.bf16 %v726, %v726
        %v770 = vpack.c.bf16 %v728, %v728
        %v771 = vpack.c.bf16 %v731, %v731
        %v772 = vpack.c.bf16 %v733, %v733
        %v773 = vpack.c.bf16 %v736, %v736
        %v774 = vpack.c.bf16 %v738, %v738
        %v775 = vpack.c.bf16 %v741, %v741
        %v776 = vpack.c.bf16 %v743, %v743
        %777 = vst [vmem:[%s315] sm:$0xf] %v745
        %778 = vst [vmem:[%s315 + $0x4] sm:$0xf] %v746
        %779 = vst [vmem:[%s315 + $0x8] sm:$0xf] %v747
        %780 = vst [vmem:[%s315 + $0xc] sm:$0xf] %v748
        %781 = vst [vmem:[%s315 + $0x10] sm:$0xf] %v749
        %782 = vst [vmem:[%s315 + $0x14] sm:$0xf] %v750
        %783 = vst [vmem:[%s315 + $0x18] sm:$0xf] %v751
        %784 = vst [vmem:[%s315 + $0x1c] sm:$0xf] %v752
        %785 = vst [vmem:[%s315 + $0x20] sm:$0xf] %v753
        %786 = vst [vmem:[%s315 + $0x24] sm:$0xf] %v754
        %787 = vst [vmem:[%s315 + $0x28] sm:$0xf] %v755
        %788 = vst [vmem:[%s315 + $0x2c] sm:$0xf] %v756
        %789 = vst [vmem:[%s315 + $0x30] sm:$0xf] %v757
        %790 = vst [vmem:[%s315 + $0x34] sm:$0xf] %v758
        %791 = vst [vmem:[%s315 + $0x38] sm:$0xf] %v759
        %792 = vst [vmem:[%s315 + $0x3c] sm:$0xf] %v760
        %793 = vst [vmem:[%s315 + $0x40] sm:$0xf] %v761
        %794 = vst [vmem:[%s315 + $0x44] sm:$0xf] %v762
        %795 = vst [vmem:[%s315 + $0x48] sm:$0xf] %v763
        %796 = vst [vmem:[%s315 + $0x4c] sm:$0xf] %v764
        %797 = vst [vmem:[%s315 + $0x50] sm:$0xf] %v765
        %798 = vst [vmem:[%s315 + $0x54] sm:$0xf] %v766
        %799 = vst [vmem:[%s315 + $0x58] sm:$0xf] %v767
        %800 = vst [vmem:[%s315 + $0x5c] sm:$0xf] %v768
        %801 = vst [vmem:[%s315 + $0x60] sm:$0xf] %v769
        %802 = vst [vmem:[%s315 + $0x64] sm:$0xf] %v770
        %803 = vst [vmem:[%s315 + $0x68] sm:$0xf] %v771
        %804 = vst [vmem:[%s315 + $0x6c] sm:$0xf] %v772
        %805 = vst [vmem:[%s315 + $0x70] sm:$0xf] %v773
        %806 = vst [vmem:[%s315 + $0x74] sm:$0xf] %v774
        %807 = vst [vmem:[%s315 + $0x78] sm:$0xf] %v775
        %808 = vst [vmem:[%s315 + $0x7c] sm:$0xf] %v776
        %809 = vadd.xlane.f32.xlu0 %v666
        %v810 = vpop.xlane.xlu0 %809
        %811 = vadd.xlane.f32.xlu0 %v668
        %v812 = vpop.xlane.xlu0 %811
        %813 = vadd.xlane.f32.xlu0 %v671
        %v814 = vpop.xlane.xlu0 %813
        %815 = vadd.xlane.f32.xlu0 %v673
        %v816 = vpop.xlane.xlu0 %815
        %817 = vadd.xlane.f32.xlu0 %v676
        %v818 = vpop.xlane.xlu0 %817
        %819 = vadd.xlane.f32.xlu0 %v678
        %v820 = vpop.xlane.xlu0 %819
        %821 = vadd.xlane.f32.xlu0 %v681
        %v822 = vpop.xlane.xlu0 %821
        %823 = vadd.xlane.f32.xlu0 %v683
        %v824 = vpop.xlane.xlu0 %823
        %825 = vadd.xlane.f32.xlu0 %v686
        %v826 = vpop.xlane.xlu0 %825
        %827 = vadd.xlane.f32.xlu0 %v688
        %v828 = vpop.xlane.xlu0 %827
        %829 = vadd.xlane.f32.xlu0 %v691
        %v830 = vpop.xlane.xlu0 %829
        %831 = vadd.xlane.f32.xlu0 %v693
        %v832 = vpop.xlane.xlu0 %831
        %833 = vadd.xlane.f32.xlu0 %v696
        %v834 = vpop.xlane.xlu0 %833
        %835 = vadd.xlane.f32.xlu0 %v698
        %v836 = vpop.xlane.xlu0 %835
        %837 = vadd.xlane.f32.xlu0 %v701
        %v838 = vpop.xlane.xlu0 %837
        %839 = vadd.xlane.f32.xlu0 %v703
        %v840 = vpop.xlane.xlu0 %839
        %841 = vadd.xlane.f32.xlu0 %v706
        %v842 = vpop.xlane.xlu0 %841
        %843 = vadd.xlane.f32.xlu0 %v708
        %v844 = vpop.xlane.xlu0 %843
        %845 = vadd.xlane.f32.xlu0 %v711
        %v846 = vpop.xlane.xlu0 %845
        %847 = vadd.xlane.f32.xlu0 %v713
        %v848 = vpop.xlane.xlu0 %847
        %849 = vadd.xlane.f32.xlu0 %v716
        %v850 = vpop.xlane.xlu0 %849
        %851 = vadd.xlane.f32.xlu0 %v718
        %v852 = vpop.xlane.xlu0 %851
        %853 = vadd.xlane.f32.xlu0 %v721
        %v854 = vpop.xlane.xlu0 %853
        %855 = vadd.xlane.f32.xlu0 %v723
        %v856 = vpop.xlane.xlu0 %855
        %857 = vadd.xlane.f32.xlu0 %v726
        %v858 = vpop.xlane.xlu0 %857
        %859 = vadd.xlane.f32.xlu0 %v728
        %v860 = vpop.xlane.xlu0 %859
        %861 = vadd.xlane.f32.xlu0 %v731
        %v862 = vpop.xlane.xlu0 %861
        %863 = vadd.xlane.f32.xlu0 %v733
        %v864 = vpop.xlane.xlu0 %863
        %865 = vadd.xlane.f32.xlu0 %v736
        %v866 = vpop.xlane.xlu0 %865
        %867 = vadd.xlane.f32.xlu0 %v738
        %v868 = vpop.xlane.xlu0 %867
        %869 = vadd.xlane.f32.xlu0 %v741
        %v870 = vpop.xlane.xlu0 %869
        %871 = vadd.xlane.f32.xlu0 %v743
        %v872 = vpop.xlane.xlu0 %871
        %vm873 = vcmask 7168
        %874 = vst.msk [vmem:[%s346] sm:$0xff] %vm873, %v810
        %875 = vst.msk [vmem:[%s346 + $0x8] sm:$0xff] %vm873, %v812
        %876 = vst.msk [vmem:[%s346 + $0x10] sm:$0xff] %vm873, %v814
        %877 = vst.msk [vmem:[%s346 + $0x18] sm:$0xff] %vm873, %v816
        %878 = vst.msk [vmem:[%s346 + $0x20] sm:$0xff] %vm873, %v818
        %879 = vst.msk [vmem:[%s346 + $0x28] sm:$0xff] %vm873, %v820
        %880 = vst.msk [vmem:[%s346 + $0x30] sm:$0xff] %vm873, %v822
        %881 = vst.msk [vmem:[%s346 + $0x38] sm:$0xff] %vm873, %v824
        %882 = vst.msk [vmem:[%s346 + $0x40] sm:$0xff] %vm873, %v826
        %883 = vst.msk [vmem:[%s346 + $0x48] sm:$0xff] %vm873, %v828
        %884 = vst.msk [vmem:[%s346 + $0x50] sm:$0xff] %vm873, %v830
        %885 = vst.msk [vmem:[%s346 + $0x58] sm:$0xff] %vm873, %v832
        %886 = vst.msk [vmem:[%s346 + $0x60] sm:$0xff] %vm873, %v834
        %887 = vst.msk [vmem:[%s346 + $0x68] sm:$0xff] %vm873, %v836
        %888 = vst.msk [vmem:[%s346 + $0x70] sm:$0xff] %vm873, %v838
        %889 = vst.msk [vmem:[%s346 + $0x78] sm:$0xff] %vm873, %v840
        %890 = vst.msk [vmem:[%s346 + $0x80] sm:$0xff] %vm873, %v842
        %891 = vst.msk [vmem:[%s346 + $0x88] sm:$0xff] %vm873, %v844
        %892 = vst.msk [vmem:[%s346 + $0x90] sm:$0xff] %vm873, %v846
        %893 = vst.msk [vmem:[%s346 + $0x98] sm:$0xff] %vm873, %v848
        %894 = vst.msk [vmem:[%s346 + $0xa0] sm:$0xff] %vm873, %v850
        %895 = vst.msk [vmem:[%s346 + $0xa8] sm:$0xff] %vm873, %v852
        %896 = vst.msk [vmem:[%s346 + $0xb0] sm:$0xff] %vm873, %v854
        %897 = vst.msk [vmem:[%s346 + $0xb8] sm:$0xff] %vm873, %v856
        %898 = vst.msk [vmem:[%s346 + $0xc0] sm:$0xff] %vm873, %v858
        %899 = vst.msk [vmem:[%s346 + $0xc8] sm:$0xff] %vm873, %v860
        %900 = vst.msk [vmem:[%s346 + $0xd0] sm:$0xff] %vm873, %v862
        %901 = vst.msk [vmem:[%s346 + $0xd8] sm:$0xff] %vm873, %v864
        %902 = vst.msk [vmem:[%s346 + $0xe0] sm:$0xff] %vm873, %v866
        %903 = vst.msk [vmem:[%s346 + $0xe8] sm:$0xff] %vm873, %v868
        %904 = vst.msk [vmem:[%s346 + $0xf0] sm:$0xff] %vm873, %v870
        %905 = vst.msk [vmem:[%s346 + $0xf8] sm:$0xff] %vm873, %v872
        %v906 = vmul.f32 %v666, %v666
        %v907 = vmul.f32 %v668, %v668
        %v908 = vmul.f32 %v671, %v671
        %v909 = vmul.f32 %v673, %v673
        %v910 = vmul.f32 %v676, %v676
        %v911 = vmul.f32 %v678, %v678
        %v912 = vmul.f32 %v681, %v681
        %v913 = vmul.f32 %v683, %v683
        %v914 = vmul.f32 %v686, %v686
        %v915 = vmul.f32 %v688, %v688
        %v916 = vmul.f32 %v691, %v691
        %v917 = vmul.f32 %v693, %v693
        %v918 = vmul.f32 %v696, %v696
        %v919 = vmul.f32 %v698, %v698
        %v920 = vmul.f32 %v701, %v701
        %v921 = vmul.f32 %v703, %v703
        %v922 = vmul.f32 %v706, %v706
        %v923 = vmul.f32 %v708, %v708
        %v924 = vmul.f32 %v711, %v711
        %v925 = vmul.f32 %v713, %v713
        %v926 = vmul.f32 %v716, %v716
        %v927 = vmul.f32 %v718, %v718
        %v928 = vmul.f32 %v721, %v721
        %v929 = vmul.f32 %v723, %v723
        %v930 = vmul.f32 %v726, %v726
        %v931 = vmul.f32 %v728, %v728
        %v932 = vmul.f32 %v731, %v731
        %v933 = vmul.f32 %v733, %v733
        %v934 = vmul.f32 %v736, %v736
        %v935 = vmul.f32 %v738, %v738
        %v936 = vmul.f32 %v741, %v741
        %v937 = vmul.f32 %v743, %v743
        %938 = vadd.xlane.f32.xlu0 %v906
        %v939 = vpop.xlane.xlu0 %938
        %940 = vadd.xlane.f32.xlu0 %v907
        %v941 = vpop.xlane.xlu0 %940
        %942 = vadd.xlane.f32.xlu0 %v908
        %v943 = vpop.xlane.xlu0 %942
        %944 = vadd.xlane.f32.xlu0 %v909
        %v945 = vpop.xlane.xlu0 %944
        %946 = vadd.xlane.f32.xlu0 %v910
        %v947 = vpop.xlane.xlu0 %946
        %948 = vadd.xlane.f32.xlu0 %v911
        %v949 = vpop.xlane.xlu0 %948
        %950 = vadd.xlane.f32.xlu0 %v912
        %v951 = vpop.xlane.xlu0 %950
        %952 = vadd.xlane.f32.xlu0 %v913
        %v953 = vpop.xlane.xlu0 %952
        %954 = vadd.xlane.f32.xlu0 %v914
        %v955 = vpop.xlane.xlu0 %954
        %956 = vadd.xlane.f32.xlu0 %v915
        %v957 = vpop.xlane.xlu0 %956
        %958 = vadd.xlane.f32.xlu0 %v916
        %v959 = vpop.xlane.xlu0 %958
        %960 = vadd.xlane.f32.xlu0 %v917
        %v961 = vpop.xlane.xlu0 %960
        %962 = vadd.xlane.f32.xlu0 %v918
        %v963 = vpop.xlane.xlu0 %962
        %964 = vadd.xlane.f32.xlu0 %v919
        %v965 = vpop.xlane.xlu0 %964
        %966 = vadd.xlane.f32.xlu0 %v920
        %v967 = vpop.xlane.xlu0 %966
        %968 = vadd.xlane.f32.xlu0 %v921
        %v969 = vpop.xlane.xlu0 %968
        %970 = vadd.xlane.f32.xlu0 %v922
        %v971 = vpop.xlane.xlu0 %970
        %972 = vadd.xlane.f32.xlu0 %v923
        %v973 = vpop.xlane.xlu0 %972
        %974 = vadd.xlane.f32.xlu0 %v924
        %v975 = vpop.xlane.xlu0 %974
        %976 = vadd.xlane.f32.xlu0 %v925
        %v977 = vpop.xlane.xlu0 %976
        %978 = vadd.xlane.f32.xlu0 %v926
        %v979 = vpop.xlane.xlu0 %978
        %980 = vadd.xlane.f32.xlu0 %v927
        %v981 = vpop.xlane.xlu0 %980
        %982 = vadd.xlane.f32.xlu0 %v928
        %v983 = vpop.xlane.xlu0 %982
        %984 = vadd.xlane.f32.xlu0 %v929
        %v985 = vpop.xlane.xlu0 %984
        %986 = vadd.xlane.f32.xlu0 %v930
        %v987 = vpop.xlane.xlu0 %986
        %988 = vadd.xlane.f32.xlu0 %v931
        %v989 = vpop.xlane.xlu0 %988
        %990 = vadd.xlane.f32.xlu0 %v932
        %v991 = vpop.xlane.xlu0 %990
        %992 = vadd.xlane.f32.xlu0 %v933
        %v993 = vpop.xlane.xlu0 %992
        %994 = vadd.xlane.f32.xlu0 %v934
        %v995 = vpop.xlane.xlu0 %994
        %996 = vadd.xlane.f32.xlu0 %v935
        %v997 = vpop.xlane.xlu0 %996
        %998 = vadd.xlane.f32.xlu0 %v936
        %v999 = vpop.xlane.xlu0 %998
        %1000 = vadd.xlane.f32.xlu0 %v937
        %v1001 = vpop.xlane.xlu0 %1000
        %1002 = vst.msk [vmem:[%s355] sm:$0xff] %vm873, %v939
        %1003 = vst.msk [vmem:[%s355 + $0x8] sm:$0xff] %vm873, %v941
        %1004 = vst.msk [vmem:[%s355 + $0x10] sm:$0xff] %vm873, %v943
        %1005 = vst.msk [vmem:[%s355 + $0x18] sm:$0xff] %vm873, %v945
        %1006 = vst.msk [vmem:[%s355 + $0x20] sm:$0xff] %vm873, %v947
        %1007 = vst.msk [vmem:[%s355 + $0x28] sm:$0xff] %vm873, %v949
        %1008 = vst.msk [vmem:[%s355 + $0x30] sm:$0xff] %vm873, %v951
        %1009 = vst.msk [vmem:[%s355 + $0x38] sm:$0xff] %vm873, %v953
        %1010 = vst.msk [vmem:[%s355 + $0x40] sm:$0xff] %vm873, %v955
        %1011 = vst.msk [vmem:[%s355 + $0x48] sm:$0xff] %vm873, %v957
        %1012 = vst.msk [vmem:[%s355 + $0x50] sm:$0xff] %vm873, %v959
        %1013 = vst.msk [vmem:[%s355 + $0x58] sm:$0xff] %vm873, %v961
        %1014 = vst.msk [vmem:[%s355 + $0x60] sm:$0xff] %vm873, %v963
        %1015 = vst.msk [vmem:[%s355 + $0x68] sm:$0xff] %vm873, %v965
        %1016 = vst.msk [vmem:[%s355 + $0x70] sm:$0xff] %vm873, %v967
        %1017 = vst.msk [vmem:[%s355 + $0x78] sm:$0xff] %vm873, %v969
        %1018 = vst.msk [vmem:[%s355 + $0x80] sm:$0xff] %vm873, %v971
        %1019 = vst.msk [vmem:[%s355 + $0x88] sm:$0xff] %vm873, %v973
        %1020 = vst.msk [vmem:[%s355 + $0x90] sm:$0xff] %vm873, %v975
        %1021 = vst.msk [vmem:[%s355 + $0x98] sm:$0xff] %vm873, %v977
        %1022 = vst.msk [vmem:[%s355 + $0xa0] sm:$0xff] %vm873, %v979
        %1023 = vst.msk [vmem:[%s355 + $0xa8] sm:$0xff] %vm873, %v981
        %1024 = vst.msk [vmem:[%s355 + $0xb0] sm:$0xff] %vm873, %v983
        %1025 = vst.msk [vmem:[%s355 + $0xb8] sm:$0xff] %vm873, %v985
        %1026 = vst.msk [vmem:[%s355 + $0xc0] sm:$0xff] %vm873, %v987
        %1027 = vst.msk [vmem:[%s355 + $0xc8] sm:$0xff] %vm873, %v989
        %1028 = vst.msk [vmem:[%s355 + $0xd0] sm:$0xff] %vm873, %v991
        %1029 = vst.msk [vmem:[%s355 + $0xd8] sm:$0xff] %vm873, %v993
        %1030 = vst.msk [vmem:[%s355 + $0xe0] sm:$0xff] %vm873, %v995
        %1031 = vst.msk [vmem:[%s355 + $0xe8] sm:$0xff] %vm873, %v997
        %1032 = vst.msk [vmem:[%s355 + $0xf0] sm:$0xff] %vm873, %v999
        %1033 = vst.msk [vmem:[%s355 + $0xf8] sm:$0xff] %vm873, %v1001
        %s1034 = sand.u32 %s131, 1
        %s1035 = sand.u32 %s131, 1
        %s1036 = smul.addr %s1035, 128
        %s1037 = scalar_lea.vmem [#allocation3], %s1036
        %p1038 = scmp.lt.s32.totalorder %s22, 7
        %s1039 = scalar_select %p1038, %s22, 7
        %p1040 = scmp.lt.s32.totalorder %s23, 1
        %s1041 = scalar_select %p1040, %s23, 1
        %s1042 = smul.addr %s1041, 32
        %s1043 = smul.addr %s1039, 64
        %s1044 = sadd.s32 %s1042, %s1043
        %s1045 = smul.addr %s1044, 8
        %s1046 = scalar_lea.vmem %s5, %s1045
        %p1047 = scmp.lt.s32.totalorder %s22, 7
        %s1048 = scalar_select %p1047, %s22, 7
        %p1049 = scmp.lt.s32.totalorder %s23, 1
        %s1050 = scalar_select %p1049, %s23, 1
        %s1051 = smul.addr %s1050, 32
        %s1052 = smul.addr %s1048, 64
        %s1053 = sadd.s32 %s1051, %s1052
        %s1054 = smul.addr %s1053, 8
        %s1055 = scalar_lea.vmem %s6, %s1054
        // Predicated region
        $region75: #{transform_net_forward.7} parent=69 // pred_check
          %p1056 = pneg %p141
        $region76: #{transform_net_forward.7} parent=69 // pred_check_branch
          %1058 = sbr.rel (%p1056) target = $region78
        $region77: #{transform_net_forward.7} parent=69 // pred_region
          %s1059 = smul.addr %s22, 64
          %s1060 = sadd.s32 %s23, %s1059
          %s1061 = smul.addr %s1060, 4
          %s1062 = scalar_lea.vmem %s4, %s1061
          // Predicated region
          $region79: #{transform_net_forward.7} parent=77 // pred_check
            _
          $region80: #{transform_net_forward.7} parent=77 // pred_check_branch
            %1064 = sbr.rel (0) target = $region82
          $region81: #{transform_net_forward.7} parent=77 // pred_region
            // Predicated region
            $region83: #{transform_net_forward.7} parent=81 // pred_check
              _
            $region84: #{transform_net_forward.7} parent=81 // pred_check_branch
              %1066 = sbr.rel target = $region86
            $region85: #{transform_net_forward.7} parent=81 // pred_region
              // Predicated region
              $region98: #{transform_net_forward.7} parent=85 // pred_check
                _
              $region99: #{transform_net_forward.7} parent=85 // pred_check_branch
                %1144 = sbr.rel (0) target = $region101
              $region100: #{transform_net_forward.7} parent=85 // pred_region
                loop: start=0, step=1, limit=1
                $region102: #{transform_net_forward.7} parent=100 // loop_pre_header
                  _
                $region103: #{transform_net_forward.7} parent=100 // loop_header
                  %s1146 = sphi 0, %s1150
                  %p1147 = scmp.ge.s32.totalorder %s1146, 1
                  %s1151 = sphi %s1037, %s1037
                  %s1152 = sphi %s1062, %s1062
                $region104: #{transform_net_forward.7} parent=100 // loop_header_branch
                  %1149 = sbr.rel (%p1147) target = $region108
                $region105: #{transform_net_forward.7} parent=100 // loop_body
                  _
                $region106: #{transform_net_forward.7} parent=100 // loop_footer
                  %s1150 = sadd.s32 1, %s1146
                $region107: #{transform_net_forward.7} parent=100 // loop_footer_branch
                  %1145 = sbr.rel target = $region103
                $region108: #{transform_net_forward.7} parent=100 // loop_exit
                  _
                %s1154 = ssub.s32 16, 1
                loop: start=0, step=1, limit=1
                $region109: #{transform_net_forward.7} parent=100 // loop_pre_header
                  _
                $region110: #{transform_net_forward.7} parent=100 // loop_header
                  %s1156 = sphi 0, %s1160
                  %p1157 = scmp.ge.s32.totalorder %s1156, 1
                  %s1161 = sphi %s1037, %s1037
                  %s1162 = sphi %s1062, %s1062
                $region111: #{transform_net_forward.7} parent=100 // loop_header_branch
                  %1159 = sbr.rel (%p1157) target = $region115
                $region112: #{transform_net_forward.7} parent=100 // loop_body
                  %v1163 = vld [vmem:[%s1161] sm:%s1154]
                  %1164 = vst [vmem:[%s1162] sm:%s1154] %v1163
                  %v1165 = vld [vmem:[%s1161 + $0x4] sm:%s1154]
                  %1166 = vst [vmem:[%s1162 + $0x8] sm:%s1154] %v1165
                  %v1167 = vld [vmem:[%s1161 + $0x8] sm:%s1154]
                  %1168 = vst [vmem:[%s1162 + $0x10] sm:%s1154] %v1167
                  %v1169 = vld [vmem:[%s1161 + $0xc] sm:%s1154]
                  %1170 = vst [vmem:[%s1162 + $0x18] sm:%s1154] %v1169
                  %v1171 = vld [vmem:[%s1161 + $0x10] sm:%s1154]
                  %1172 = vst [vmem:[%s1162 + $0x20] sm:%s1154] %v1171
                  %v1173 = vld [vmem:[%s1161 + $0x14] sm:%s1154]
                  %1174 = vst [vmem:[%s1162 + $0x28] sm:%s1154] %v1173
                  %v1175 = vld [vmem:[%s1161 + $0x18] sm:%s1154]
                  %1176 = vst [vmem:[%s1162 + $0x30] sm:%s1154] %v1175
                  %v1177 = vld [vmem:[%s1161 + $0x1c] sm:%s1154]
                  %1178 = vst [vmem:[%s1162 + $0x38] sm:%s1154] %v1177
                  %v1179 = vld [vmem:[%s1161 + $0x20] sm:%s1154]
                  %1180 = vst [vmem:[%s1162 + $0x40] sm:%s1154] %v1179
                  %v1181 = vld [vmem:[%s1161 + $0x24] sm:%s1154]
                  %1182 = vst [vmem:[%s1162 + $0x48] sm:%s1154] %v1181
                  %v1183 = vld [vmem:[%s1161 + $0x28] sm:%s1154]
                  %1184 = vst [vmem:[%s1162 + $0x50] sm:%s1154] %v1183
                  %v1185 = vld [vmem:[%s1161 + $0x2c] sm:%s1154]
                  %1186 = vst [vmem:[%s1162 + $0x58] sm:%s1154] %v1185
                  %v1187 = vld [vmem:[%s1161 + $0x30] sm:%s1154]
                  %1188 = vst [vmem:[%s1162 + $0x60] sm:%s1154] %v1187
                  %v1189 = vld [vmem:[%s1161 + $0x34] sm:%s1154]
                  %1190 = vst [vmem:[%s1162 + $0x68] sm:%s1154] %v1189
                  %v1191 = vld [vmem:[%s1161 + $0x38] sm:%s1154]
                  %1192 = vst [vmem:[%s1162 + $0x70] sm:%s1154] %v1191
                  %v1193 = vld [vmem:[%s1161 + $0x3c] sm:%s1154]
                  %1194 = vst [vmem:[%s1162 + $0x78] sm:%s1154] %v1193
                  %v1195 = vld [vmem:[%s1161 + $0x40] sm:%s1154]
                  %1196 = vst [vmem:[%s1162 + $0x80] sm:%s1154] %v1195
                  %v1197 = vld [vmem:[%s1161 + $0x44] sm:%s1154]
                  %1198 = vst [vmem:[%s1162 + $0x88] sm:%s1154] %v1197
                  %v1199 = vld [vmem:[%s1161 + $0x48] sm:%s1154]
                  %1200 = vst [vmem:[%s1162 + $0x90] sm:%s1154] %v1199
                  %v1201 = vld [vmem:[%s1161 + $0x4c] sm:%s1154]
                  %1202 = vst [vmem:[%s1162 + $0x98] sm:%s1154] %v1201
                  %v1203 = vld [vmem:[%s1161 + $0x50] sm:%s1154]
                  %1204 = vst [vmem:[%s1162 + $0xa0] sm:%s1154] %v1203
                  %v1205 = vld [vmem:[%s1161 + $0x54] sm:%s1154]
                  %1206 = vst [vmem:[%s1162 + $0xa8] sm:%s1154] %v1205
                  %v1207 = vld [vmem:[%s1161 + $0x58] sm:%s1154]
                  %1208 = vst [vmem:[%s1162 + $0xb0] sm:%s1154] %v1207
                  %v1209 = vld [vmem:[%s1161 + $0x5c] sm:%s1154]
                  %1210 = vst [vmem:[%s1162 + $0xb8] sm:%s1154] %v1209
                  %v1211 = vld [vmem:[%s1161 + $0x60] sm:%s1154]
                  %1212 = vst [vmem:[%s1162 + $0xc0] sm:%s1154] %v1211
                  %v1213 = vld [vmem:[%s1161 + $0x64] sm:%s1154]
                  %1214 = vst [vmem:[%s1162 + $0xc8] sm:%s1154] %v1213
                  %v1215 = vld [vmem:[%s1161 + $0x68] sm:%s1154]
                  %1216 = vst [vmem:[%s1162 + $0xd0] sm:%s1154] %v1215
                  %v1217 = vld [vmem:[%s1161 + $0x6c] sm:%s1154]
                  %1218 = vst [vmem:[%s1162 + $0xd8] sm:%s1154] %v1217
                  %v1219 = vld [vmem:[%s1161 + $0x70] sm:%s1154]
                  %1220 = vst [vmem:[%s1162 + $0xe0] sm:%s1154] %v1219
                  %v1221 = vld [vmem:[%s1161 + $0x74] sm:%s1154]
                  %1222 = vst [vmem:[%s1162 + $0xe8] sm:%s1154] %v1221
                  %v1223 = vld [vmem:[%s1161 + $0x78] sm:%s1154]
                  %1224 = vst [vmem:[%s1162 + $0xf0] sm:%s1154] %v1223
                  %v1225 = vld [vmem:[%s1161 + $0x7c] sm:%s1154]
                  %1226 = vst [vmem:[%s1162 + $0xf8] sm:%s1154] %v1225
                $region113: #{transform_net_forward.7} parent=100 // loop_footer
                  %s1160 = sadd.s32 1, %s1156
                $region114: #{transform_net_forward.7} parent=100 // loop_footer_branch
                  %1155 = sbr.rel target = $region110
                $region115: #{transform_net_forward.7} parent=100 // loop_exit
                  _
              $region101: #{transform_net_forward.7} parent=85 // pred_fallthru
                _
            $region86: #{transform_net_forward.7} parent=81 // pred_fallthru
              _
            // Predicated region
            $region87: #{transform_net_forward.7} parent=81 // pred_check
              _
            $region88: #{transform_net_forward.7} parent=81 // pred_check_branch
              %1068 = sbr.rel (0) target = $region90
            $region89: #{transform_net_forward.7} parent=81 // pred_region
              %s1070 = ssub.s32 16, 1
              loop: start=0, step=1, limit=1
              $region91: #{transform_net_forward.7} parent=89 // loop_pre_header
                _
              $region92: #{transform_net_forward.7} parent=89 // loop_header
                %s1072 = sphi 0, %s1076
                %p1073 = scmp.ge.s32.totalorder %s1072, 1
                %s1077 = sphi %s1037, %s1037
                %s1078 = sphi %s1062, %s1062
              $region93: #{transform_net_forward.7} parent=89 // loop_header_branch
                %1075 = sbr.rel (%p1073) target = $region97
              $region94: #{transform_net_forward.7} parent=89 // loop_body
                %v1079 = vld [vmem:[%s1077] sm:%s1070]
                %1080 = vst [vmem:[%s1078] sm:%s1070] %v1079
                %v1081 = vld [vmem:[%s1077 + $0x4] sm:%s1070]
                %1082 = vst [vmem:[%s1078 + $0x8] sm:%s1070] %v1081
                %v1083 = vld [vmem:[%s1077 + $0x8] sm:%s1070]
                %1084 = vst [vmem:[%s1078 + $0x10] sm:%s1070] %v1083
                %v1085 = vld [vmem:[%s1077 + $0xc] sm:%s1070]
                %1086 = vst [vmem:[%s1078 + $0x18] sm:%s1070] %v1085
                %v1087 = vld [vmem:[%s1077 + $0x10] sm:%s1070]
                %1088 = vst [vmem:[%s1078 + $0x20] sm:%s1070] %v1087
                %v1089 = vld [vmem:[%s1077 + $0x14] sm:%s1070]
                %1090 = vst [vmem:[%s1078 + $0x28] sm:%s1070] %v1089
                %v1091 = vld [vmem:[%s1077 + $0x18] sm:%s1070]
                %1092 = vst [vmem:[%s1078 + $0x30] sm:%s1070] %v1091
                %v1093 = vld [vmem:[%s1077 + $0x1c] sm:%s1070]
                %1094 = vst [vmem:[%s1078 + $0x38] sm:%s1070] %v1093
                %v1095 = vld [vmem:[%s1077 + $0x20] sm:%s1070]
                %1096 = vst [vmem:[%s1078 + $0x40] sm:%s1070] %v1095
                %v1097 = vld [vmem:[%s1077 + $0x24] sm:%s1070]
                %1098 = vst [vmem:[%s1078 + $0x48] sm:%s1070] %v1097
                %v1099 = vld [vmem:[%s1077 + $0x28] sm:%s1070]
                %1100 = vst [vmem:[%s1078 + $0x50] sm:%s1070] %v1099
                %v1101 = vld [vmem:[%s1077 + $0x2c] sm:%s1070]
                %1102 = vst [vmem:[%s1078 + $0x58] sm:%s1070] %v1101
                %v1103 = vld [vmem:[%s1077 + $0x30] sm:%s1070]
                %1104 = vst [vmem:[%s1078 + $0x60] sm:%s1070] %v1103
                %v1105 = vld [vmem:[%s1077 + $0x34] sm:%s1070]
                %1106 = vst [vmem:[%s1078 + $0x68] sm:%s1070] %v1105
                %v1107 = vld [vmem:[%s1077 + $0x38] sm:%s1070]
                %1108 = vst [vmem:[%s1078 + $0x70] sm:%s1070] %v1107
                %v1109 = vld [vmem:[%s1077 + $0x3c] sm:%s1070]
                %1110 = vst [vmem:[%s1078 + $0x78] sm:%s1070] %v1109
                %v1111 = vld [vmem:[%s1077 + $0x40] sm:%s1070]
                %1112 = vst [vmem:[%s1078 + $0x80] sm:%s1070] %v1111
                %v1113 = vld [vmem:[%s1077 + $0x44] sm:%s1070]
                %1114 = vst [vmem:[%s1078 + $0x88] sm:%s1070] %v1113
                %v1115 = vld [vmem:[%s1077 + $0x48] sm:%s1070]
                %1116 = vst [vmem:[%s1078 + $0x90] sm:%s1070] %v1115
                %v1117 = vld [vmem:[%s1077 + $0x4c] sm:%s1070]
                %1118 = vst [vmem:[%s1078 + $0x98] sm:%s1070] %v1117
                %v1119 = vld [vmem:[%s1077 + $0x50] sm:%s1070]
                %1120 = vst [vmem:[%s1078 + $0xa0] sm:%s1070] %v1119
                %v1121 = vld [vmem:[%s1077 + $0x54] sm:%s1070]
                %1122 = vst [vmem:[%s1078 + $0xa8] sm:%s1070] %v1121
                %v1123 = vld [vmem:[%s1077 + $0x58] sm:%s1070]
                %1124 = vst [vmem:[%s1078 + $0xb0] sm:%s1070] %v1123
                %v1125 = vld [vmem:[%s1077 + $0x5c] sm:%s1070]
                %1126 = vst [vmem:[%s1078 + $0xb8] sm:%s1070] %v1125
                %v1127 = vld [vmem:[%s1077 + $0x60] sm:%s1070]
                %1128 = vst [vmem:[%s1078 + $0xc0] sm:%s1070] %v1127
                %v1129 = vld [vmem:[%s1077 + $0x64] sm:%s1070]
                %1130 = vst [vmem:[%s1078 + $0xc8] sm:%s1070] %v1129
                %v1131 = vld [vmem:[%s1077 + $0x68] sm:%s1070]
                %1132 = vst [vmem:[%s1078 + $0xd0] sm:%s1070] %v1131
                %v1133 = vld [vmem:[%s1077 + $0x6c] sm:%s1070]
                %1134 = vst [vmem:[%s1078 + $0xd8] sm:%s1070] %v1133
                %v1135 = vld [vmem:[%s1077 + $0x70] sm:%s1070]
                %1136 = vst [vmem:[%s1078 + $0xe0] sm:%s1070] %v1135
                %v1137 = vld [vmem:[%s1077 + $0x74] sm:%s1070]
                %1138 = vst [vmem:[%s1078 + $0xe8] sm:%s1070] %v1137
                %v1139 = vld [vmem:[%s1077 + $0x78] sm:%s1070]
                %1140 = vst [vmem:[%s1078 + $0xf0] sm:%s1070] %v1139
                %v1141 = vld [vmem:[%s1077 + $0x7c] sm:%s1070]
                %1142 = vst [vmem:[%s1078 + $0xf8] sm:%s1070] %v1141
              $region95: #{transform_net_forward.7} parent=89 // loop_footer
                %s1076 = sadd.s32 1, %s1072
              $region96: #{transform_net_forward.7} parent=89 // loop_footer_branch
                %1071 = sbr.rel target = $region92
              $region97: #{transform_net_forward.7} parent=89 // loop_exit
                _
            $region90: #{transform_net_forward.7} parent=81 // pred_fallthru
              _
          $region82: #{transform_net_forward.7} parent=77 // pred_fallthru
            _
          %1227 = vnop
        $region78: #{transform_net_forward.7} parent=69 // pred_fallthru
          _
        // Predicated region
        $region116: #{transform_net_forward.7} parent=69 // pred_check
          %p1228 = pneg %p169
        $region117: #{transform_net_forward.7} parent=69 // pred_check_branch
          %1230 = sbr.rel (%p1228) target = $region119
        $region118: #{transform_net_forward.7} parent=69 // pred_region
          _
        $region119: #{transform_net_forward.7} parent=69 // pred_fallthru
          _
        // Predicated region
        $region120: #{transform_net_forward.7} parent=69 // pred_check
          %p1231 = pneg %p197
        $region121: #{transform_net_forward.7} parent=69 // pred_check_branch
          %1233 = sbr.rel (%p1231) target = $region123
        $region122: #{transform_net_forward.7} parent=69 // pred_region
          _
        $region123: #{transform_net_forward.7} parent=69 // pred_fallthru
          _
      $region70: #{transform_net_forward.7} parent=5 // pred_fallthru
        _
      %p1234 = scmp.le.s32.totalorder 2, %s13
      // Predicated region
      $region124: #{transform_net_forward.7} parent=5 // pred_check
        %p1235 = pneg %p1234
      $region125: #{transform_net_forward.7} parent=5 // pred_check_branch
        %1237 = sbr.rel (%p1235) target = $region127
      $region126: #{transform_net_forward.7} parent=5 // pred_region
        %s1238 = ssub.s32 %s13, 2
        // Predicated region
        $region128: #{transform_net_forward.7} parent=126 // pred_check
          %p1239 = pneg %p147
        $region129: #{transform_net_forward.7} parent=126 // pred_check_branch
          %1241 = sbr.rel (%p1239) target = $region131
        $region130: #{transform_net_forward.7} parent=126 // pred_region
          %s1242 = sand.u32 %s132, 1
          %s1243 = sand.u32 %s132, 1
          %s1244 = smul.addr %s1243, 128
          %s1245 = scalar_lea.vmem [#allocation3], %s1244
        $region131: #{transform_net_forward.7} parent=126 // pred_fallthru
          _
        // Predicated region
        $region132: #{transform_net_forward.7} parent=126 // pred_check
          %p1246 = pneg %p175
        $region133: #{transform_net_forward.7} parent=126 // pred_check_branch
          %1248 = sbr.rel (%p1246) target = $region135
        $region134: #{transform_net_forward.7} parent=126 // pred_region
          %p1249 = scmp.lt.s32.totalorder %s24, 7
          %s1250 = scalar_select %p1249, %s24, 7
          %p1251 = scmp.lt.s32.totalorder %s25, 1
          %s1252 = scalar_select %p1251, %s25, 1
          %s1253 = smul.addr %s1252, 32
          %s1254 = smul.addr %s1250, 64
          %s1255 = sadd.s32 %s1253, %s1254
          %s1256 = smul.addr %s1255, 8
          %s1257 = scalar_lea.vmem %s5, %s1256
        $region135: #{transform_net_forward.7} parent=126 // pred_fallthru
          _
        // Predicated region
        $region136: #{transform_net_forward.7} parent=126 // pred_check
          %p1258 = pneg %p203
        $region137: #{transform_net_forward.7} parent=126 // pred_check_branch
          %1260 = sbr.rel (%p1258) target = $region139
        $region138: #{transform_net_forward.7} parent=126 // pred_region
          %p1261 = scmp.lt.s32.totalorder %s24, 7
          %s1262 = scalar_select %p1261, %s24, 7
          %p1263 = scmp.lt.s32.totalorder %s25, 1
          %s1264 = scalar_select %p1263, %s25, 1
          %s1265 = smul.addr %s1264, 32
          %s1266 = smul.addr %s1262, 64
          %s1267 = sadd.s32 %s1265, %s1266
          %s1268 = smul.addr %s1267, 8
          %s1269 = scalar_lea.vmem %s6, %s1268
        $region139: #{transform_net_forward.7} parent=126 // pred_fallthru
          _
      $region127: #{transform_net_forward.7} parent=5 // pred_fallthru
        _
    $region6: #{transform_net_forward.7} parent=1 // loop_footer
      %s17 = sadd.s32 1, %s13
    $region7: #{transform_net_forward.7} parent=1 // loop_footer_branch
      %12 = sbr.rel target = $region3
    $region8: #{transform_net_forward.7} parent=1 // loop_exit
      _

// kernel: transform_net_forward.8
$region0: #{transform_net_forward.8}
  #allocation0 [shape = 'u32[]', space=smem, size = 0x4, offset = 0x4, fixed_abs, tag = 'smem constant byte address 0x4 - core index']
  #allocation1 [shape = 'u32[72,128]{1,0:T(1,128)}', space=vmem, size = 0x9000, scoped, tag = 'internal scratch']
  %s0 = inlined_call_operand.vmem [shape: bf16[8,256,256], index: 0, kind: input, shape index: {}]
  %s1 = inlined_call_operand.vmem [shape: f32[256,1], index: 1, kind: input, shape index: {}]
  %s2 = inlined_call_operand.vmem [shape: f32[256,1], index: 2, kind: input, shape index: {}]
  %s3 = inlined_call_operand.vmem [shape: f32[8,1,256,1], index: 3, kind: output, shape index: {}]
  %s4 = sld [smem:[#allocation0]]
  $region45: #{transform_net_forward.8} parent=0
    _
  %s6 = ssub.s32 1, %s4
  %s7 = scalar_select 0, %s6, %s4
  loop: start=0, step=1, limit=10
  $region2: #{transform_net_forward.8} parent=0 // loop_pre_header
    _
  $region3: #{transform_net_forward.8} parent=0 // loop_header
    %s9 = sphi 0, %s13
    %p10 = scmp.ge.s32.totalorder %s9, 10
    %s16 = sphi 0, %s28
    %s17 = sphi 0, %s24
    %s18 = sphi 0, %s16
    %s19 = sphi 0, %s17
    %s20 = sphi 0, %s18
    %s21 = sphi 0, %s19
    %s33 = sphi 0, %s35
    %s36 = sphi 0, %s33
    %s37 = sphi 0, %s36
    %s53 = sphi 0, %s37
    %s57 = sphi 0, %s57
    %s59 = sphi 0, %s57
    %s60 = sphi 0, %s59
    %s74 = sphi 0, %s60
    %s78 = sphi 0, %s78
    %s80 = sphi 0, %s78
    %s81 = sphi 0, %s80
    %s95 = sphi 0, %s81
    %s103 = sphi 0, %s105
    %s106 = sphi 0, %s103
    %s107 = sphi 0, %s106
    %s123 = sphi 0, %s107
  $region4: #{transform_net_forward.8} parent=0 // loop_header_branch
    %12 = sbr.rel (%p10) target = $region8
  $region5: #{transform_net_forward.8} parent=0 // loop_body
    %s14 = ssub.s32 %s9, 1
    %s15 = ssub.s32 %s9, 2
    %s22 = sadd.s32 1, %s17
    %p23 = scmp.ge.s32.totalorder %s22, 1
    %s24 = scalar_select %p23, 0, %s22
    %s25 = sadd.s32 1, %s16
    %s26 = scalar_select %p23, %s25, %s16
    %p27 = scmp.ge.s32.totalorder %s26, 8
    %s28 = scalar_select %p27, 0, %s26
    %s29 = ssub.s32 %s16, %s28
    %s30 = ssub.s32 %s17, %s24
    %s31 = sor.u32 %s29, %s30
    %p32 = scmp.eq.s32.totalorder %s31, 0
    %s34 = sadd.s32 %s33, 1
    %s35 = scalar_select %p32, %s33, %s34
    %p38 = pneg %p32
    %p39 = scmp.eq.s32.totalorder %s9, 7
    %p40 = por %p38, %p39
    %p41 = scmp.ne.s32.totalorder %s33, %s36
    %p42 = scmp.eq.s32.totalorder %s9, 0
    %p43 = por %p41, %p42
    %p44 = scmp.ne.s32.totalorder %s33, %s36
    %p45 = scmp.eq.s32.totalorder %s14, 7
    %p46 = por %p44, %p45
    %p47 = scmp.ne.s32.totalorder %s36, %s37
    %p48 = scmp.eq.s32.totalorder %s14, 0
    %p49 = por %p47, %p48
    %p50 = scmp.ne.s32.totalorder %s36, %s37
    %p51 = scmp.eq.s32.totalorder %s15, 7
    %p52 = por %p50, %p51
    %p54 = scmp.ne.s32.totalorder %s37, %s53
    %p55 = scmp.eq.s32.totalorder %s15, 0
    %p56 = por %p54, %p55
    %s58 = sadd.s32 %s57, 1
    %p61 = scmp.eq.s32.totalorder %s9, 7
    %p62 = scmp.ne.s32.totalorder %s57, %s59
    %p63 = scmp.eq.s32.totalorder %s9, 0
    %p64 = por %p62, %p63
    %p65 = scmp.ne.s32.totalorder %s57, %s59
    %p66 = scmp.eq.s32.totalorder %s14, 7
    %p67 = por %p65, %p66
    %p68 = scmp.ne.s32.totalorder %s59, %s60
    %p69 = scmp.eq.s32.totalorder %s14, 0
    %p70 = por %p68, %p69
    %p71 = scmp.ne.s32.totalorder %s59, %s60
    %p72 = scmp.eq.s32.totalorder %s15, 7
    %p73 = por %p71, %p72
    %p75 = scmp.ne.s32.totalorder %s60, %s74
    %p76 = scmp.eq.s32.totalorder %s15, 0
    %p77 = por %p75, %p76
    %s79 = sadd.s32 %s78, 1
    %p82 = scmp.eq.s32.totalorder %s9, 7
    %p83 = scmp.ne.s32.totalorder %s78, %s80
    %p84 = scmp.eq.s32.totalorder %s9, 0
    %p85 = por %p83, %p84
    %p86 = scmp.ne.s32.totalorder %s78, %s80
    %p87 = scmp.eq.s32.totalorder %s14, 7
    %p88 = por %p86, %p87
    %p89 = scmp.ne.s32.totalorder %s80, %s81
    %p90 = scmp.eq.s32.totalorder %s14, 0
    %p91 = por %p89, %p90
    %p92 = scmp.ne.s32.totalorder %s80, %s81
    %p93 = scmp.eq.s32.totalorder %s15, 7
    %p94 = por %p92, %p93
    %p96 = scmp.ne.s32.totalorder %s81, %s95
    %p97 = scmp.eq.s32.totalorder %s15, 0
    %p98 = por %p96, %p97
    %s99 = ssub.s32 %s16, %s28
    %s100 = ssub.s32 %s17, %s24
    %s101 = sor.u32 %s99, %s100
    %p102 = scmp.eq.s32.totalorder %s101, 0
    %s104 = sadd.s32 %s103, 1
    %s105 = scalar_select %p102, %s103, %s104
    %p108 = pneg %p102
    %p109 = scmp.eq.s32.totalorder %s9, 7
    %p110 = por %p108, %p109
    %p111 = scmp.ne.s32.totalorder %s103, %s106
    %p112 = scmp.eq.s32.totalorder %s9, 0
    %p113 = por %p111, %p112
    %p114 = scmp.ne.s32.totalorder %s103, %s106
    %p115 = scmp.eq.s32.totalorder %s14, 7
    %p116 = por %p114, %p115
    %p117 = scmp.ne.s32.totalorder %s106, %s107
    %p118 = scmp.eq.s32.totalorder %s14, 0
    %p119 = por %p117, %p118
    %p120 = scmp.ne.s32.totalorder %s106, %s107
    %p121 = scmp.eq.s32.totalorder %s15, 7
    %p122 = por %p120, %p121
    %p124 = scmp.ne.s32.totalorder %s107, %s123
    %p125 = scmp.eq.s32.totalorder %s15, 0
    %p126 = por %p124, %p125
    %p127 = scmp.le.s32.totalorder 1, %s9
    %p128 = scmp.lt.s32.totalorder %s9, 9
    %p129 = pnand %p127, %p128
    %p130 = pneg %p129
    // Predicated region
    $region9: #{transform_net_forward.8} parent=5 // pred_check
      _
    $region10: #{transform_net_forward.8} parent=5 // pred_check_branch
      %132 = sbr.rel (%p129) target = $region12
    $region11: #{transform_net_forward.8} parent=5 // pred_region
      %s133 = ssub.s32 %s9, 1
      // Predicated region
      $region13: #{transform_net_forward.8} parent=11 // pred_check
        %p134 = pneg %p70
      $region14: #{transform_net_forward.8} parent=11 // pred_check_branch
        %136 = sbr.rel (%p134) target = $region16
      $region15: #{transform_net_forward.8} parent=11 // pred_region
        _
      $region16: #{transform_net_forward.8} parent=11 // pred_fallthru
        _
      // Predicated region
      $region17: #{transform_net_forward.8} parent=11 // pred_check
        %p137 = pneg %p91
      $region18: #{transform_net_forward.8} parent=11 // pred_check_branch
        %139 = sbr.rel (%p137) target = $region20
      $region19: #{transform_net_forward.8} parent=11 // pred_region
        _
      $region20: #{transform_net_forward.8} parent=11 // pred_fallthru
        _
    $region12: #{transform_net_forward.8} parent=5 // pred_fallthru
      _
    %p140 = scmp.lt.s32.totalorder %s9, 8
    // Predicated region
    $region21: #{transform_net_forward.8} parent=5 // pred_check
      %p141 = pneg %p140
    $region22: #{transform_net_forward.8} parent=5 // pred_check_branch
      %143 = sbr.rel (%p141) target = $region24
    $region23: #{transform_net_forward.8} parent=5 // pred_region
      // Predicated region
      $region25: #{transform_net_forward.8} parent=23 // pred_check
        %p144 = pneg %p43
      $region26: #{transform_net_forward.8} parent=23 // pred_check_branch
        %146 = sbr.rel (%p144) target = $region28
      $region27: #{transform_net_forward.8} parent=23 // pred_region
        %s147 = smul.u32 2, %s17
        %p148 = scmp.lt.s32.totalorder %s16, 7
        %s149 = scalar_select %p148, %s16, 7
        %p150 = scmp.lt.s32.totalorder %s147, 1
        %s151 = scalar_select %p150, %s147, 1
        %s152 = smul.addr %s149, 64
        %s153 = sadd.s32 %s151, %s152
        %s154 = smul.addr %s153, 4
        %s155 = scalar_lea.vmem %s0, %s154
        %s156 = smul.u32 2, %s17
      $region28: #{transform_net_forward.8} parent=23 // pred_fallthru
        _
    $region24: #{transform_net_forward.8} parent=5 // pred_fallthru
      _
    %p157 = scmp.le.s32.totalorder 1, %s9
    %p158 = scmp.lt.s32.totalorder %s9, 9
    %p159 = pnand %p157, %p158
    %p160 = pneg %p159
    // Predicated region
    $region29: #{transform_net_forward.8} parent=5 // pred_check
      _
    $region30: #{transform_net_forward.8} parent=5 // pred_check_branch
      %162 = sbr.rel (%p159) target = $region32
    $region31: #{transform_net_forward.8} parent=5 // pred_region
      %s163 = ssub.s32 %s9, 1
      %s164 = smul.u32 2, %s19
      %p165 = scmp.lt.s32.totalorder %s18, 7
      %s166 = scalar_select %p165, %s18, 7
      %p167 = scmp.lt.s32.totalorder %s164, 1
      %s168 = scalar_select %p167, %s164, 1
      %s169 = smul.addr %s166, 64
      %s170 = sadd.s32 %s168, %s169
      %s171 = smul.addr %s170, 4
      %s172 = scalar_lea.vmem %s0, %s171
      %p173 = pneg %p49
      %p174 = pneg %p46
      %p175 = pneg %p70
      %p176 = pneg %p67
      %p177 = pneg %p91
      %p178 = pneg %p88
      %p179 = pneg %p119
      %p180 = pneg %p116
      %p181 = scmp.lt.s32.totalorder %s18, 7
      %s182 = scalar_select %p181, %s18, 7
      %p183 = scmp.lt.s32.totalorder %s19, 0
      %s184 = scalar_select %p183, %s19, 0
      %s185 = smul.addr %s184, 32
      %s186 = smul.addr %s182, 32
      %s187 = sadd.s32 %s185, %s186
      %s188 = smul.addr %s187, 8
      %s189 = scalar_lea.vmem %s3, %s188
      %s190 = smul.u32 2, %s19
      %p191 = scmp.lt.s32.totalorder %s18, 7
      %s192 = scalar_select %p191, %s18, 7
      %p193 = scmp.lt.s32.totalorder %s190, 1
      %s194 = scalar_select %p193, %s190, 1
      %s195 = smul.addr %s192, 64
      %s196 = sadd.s32 %s194, %s195
      %s197 = smul.addr %s196, 4
      %s198 = scalar_lea.vmem %s0, %s197
      %s199 = smul.u32 2, %s19
      %p200 = scmp.lt.s32.totalorder %s18, 7
      %s201 = scalar_select %p200, %s18, 7
      %p202 = scmp.lt.s32.totalorder %s19, 0
      %s203 = scalar_select %p202, %s19, 0
      %s204 = smul.addr %s203, 32
      %s205 = smul.addr %s201, 32
      %s206 = sadd.s32 %s204, %s205
      %s207 = smul.addr %s206, 8
      %s208 = scalar_lea.vmem %s3, %s207
      %v209 = vld [vmem:[%s198] sm:$0xff]
      %v210 = vld [vmem:[%s198 + $0x8] sm:$0xff]
      %v211 = vld [vmem:[%s198 + $0x10] sm:$0xff]
      %v212 = vld [vmem:[%s198 + $0x18] sm:$0xff]
      %v213 = vld [vmem:[%s198 + $0x20] sm:$0xff]
      %v214 = vld [vmem:[%s198 + $0x28] sm:$0xff]
      %v215 = vld [vmem:[%s198 + $0x30] sm:$0xff]
      %v216 = vld [vmem:[%s198 + $0x38] sm:$0xff]
      %v217 = vld [vmem:[%s198 + $0x40] sm:$0xff]
      %v218 = vld [vmem:[%s198 + $0x48] sm:$0xff]
      %v219 = vld [vmem:[%s198 + $0x50] sm:$0xff]
      %v220 = vld [vmem:[%s198 + $0x58] sm:$0xff]
      %v221 = vld [vmem:[%s198 + $0x60] sm:$0xff]
      %v222 = vld [vmem:[%s198 + $0x68] sm:$0xff]
      %v223 = vld [vmem:[%s198 + $0x70] sm:$0xff]
      %v224 = vld [vmem:[%s198 + $0x78] sm:$0xff]
      %v225 = vld [vmem:[%s198 + $0x80] sm:$0xff]
      %v226 = vld [vmem:[%s198 + $0x88] sm:$0xff]
      %v227 = vld [vmem:[%s198 + $0x90] sm:$0xff]
      %v228 = vld [vmem:[%s198 + $0x98] sm:$0xff]
      %v229 = vld [vmem:[%s198 + $0xa0] sm:$0xff]
      %v230 = vld [vmem:[%s198 + $0xa8] sm:$0xff]
      %v231 = vld [vmem:[%s198 + $0xb0] sm:$0xff]
      %v232 = vld [vmem:[%s198 + $0xb8] sm:$0xff]
      %v233 = vld [vmem:[%s198 + $0xc0] sm:$0xff]
      %v234 = vld [vmem:[%s198 + $0xc8] sm:$0xff]
      %v235 = vld [vmem:[%s198 + $0xd0] sm:$0xff]
      %v236 = vld [vmem:[%s198 + $0xd8] sm:$0xff]
      %v237 = vld [vmem:[%s198 + $0xe0] sm:$0xff]
      %v238 = vld [vmem:[%s198 + $0xe8] sm:$0xff]
      %v239 = vld [vmem:[%s198 + $0xf0] sm:$0xff]
      %v240 = vld [vmem:[%s198 + $0xf8] sm:$0xff]
      %v241 = vld [vmem:[%s1] sm:$0xff]
      %v242 = vld [vmem:[%s1 + $0x8] sm:$0xff]
      %v243 = vld [vmem:[%s1 + $0x10] sm:$0xff]
      %v244 = vld [vmem:[%s1 + $0x18] sm:$0xff]
      %v245 = vld [vmem:[%s1 + $0x20] sm:$0xff]
      %v246 = vld [vmem:[%s1 + $0x28] sm:$0xff]
      %v247 = vld [vmem:[%s1 + $0x30] sm:$0xff]
      %v248 = vld [vmem:[%s1 + $0x38] sm:$0xff]
      %v249 = vld [vmem:[%s1 + $0x40] sm:$0xff]
      %v250 = vld [vmem:[%s1 + $0x48] sm:$0xff]
      %v251 = vld [vmem:[%s1 + $0x50] sm:$0xff]
      %v252 = vld [vmem:[%s1 + $0x58] sm:$0xff]
      %v253 = vld [vmem:[%s1 + $0x60] sm:$0xff]
      %v254 = vld [vmem:[%s1 + $0x68] sm:$0xff]
      %v255 = vld [vmem:[%s1 + $0x70] sm:$0xff]
      %v256 = vld [vmem:[%s1 + $0x78] sm:$0xff]
      %v257 = vld [vmem:[%s1 + $0x80] sm:$0xff]
      %v258 = vld [vmem:[%s1 + $0x88] sm:$0xff]
      %v259 = vld [vmem:[%s1 + $0x90] sm:$0xff]
      %v260 = vld [vmem:[%s1 + $0x98] sm:$0xff]
      %v261 = vld [vmem:[%s1 + $0xa0] sm:$0xff]
      %v262 = vld [vmem:[%s1 + $0xa8] sm:$0xff]
      %v263 = vld [vmem:[%s1 + $0xb0] sm:$0xff]
      %v264 = vld [vmem:[%s1 + $0xb8] sm:$0xff]
      %v265 = vld [vmem:[%s1 + $0xc0] sm:$0xff]
      %v266 = vld [vmem:[%s1 + $0xc8] sm:$0xff]
      %v267 = vld [vmem:[%s1 + $0xd0] sm:$0xff]
      %v268 = vld [vmem:[%s1 + $0xd8] sm:$0xff]
      %v269 = vld [vmem:[%s1 + $0xe0] sm:$0xff]
      %v270 = vld [vmem:[%s1 + $0xe8] sm:$0xff]
      %v271 = vld [vmem:[%s1 + $0xf0] sm:$0xff]
      %v272 = vld [vmem:[%s1 + $0xf8] sm:$0xff]
      %v273 = vpack.c.bf16 %v241, %v241
      %v274 = vpack.c.bf16 %v242, %v242
      %v275 = vpack.c.bf16 %v243, %v243
      %v276 = vpack.c.bf16 %v244, %v244
      %v277 = vpack.c.bf16 %v245, %v245
      %v278 = vpack.c.bf16 %v246, %v246
      %v279 = vpack.c.bf16 %v247, %v247
      %v280 = vpack.c.bf16 %v248, %v248
      %v281 = vpack.c.bf16 %v249, %v249
      %v282 = vpack.c.bf16 %v250, %v250
      %v283 = vpack.c.bf16 %v251, %v251
      %v284 = vpack.c.bf16 %v252, %v252
      %v285 = vpack.c.bf16 %v253, %v253
      %v286 = vpack.c.bf16 %v254, %v254
      %v287 = vpack.c.bf16 %v255, %v255
      %v288 = vpack.c.bf16 %v256, %v256
      %v289 = vpack.c.bf16 %v257, %v257
      %v290 = vpack.c.bf16 %v258, %v258
      %v291 = vpack.c.bf16 %v259, %v259
      %v292 = vpack.c.bf16 %v260, %v260
      %v293 = vpack.c.bf16 %v261, %v261
      %v294 = vpack.c.bf16 %v262, %v262
      %v295 = vpack.c.bf16 %v263, %v263
      %v296 = vpack.c.bf16 %v264, %v264
      %v297 = vpack.c.bf16 %v265, %v265
      %v298 = vpack.c.bf16 %v266, %v266
      %v299 = vpack.c.bf16 %v267, %v267
      %v300 = vpack.c.bf16 %v268, %v268
      %v301 = vpack.c.bf16 %v269, %v269
      %v302 = vpack.c.bf16 %v270, %v270
      %v303 = vpack.c.bf16 %v271, %v271
      %v304 = vpack.c.bf16 %v272, %v272
      %306 = vset.pattern.permute.xlu0 0
      %307 = vperm.xlu0 %306, %v273
      %v308 = vpop.permute.xlu0 %307
      %v311 = vunpack.c.l.s4 839922192
      %v312 = vunpack.c.0.s8 %v311
      %v313 = vperm.slane %v308, %v312
      %315 = vset.pattern.permute.xlu0 0
      %316 = vperm.xlu0 %315, %v274
      %v317 = vpop.permute.xlu0 %316
      %v320 = vunpack.c.l.s4 839922192
      %v321 = vunpack.c.0.s8 %v320
      %v322 = vperm.slane %v317, %v321
      %324 = vset.pattern.permute.xlu0 0
      %325 = vperm.xlu0 %324, %v275
      %v326 = vpop.permute.xlu0 %325
      %v329 = vunpack.c.l.s4 839922192
      %v330 = vunpack.c.0.s8 %v329
      %v331 = vperm.slane %v326, %v330
      %333 = vset.pattern.permute.xlu0 0
      %334 = vperm.xlu0 %333, %v276
      %v335 = vpop.permute.xlu0 %334
      %v338 = vunpack.c.l.s4 839922192
      %v339 = vunpack.c.0.s8 %v338
      %v340 = vperm.slane %v335, %v339
      %342 = vset.pattern.permute.xlu0 0
      %343 = vperm.xlu0 %342, %v277
      %v344 = vpop.permute.xlu0 %343
      %v347 = vunpack.c.l.s4 839922192
      %v348 = vunpack.c.0.s8 %v347
      %v349 = vperm.slane %v344, %v348
      %351 = vset.pattern.permute.xlu0 0
      %352 = vperm.xlu0 %351, %v278
      %v353 = vpop.permute.xlu0 %352
      %v356 = vunpack.c.l.s4 839922192
      %v357 = vunpack.c.0.s8 %v356
      %v358 = vperm.slane %v353, %v357
      %360 = vset.pattern.permute.xlu0 0
      %361 = vperm.xlu0 %360, %v279
      %v362 = vpop.permute.xlu0 %361
      %v365 = vunpack.c.l.s4 839922192
      %v366 = vunpack.c.0.s8 %v365
      %v367 = vperm.slane %v362, %v366
      %369 = vset.pattern.permute.xlu0 0
      %370 = vperm.xlu0 %369, %v280
      %v371 = vpop.permute.xlu0 %370
      %v374 = vunpack.c.l.s4 839922192
      %v375 = vunpack.c.0.s8 %v374
      %v376 = vperm.slane %v371, %v375
      %378 = vset.pattern.permute.xlu0 0
      %379 = vperm.xlu0 %378, %v281
      %v380 = vpop.permute.xlu0 %379
      %v383 = vunpack.c.l.s4 839922192
      %v384 = vunpack.c.0.s8 %v383
      %v385 = vperm.slane %v380, %v384
      %387 = vset.pattern.permute.xlu0 0
      %388 = vperm.xlu0 %387, %v282
      %v389 = vpop.permute.xlu0 %388
      %v392 = vunpack.c.l.s4 839922192
      %v393 = vunpack.c.0.s8 %v392
      %v394 = vperm.slane %v389, %v393
      %396 = vset.pattern.permute.xlu0 0
      %397 = vperm.xlu0 %396, %v283
      %v398 = vpop.permute.xlu0 %397
      %v401 = vunpack.c.l.s4 839922192
      %v402 = vunpack.c.0.s8 %v401
      %v403 = vperm.slane %v398, %v402
      %405 = vset.pattern.permute.xlu0 0
      %406 = vperm.xlu0 %405, %v284
      %v407 = vpop.permute.xlu0 %406
      %v410 = vunpack.c.l.s4 839922192
      %v411 = vunpack.c.0.s8 %v410
      %v412 = vperm.slane %v407, %v411
      %414 = vset.pattern.permute.xlu0 0
      %415 = vperm.xlu0 %414, %v285
      %v416 = vpop.permute.xlu0 %415
      %v419 = vunpack.c.l.s4 839922192
      %v420 = vunpack.c.0.s8 %v419
      %v421 = vperm.slane %v416, %v420
      %423 = vset.pattern.permute.xlu0 0
      %424 = vperm.xlu0 %423, %v286
      %v425 = vpop.permute.xlu0 %424
      %v428 = vunpack.c.l.s4 839922192
      %v429 = vunpack.c.0.s8 %v428
      %v430 = vperm.slane %v425, %v429
      %432 = vset.pattern.permute.xlu0 0
      %433 = vperm.xlu0 %432, %v287
      %v434 = vpop.permute.xlu0 %433
      %v437 = vunpack.c.l.s4 839922192
      %v438 = vunpack.c.0.s8 %v437
      %v439 = vperm.slane %v434, %v438
      %441 = vset.pattern.permute.xlu0 0
      %442 = vperm.xlu0 %441, %v288
      %v443 = vpop.permute.xlu0 %442
      %v446 = vunpack.c.l.s4 839922192
      %v447 = vunpack.c.0.s8 %v446
      %v448 = vperm.slane %v443, %v447
      %450 = vset.pattern.permute.xlu0 0
      %451 = vperm.xlu0 %450, %v289
      %v452 = vpop.permute.xlu0 %451
      %v455 = vunpack.c.l.s4 839922192
      %v456 = vunpack.c.0.s8 %v455
      %v457 = vperm.slane %v452, %v456
      %459 = vset.pattern.permute.xlu0 0
      %460 = vperm.xlu0 %459, %v290
      %v461 = vpop.permute.xlu0 %460
      %v464 = vunpack.c.l.s4 839922192
      %v465 = vunpack.c.0.s8 %v464
      %v466 = vperm.slane %v461, %v465
      %468 = vset.pattern.permute.xlu0 0
      %469 = vperm.xlu0 %468, %v291
      %v470 = vpop.permute.xlu0 %469
      %v473 = vunpack.c.l.s4 839922192
      %v474 = vunpack.c.0.s8 %v473
      %v475 = vperm.slane %v470, %v474
      %477 = vset.pattern.permute.xlu0 0
      %478 = vperm.xlu0 %477, %v292
      %v479 = vpop.permute.xlu0 %478
      %v482 = vunpack.c.l.s4 839922192
      %v483 = vunpack.c.0.s8 %v482
      %v484 = vperm.slane %v479, %v483
      %486 = vset.pattern.permute.xlu0 0
      %487 = vperm.xlu0 %486, %v293
      %v488 = vpop.permute.xlu0 %487
      %v491 = vunpack.c.l.s4 839922192
      %v492 = vunpack.c.0.s8 %v491
      %v493 = vperm.slane %v488, %v492
      %495 = vset.pattern.permute.xlu0 0
      %496 = vperm.xlu0 %495, %v294
      %v497 = vpop.permute.xlu0 %496
      %v500 = vunpack.c.l.s4 839922192
      %v501 = vunpack.c.0.s8 %v500
      %v502 = vperm.slane %v497, %v501
      %504 = vset.pattern.permute.xlu0 0
      %505 = vperm.xlu0 %504, %v295
      %v506 = vpop.permute.xlu0 %505
      %v509 = vunpack.c.l.s4 839922192
      %v510 = vunpack.c.0.s8 %v509
      %v511 = vperm.slane %v506, %v510
      %513 = vset.pattern.permute.xlu0 0
      %514 = vperm.xlu0 %513, %v296
      %v515 = vpop.permute.xlu0 %514
      %v518 = vunpack.c.l.s4 839922192
      %v519 = vunpack.c.0.s8 %v518
      %v520 = vperm.slane %v515, %v519
      %522 = vset.pattern.permute.xlu0 0
      %523 = vperm.xlu0 %522, %v297
      %v524 = vpop.permute.xlu0 %523
      %v527 = vunpack.c.l.s4 839922192
      %v528 = vunpack.c.0.s8 %v527
      %v529 = vperm.slane %v524, %v528
      %531 = vset.pattern.permute.xlu0 0
      %532 = vperm.xlu0 %531, %v298
      %v533 = vpop.permute.xlu0 %532
      %v536 = vunpack.c.l.s4 839922192
      %v537 = vunpack.c.0.s8 %v536
      %v538 = vperm.slane %v533, %v537
      %540 = vset.pattern.permute.xlu0 0
      %541 = vperm.xlu0 %540, %v299
      %v542 = vpop.permute.xlu0 %541
      %v545 = vunpack.c.l.s4 839922192
      %v546 = vunpack.c.0.s8 %v545
      %v547 = vperm.slane %v542, %v546
      %549 = vset.pattern.permute.xlu0 0
      %550 = vperm.xlu0 %549, %v300
      %v551 = vpop.permute.xlu0 %550
      %v554 = vunpack.c.l.s4 839922192
      %v555 = vunpack.c.0.s8 %v554
      %v556 = vperm.slane %v551, %v555
      %558 = vset.pattern.permute.xlu0 0
      %559 = vperm.xlu0 %558, %v301
      %v560 = vpop.permute.xlu0 %559
      %v563 = vunpack.c.l.s4 839922192
      %v564 = vunpack.c.0.s8 %v563
      %v565 = vperm.slane %v560, %v564
      %567 = vset.pattern.permute.xlu0 0
      %568 = vperm.xlu0 %567, %v302
      %v569 = vpop.permute.xlu0 %568
      %v572 = vunpack.c.l.s4 839922192
      %v573 = vunpack.c.0.s8 %v572
      %v574 = vperm.slane %v569, %v573
      %576 = vset.pattern.permute.xlu0 0
      %577 = vperm.xlu0 %576, %v303
      %v578 = vpop.permute.xlu0 %577
      %v581 = vunpack.c.l.s4 839922192
      %v582 = vunpack.c.0.s8 %v581
      %v583 = vperm.slane %v578, %v582
      %585 = vset.pattern.permute.xlu0 0
      %586 = vperm.xlu0 %585, %v304
      %v587 = vpop.permute.xlu0 %586
      %v590 = vunpack.c.l.s4 839922192
      %v591 = vunpack.c.0.s8 %v590
      %v592 = vperm.slane %v587, %v591
      %v593 = vunpack.c.l.bf16 %v209
      %v594 = vunpack.c.h.bf16 %v209
      %v595 = vunpack.c.l.bf16 %v210
      %v596 = vunpack.c.h.bf16 %v210
      %v597 = vunpack.c.l.bf16 %v211
      %v598 = vunpack.c.h.bf16 %v211
      %v599 = vunpack.c.l.bf16 %v212
      %v600 = vunpack.c.h.bf16 %v212
      %v601 = vunpack.c.l.bf16 %v213
      %v602 = vunpack.c.h.bf16 %v213
      %v603 = vunpack.c.l.bf16 %v214
      %v604 = vunpack.c.h.bf16 %v214
      %v605 = vunpack.c.l.bf16 %v215
      %v606 = vunpack.c.h.bf16 %v215
      %v607 = vunpack.c.l.bf16 %v216
      %v608 = vunpack.c.h.bf16 %v216
      %v609 = vunpack.c.l.bf16 %v217
      %v610 = vunpack.c.h.bf16 %v217
      %v611 = vunpack.c.l.bf16 %v218
      %v612 = vunpack.c.h.bf16 %v218
      %v613 = vunpack.c.l.bf16 %v219
      %v614 = vunpack.c.h.bf16 %v219
      %v615 = vunpack.c.l.bf16 %v220
      %v616 = vunpack.c.h.bf16 %v220
      %v617 = vunpack.c.l.bf16 %v221
      %v618 = vunpack.c.h.bf16 %v221
      %v619 = vunpack.c.l.bf16 %v222
      %v620 = vunpack.c.h.bf16 %v222
      %v621 = vunpack.c.l.bf16 %v223
      %v622 = vunpack.c.h.bf16 %v223
      %v623 = vunpack.c.l.bf16 %v224
      %v624 = vunpack.c.h.bf16 %v224
      %v625 = vunpack.c.l.bf16 %v225
      %v626 = vunpack.c.h.bf16 %v225
      %v627 = vunpack.c.l.bf16 %v226
      %v628 = vunpack.c.h.bf16 %v226
      %v629 = vunpack.c.l.bf16 %v227
      %v630 = vunpack.c.h.bf16 %v227
      %v631 = vunpack.c.l.bf16 %v228
      %v632 = vunpack.c.h.bf16 %v228
      %v633 = vunpack.c.l.bf16 %v229
      %v634 = vunpack.c.h.bf16 %v229
      %v635 = vunpack.c.l.bf16 %v230
      %v636 = vunpack.c.h.bf16 %v230
      %v637 = vunpack.c.l.bf16 %v231
      %v638 = vunpack.c.h.bf16 %v231
      %v639 = vunpack.c.l.bf16 %v232
      %v640 = vunpack.c.h.bf16 %v232
      %v641 = vunpack.c.l.bf16 %v233
      %v642 = vunpack.c.h.bf16 %v233
      %v643 = vunpack.c.l.bf16 %v234
      %v644 = vunpack.c.h.bf16 %v234
      %v645 = vunpack.c.l.bf16 %v235
      %v646 = vunpack.c.h.bf16 %v235
      %v647 = vunpack.c.l.bf16 %v236
      %v648 = vunpack.c.h.bf16 %v236
      %v649 = vunpack.c.l.bf16 %v237
      %v650 = vunpack.c.h.bf16 %v237
      %v651 = vunpack.c.l.bf16 %v238
      %v652 = vunpack.c.h.bf16 %v238
      %v653 = vunpack.c.l.bf16 %v239
      %v654 = vunpack.c.h.bf16 %v239
      %v655 = vunpack.c.l.bf16 %v240
      %v656 = vunpack.c.h.bf16 %v240
      %v657 = vunpack.c.l.bf16 %v313
      %v658 = vunpack.c.l.bf16 %v322
      %v659 = vunpack.c.l.bf16 %v331
      %v660 = vunpack.c.l.bf16 %v340
      %v661 = vunpack.c.l.bf16 %v349
      %v662 = vunpack.c.l.bf16 %v358
      %v663 = vunpack.c.l.bf16 %v367
      %v664 = vunpack.c.l.bf16 %v376
      %v665 = vunpack.c.l.bf16 %v385
      %v666 = vunpack.c.l.bf16 %v394
      %v667 = vunpack.c.l.bf16 %v403
      %v668 = vunpack.c.l.bf16 %v412
      %v669 = vunpack.c.l.bf16 %v421
      %v670 = vunpack.c.l.bf16 %v430
      %v671 = vunpack.c.l.bf16 %v439
      %v672 = vunpack.c.l.bf16 %v448
      %v673 = vunpack.c.l.bf16 %v457
      %v674 = vunpack.c.l.bf16 %v466
      %v675 = vunpack.c.l.bf16 %v475
      %v676 = vunpack.c.l.bf16 %v484
      %v677 = vunpack.c.l.bf16 %v493
      %v678 = vunpack.c.l.bf16 %v502
      %v679 = vunpack.c.l.bf16 %v511
      %v680 = vunpack.c.l.bf16 %v520
      %v681 = vunpack.c.l.bf16 %v529
      %v682 = vunpack.c.l.bf16 %v538
      %v683 = vunpack.c.l.bf16 %v547
      %v684 = vunpack.c.l.bf16 %v556
      %v685 = vunpack.c.l.bf16 %v565
      %v686 = vunpack.c.l.bf16 %v574
      %v687 = vunpack.c.l.bf16 %v583
      %v688 = vunpack.c.l.bf16 %v592
      %v689 = vmul.f32 %v593, %v657
      %v690 = vmul.f32 %v594, %v657
      %v691 = vmul.f32 %v595, %v658
      %v692 = vmul.f32 %v596, %v658
      %v693 = vmul.f32 %v597, %v659
      %v694 = vmul.f32 %v598, %v659
      %v695 = vmul.f32 %v599, %v660
      %v696 = vmul.f32 %v600, %v660
      %v697 = vmul.f32 %v601, %v661
      %v698 = vmul.f32 %v602, %v661
      %v699 = vmul.f32 %v603, %v662
      %v700 = vmul.f32 %v604, %v662
      %v701 = vmul.f32 %v605, %v663
      %v702 = vmul.f32 %v606, %v663
      %v703 = vmul.f32 %v607, %v664
      %v704 = vmul.f32 %v608, %v664
      %v705 = vmul.f32 %v609, %v665
      %v706 = vmul.f32 %v610, %v665
      %v707 = vmul.f32 %v611, %v666
      %v708 = vmul.f32 %v612, %v666
      %v709 = vmul.f32 %v613, %v667
      %v710 = vmul.f32 %v614, %v667
      %v711 = vmul.f32 %v615, %v668
      %v712 = vmul.f32 %v616, %v668
      %v713 = vmul.f32 %v617, %v669
      %v714 = vmul.f32 %v618, %v669
      %v715 = vmul.f32 %v619, %v670
      %v716 = vmul.f32 %v620, %v670
      %v717 = vmul.f32 %v621, %v671
      %v718 = vmul.f32 %v622, %v671
      %v719 = vmul.f32 %v623, %v672
      %v720 = vmul.f32 %v624, %v672
      %v721 = vmul.f32 %v625, %v673
      %v722 = vmul.f32 %v626, %v673
      %v723 = vmul.f32 %v627, %v674
      %v724 = vmul.f32 %v628, %v674
      %v725 = vmul.f32 %v629, %v675
      %v726 = vmul.f32 %v630, %v675
      %v727 = vmul.f32 %v631, %v676
      %v728 = vmul.f32 %v632, %v676
      %v729 = vmul.f32 %v633, %v677
      %v730 = vmul.f32 %v634, %v677
      %v731 = vmul.f32 %v635, %v678
      %v732 = vmul.f32 %v636, %v678
      %v733 = vmul.f32 %v637, %v679
      %v734 = vmul.f32 %v638, %v679
      %v735 = vmul.f32 %v639, %v680
      %v736 = vmul.f32 %v640, %v680
      %v737 = vmul.f32 %v641, %v681
      %v738 = vmul.f32 %v642, %v681
      %v739 = vmul.f32 %v643, %v682
      %v740 = vmul.f32 %v644, %v682
      %v741 = vmul.f32 %v645, %v683
      %v742 = vmul.f32 %v646, %v683
      %v743 = vmul.f32 %v647, %v684
      %v744 = vmul.f32 %v648, %v684
      %v745 = vmul.f32 %v649, %v685
      %v746 = vmul.f32 %v650, %v685
      %v747 = vmul.f32 %v651, %v686
      %v748 = vmul.f32 %v652, %v686
      %v749 = vmul.f32 %v653, %v687
      %v750 = vmul.f32 %v654, %v687
      %v751 = vmul.f32 %v655, %v688
      %v752 = vmul.f32 %v656, %v688
      %v753 = vpack.c.bf16 %v690, %v689
      %v754 = vpack.c.bf16 %v692, %v691
      %v755 = vpack.c.bf16 %v694, %v693
      %v756 = vpack.c.bf16 %v696, %v695
      %v757 = vpack.c.bf16 %v698, %v697
      %v758 = vpack.c.bf16 %v700, %v699
      %v759 = vpack.c.bf16 %v702, %v701
      %v760 = vpack.c.bf16 %v704, %v703
      %v761 = vpack.c.bf16 %v706, %v705
      %v762 = vpack.c.bf16 %v708, %v707
      %v763 = vpack.c.bf16 %v710, %v709
      %v764 = vpack.c.bf16 %v712, %v711
      %v765 = vpack.c.bf16 %v714, %v713
      %v766 = vpack.c.bf16 %v716, %v715
      %v767 = vpack.c.bf16 %v718, %v717
      %v768 = vpack.c.bf16 %v720, %v719
      %v769 = vpack.c.bf16 %v722, %v721
      %v770 = vpack.c.bf16 %v724, %v723
      %v771 = vpack.c.bf16 %v726, %v725
      %v772 = vpack.c.bf16 %v728, %v727
      %v773 = vpack.c.bf16 %v730, %v729
      %v774 = vpack.c.bf16 %v732, %v731
      %v775 = vpack.c.bf16 %v734, %v733
      %v776 = vpack.c.bf16 %v736, %v735
      %v777 = vpack.c.bf16 %v738, %v737
      %v778 = vpack.c.bf16 %v740, %v739
      %v779 = vpack.c.bf16 %v742, %v741
      %v780 = vpack.c.bf16 %v744, %v743
      %v781 = vpack.c.bf16 %v746, %v745
      %v782 = vpack.c.bf16 %v748, %v747
      %v783 = vpack.c.bf16 %v750, %v749
      %v784 = vpack.c.bf16 %v752, %v751
      %v785 = vld [vmem:[%s2] sm:$0xff]
      %v786 = vld [vmem:[%s2 + $0x8] sm:$0xff]
      %v787 = vld [vmem:[%s2 + $0x10] sm:$0xff]
      %v788 = vld [vmem:[%s2 + $0x18] sm:$0xff]
      %v789 = vld [vmem:[%s2 + $0x20] sm:$0xff]
      %v790 = vld [vmem:[%s2 + $0x28] sm:$0xff]
      %v791 = vld [vmem:[%s2 + $0x30] sm:$0xff]
      %v792 = vld [vmem:[%s2 + $0x38] sm:$0xff]
      %v793 = vld [vmem:[%s2 + $0x40] sm:$0xff]
      %v794 = vld [vmem:[%s2 + $0x48] sm:$0xff]
      %v795 = vld [vmem:[%s2 + $0x50] sm:$0xff]
      %v796 = vld [vmem:[%s2 + $0x58] sm:$0xff]
      %v797 = vld [vmem:[%s2 + $0x60] sm:$0xff]
      %v798 = vld [vmem:[%s2 + $0x68] sm:$0xff]
      %v799 = vld [vmem:[%s2 + $0x70] sm:$0xff]
      %v800 = vld [vmem:[%s2 + $0x78] sm:$0xff]
      %v801 = vld [vmem:[%s2 + $0x80] sm:$0xff]
      %v802 = vld [vmem:[%s2 + $0x88] sm:$0xff]
      %v803 = vld [vmem:[%s2 + $0x90] sm:$0xff]
      %v804 = vld [vmem:[%s2 + $0x98] sm:$0xff]
      %v805 = vld [vmem:[%s2 + $0xa0] sm:$0xff]
      %v806 = vld [vmem:[%s2 + $0xa8] sm:$0xff]
      %v807 = vld [vmem:[%s2 + $0xb0] sm:$0xff]
      %v808 = vld [vmem:[%s2 + $0xb8] sm:$0xff]
      %v809 = vld [vmem:[%s2 + $0xc0] sm:$0xff]
      %v810 = vld [vmem:[%s2 + $0xc8] sm:$0xff]
      %v811 = vld [vmem:[%s2 + $0xd0] sm:$0xff]
      %v812 = vld [vmem:[%s2 + $0xd8] sm:$0xff]
      %v813 = vld [vmem:[%s2 + $0xe0] sm:$0xff]
      %v814 = vld [vmem:[%s2 + $0xe8] sm:$0xff]
      %v815 = vld [vmem:[%s2 + $0xf0] sm:$0xff]
      %v816 = vld [vmem:[%s2 + $0xf8] sm:$0xff]
      %v817 = vpack.c.bf16 %v785, %v785
      %v818 = vpack.c.bf16 %v786, %v786
      %v819 = vpack.c.bf16 %v787, %v787
      %v820 = vpack.c.bf16 %v788, %v788
      %v821 = vpack.c.bf16 %v789, %v789
      %v822 = vpack.c.bf16 %v790, %v790
      %v823 = vpack.c.bf16 %v791, %v791
      %v824 = vpack.c.bf16 %v792, %v792
      %v825 = vpack.c.bf16 %v793, %v793
      %v826 = vpack.c.bf16 %v794, %v794
      %v827 = vpack.c.bf16 %v795, %v795
      %v828 = vpack.c.bf16 %v796, %v796
      %v829 = vpack.c.bf16 %v797, %v797
      %v830 = vpack.c.bf16 %v798, %v798
      %v831 = vpack.c.bf16 %v799, %v799
      %v832 = vpack.c.bf16 %v800, %v800
      %v833 = vpack.c.bf16 %v801, %v801
      %v834 = vpack.c.bf16 %v802, %v802
      %v835 = vpack.c.bf16 %v803, %v803
      %v836 = vpack.c.bf16 %v804, %v804
      %v837 = vpack.c.bf16 %v805, %v805
      %v838 = vpack.c.bf16 %v806, %v806
      %v839 = vpack.c.bf16 %v807, %v807
      %v840 = vpack.c.bf16 %v808, %v808
      %v841 = vpack.c.bf16 %v809, %v809
      %v842 = vpack.c.bf16 %v810, %v810
      %v843 = vpack.c.bf16 %v811, %v811
      %v844 = vpack.c.bf16 %v812, %v812
      %v845 = vpack.c.bf16 %v813, %v813
      %v846 = vpack.c.bf16 %v814, %v814
      %v847 = vpack.c.bf16 %v815, %v815
      %v848 = vpack.c.bf16 %v816, %v816
      %850 = vset.pattern.permute.xlu0 0
      %851 = vperm.xlu0 %850, %v817
      %v852 = vpop.permute.xlu0 %851
      %v855 = vunpack.c.l.s4 839922192
      %v856 = vunpack.c.0.s8 %v855
      %v857 = vperm.slane %v852, %v856
      %859 = vset.pattern.permute.xlu0 0
      %860 = vperm.xlu0 %859, %v818
      %v861 = vpop.permute.xlu0 %860
      %v864 = vunpack.c.l.s4 839922192
      %v865 = vunpack.c.0.s8 %v864
      %v866 = vperm.slane %v861, %v865
      %868 = vset.pattern.permute.xlu0 0
      %869 = vperm.xlu0 %868, %v819
      %v870 = vpop.permute.xlu0 %869
      %v873 = vunpack.c.l.s4 839922192
      %v874 = vunpack.c.0.s8 %v873
      %v875 = vperm.slane %v870, %v874
      %877 = vset.pattern.permute.xlu0 0
      %878 = vperm.xlu0 %877, %v820
      %v879 = vpop.permute.xlu0 %878
      %v882 = vunpack.c.l.s4 839922192
      %v883 = vunpack.c.0.s8 %v882
      %v884 = vperm.slane %v879, %v883
      %886 = vset.pattern.permute.xlu0 0
      %887 = vperm.xlu0 %886, %v821
      %v888 = vpop.permute.xlu0 %887
      %v891 = vunpack.c.l.s4 839922192
      %v892 = vunpack.c.0.s8 %v891
      %v893 = vperm.slane %v888, %v892
      %895 = vset.pattern.permute.xlu0 0
      %896 = vperm.xlu0 %895, %v822
      %v897 = vpop.permute.xlu0 %896
      %v900 = vunpack.c.l.s4 839922192
      %v901 = vunpack.c.0.s8 %v900
      %v902 = vperm.slane %v897, %v901
      %904 = vset.pattern.permute.xlu0 0
      %905 = vperm.xlu0 %904, %v823
      %v906 = vpop.permute.xlu0 %905
      %v909 = vunpack.c.l.s4 839922192
      %v910 = vunpack.c.0.s8 %v909
      %v911 = vperm.slane %v906, %v910
      %913 = vset.pattern.permute.xlu0 0
      %914 = vperm.xlu0 %913, %v824
      %v915 = vpop.permute.xlu0 %914
      %v918 = vunpack.c.l.s4 839922192
      %v919 = vunpack.c.0.s8 %v918
      %v920 = vperm.slane %v915, %v919
      %922 = vset.pattern.permute.xlu0 0
      %923 = vperm.xlu0 %922, %v825
      %v924 = vpop.permute.xlu0 %923
      %v927 = vunpack.c.l.s4 839922192
      %v928 = vunpack.c.0.s8 %v927
      %v929 = vperm.slane %v924, %v928
      %931 = vset.pattern.permute.xlu0 0
      %932 = vperm.xlu0 %931, %v826
      %v933 = vpop.permute.xlu0 %932
      %v936 = vunpack.c.l.s4 839922192
      %v937 = vunpack.c.0.s8 %v936
      %v938 = vperm.slane %v933, %v937
      %940 = vset.pattern.permute.xlu0 0
      %941 = vperm.xlu0 %940, %v827
      %v942 = vpop.permute.xlu0 %941
      %v945 = vunpack.c.l.s4 839922192
      %v946 = vunpack.c.0.s8 %v945
      %v947 = vperm.slane %v942, %v946
      %949 = vset.pattern.permute.xlu0 0
      %950 = vperm.xlu0 %949, %v828
      %v951 = vpop.permute.xlu0 %950
      %v954 = vunpack.c.l.s4 839922192
      %v955 = vunpack.c.0.s8 %v954
      %v956 = vperm.slane %v951, %v955
      %958 = vset.pattern.permute.xlu0 0
      %959 = vperm.xlu0 %958, %v829
      %v960 = vpop.permute.xlu0 %959
      %v963 = vunpack.c.l.s4 839922192
      %v964 = vunpack.c.0.s8 %v963
      %v965 = vperm.slane %v960, %v964
      %967 = vset.pattern.permute.xlu0 0
      %968 = vperm.xlu0 %967, %v830
      %v969 = vpop.permute.xlu0 %968
      %v972 = vunpack.c.l.s4 839922192
      %v973 = vunpack.c.0.s8 %v972
      %v974 = vperm.slane %v969, %v973
      %976 = vset.pattern.permute.xlu0 0
      %977 = vperm.xlu0 %976, %v831
      %v978 = vpop.permute.xlu0 %977
      %v981 = vunpack.c.l.s4 839922192
      %v982 = vunpack.c.0.s8 %v981
      %v983 = vperm.slane %v978, %v982
      %985 = vset.pattern.permute.xlu0 0
      %986 = vperm.xlu0 %985, %v832
      %v987 = vpop.permute.xlu0 %986
      %v990 = vunpack.c.l.s4 839922192
      %v991 = vunpack.c.0.s8 %v990
      %v992 = vperm.slane %v987, %v991
      %994 = vset.pattern.permute.xlu0 0
      %995 = vperm.xlu0 %994, %v833
      %v996 = vpop.permute.xlu0 %995
      %v999 = vunpack.c.l.s4 839922192
      %v1000 = vunpack.c.0.s8 %v999
      %v1001 = vperm.slane %v996, %v1000
      %1003 = vset.pattern.permute.xlu0 0
      %1004 = vperm.xlu0 %1003, %v834
      %v1005 = vpop.permute.xlu0 %1004
      %v1008 = vunpack.c.l.s4 839922192
      %v1009 = vunpack.c.0.s8 %v1008
      %v1010 = vperm.slane %v1005, %v1009
      %1012 = vset.pattern.permute.xlu0 0
      %1013 = vperm.xlu0 %1012, %v835
      %v1014 = vpop.permute.xlu0 %1013
      %v1017 = vunpack.c.l.s4 839922192
      %v1018 = vunpack.c.0.s8 %v1017
      %v1019 = vperm.slane %v1014, %v1018
      %1021 = vset.pattern.permute.xlu0 0
      %1022 = vperm.xlu0 %1021, %v836
      %v1023 = vpop.permute.xlu0 %1022
      %v1026 = vunpack.c.l.s4 839922192
      %v1027 = vunpack.c.0.s8 %v1026
      %v1028 = vperm.slane %v1023, %v1027
      %1030 = vset.pattern.permute.xlu0 0
      %1031 = vperm.xlu0 %1030, %v837
      %v1032 = vpop.permute.xlu0 %1031
      %v1035 = vunpack.c.l.s4 839922192
      %v1036 = vunpack.c.0.s8 %v1035
      %v1037 = vperm.slane %v1032, %v1036
      %1039 = vset.pattern.permute.xlu0 0
      %1040 = vperm.xlu0 %1039, %v838
      %v1041 = vpop.permute.xlu0 %1040
      %v1044 = vunpack.c.l.s4 839922192
      %v1045 = vunpack.c.0.s8 %v1044
      %v1046 = vperm.slane %v1041, %v1045
      %1048 = vset.pattern.permute.xlu0 0
      %1049 = vperm.xlu0 %1048, %v839
      %v1050 = vpop.permute.xlu0 %1049
      %v1053 = vunpack.c.l.s4 839922192
      %v1054 = vunpack.c.0.s8 %v1053
      %v1055 = vperm.slane %v1050, %v1054
      %1057 = vset.pattern.permute.xlu0 0
      %1058 = vperm.xlu0 %1057, %v840
      %v1059 = vpop.permute.xlu0 %1058
      %v1062 = vunpack.c.l.s4 839922192
      %v1063 = vunpack.c.0.s8 %v1062
      %v1064 = vperm.slane %v1059, %v1063
      %1066 = vset.pattern.permute.xlu0 0
      %1067 = vperm.xlu0 %1066, %v841
      %v1068 = vpop.permute.xlu0 %1067
      %v1071 = vunpack.c.l.s4 839922192
      %v1072 = vunpack.c.0.s8 %v1071
      %v1073 = vperm.slane %v1068, %v1072
      %1075 = vset.pattern.permute.xlu0 0
      %1076 = vperm.xlu0 %1075, %v842
      %v1077 = vpop.permute.xlu0 %1076
      %v1080 = vunpack.c.l.s4 839922192
      %v1081 = vunpack.c.0.s8 %v1080
      %v1082 = vperm.slane %v1077, %v1081
      %1084 = vset.pattern.permute.xlu0 0
      %1085 = vperm.xlu0 %1084, %v843
      %v1086 = vpop.permute.xlu0 %1085
      %v1089 = vunpack.c.l.s4 839922192
      %v1090 = vunpack.c.0.s8 %v1089
      %v1091 = vperm.slane %v1086, %v1090
      %1093 = vset.pattern.permute.xlu0 0
      %1094 = vperm.xlu0 %1093, %v844
      %v1095 = vpop.permute.xlu0 %1094
      %v1098 = vunpack.c.l.s4 839922192
      %v1099 = vunpack.c.0.s8 %v1098
      %v1100 = vperm.slane %v1095, %v1099
      %1102 = vset.pattern.permute.xlu0 0
      %1103 = vperm.xlu0 %1102, %v845
      %v1104 = vpop.permute.xlu0 %1103
      %v1107 = vunpack.c.l.s4 839922192
      %v1108 = vunpack.c.0.s8 %v1107
      %v1109 = vperm.slane %v1104, %v1108
      %1111 = vset.pattern.permute.xlu0 0
      %1112 = vperm.xlu0 %1111, %v846
      %v1113 = vpop.permute.xlu0 %1112
      %v1116 = vunpack.c.l.s4 839922192
      %v1117 = vunpack.c.0.s8 %v1116
      %v1118 = vperm.slane %v1113, %v1117
      %1120 = vset.pattern.permute.xlu0 0
      %1121 = vperm.xlu0 %1120, %v847
      %v1122 = vpop.permute.xlu0 %1121
      %v1125 = vunpack.c.l.s4 839922192
      %v1126 = vunpack.c.0.s8 %v1125
      %v1127 = vperm.slane %v1122, %v1126
      %1129 = vset.pattern.permute.xlu0 0
      %1130 = vperm.xlu0 %1129, %v848
      %v1131 = vpop.permute.xlu0 %1130
      %v1134 = vunpack.c.l.s4 839922192
      %v1135 = vunpack.c.0.s8 %v1134
      %v1136 = vperm.slane %v1131, %v1135
      %v1137 = vunpack.c.l.bf16 %v753
      %v1138 = vunpack.c.h.bf16 %v753
      %v1139 = vunpack.c.l.bf16 %v754
      %v1140 = vunpack.c.h.bf16 %v754
      %v1141 = vunpack.c.l.bf16 %v755
      %v1142 = vunpack.c.h.bf16 %v755
      %v1143 = vunpack.c.l.bf16 %v756
      %v1144 = vunpack.c.h.bf16 %v756
      %v1145 = vunpack.c.l.bf16 %v757
      %v1146 = vunpack.c.h.bf16 %v757
      %v1147 = vunpack.c.l.bf16 %v758
      %v1148 = vunpack.c.h.bf16 %v758
      %v1149 = vunpack.c.l.bf16 %v759
      %v1150 = vunpack.c.h.bf16 %v759
      %v1151 = vunpack.c.l.bf16 %v760
      %v1152 = vunpack.c.h.bf16 %v760
      %v1153 = vunpack.c.l.bf16 %v761
      %v1154 = vunpack.c.h.bf16 %v761
      %v1155 = vunpack.c.l.bf16 %v762
      %v1156 = vunpack.c.h.bf16 %v762
      %v1157 = vunpack.c.l.bf16 %v763
      %v1158 = vunpack.c.h.bf16 %v763
      %v1159 = vunpack.c.l.bf16 %v764
      %v1160 = vunpack.c.h.bf16 %v764
      %v1161 = vunpack.c.l.bf16 %v765
      %v1162 = vunpack.c.h.bf16 %v765
      %v1163 = vunpack.c.l.bf16 %v766
      %v1164 = vunpack.c.h.bf16 %v766
      %v1165 = vunpack.c.l.bf16 %v767
      %v1166 = vunpack.c.h.bf16 %v767
      %v1167 = vunpack.c.l.bf16 %v768
      %v1168 = vunpack.c.h.bf16 %v768
      %v1169 = vunpack.c.l.bf16 %v769
      %v1170 = vunpack.c.h.bf16 %v769
      %v1171 = vunpack.c.l.bf16 %v770
      %v1172 = vunpack.c.h.bf16 %v770
      %v1173 = vunpack.c.l.bf16 %v771
      %v1174 = vunpack.c.h.bf16 %v771
      %v1175 = vunpack.c.l.bf16 %v772
      %v1176 = vunpack.c.h.bf16 %v772
      %v1177 = vunpack.c.l.bf16 %v773
      %v1178 = vunpack.c.h.bf16 %v773
      %v1179 = vunpack.c.l.bf16 %v774
      %v1180 = vunpack.c.h.bf16 %v774
      %v1181 = vunpack.c.l.bf16 %v775
      %v1182 = vunpack.c.h.bf16 %v775
      %v1183 = vunpack.c.l.bf16 %v776
      %v1184 = vunpack.c.h.bf16 %v776
      %v1185 = vunpack.c.l.bf16 %v777
      %v1186 = vunpack.c.h.bf16 %v777
      %v1187 = vunpack.c.l.bf16 %v778
      %v1188 = vunpack.c.h.bf16 %v778
      %v1189 = vunpack.c.l.bf16 %v779
      %v1190 = vunpack.c.h.bf16 %v779
      %v1191 = vunpack.c.l.bf16 %v780
      %v1192 = vunpack.c.h.bf16 %v780
      %v1193 = vunpack.c.l.bf16 %v781
      %v1194 = vunpack.c.h.bf16 %v781
      %v1195 = vunpack.c.l.bf16 %v782
      %v1196 = vunpack.c.h.bf16 %v782
      %v1197 = vunpack.c.l.bf16 %v783
      %v1198 = vunpack.c.h.bf16 %v783
      %v1199 = vunpack.c.l.bf16 %v784
      %v1200 = vunpack.c.h.bf16 %v784
      %v1201 = vunpack.c.l.bf16 %v857
      %v1202 = vunpack.c.l.bf16 %v866
      %v1203 = vunpack.c.l.bf16 %v875
      %v1204 = vunpack.c.l.bf16 %v884
      %v1205 = vunpack.c.l.bf16 %v893
      %v1206 = vunpack.c.l.bf16 %v902
      %v1207 = vunpack.c.l.bf16 %v911
      %v1208 = vunpack.c.l.bf16 %v920
      %v1209 = vunpack.c.l.bf16 %v929
      %v1210 = vunpack.c.l.bf16 %v938
      %v1211 = vunpack.c.l.bf16 %v947
      %v1212 = vunpack.c.l.bf16 %v956
      %v1213 = vunpack.c.l.bf16 %v965
      %v1214 = vunpack.c.l.bf16 %v974
      %v1215 = vunpack.c.l.bf16 %v983
      %v1216 = vunpack.c.l.bf16 %v992
      %v1217 = vunpack.c.l.bf16 %v1001
      %v1218 = vunpack.c.l.bf16 %v1010
      %v1219 = vunpack.c.l.bf16 %v1019
      %v1220 = vunpack.c.l.bf16 %v1028
      %v1221 = vunpack.c.l.bf16 %v1037
      %v1222 = vunpack.c.l.bf16 %v1046
      %v1223 = vunpack.c.l.bf16 %v1055
      %v1224 = vunpack.c.l.bf16 %v1064
      %v1225 = vunpack.c.l.bf16 %v1073
      %v1226 = vunpack.c.l.bf16 %v1082
      %v1227 = vunpack.c.l.bf16 %v1091
      %v1228 = vunpack.c.l.bf16 %v1100
      %v1229 = vunpack.c.l.bf16 %v1109
      %v1230 = vunpack.c.l.bf16 %v1118
      %v1231 = vunpack.c.l.bf16 %v1127
      %v1232 = vunpack.c.l.bf16 %v1136
      %v1233 = vadd.f32 %v1137, %v1201
      %v1234 = vadd.f32 %v1138, %v1201
      %v1235 = vadd.f32 %v1139, %v1202
      %v1236 = vadd.f32 %v1140, %v1202
      %v1237 = vadd.f32 %v1141, %v1203
      %v1238 = vadd.f32 %v1142, %v1203
      %v1239 = vadd.f32 %v1143, %v1204
      %v1240 = vadd.f32 %v1144, %v1204
      %v1241 = vadd.f32 %v1145, %v1205
      %v1242 = vadd.f32 %v1146, %v1205
      %v1243 = vadd.f32 %v1147, %v1206
      %v1244 = vadd.f32 %v1148, %v1206
      %v1245 = vadd.f32 %v1149, %v1207
      %v1246 = vadd.f32 %v1150, %v1207
      %v1247 = vadd.f32 %v1151, %v1208
      %v1248 = vadd.f32 %v1152, %v1208
      %v1249 = vadd.f32 %v1153, %v1209
      %v1250 = vadd.f32 %v1154, %v1209
      %v1251 = vadd.f32 %v1155, %v1210
      %v1252 = vadd.f32 %v1156, %v1210
      %v1253 = vadd.f32 %v1157, %v1211
      %v1254 = vadd.f32 %v1158, %v1211
      %v1255 = vadd.f32 %v1159, %v1212
      %v1256 = vadd.f32 %v1160, %v1212
      %v1257 = vadd.f32 %v1161, %v1213
      %v1258 = vadd.f32 %v1162, %v1213
      %v1259 = vadd.f32 %v1163, %v1214
      %v1260 = vadd.f32 %v1164, %v1214
      %v1261 = vadd.f32 %v1165, %v1215
      %v1262 = vadd.f32 %v1166, %v1215
      %v1263 = vadd.f32 %v1167, %v1216
      %v1264 = vadd.f32 %v1168, %v1216
      %v1265 = vadd.f32 %v1169, %v1217
      %v1266 = vadd.f32 %v1170, %v1217
      %v1267 = vadd.f32 %v1171, %v1218
      %v1268 = vadd.f32 %v1172, %v1218
      %v1269 = vadd.f32 %v1173, %v1219
      %v1270 = vadd.f32 %v1174, %v1219
      %v1271 = vadd.f32 %v1175, %v1220
      %v1272 = vadd.f32 %v1176, %v1220
      %v1273 = vadd.f32 %v1177, %v1221
      %v1274 = vadd.f32 %v1178, %v1221
      %v1275 = vadd.f32 %v1179, %v1222
      %v1276 = vadd.f32 %v1180, %v1222
      %v1277 = vadd.f32 %v1181, %v1223
      %v1278 = vadd.f32 %v1182, %v1223
      %v1279 = vadd.f32 %v1183, %v1224
      %v1280 = vadd.f32 %v1184, %v1224
      %v1281 = vadd.f32 %v1185, %v1225
      %v1282 = vadd.f32 %v1186, %v1225
      %v1283 = vadd.f32 %v1187, %v1226
      %v1284 = vadd.f32 %v1188, %v1226
      %v1285 = vadd.f32 %v1189, %v1227
      %v1286 = vadd.f32 %v1190, %v1227
      %v1287 = vadd.f32 %v1191, %v1228
      %v1288 = vadd.f32 %v1192, %v1228
      %v1289 = vadd.f32 %v1193, %v1229
      %v1290 = vadd.f32 %v1194, %v1229
      %v1291 = vadd.f32 %v1195, %v1230
      %v1292 = vadd.f32 %v1196, %v1230
      %v1293 = vadd.f32 %v1197, %v1231
      %v1294 = vadd.f32 %v1198, %v1231
      %v1295 = vadd.f32 %v1199, %v1232
      %v1296 = vadd.f32 %v1200, %v1232
      %v1297 = vpack.c.bf16 %v1234, %v1233
      %v1298 = vpack.c.bf16 %v1236, %v1235
      %v1299 = vpack.c.bf16 %v1238, %v1237
      %v1300 = vpack.c.bf16 %v1240, %v1239
      %v1301 = vpack.c.bf16 %v1242, %v1241
      %v1302 = vpack.c.bf16 %v1244, %v1243
      %v1303 = vpack.c.bf16 %v1246, %v1245
      %v1304 = vpack.c.bf16 %v1248, %v1247
      %v1305 = vpack.c.bf16 %v1250, %v1249
      %v1306 = vpack.c.bf16 %v1252, %v1251
      %v1307 = vpack.c.bf16 %v1254, %v1253
      %v1308 = vpack.c.bf16 %v1256, %v1255
      %v1309 = vpack.c.bf16 %v1258, %v1257
      %v1310 = vpack.c.bf16 %v1260, %v1259
      %v1311 = vpack.c.bf16 %v1262, %v1261
      %v1312 = vpack.c.bf16 %v1264, %v1263
      %v1313 = vpack.c.bf16 %v1266, %v1265
      %v1314 = vpack.c.bf16 %v1268, %v1267
      %v1315 = vpack.c.bf16 %v1270, %v1269
      %v1316 = vpack.c.bf16 %v1272, %v1271
      %v1317 = vpack.c.bf16 %v1274, %v1273
      %v1318 = vpack.c.bf16 %v1276, %v1275
      %v1319 = vpack.c.bf16 %v1278, %v1277
      %v1320 = vpack.c.bf16 %v1280, %v1279
      %v1321 = vpack.c.bf16 %v1282, %v1281
      %v1322 = vpack.c.bf16 %v1284, %v1283
      %v1323 = vpack.c.bf16 %v1286, %v1285
      %v1324 = vpack.c.bf16 %v1288, %v1287
      %v1325 = vpack.c.bf16 %v1290, %v1289
      %v1326 = vpack.c.bf16 %v1292, %v1291
      %v1327 = vpack.c.bf16 %v1294, %v1293
      %v1328 = vpack.c.bf16 %v1296, %v1295
      %v1329 = vunpack.c.l.bf16 %v1297
      %v1330 = vunpack.c.h.bf16 %v1297
      %v1331 = vunpack.c.l.bf16 %v1298
      %v1332 = vunpack.c.h.bf16 %v1298
      %v1333 = vunpack.c.l.bf16 %v1299
      %v1334 = vunpack.c.h.bf16 %v1299
      %v1335 = vunpack.c.l.bf16 %v1300
      %v1336 = vunpack.c.h.bf16 %v1300
      %v1337 = vunpack.c.l.bf16 %v1301
      %v1338 = vunpack.c.h.bf16 %v1301
      %v1339 = vunpack.c.l.bf16 %v1302
      %v1340 = vunpack.c.h.bf16 %v1302
      %v1341 = vunpack.c.l.bf16 %v1303
      %v1342 = vunpack.c.h.bf16 %v1303
      %v1343 = vunpack.c.l.bf16 %v1304
      %v1344 = vunpack.c.h.bf16 %v1304
      %v1345 = vunpack.c.l.bf16 %v1305
      %v1346 = vunpack.c.h.bf16 %v1305
      %v1347 = vunpack.c.l.bf16 %v1306
      %v1348 = vunpack.c.h.bf16 %v1306
      %v1349 = vunpack.c.l.bf16 %v1307
      %v1350 = vunpack.c.h.bf16 %v1307
      %v1351 = vunpack.c.l.bf16 %v1308
      %v1352 = vunpack.c.h.bf16 %v1308
      %v1353 = vunpack.c.l.bf16 %v1309
      %v1354 = vunpack.c.h.bf16 %v1309
      %v1355 = vunpack.c.l.bf16 %v1310
      %v1356 = vunpack.c.h.bf16 %v1310
      %v1357 = vunpack.c.l.bf16 %v1311
      %v1358 = vunpack.c.h.bf16 %v1311
      %v1359 = vunpack.c.l.bf16 %v1312
      %v1360 = vunpack.c.h.bf16 %v1312
      %v1361 = vunpack.c.l.bf16 %v1313
      %v1362 = vunpack.c.h.bf16 %v1313
      %v1363 = vunpack.c.l.bf16 %v1314
      %v1364 = vunpack.c.h.bf16 %v1314
      %v1365 = vunpack.c.l.bf16 %v1315
      %v1366 = vunpack.c.h.bf16 %v1315
      %v1367 = vunpack.c.l.bf16 %v1316
      %v1368 = vunpack.c.h.bf16 %v1316
      %v1369 = vunpack.c.l.bf16 %v1317
      %v1370 = vunpack.c.h.bf16 %v1317
      %v1371 = vunpack.c.l.bf16 %v1318
      %v1372 = vunpack.c.h.bf16 %v1318
      %v1373 = vunpack.c.l.bf16 %v1319
      %v1374 = vunpack.c.h.bf16 %v1319
      %v1375 = vunpack.c.l.bf16 %v1320
      %v1376 = vunpack.c.h.bf16 %v1320
      %v1377 = vunpack.c.l.bf16 %v1321
      %v1378 = vunpack.c.h.bf16 %v1321
      %v1379 = vunpack.c.l.bf16 %v1322
      %v1380 = vunpack.c.h.bf16 %v1322
      %v1381 = vunpack.c.l.bf16 %v1323
      %v1382 = vunpack.c.h.bf16 %v1323
      %v1383 = vunpack.c.l.bf16 %v1324
      %v1384 = vunpack.c.h.bf16 %v1324
      %v1385 = vunpack.c.l.bf16 %v1325
      %v1386 = vunpack.c.h.bf16 %v1325
      %v1387 = vunpack.c.l.bf16 %v1326
      %v1388 = vunpack.c.h.bf16 %v1326
      %v1389 = vunpack.c.l.bf16 %v1327
      %v1390 = vunpack.c.h.bf16 %v1327
      %v1391 = vunpack.c.l.bf16 %v1328
      %v1392 = vunpack.c.h.bf16 %v1328
      %v1393 = vmax.f32 %v1329, 0.0
      %v1394 = vmax.f32 %v1330, 0.0
      %v1395 = vmax.f32 %v1331, 0.0
      %v1396 = vmax.f32 %v1332, 0.0
      %v1397 = vmax.f32 %v1333, 0.0
      %v1398 = vmax.f32 %v1334, 0.0
      %v1399 = vmax.f32 %v1335, 0.0
      %v1400 = vmax.f32 %v1336, 0.0
      %v1401 = vmax.f32 %v1337, 0.0
      %v1402 = vmax.f32 %v1338, 0.0
      %v1403 = vmax.f32 %v1339, 0.0
      %v1404 = vmax.f32 %v1340, 0.0
      %v1405 = vmax.f32 %v1341, 0.0
      %v1406 = vmax.f32 %v1342, 0.0
      %v1407 = vmax.f32 %v1343, 0.0
      %v1408 = vmax.f32 %v1344, 0.0
      %v1409 = vmax.f32 %v1345, 0.0
      %v1410 = vmax.f32 %v1346, 0.0
      %v1411 = vmax.f32 %v1347, 0.0
      %v1412 = vmax.f32 %v1348, 0.0
      %v1413 = vmax.f32 %v1349, 0.0
      %v1414 = vmax.f32 %v1350, 0.0
      %v1415 = vmax.f32 %v1351, 0.0
      %v1416 = vmax.f32 %v1352, 0.0
      %v1417 = vmax.f32 %v1353, 0.0
      %v1418 = vmax.f32 %v1354, 0.0
      %v1419 = vmax.f32 %v1355, 0.0
      %v1420 = vmax.f32 %v1356, 0.0
      %v1421 = vmax.f32 %v1357, 0.0
      %v1422 = vmax.f32 %v1358, 0.0
      %v1423 = vmax.f32 %v1359, 0.0
      %v1424 = vmax.f32 %v1360, 0.0
      %v1425 = vmax.f32 %v1361, 0.0
      %v1426 = vmax.f32 %v1362, 0.0
      %v1427 = vmax.f32 %v1363, 0.0
      %v1428 = vmax.f32 %v1364, 0.0
      %v1429 = vmax.f32 %v1365, 0.0
      %v1430 = vmax.f32 %v1366, 0.0
      %v1431 = vmax.f32 %v1367, 0.0
      %v1432 = vmax.f32 %v1368, 0.0
      %v1433 = vmax.f32 %v1369, 0.0
      %v1434 = vmax.f32 %v1370, 0.0
      %v1435 = vmax.f32 %v1371, 0.0
      %v1436 = vmax.f32 %v1372, 0.0
      %v1437 = vmax.f32 %v1373, 0.0
      %v1438 = vmax.f32 %v1374, 0.0
      %v1439 = vmax.f32 %v1375, 0.0
      %v1440 = vmax.f32 %v1376, 0.0
      %v1441 = vmax.f32 %v1377, 0.0
      %v1442 = vmax.f32 %v1378, 0.0
      %v1443 = vmax.f32 %v1379, 0.0
      %v1444 = vmax.f32 %v1380, 0.0
      %v1445 = vmax.f32 %v1381, 0.0
      %v1446 = vmax.f32 %v1382, 0.0
      %v1447 = vmax.f32 %v1383, 0.0
      %v1448 = vmax.f32 %v1384, 0.0
      %v1449 = vmax.f32 %v1385, 0.0
      %v1450 = vmax.f32 %v1386, 0.0
      %v1451 = vmax.f32 %v1387, 0.0
      %v1452 = vmax.f32 %v1388, 0.0
      %v1453 = vmax.f32 %v1389, 0.0
      %v1454 = vmax.f32 %v1390, 0.0
      %v1455 = vmax.f32 %v1391, 0.0
      %v1456 = vmax.f32 %v1392, 0.0
      %v1457 = vpack.c.bf16 %v1395, %v1393
      %v1458 = vpack.c.bf16 %v1396, %v1394
      %v1459 = vpack.c.bf16 %v1399, %v1397
      %v1460 = vpack.c.bf16 %v1400, %v1398
      %v1461 = vpack.c.bf16 %v1403, %v1401
      %v1462 = vpack.c.bf16 %v1404, %v1402
      %v1463 = vpack.c.bf16 %v1407, %v1405
      %v1464 = vpack.c.bf16 %v1408, %v1406
      %v1465 = vpack.c.bf16 %v1411, %v1409
      %v1466 = vpack.c.bf16 %v1412, %v1410
      %v1467 = vpack.c.bf16 %v1415, %v1413
      %v1468 = vpack.c.bf16 %v1416, %v1414
      %v1469 = vpack.c.bf16 %v1419, %v1417
      %v1470 = vpack.c.bf16 %v1420, %v1418
      %v1471 = vpack.c.bf16 %v1423, %v1421
      %v1472 = vpack.c.bf16 %v1424, %v1422
      %v1473 = vpack.c.bf16 %v1427, %v1425
      %v1474 = vpack.c.bf16 %v1428, %v1426
      %v1475 = vpack.c.bf16 %v1431, %v1429
      %v1476 = vpack.c.bf16 %v1432, %v1430
      %v1477 = vpack.c.bf16 %v1435, %v1433
      %v1478 = vpack.c.bf16 %v1436, %v1434
      %v1479 = vpack.c.bf16 %v1439, %v1437
      %v1480 = vpack.c.bf16 %v1440, %v1438
      %v1481 = vpack.c.bf16 %v1443, %v1441
      %v1482 = vpack.c.bf16 %v1444, %v1442
      %v1483 = vpack.c.bf16 %v1447, %v1445
      %v1484 = vpack.c.bf16 %v1448, %v1446
      %v1485 = vpack.c.bf16 %v1451, %v1449
      %v1486 = vpack.c.bf16 %v1452, %v1450
      %v1487 = vpack.c.bf16 %v1455, %v1453
      %v1488 = vpack.c.bf16 %v1456, %v1454
      %v1489 = vunpack.c.l.bf16 %v1457
      %v1490 = vunpack.c.l.bf16 %v1458
      %v1491 = vunpack.c.h.bf16 %v1457
      %v1492 = vunpack.c.h.bf16 %v1458
      %v1493 = vunpack.c.l.bf16 %v1459
      %v1494 = vunpack.c.l.bf16 %v1460
      %v1495 = vunpack.c.h.bf16 %v1459
      %v1496 = vunpack.c.h.bf16 %v1460
      %v1497 = vunpack.c.l.bf16 %v1461
      %v1498 = vunpack.c.l.bf16 %v1462
      %v1499 = vunpack.c.h.bf16 %v1461
      %v1500 = vunpack.c.h.bf16 %v1462
      %v1501 = vunpack.c.l.bf16 %v1463
      %v1502 = vunpack.c.l.bf16 %v1464
      %v1503 = vunpack.c.h.bf16 %v1463
      %v1504 = vunpack.c.h.bf16 %v1464
      %v1505 = vunpack.c.l.bf16 %v1465
      %v1506 = vunpack.c.l.bf16 %v1466
      %v1507 = vunpack.c.h.bf16 %v1465
      %v1508 = vunpack.c.h.bf16 %v1466
      %v1509 = vunpack.c.l.bf16 %v1467
      %v1510 = vunpack.c.l.bf16 %v1468
      %v1511 = vunpack.c.h.bf16 %v1467
      %v1512 = vunpack.c.h.bf16 %v1468
      %v1513 = vunpack.c.l.bf16 %v1469
      %v1514 = vunpack.c.l.bf16 %v1470
      %v1515 = vunpack.c.h.bf16 %v1469
      %v1516 = vunpack.c.h.bf16 %v1470
      %v1517 = vunpack.c.l.bf16 %v1471
      %v1518 = vunpack.c.l.bf16 %v1472
      %v1519 = vunpack.c.h.bf16 %v1471
      %v1520 = vunpack.c.h.bf16 %v1472
      %v1521 = vunpack.c.l.bf16 %v1473
      %v1522 = vunpack.c.l.bf16 %v1474
      %v1523 = vunpack.c.h.bf16 %v1473
      %v1524 = vunpack.c.h.bf16 %v1474
      %v1525 = vunpack.c.l.bf16 %v1475
      %v1526 = vunpack.c.l.bf16 %v1476
      %v1527 = vunpack.c.h.bf16 %v1475
      %v1528 = vunpack.c.h.bf16 %v1476
      %v1529 = vunpack.c.l.bf16 %v1477
      %v1530 = vunpack.c.l.bf16 %v1478
      %v1531 = vunpack.c.h.bf16 %v1477
      %v1532 = vunpack.c.h.bf16 %v1478
      %v1533 = vunpack.c.l.bf16 %v1479
      %v1534 = vunpack.c.l.bf16 %v1480
      %v1535 = vunpack.c.h.bf16 %v1479
      %v1536 = vunpack.c.h.bf16 %v1480
      %v1537 = vunpack.c.l.bf16 %v1481
      %v1538 = vunpack.c.l.bf16 %v1482
      %v1539 = vunpack.c.h.bf16 %v1481
      %v1540 = vunpack.c.h.bf16 %v1482
      %v1541 = vunpack.c.l.bf16 %v1483
      %v1542 = vunpack.c.l.bf16 %v1484
      %v1543 = vunpack.c.h.bf16 %v1483
      %v1544 = vunpack.c.h.bf16 %v1484
      %v1545 = vunpack.c.l.bf16 %v1485
      %v1546 = vunpack.c.l.bf16 %v1486
      %v1547 = vunpack.c.h.bf16 %v1485
      %v1548 = vunpack.c.h.bf16 %v1486
      %v1549 = vunpack.c.l.bf16 %v1487
      %v1550 = vunpack.c.l.bf16 %v1488
      %v1551 = vunpack.c.h.bf16 %v1487
      %v1552 = vunpack.c.h.bf16 %v1488
      %v1553 = vmax.f32 %v1489, %v1490
      %1554 = vmax.xlane.f32.xlu0 %v1553
      %v1555 = vpop.xlane.xlu0 %1554
      %v1556 = vmax.f32 %v1491, %v1492
      %1557 = vmax.xlane.f32.xlu0 %v1556
      %v1558 = vpop.xlane.xlu0 %1557
      %v1559 = vmax.f32 %v1493, %v1494
      %1560 = vmax.xlane.f32.xlu0 %v1559
      %v1561 = vpop.xlane.xlu0 %1560
      %v1562 = vmax.f32 %v1495, %v1496
      %1563 = vmax.xlane.f32.xlu0 %v1562
      %v1564 = vpop.xlane.xlu0 %1563
      %v1565 = vmax.f32 %v1497, %v1498
      %1566 = vmax.xlane.f32.xlu0 %v1565
      %v1567 = vpop.xlane.xlu0 %1566
      %v1568 = vmax.f32 %v1499, %v1500
      %1569 = vmax.xlane.f32.xlu0 %v1568
      %v1570 = vpop.xlane.xlu0 %1569
      %v1571 = vmax.f32 %v1501, %v1502
      %1572 = vmax.xlane.f32.xlu0 %v1571
      %v1573 = vpop.xlane.xlu0 %1572
      %v1574 = vmax.f32 %v1503, %v1504
      %1575 = vmax.xlane.f32.xlu0 %v1574
      %v1576 = vpop.xlane.xlu0 %1575
      %v1577 = vmax.f32 %v1505, %v1506
      %1578 = vmax.xlane.f32.xlu0 %v1577
      %v1579 = vpop.xlane.xlu0 %1578
      %v1580 = vmax.f32 %v1507, %v1508
      %1581 = vmax.xlane.f32.xlu0 %v1580
      %v1582 = vpop.xlane.xlu0 %1581
      %v1583 = vmax.f32 %v1509, %v1510
      %1584 = vmax.xlane.f32.xlu0 %v1583
      %v1585 = vpop.xlane.xlu0 %1584
      %v1586 = vmax.f32 %v1511, %v1512
      %1587 = vmax.xlane.f32.xlu0 %v1586
      %v1588 = vpop.xlane.xlu0 %1587
      %v1589 = vmax.f32 %v1513, %v1514
      %1590 = vmax.xlane.f32.xlu0 %v1589
      %v1591 = vpop.xlane.xlu0 %1590
      %v1592 = vmax.f32 %v1515, %v1516
      %1593 = vmax.xlane.f32.xlu0 %v1592
      %v1594 = vpop.xlane.xlu0 %1593
      %v1595 = vmax.f32 %v1517, %v1518
      %1596 = vmax.xlane.f32.xlu0 %v1595
      %v1597 = vpop.xlane.xlu0 %1596
      %v1598 = vmax.f32 %v1519, %v1520
      %1599 = vmax.xlane.f32.xlu0 %v1598
      %v1600 = vpop.xlane.xlu0 %1599
      %v1601 = vmax.f32 %v1521, %v1522
      %1602 = vmax.xlane.f32.xlu0 %v1601
      %v1603 = vpop.xlane.xlu0 %1602
      %v1604 = vmax.f32 %v1523, %v1524
      %1605 = vmax.xlane.f32.xlu0 %v1604
      %v1606 = vpop.xlane.xlu0 %1605
      %v1607 = vmax.f32 %v1525, %v1526
      %1608 = vmax.xlane.f32.xlu0 %v1607
      %v1609 = vpop.xlane.xlu0 %1608
      %v1610 = vmax.f32 %v1527, %v1528
      %1611 = vmax.xlane.f32.xlu0 %v1610
      %v1612 = vpop.xlane.xlu0 %1611
      %v1613 = vmax.f32 %v1529, %v1530
      %1614 = vmax.xlane.f32.xlu0 %v1613
      %v1615 = vpop.xlane.xlu0 %1614
      %v1616 = vmax.f32 %v1531, %v1532
      %1617 = vmax.xlane.f32.xlu0 %v1616
      %v1618 = vpop.xlane.xlu0 %1617
      %v1619 = vmax.f32 %v1533, %v1534
      %1620 = vmax.xlane.f32.xlu0 %v1619
      %v1621 = vpop.xlane.xlu0 %1620
      %v1622 = vmax.f32 %v1535, %v1536
      %1623 = vmax.xlane.f32.xlu0 %v1622
      %v1624 = vpop.xlane.xlu0 %1623
      %v1625 = vmax.f32 %v1537, %v1538
      %1626 = vmax.xlane.f32.xlu0 %v1625
      %v1627 = vpop.xlane.xlu0 %1626
      %v1628 = vmax.f32 %v1539, %v1540
      %1629 = vmax.xlane.f32.xlu0 %v1628
      %v1630 = vpop.xlane.xlu0 %1629
      %v1631 = vmax.f32 %v1541, %v1542
      %1632 = vmax.xlane.f32.xlu0 %v1631
      %v1633 = vpop.xlane.xlu0 %1632
      %v1634 = vmax.f32 %v1543, %v1544
      %1635 = vmax.xlane.f32.xlu0 %v1634
      %v1636 = vpop.xlane.xlu0 %1635
      %v1637 = vmax.f32 %v1545, %v1546
      %1638 = vmax.xlane.f32.xlu0 %v1637
      %v1639 = vpop.xlane.xlu0 %1638
      %v1640 = vmax.f32 %v1547, %v1548
      %1641 = vmax.xlane.f32.xlu0 %v1640
      %v1642 = vpop.xlane.xlu0 %1641
      %v1643 = vmax.f32 %v1549, %v1550
      %1644 = vmax.xlane.f32.xlu0 %v1643
      %v1645 = vpop.xlane.xlu0 %1644
      %v1646 = vmax.f32 %v1551, %v1552
      %1647 = vmax.xlane.f32.xlu0 %v1646
      %v1648 = vpop.xlane.xlu0 %1647
      %vm1649 = vcmask 7168
      %1650 = vst.msk [vmem:[%s208] sm:$0xff] %vm1649, %v1555
      %1651 = vst.msk [vmem:[%s208 + $0x8] sm:$0xff] %vm1649, %v1558
      %1652 = vst.msk [vmem:[%s208 + $0x10] sm:$0xff] %vm1649, %v1561
      %1653 = vst.msk [vmem:[%s208 + $0x18] sm:$0xff] %vm1649, %v1564
      %1654 = vst.msk [vmem:[%s208 + $0x20] sm:$0xff] %vm1649, %v1567
      %1655 = vst.msk [vmem:[%s208 + $0x28] sm:$0xff] %vm1649, %v1570
      %1656 = vst.msk [vmem:[%s208 + $0x30] sm:$0xff] %vm1649, %v1573
      %1657 = vst.msk [vmem:[%s208 + $0x38] sm:$0xff] %vm1649, %v1576
      %1658 = vst.msk [vmem:[%s208 + $0x40] sm:$0xff] %vm1649, %v1579
      %1659 = vst.msk [vmem:[%s208 + $0x48] sm:$0xff] %vm1649, %v1582
      %1660 = vst.msk [vmem:[%s208 + $0x50] sm:$0xff] %vm1649, %v1585
      %1661 = vst.msk [vmem:[%s208 + $0x58] sm:$0xff] %vm1649, %v1588
      %1662 = vst.msk [vmem:[%s208 + $0x60] sm:$0xff] %vm1649, %v1591
      %1663 = vst.msk [vmem:[%s208 + $0x68] sm:$0xff] %vm1649, %v1594
      %1664 = vst.msk [vmem:[%s208 + $0x70] sm:$0xff] %vm1649, %v1597
      %1665 = vst.msk [vmem:[%s208 + $0x78] sm:$0xff] %vm1649, %v1600
      %1666 = vst.msk [vmem:[%s208 + $0x80] sm:$0xff] %vm1649, %v1603
      %1667 = vst.msk [vmem:[%s208 + $0x88] sm:$0xff] %vm1649, %v1606
      %1668 = vst.msk [vmem:[%s208 + $0x90] sm:$0xff] %vm1649, %v1609
      %1669 = vst.msk [vmem:[%s208 + $0x98] sm:$0xff] %vm1649, %v1612
      %1670 = vst.msk [vmem:[%s208 + $0xa0] sm:$0xff] %vm1649, %v1615
      %1671 = vst.msk [vmem:[%s208 + $0xa8] sm:$0xff] %vm1649, %v1618
      %1672 = vst.msk [vmem:[%s208 + $0xb0] sm:$0xff] %vm1649, %v1621
      %1673 = vst.msk [vmem:[%s208 + $0xb8] sm:$0xff] %vm1649, %v1624
      %1674 = vst.msk [vmem:[%s208 + $0xc0] sm:$0xff] %vm1649, %v1627
      %1675 = vst.msk [vmem:[%s208 + $0xc8] sm:$0xff] %vm1649, %v1630
      %1676 = vst.msk [vmem:[%s208 + $0xd0] sm:$0xff] %vm1649, %v1633
      %1677 = vst.msk [vmem:[%s208 + $0xd8] sm:$0xff] %vm1649, %v1636
      %1678 = vst.msk [vmem:[%s208 + $0xe0] sm:$0xff] %vm1649, %v1639
      %1679 = vst.msk [vmem:[%s208 + $0xe8] sm:$0xff] %vm1649, %v1642
      %1680 = vst.msk [vmem:[%s208 + $0xf0] sm:$0xff] %vm1649, %v1645
      %1681 = vst.msk [vmem:[%s208 + $0xf8] sm:$0xff] %vm1649, %v1648
      %p1682 = scmp.lt.s32.totalorder %s18, 7
      %s1683 = scalar_select %p1682, %s18, 7
      %p1684 = scmp.lt.s32.totalorder %s19, 0
      %s1685 = scalar_select %p1684, %s19, 0
      %s1686 = smul.addr %s1685, 32
      %s1687 = smul.addr %s1683, 32
      %s1688 = sadd.s32 %s1686, %s1687
      %s1689 = smul.addr %s1688, 8
      %s1690 = scalar_lea.vmem %s3, %s1689
      // Predicated region
      $region33: #{transform_net_forward.8} parent=31 // pred_check
        %p1691 = pneg %p116
      $region34: #{transform_net_forward.8} parent=31 // pred_check_branch
        %1693 = sbr.rel (%p1691) target = $region36
      $region35: #{transform_net_forward.8} parent=31 // pred_region
        _
      $region36: #{transform_net_forward.8} parent=31 // pred_fallthru
        _
    $region32: #{transform_net_forward.8} parent=5 // pred_fallthru
      _
    %p1694 = scmp.le.s32.totalorder 2, %s9
    // Predicated region
    $region37: #{transform_net_forward.8} parent=5 // pred_check
      %p1695 = pneg %p1694
    $region38: #{transform_net_forward.8} parent=5 // pred_check_branch
      %1697 = sbr.rel (%p1695) target = $region40
    $region39: #{transform_net_forward.8} parent=5 // pred_region
      %s1698 = ssub.s32 %s9, 2
      // Predicated region
      $region41: #{transform_net_forward.8} parent=39 // pred_check
        %p1699 = pneg %p122
      $region42: #{transform_net_forward.8} parent=39 // pred_check_branch
        %1701 = sbr.rel (%p1699) target = $region44
      $region43: #{transform_net_forward.8} parent=39 // pred_region
        %p1702 = scmp.lt.s32.totalorder %s20, 7
        %s1703 = scalar_select %p1702, %s20, 7
        %p1704 = scmp.lt.s32.totalorder %s21, 0
        %s1705 = scalar_select %p1704, %s21, 0
        %s1706 = smul.addr %s1705, 32
        %s1707 = smul.addr %s1703, 32
        %s1708 = sadd.s32 %s1706, %s1707
        %s1709 = smul.addr %s1708, 8
        %s1710 = scalar_lea.vmem %s3, %s1709
      $region44: #{transform_net_forward.8} parent=39 // pred_fallthru
        _
    $region40: #{transform_net_forward.8} parent=5 // pred_fallthru
      _
  $region6: #{transform_net_forward.8} parent=0 // loop_footer
    %s13 = sadd.s32 1, %s9
  $region7: #{transform_net_forward.8} parent=0 // loop_footer_branch
    %8 = sbr.rel target = $region3
  $region8: #{transform_net_forward.8} parent=0 // loop_exit
    _

// kernel: transform_net_forward.9
$region0: #{transform_net_forward.9}
  #allocation0 [shape = 'u32[]', space=smem, size = 0x4, offset = 0x4, fixed_abs, tag = 'smem constant byte address 0x4 - core index']
  #allocation1 [shape = 'u32[72,128]{1,0:T(1,128)}', space=vmem, size = 0x9000, scoped, tag = 'internal scratch']
  %s0 = inlined_call_operand.vmem [shape: f32[256,8], index: 0, kind: input, shape index: {}]
  %s1 = inlined_call_operand.vmem [shape: bf16[128,256], index: 1, kind: input, shape index: {}]
  %s2 = inlined_call_operand.vmem [shape: f32[128,1], index: 2, kind: input, shape index: {}]
  %s3 = inlined_call_operand.vmem [shape: f32[128,1], index: 3, kind: input, shape index: {}]
  %s4 = inlined_call_operand.vmem [shape: bf16[64,128], index: 4, kind: input, shape index: {}]
  %s5 = inlined_call_operand.vmem [shape: f32[64,1], index: 5, kind: input, shape index: {}]
  %s6 = inlined_call_operand.vmem [shape: f32[64,1], index: 6, kind: input, shape index: {}]
  %s7 = inlined_call_operand.vmem [shape: bf16[16,64], index: 7, kind: input, shape index: {}]
  %s8 = inlined_call_operand.vmem [shape: f32[16,1], index: 8, kind: input, shape index: {}]
  %s9 = inlined_call_operand.vmem [shape: f32[16,8], index: 9, kind: output, shape index: {}]
  %s10 = sld [smem:[#allocation0]]
  $region46: #{transform_net_forward.9} parent=0
    _
  %s12 = ssub.s32 1, %s10
  %s13 = scalar_select 0, %s12, %s10
  // Predicated region
  $region2: #{transform_net_forward.9} parent=0 // pred_check
    _
  $region3: #{transform_net_forward.9} parent=0 // pred_check_branch
    %15 = sbr.rel (0) target = $region5
  $region4: #{transform_net_forward.9} parent=0 // pred_region
    _
  $region5: #{transform_net_forward.9} parent=0 // pred_fallthru
    _
  // Predicated region
  $region6: #{transform_net_forward.9} parent=0 // pred_check
    _
  $region7: #{transform_net_forward.9} parent=0 // pred_check_branch
    %17 = sbr.rel (0) target = $region9
  $region8: #{transform_net_forward.9} parent=0 // pred_region
    _
  $region9: #{transform_net_forward.9} parent=0 // pred_fallthru
    _
  // Predicated region
  $region10: #{transform_net_forward.9} parent=0 // pred_check
    _
  $region11: #{transform_net_forward.9} parent=0 // pred_check_branch
    %19 = sbr.rel (0) target = $region13
  $region12: #{transform_net_forward.9} parent=0 // pred_region
    _
  $region13: #{transform_net_forward.9} parent=0 // pred_fallthru
    _
  // Predicated region
  $region14: #{transform_net_forward.9} parent=0 // pred_check
    _
  $region15: #{transform_net_forward.9} parent=0 // pred_check_branch
    %21 = sbr.rel (0) target = $region17
  $region16: #{transform_net_forward.9} parent=0 // pred_region
    _
  $region17: #{transform_net_forward.9} parent=0 // pred_fallthru
    _
  // Predicated region
  $region18: #{transform_net_forward.9} parent=0 // pred_check
    _
  $region19: #{transform_net_forward.9} parent=0 // pred_check_branch
    %23 = sbr.rel (0) target = $region21
  $region20: #{transform_net_forward.9} parent=0 // pred_region
    _
  $region21: #{transform_net_forward.9} parent=0 // pred_fallthru
    _
  // Predicated region
  $region22: #{transform_net_forward.9} parent=0 // pred_check
    _
  $region23: #{transform_net_forward.9} parent=0 // pred_check_branch
    %25 = sbr.rel (0) target = $region25
  $region24: #{transform_net_forward.9} parent=0 // pred_region
    _
  $region25: #{transform_net_forward.9} parent=0 // pred_fallthru
    _
  // Predicated region
  $region26: #{transform_net_forward.9} parent=0 // pred_check
    _
  $region27: #{transform_net_forward.9} parent=0 // pred_check_branch
    %27 = sbr.rel (0) target = $region29
  $region28: #{transform_net_forward.9} parent=0 // pred_region
    _
  $region29: #{transform_net_forward.9} parent=0 // pred_fallthru
    _
  // Predicated region
  $region30: #{transform_net_forward.9} parent=0 // pred_check
    _
  $region31: #{transform_net_forward.9} parent=0 // pred_check_branch
    %29 = sbr.rel (0) target = $region33
  $region32: #{transform_net_forward.9} parent=0 // pred_region
    _
  $region33: #{transform_net_forward.9} parent=0 // pred_fallthru
    _
  // Predicated region
  $region34: #{transform_net_forward.9} parent=0 // pred_check
    _
  $region35: #{transform_net_forward.9} parent=0 // pred_check_branch
    %31 = sbr.rel (0) target = $region37
  $region36: #{transform_net_forward.9} parent=0 // pred_region
    _
  $region37: #{transform_net_forward.9} parent=0 // pred_fallthru
    _
  %v33 = vld [vmem:[%s0] sm:$0xff]
  %v34 = vld [vmem:[%s0 + $0x8] sm:$0xff]
  %v35 = vld [vmem:[%s0 + $0x10] sm:$0xff]
  %v36 = vld [vmem:[%s0 + $0x18] sm:$0xff]
  %v37 = vld [vmem:[%s0 + $0x20] sm:$0xff]
  %v38 = vld [vmem:[%s0 + $0x28] sm:$0xff]
  %v39 = vld [vmem:[%s0 + $0x30] sm:$0xff]
  %v40 = vld [vmem:[%s0 + $0x38] sm:$0xff]
  %v41 = vld [vmem:[%s0 + $0x40] sm:$0xff]
  %v42 = vld [vmem:[%s0 + $0x48] sm:$0xff]
  %v43 = vld [vmem:[%s0 + $0x50] sm:$0xff]
  %v44 = vld [vmem:[%s0 + $0x58] sm:$0xff]
  %v45 = vld [vmem:[%s0 + $0x60] sm:$0xff]
  %v46 = vld [vmem:[%s0 + $0x68] sm:$0xff]
  %v47 = vld [vmem:[%s0 + $0x70] sm:$0xff]
  %v48 = vld [vmem:[%s0 + $0x78] sm:$0xff]
  %v49 = vld [vmem:[%s0 + $0x80] sm:$0xff]
  %v50 = vld [vmem:[%s0 + $0x88] sm:$0xff]
  %v51 = vld [vmem:[%s0 + $0x90] sm:$0xff]
  %v52 = vld [vmem:[%s0 + $0x98] sm:$0xff]
  %v53 = vld [vmem:[%s0 + $0xa0] sm:$0xff]
  %v54 = vld [vmem:[%s0 + $0xa8] sm:$0xff]
  %v55 = vld [vmem:[%s0 + $0xb0] sm:$0xff]
  %v56 = vld [vmem:[%s0 + $0xb8] sm:$0xff]
  %v57 = vld [vmem:[%s0 + $0xc0] sm:$0xff]
  %v58 = vld [vmem:[%s0 + $0xc8] sm:$0xff]
  %v59 = vld [vmem:[%s0 + $0xd0] sm:$0xff]
  %v60 = vld [vmem:[%s0 + $0xd8] sm:$0xff]
  %v61 = vld [vmem:[%s0 + $0xe0] sm:$0xff]
  %v62 = vld [vmem:[%s0 + $0xe8] sm:$0xff]
  %v63 = vld [vmem:[%s0 + $0xf0] sm:$0xff]
  %v64 = vld [vmem:[%s0 + $0xf8] sm:$0xff]
  %v65 = vpack.c.bf16 %v34, %v33
  %v66 = vpack.c.bf16 %v36, %v35
  %v67 = vpack.c.bf16 %v38, %v37
  %v68 = vpack.c.bf16 %v40, %v39
  %v69 = vpack.c.bf16 %v42, %v41
  %v70 = vpack.c.bf16 %v44, %v43
  %v71 = vpack.c.bf16 %v46, %v45
  %v72 = vpack.c.bf16 %v48, %v47
  %v73 = vpack.c.bf16 %v50, %v49
  %v74 = vpack.c.bf16 %v52, %v51
  %v75 = vpack.c.bf16 %v54, %v53
  %v76 = vpack.c.bf16 %v56, %v55
  %v77 = vpack.c.bf16 %v58, %v57
  %v78 = vpack.c.bf16 %v60, %v59
  %v79 = vpack.c.bf16 %v62, %v61
  %v80 = vpack.c.bf16 %v64, %v63
  %v81 = vld [vmem:[%s1] sm:$0xff]
  %v82 = vld [vmem:[%s1 + $0x8] sm:$0xff]
  %v83 = vld [vmem:[%s1 + $0x10] sm:$0xff]
  %v84 = vld [vmem:[%s1 + $0x18] sm:$0xff]
  %v85 = vld [vmem:[%s1 + $0x20] sm:$0xff]
  %v86 = vld [vmem:[%s1 + $0x28] sm:$0xff]
  %v87 = vld [vmem:[%s1 + $0x30] sm:$0xff]
  %v88 = vld [vmem:[%s1 + $0x38] sm:$0xff]
  %v89 = vld [vmem:[%s1 + $0x40] sm:$0xff]
  %v90 = vld [vmem:[%s1 + $0x48] sm:$0xff]
  %v91 = vld [vmem:[%s1 + $0x50] sm:$0xff]
  %v92 = vld [vmem:[%s1 + $0x58] sm:$0xff]
  %v93 = vld [vmem:[%s1 + $0x60] sm:$0xff]
  %v94 = vld [vmem:[%s1 + $0x68] sm:$0xff]
  %v95 = vld [vmem:[%s1 + $0x70] sm:$0xff]
  %v96 = vld [vmem:[%s1 + $0x78] sm:$0xff]
  %v113 = vunpack.c.l.b16 %v81
  %v114 = vunpack.c.h.b16 %v81
  %v115 = vunpack.c.l.b16 %v82
  %v116 = vunpack.c.h.b16 %v82
  %v117 = vunpack.c.l.b16 %v83
  %v118 = vunpack.c.h.b16 %v83
  %v119 = vunpack.c.l.b16 %v84
  %v120 = vunpack.c.h.b16 %v84
  %v121 = vunpack.c.l.b16 %v85
  %v122 = vunpack.c.h.b16 %v85
  %v123 = vunpack.c.l.b16 %v86
  %v124 = vunpack.c.h.b16 %v86
  %v125 = vunpack.c.l.b16 %v87
  %v126 = vunpack.c.h.b16 %v87
  %v127 = vunpack.c.l.b16 %v88
  %v128 = vunpack.c.h.b16 %v88
  %v129 = vunpack.c.l.b16 %v89
  %v130 = vunpack.c.h.b16 %v89
  %v131 = vunpack.c.l.b16 %v90
  %v132 = vunpack.c.h.b16 %v90
  %v133 = vunpack.c.l.b16 %v91
  %v134 = vunpack.c.h.b16 %v91
  %v135 = vunpack.c.l.b16 %v92
  %v136 = vunpack.c.h.b16 %v92
  %v137 = vunpack.c.l.b16 %v93
  %v138 = vunpack.c.h.b16 %v93
  %v139 = vunpack.c.l.b16 %v94
  %v140 = vunpack.c.h.b16 %v94
  %v141 = vunpack.c.l.b16 %v95
  %v142 = vunpack.c.h.b16 %v95
  %v143 = vunpack.c.l.b16 %v96
  %v144 = vunpack.c.h.b16 %v96
  %v145 = vpack.c.b16 %v115, %v113
  %v146 = vpack.c.b16 %v116, %v114
  %v147 = vpack.c.b16 %v119, %v117
  %v148 = vpack.c.b16 %v120, %v118
  %v149 = vpack.c.b16 %v123, %v121
  %v150 = vpack.c.b16 %v124, %v122
  %v151 = vpack.c.b16 %v127, %v125
  %v152 = vpack.c.b16 %v128, %v126
  %v153 = vpack.c.b16 %v131, %v129
  %v154 = vpack.c.b16 %v132, %v130
  %v155 = vpack.c.b16 %v135, %v133
  %v156 = vpack.c.b16 %v136, %v134
  %v157 = vpack.c.b16 %v139, %v137
  %v158 = vpack.c.b16 %v140, %v138
  %v159 = vpack.c.b16 %v143, %v141
  %v160 = vpack.c.b16 %v144, %v142
  %177 = vmatpush.bf16.msra.mxu0 %v72
  %178 = vmatpush.bf16.msra.mxu0 %v71
  %179 = vmatpush.bf16.msra.mxu0 %v70
  %180 = vmatpush.bf16.msra.mxu0 %v69
  %181 = vmatpush.bf16.msra.mxu0 %v68
  %182 = vmatpush.bf16.msra.mxu0 %v67
  %183 = vmatpush.bf16.msra.mxu0 %v66
  %184 = vmatpush.bf16.msra.mxu0 %v65
  %185 = vmatmul.bf16.gmra.mxu0 %v145
  %v186 = vpop.f32.mrf.mxu0
  %v187 = vadd.f32 0.0, %v186
  %v188 = vpop.f32.mrf.mxu0
  %v189 = vadd.f32 0.0, %v188
  %190 = vmatmul.bf16.gmra.mxu0 %v147
  %v191 = vpop.f32.mrf.mxu0
  %v192 = vadd.f32 0.0, %v191
  %v193 = vpop.f32.mrf.mxu0
  %v194 = vadd.f32 0.0, %v193
  %195 = vmatmul.bf16.gmra.mxu0 %v149
  %v196 = vpop.f32.mrf.mxu0
  %v197 = vadd.f32 0.0, %v196
  %v198 = vpop.f32.mrf.mxu0
  %v199 = vadd.f32 0.0, %v198
  %200 = vmatmul.bf16.gmra.mxu0 %v151
  %v201 = vpop.f32.mrf.mxu0
  %v202 = vadd.f32 0.0, %v201
  %v203 = vpop.f32.mrf.mxu0
  %v204 = vadd.f32 0.0, %v203
  %205 = vmatmul.bf16.gmra.mxu0 %v153
  %v206 = vpop.f32.mrf.mxu0
  %v207 = vadd.f32 0.0, %v206
  %v208 = vpop.f32.mrf.mxu0
  %v209 = vadd.f32 0.0, %v208
  %210 = vmatmul.bf16.gmra.mxu0 %v155
  %v211 = vpop.f32.mrf.mxu0
  %v212 = vadd.f32 0.0, %v211
  %v213 = vpop.f32.mrf.mxu0
  %v214 = vadd.f32 0.0, %v213
  %215 = vmatmul.bf16.gmra.mxu0 %v157
  %v216 = vpop.f32.mrf.mxu0
  %v217 = vadd.f32 0.0, %v216
  %v218 = vpop.f32.mrf.mxu0
  %v219 = vadd.f32 0.0, %v218
  %220 = vmatmul.bf16.gmra.mxu0 %v159
  %v221 = vpop.f32.mrf.mxu0
  %v222 = vadd.f32 0.0, %v221
  %v223 = vpop.f32.mrf.mxu0
  %v224 = vadd.f32 0.0, %v223
  %225 = vdwg.mxu0
  %226 = vmatpush.bf16.msra.mxu0 %v80
  %227 = vmatpush.bf16.msra.mxu0 %v79
  %228 = vmatpush.bf16.msra.mxu0 %v78
  %229 = vmatpush.bf16.msra.mxu0 %v77
  %230 = vmatpush.bf16.msra.mxu0 %v76
  %231 = vmatpush.bf16.msra.mxu0 %v75
  %232 = vmatpush.bf16.msra.mxu0 %v74
  %233 = vmatpush.bf16.msra.mxu0 %v73
  %234 = vmatmul.bf16.gmra.mxu0 %v146
  %v235 = vpop.f32.mrf.mxu0
  %v236 = vadd.f32 %v187, %v235
  %v237 = vpop.f32.mrf.mxu0
  %v238 = vadd.f32 %v189, %v237
  %239 = vmatmul.bf16.gmra.mxu0 %v148
  %v240 = vpop.f32.mrf.mxu0
  %v241 = vadd.f32 %v192, %v240
  %v242 = vpop.f32.mrf.mxu0
  %v243 = vadd.f32 %v194, %v242
  %244 = vmatmul.bf16.gmra.mxu0 %v150
  %v245 = vpop.f32.mrf.mxu0
  %v246 = vadd.f32 %v197, %v245
  %v247 = vpop.f32.mrf.mxu0
  %v248 = vadd.f32 %v199, %v247
  %249 = vmatmul.bf16.gmra.mxu0 %v152
  %v250 = vpop.f32.mrf.mxu0
  %v251 = vadd.f32 %v202, %v250
  %v252 = vpop.f32.mrf.mxu0
  %v253 = vadd.f32 %v204, %v252
  %254 = vmatmul.bf16.gmra.mxu0 %v154
  %v255 = vpop.f32.mrf.mxu0
  %v256 = vadd.f32 %v207, %v255
  %v257 = vpop.f32.mrf.mxu0
  %v258 = vadd.f32 %v209, %v257
  %259 = vmatmul.bf16.gmra.mxu0 %v156
  %v260 = vpop.f32.mrf.mxu0
  %v261 = vadd.f32 %v212, %v260
  %v262 = vpop.f32.mrf.mxu0
  %v263 = vadd.f32 %v214, %v262
  %264 = vmatmul.bf16.gmra.mxu0 %v158
  %v265 = vpop.f32.mrf.mxu0
  %v266 = vadd.f32 %v217, %v265
  %v267 = vpop.f32.mrf.mxu0
  %v268 = vadd.f32 %v219, %v267
  %269 = vmatmul.bf16.gmra.mxu0 %v160
  %v270 = vpop.f32.mrf.mxu0
  %v271 = vadd.f32 %v222, %v270
  %v272 = vpop.f32.mrf.mxu0
  %v273 = vadd.f32 %v224, %v272
  %274 = vdwg.mxu0
  %vm275 = vcmask 64512
  %v276 = vsel %vm275, %v236, 0.0
  %277 = vadd.xlane.f32.xlu0 %v276
  %v278 = vpop.xlane.xlu0 %277
  %v279 = vsel %vm275, %v238, 0.0
  %280 = vadd.xlane.f32.xlu0 %v279
  %v281 = vpop.xlane.xlu0 %280
  %v282 = vsel %vm275, %v241, 0.0
  %283 = vadd.xlane.f32.xlu0 %v282
  %v284 = vpop.xlane.xlu0 %283
  %v285 = vsel %vm275, %v243, 0.0
  %286 = vadd.xlane.f32.xlu0 %v285
  %v287 = vpop.xlane.xlu0 %286
  %v288 = vsel %vm275, %v246, 0.0
  %289 = vadd.xlane.f32.xlu0 %v288
  %v290 = vpop.xlane.xlu0 %289
  %v291 = vsel %vm275, %v248, 0.0
  %292 = vadd.xlane.f32.xlu0 %v291
  %v293 = vpop.xlane.xlu0 %292
  %v294 = vsel %vm275, %v251, 0.0
  %295 = vadd.xlane.f32.xlu0 %v294
  %v296 = vpop.xlane.xlu0 %295
  %v297 = vsel %vm275, %v253, 0.0
  %298 = vadd.xlane.f32.xlu0 %v297
  %v299 = vpop.xlane.xlu0 %298
  %v300 = vsel %vm275, %v256, 0.0
  %301 = vadd.xlane.f32.xlu0 %v300
  %v302 = vpop.xlane.xlu0 %301
  %v303 = vsel %vm275, %v258, 0.0
  %304 = vadd.xlane.f32.xlu0 %v303
  %v305 = vpop.xlane.xlu0 %304
  %v306 = vsel %vm275, %v261, 0.0
  %307 = vadd.xlane.f32.xlu0 %v306
  %v308 = vpop.xlane.xlu0 %307
  %v309 = vsel %vm275, %v263, 0.0
  %310 = vadd.xlane.f32.xlu0 %v309
  %v311 = vpop.xlane.xlu0 %310
  %v312 = vsel %vm275, %v266, 0.0
  %313 = vadd.xlane.f32.xlu0 %v312
  %v314 = vpop.xlane.xlu0 %313
  %v315 = vsel %vm275, %v268, 0.0
  %316 = vadd.xlane.f32.xlu0 %v315
  %v317 = vpop.xlane.xlu0 %316
  %v318 = vsel %vm275, %v271, 0.0
  %319 = vadd.xlane.f32.xlu0 %v318
  %v320 = vpop.xlane.xlu0 %319
  %v321 = vsel %vm275, %v273, 0.0
  %322 = vadd.xlane.f32.xlu0 %v321
  %v323 = vpop.xlane.xlu0 %322
  %v324 = vmul.f32 %v278, 0.125
  %v325 = vmul.f32 %v281, 0.125
  %v326 = vmul.f32 %v284, 0.125
  %v327 = vmul.f32 %v287, 0.125
  %v328 = vmul.f32 %v290, 0.125
  %v329 = vmul.f32 %v293, 0.125
  %v330 = vmul.f32 %v296, 0.125
  %v331 = vmul.f32 %v299, 0.125
  %v332 = vmul.f32 %v302, 0.125
  %v333 = vmul.f32 %v305, 0.125
  %v334 = vmul.f32 %v308, 0.125
  %v335 = vmul.f32 %v311, 0.125
  %v336 = vmul.f32 %v314, 0.125
  %v337 = vmul.f32 %v317, 0.125
  %v338 = vmul.f32 %v320, 0.125
  %v339 = vmul.f32 %v323, 0.125
  %v340 = vmul.f32 %v236, %v236
  %v341 = vmul.f32 %v238, %v238
  %v342 = vmul.f32 %v241, %v241
  %v343 = vmul.f32 %v243, %v243
  %v344 = vmul.f32 %v246, %v246
  %v345 = vmul.f32 %v248, %v248
  %v346 = vmul.f32 %v251, %v251
  %v347 = vmul.f32 %v253, %v253
  %v348 = vmul.f32 %v256, %v256
  %v349 = vmul.f32 %v258, %v258
  %v350 = vmul.f32 %v261, %v261
  %v351 = vmul.f32 %v263, %v263
  %v352 = vmul.f32 %v266, %v266
  %v353 = vmul.f32 %v268, %v268
  %v354 = vmul.f32 %v271, %v271
  %v355 = vmul.f32 %v273, %v273
  %v356 = vsel %vm275, %v340, 0.0
  %357 = vadd.xlane.f32.xlu0 %v356
  %v358 = vpop.xlane.xlu0 %357
  %v359 = vsel %vm275, %v341, 0.0
  %360 = vadd.xlane.f32.xlu0 %v359
  %v361 = vpop.xlane.xlu0 %360
  %v362 = vsel %vm275, %v342, 0.0
  %363 = vadd.xlane.f32.xlu0 %v362
  %v364 = vpop.xlane.xlu0 %363
  %v365 = vsel %vm275, %v343, 0.0
  %366 = vadd.xlane.f32.xlu0 %v365
  %v367 = vpop.xlane.xlu0 %366
  %v368 = vsel %vm275, %v344, 0.0
  %369 = vadd.xlane.f32.xlu0 %v368
  %v370 = vpop.xlane.xlu0 %369
  %v371 = vsel %vm275, %v345, 0.0
  %372 = vadd.xlane.f32.xlu0 %v371
  %v373 = vpop.xlane.xlu0 %372
  %v374 = vsel %vm275, %v346, 0.0
  %375 = vadd.xlane.f32.xlu0 %v374
  %v376 = vpop.xlane.xlu0 %375
  %v377 = vsel %vm275, %v347, 0.0
  %378 = vadd.xlane.f32.xlu0 %v377
  %v379 = vpop.xlane.xlu0 %378
  %v380 = vsel %vm275, %v348, 0.0
  %381 = vadd.xlane.f32.xlu0 %v380
  %v382 = vpop.xlane.xlu0 %381
  %v383 = vsel %vm275, %v349, 0.0
  %384 = vadd.xlane.f32.xlu0 %v383
  %v385 = vpop.xlane.xlu0 %384
  %v386 = vsel %vm275, %v350, 0.0
  %387 = vadd.xlane.f32.xlu0 %v386
  %v388 = vpop.xlane.xlu0 %387
  %v389 = vsel %vm275, %v351, 0.0
  %390 = vadd.xlane.f32.xlu0 %v389
  %v391 = vpop.xlane.xlu0 %390
  %v392 = vsel %vm275, %v352, 0.0
  %393 = vadd.xlane.f32.xlu0 %v392
  %v394 = vpop.xlane.xlu0 %393
  %v395 = vsel %vm275, %v353, 0.0
  %396 = vadd.xlane.f32.xlu0 %v395
  %v397 = vpop.xlane.xlu0 %396
  %v398 = vsel %vm275, %v354, 0.0
  %399 = vadd.xlane.f32.xlu0 %v398
  %v400 = vpop.xlane.xlu0 %399
  %v401 = vsel %vm275, %v355, 0.0
  %402 = vadd.xlane.f32.xlu0 %v401
  %v403 = vpop.xlane.xlu0 %402
  %v404 = vmul.f32 %v358, 0.125
  %v405 = vmul.f32 %v361, 0.125
  %v406 = vmul.f32 %v364, 0.125
  %v407 = vmul.f32 %v367, 0.125
  %v408 = vmul.f32 %v370, 0.125
  %v409 = vmul.f32 %v373, 0.125
  %v410 = vmul.f32 %v376, 0.125
  %v411 = vmul.f32 %v379, 0.125
  %v412 = vmul.f32 %v382, 0.125
  %v413 = vmul.f32 %v385, 0.125
  %v414 = vmul.f32 %v388, 0.125
  %v415 = vmul.f32 %v391, 0.125
  %v416 = vmul.f32 %v394, 0.125
  %v417 = vmul.f32 %v397, 0.125
  %v418 = vmul.f32 %v400, 0.125
  %v419 = vmul.f32 %v403, 0.125
  %v420 = vmul.f32 %v324, %v324
  %v421 = vmul.f32 %v325, %v325
  %v422 = vmul.f32 %v326, %v326
  %v423 = vmul.f32 %v327, %v327
  %v424 = vmul.f32 %v328, %v328
  %v425 = vmul.f32 %v329, %v329
  %v426 = vmul.f32 %v330, %v330
  %v427 = vmul.f32 %v331, %v331
  %v428 = vmul.f32 %v332, %v332
  %v429 = vmul.f32 %v333, %v333
  %v430 = vmul.f32 %v334, %v334
  %v431 = vmul.f32 %v335, %v335
  %v432 = vmul.f32 %v336, %v336
  %v433 = vmul.f32 %v337, %v337
  %v434 = vmul.f32 %v338, %v338
  %v435 = vmul.f32 %v339, %v339
  %v436 = vsub.f32 %v404, %v420
  %v437 = vsub.f32 %v405, %v421
  %v438 = vsub.f32 %v406, %v422
  %v439 = vsub.f32 %v407, %v423
  %v440 = vsub.f32 %v408, %v424
  %v441 = vsub.f32 %v409, %v425
  %v442 = vsub.f32 %v410, %v426
  %v443 = vsub.f32 %v411, %v427
  %v444 = vsub.f32 %v412, %v428
  %v445 = vsub.f32 %v413, %v429
  %v446 = vsub.f32 %v414, %v430
  %v447 = vsub.f32 %v415, %v431
  %v448 = vsub.f32 %v416, %v432
  %v449 = vsub.f32 %v417, %v433
  %v450 = vsub.f32 %v418, %v434
  %v451 = vsub.f32 %v419, %v435
  %v452 = vmax.f32 %v436, 0.0
  %v453 = vmax.f32 %v437, 0.0
  %v454 = vmax.f32 %v438, 0.0
  %v455 = vmax.f32 %v439, 0.0
  %v456 = vmax.f32 %v440, 0.0
  %v457 = vmax.f32 %v441, 0.0
  %v458 = vmax.f32 %v442, 0.0
  %v459 = vmax.f32 %v443, 0.0
  %v460 = vmax.f32 %v444, 0.0
  %v461 = vmax.f32 %v445, 0.0
  %v462 = vmax.f32 %v446, 0.0
  %v463 = vmax.f32 %v447, 0.0
  %v464 = vmax.f32 %v448, 0.0
  %v465 = vmax.f32 %v449, 0.0
  %v466 = vmax.f32 %v450, 0.0
  %v467 = vmax.f32 %v451, 0.0
  %v468 = vld [vmem:[%s2] sm:$0xff]
  %v469 = vld [vmem:[%s2 + $0x8] sm:$0xff]
  %v470 = vld [vmem:[%s2 + $0x10] sm:$0xff]
  %v471 = vld [vmem:[%s2 + $0x18] sm:$0xff]
  %v472 = vld [vmem:[%s2 + $0x20] sm:$0xff]
  %v473 = vld [vmem:[%s2 + $0x28] sm:$0xff]
  %v474 = vld [vmem:[%s2 + $0x30] sm:$0xff]
  %v475 = vld [vmem:[%s2 + $0x38] sm:$0xff]
  %v476 = vld [vmem:[%s2 + $0x40] sm:$0xff]
  %v477 = vld [vmem:[%s2 + $0x48] sm:$0xff]
  %v478 = vld [vmem:[%s2 + $0x50] sm:$0xff]
  %v479 = vld [vmem:[%s2 + $0x58] sm:$0xff]
  %v480 = vld [vmem:[%s2 + $0x60] sm:$0xff]
  %v481 = vld [vmem:[%s2 + $0x68] sm:$0xff]
  %v482 = vld [vmem:[%s2 + $0x70] sm:$0xff]
  %v483 = vld [vmem:[%s2 + $0x78] sm:$0xff]
  %v484 = vadd.f32 %v452, 1e-05
  %v485 = vadd.f32 %v453, 1e-05
  %v486 = vadd.f32 %v454, 1e-05
  %v487 = vadd.f32 %v455, 1e-05
  %v488 = vadd.f32 %v456, 1e-05
  %v489 = vadd.f32 %v457, 1e-05
  %v490 = vadd.f32 %v458, 1e-05
  %v491 = vadd.f32 %v459, 1e-05
  %v492 = vadd.f32 %v460, 1e-05
  %v493 = vadd.f32 %v461, 1e-05
  %v494 = vadd.f32 %v462, 1e-05
  %v495 = vadd.f32 %v463, 1e-05
  %v496 = vadd.f32 %v464, 1e-05
  %v497 = vadd.f32 %v465, 1e-05
  %v498 = vadd.f32 %v466, 1e-05
  %v499 = vadd.f32 %v467, 1e-05
  %v500 = vrsqrt.pop %v484
  %v501 = vmul.f32 %v500, %v484
  %v502 = vmul.f32 %v501, %v500
  %v503 = vmul.f32 0.5, %v502
  %v504 = vsub.f32 1.5, %v503
  %v505 = vmul.f32 %v500, %v504
  %vm506 = vweird.f32 %v484
  %vm507 = vweird.f32 %v500
  %vm508 = vmor %vm506, %vm507
  %v509 = vsel %vm508, %v500, %v505
  %v510 = vrsqrt.pop %v485
  %v511 = vmul.f32 %v510, %v485
  %v512 = vmul.f32 %v511, %v510
  %v513 = vmul.f32 0.5, %v512
  %v514 = vsub.f32 1.5, %v513
  %v515 = vmul.f32 %v510, %v514
  %vm516 = vweird.f32 %v485
  %vm517 = vweird.f32 %v510
  %vm518 = vmor %vm516, %vm517
  %v519 = vsel %vm518, %v510, %v515
  %v520 = vrsqrt.pop %v486
  %v521 = vmul.f32 %v520, %v486
  %v522 = vmul.f32 %v521, %v520
  %v523 = vmul.f32 0.5, %v522
  %v524 = vsub.f32 1.5, %v523
  %v525 = vmul.f32 %v520, %v524
  %vm526 = vweird.f32 %v486
  %vm527 = vweird.f32 %v520
  %vm528 = vmor %vm526, %vm527
  %v529 = vsel %vm528, %v520, %v525
  %v530 = vrsqrt.pop %v487
  %v531 = vmul.f32 %v530, %v487
  %v532 = vmul.f32 %v531, %v530
  %v533 = vmul.f32 0.5, %v532
  %v534 = vsub.f32 1.5, %v533
  %v535 = vmul.f32 %v530, %v534
  %vm536 = vweird.f32 %v487
  %vm537 = vweird.f32 %v530
  %vm538 = vmor %vm536, %vm537
  %v539 = vsel %vm538, %v530, %v535
  %v540 = vrsqrt.pop %v488
  %v541 = vmul.f32 %v540, %v488
  %v542 = vmul.f32 %v541, %v540
  %v543 = vmul.f32 0.5, %v542
  %v544 = vsub.f32 1.5, %v543
  %v545 = vmul.f32 %v540, %v544
  %vm546 = vweird.f32 %v488
  %vm547 = vweird.f32 %v540
  %vm548 = vmor %vm546, %vm547
  %v549 = vsel %vm548, %v540, %v545
  %v550 = vrsqrt.pop %v489
  %v551 = vmul.f32 %v550, %v489
  %v552 = vmul.f32 %v551, %v550
  %v553 = vmul.f32 0.5, %v552
  %v554 = vsub.f32 1.5, %v553
  %v555 = vmul.f32 %v550, %v554
  %vm556 = vweird.f32 %v489
  %vm557 = vweird.f32 %v550
  %vm558 = vmor %vm556, %vm557
  %v559 = vsel %vm558, %v550, %v555
  %v560 = vrsqrt.pop %v490
  %v561 = vmul.f32 %v560, %v490
  %v562 = vmul.f32 %v561, %v560
  %v563 = vmul.f32 0.5, %v562
  %v564 = vsub.f32 1.5, %v563
  %v565 = vmul.f32 %v560, %v564
  %vm566 = vweird.f32 %v490
  %vm567 = vweird.f32 %v560
  %vm568 = vmor %vm566, %vm567
  %v569 = vsel %vm568, %v560, %v565
  %v570 = vrsqrt.pop %v491
  %v571 = vmul.f32 %v570, %v491
  %v572 = vmul.f32 %v571, %v570
  %v573 = vmul.f32 0.5, %v572
  %v574 = vsub.f32 1.5, %v573
  %v575 = vmul.f32 %v570, %v574
  %vm576 = vweird.f32 %v491
  %vm577 = vweird.f32 %v570
  %vm578 = vmor %vm576, %vm577
  %v579 = vsel %vm578, %v570, %v575
  %v580 = vrsqrt.pop %v492
  %v581 = vmul.f32 %v580, %v492
  %v582 = vmul.f32 %v581, %v580
  %v583 = vmul.f32 0.5, %v582
  %v584 = vsub.f32 1.5, %v583
  %v585 = vmul.f32 %v580, %v584
  %vm586 = vweird.f32 %v492
  %vm587 = vweird.f32 %v580
  %vm588 = vmor %vm586, %vm587
  %v589 = vsel %vm588, %v580, %v585
  %v590 = vrsqrt.pop %v493
  %v591 = vmul.f32 %v590, %v493
  %v592 = vmul.f32 %v591, %v590
  %v593 = vmul.f32 0.5, %v592
  %v594 = vsub.f32 1.5, %v593
  %v595 = vmul.f32 %v590, %v594
  %vm596 = vweird.f32 %v493
  %vm597 = vweird.f32 %v590
  %vm598 = vmor %vm596, %vm597
  %v599 = vsel %vm598, %v590, %v595
  %v600 = vrsqrt.pop %v494
  %v601 = vmul.f32 %v600, %v494
  %v602 = vmul.f32 %v601, %v600
  %v603 = vmul.f32 0.5, %v602
  %v604 = vsub.f32 1.5, %v603
  %v605 = vmul.f32 %v600, %v604
  %vm606 = vweird.f32 %v494
  %vm607 = vweird.f32 %v600
  %vm608 = vmor %vm606, %vm607
  %v609 = vsel %vm608, %v600, %v605
  %v610 = vrsqrt.pop %v495
  %v611 = vmul.f32 %v610, %v495
  %v612 = vmul.f32 %v611, %v610
  %v613 = vmul.f32 0.5, %v612
  %v614 = vsub.f32 1.5, %v613
  %v615 = vmul.f32 %v610, %v614
  %vm616 = vweird.f32 %v495
  %vm617 = vweird.f32 %v610
  %vm618 = vmor %vm616, %vm617
  %v619 = vsel %vm618, %v610, %v615
  %v620 = vrsqrt.pop %v496
  %v621 = vmul.f32 %v620, %v496
  %v622 = vmul.f32 %v621, %v620
  %v623 = vmul.f32 0.5, %v622
  %v624 = vsub.f32 1.5, %v623
  %v625 = vmul.f32 %v620, %v624
  %vm626 = vweird.f32 %v496
  %vm627 = vweird.f32 %v620
  %vm628 = vmor %vm626, %vm627
  %v629 = vsel %vm628, %v620, %v625
  %v630 = vrsqrt.pop %v497
  %v631 = vmul.f32 %v630, %v497
  %v632 = vmul.f32 %v631, %v630
  %v633 = vmul.f32 0.5, %v632
  %v634 = vsub.f32 1.5, %v633
  %v635 = vmul.f32 %v630, %v634
  %vm636 = vweird.f32 %v497
  %vm637 = vweird.f32 %v630
  %vm638 = vmor %vm636, %vm637
  %v639 = vsel %vm638, %v630, %v635
  %v640 = vrsqrt.pop %v498
  %v641 = vmul.f32 %v640, %v498
  %v642 = vmul.f32 %v641, %v640
  %v643 = vmul.f32 0.5, %v642
  %v644 = vsub.f32 1.5, %v643
  %v645 = vmul.f32 %v640, %v644
  %vm646 = vweird.f32 %v498
  %vm647 = vweird.f32 %v640
  %vm648 = vmor %vm646, %vm647
  %v649 = vsel %vm648, %v640, %v645
  %v650 = vrsqrt.pop %v499
  %v651 = vmul.f32 %v650, %v499
  %v652 = vmul.f32 %v651, %v650
  %v653 = vmul.f32 0.5, %v652
  %v654 = vsub.f32 1.5, %v653
  %v655 = vmul.f32 %v650, %v654
  %vm656 = vweird.f32 %v499
  %vm657 = vweird.f32 %v650
  %vm658 = vmor %vm656, %vm657
  %v659 = vsel %vm658, %v650, %v655
  %v660 = vmul.f32 %v468, %v509
  %v661 = vmul.f32 %v469, %v519
  %v662 = vmul.f32 %v470, %v529
  %v663 = vmul.f32 %v471, %v539
  %v664 = vmul.f32 %v472, %v549
  %v665 = vmul.f32 %v473, %v559
  %v666 = vmul.f32 %v474, %v569
  %v667 = vmul.f32 %v475, %v579
  %v668 = vmul.f32 %v476, %v589
  %v669 = vmul.f32 %v477, %v599
  %v670 = vmul.f32 %v478, %v609
  %v671 = vmul.f32 %v479, %v619
  %v672 = vmul.f32 %v480, %v629
  %v673 = vmul.f32 %v481, %v639
  %v674 = vmul.f32 %v482, %v649
  %v675 = vmul.f32 %v483, %v659
  %v676 = vld [vmem:[%s3] sm:$0xff]
  %v677 = vld [vmem:[%s3 + $0x8] sm:$0xff]
  %v678 = vld [vmem:[%s3 + $0x10] sm:$0xff]
  %v679 = vld [vmem:[%s3 + $0x18] sm:$0xff]
  %v680 = vld [vmem:[%s3 + $0x20] sm:$0xff]
  %v681 = vld [vmem:[%s3 + $0x28] sm:$0xff]
  %v682 = vld [vmem:[%s3 + $0x30] sm:$0xff]
  %v683 = vld [vmem:[%s3 + $0x38] sm:$0xff]
  %v684 = vld [vmem:[%s3 + $0x40] sm:$0xff]
  %v685 = vld [vmem:[%s3 + $0x48] sm:$0xff]
  %v686 = vld [vmem:[%s3 + $0x50] sm:$0xff]
  %v687 = vld [vmem:[%s3 + $0x58] sm:$0xff]
  %v688 = vld [vmem:[%s3 + $0x60] sm:$0xff]
  %v689 = vld [vmem:[%s3 + $0x68] sm:$0xff]
  %v690 = vld [vmem:[%s3 + $0x70] sm:$0xff]
  %v691 = vld [vmem:[%s3 + $0x78] sm:$0xff]
  %v692 = vmul.f32 %v324, %v660
  %v693 = vmul.f32 %v325, %v661
  %v694 = vmul.f32 %v326, %v662
  %v695 = vmul.f32 %v327, %v663
  %v696 = vmul.f32 %v328, %v664
  %v697 = vmul.f32 %v329, %v665
  %v698 = vmul.f32 %v330, %v666
  %v699 = vmul.f32 %v331, %v667
  %v700 = vmul.f32 %v332, %v668
  %v701 = vmul.f32 %v333, %v669
  %v702 = vmul.f32 %v334, %v670
  %v703 = vmul.f32 %v335, %v671
  %v704 = vmul.f32 %v336, %v672
  %v705 = vmul.f32 %v337, %v673
  %v706 = vmul.f32 %v338, %v674
  %v707 = vmul.f32 %v339, %v675
  %v708 = vsub.f32 %v676, %v692
  %v709 = vsub.f32 %v677, %v693
  %v710 = vsub.f32 %v678, %v694
  %v711 = vsub.f32 %v679, %v695
  %v712 = vsub.f32 %v680, %v696
  %v713 = vsub.f32 %v681, %v697
  %v714 = vsub.f32 %v682, %v698
  %v715 = vsub.f32 %v683, %v699
  %v716 = vsub.f32 %v684, %v700
  %v717 = vsub.f32 %v685, %v701
  %v718 = vsub.f32 %v686, %v702
  %v719 = vsub.f32 %v687, %v703
  %v720 = vsub.f32 %v688, %v704
  %v721 = vsub.f32 %v689, %v705
  %v722 = vsub.f32 %v690, %v706
  %v723 = vsub.f32 %v691, %v707
  %v724 = vpack.c.bf16 %v236, %v236
  %v725 = vpack.c.bf16 %v238, %v238
  %v726 = vpack.c.bf16 %v241, %v241
  %v727 = vpack.c.bf16 %v243, %v243
  %v728 = vpack.c.bf16 %v246, %v246
  %v729 = vpack.c.bf16 %v248, %v248
  %v730 = vpack.c.bf16 %v251, %v251
  %v731 = vpack.c.bf16 %v253, %v253
  %v732 = vpack.c.bf16 %v256, %v256
  %v733 = vpack.c.bf16 %v258, %v258
  %v734 = vpack.c.bf16 %v261, %v261
  %v735 = vpack.c.bf16 %v263, %v263
  %v736 = vpack.c.bf16 %v266, %v266
  %v737 = vpack.c.bf16 %v268, %v268
  %v738 = vpack.c.bf16 %v271, %v271
  %v739 = vpack.c.bf16 %v273, %v273
  %v740 = vpack.c.bf16 %v660, %v660
  %v741 = vpack.c.bf16 %v661, %v661
  %v742 = vpack.c.bf16 %v662, %v662
  %v743 = vpack.c.bf16 %v663, %v663
  %v744 = vpack.c.bf16 %v664, %v664
  %v745 = vpack.c.bf16 %v665, %v665
  %v746 = vpack.c.bf16 %v666, %v666
  %v747 = vpack.c.bf16 %v667, %v667
  %v748 = vpack.c.bf16 %v668, %v668
  %v749 = vpack.c.bf16 %v669, %v669
  %v750 = vpack.c.bf16 %v670, %v670
  %v751 = vpack.c.bf16 %v671, %v671
  %v752 = vpack.c.bf16 %v672, %v672
  %v753 = vpack.c.bf16 %v673, %v673
  %v754 = vpack.c.bf16 %v674, %v674
  %v755 = vpack.c.bf16 %v675, %v675
  %757 = vset.pattern.permute.xlu0 0
  %758 = vperm.xlu0 %757, %v740
  %v759 = vpop.permute.xlu0 %758
  %v762 = vunpack.c.l.s4 839922192
  %v763 = vunpack.c.0.s8 %v762
  %v764 = vperm.slane %v759, %v763
  %766 = vset.pattern.permute.xlu0 0
  %767 = vperm.xlu0 %766, %v741
  %v768 = vpop.permute.xlu0 %767
  %v771 = vunpack.c.l.s4 839922192
  %v772 = vunpack.c.0.s8 %v771
  %v773 = vperm.slane %v768, %v772
  %775 = vset.pattern.permute.xlu0 0
  %776 = vperm.xlu0 %775, %v742
  %v777 = vpop.permute.xlu0 %776
  %v780 = vunpack.c.l.s4 839922192
  %v781 = vunpack.c.0.s8 %v780
  %v782 = vperm.slane %v777, %v781
  %784 = vset.pattern.permute.xlu0 0
  %785 = vperm.xlu0 %784, %v743
  %v786 = vpop.permute.xlu0 %785
  %v789 = vunpack.c.l.s4 839922192
  %v790 = vunpack.c.0.s8 %v789
  %v791 = vperm.slane %v786, %v790
  %793 = vset.pattern.permute.xlu0 0
  %794 = vperm.xlu0 %793, %v744
  %v795 = vpop.permute.xlu0 %794
  %v798 = vunpack.c.l.s4 839922192
  %v799 = vunpack.c.0.s8 %v798
  %v800 = vperm.slane %v795, %v799
  %802 = vset.pattern.permute.xlu0 0
  %803 = vperm.xlu0 %802, %v745
  %v804 = vpop.permute.xlu0 %803
  %v807 = vunpack.c.l.s4 839922192
  %v808 = vunpack.c.0.s8 %v807
  %v809 = vperm.slane %v804, %v808
  %811 = vset.pattern.permute.xlu0 0
  %812 = vperm.xlu0 %811, %v746
  %v813 = vpop.permute.xlu0 %812
  %v816 = vunpack.c.l.s4 839922192
  %v817 = vunpack.c.0.s8 %v816
  %v818 = vperm.slane %v813, %v817
  %820 = vset.pattern.permute.xlu0 0
  %821 = vperm.xlu0 %820, %v747
  %v822 = vpop.permute.xlu0 %821
  %v825 = vunpack.c.l.s4 839922192
  %v826 = vunpack.c.0.s8 %v825
  %v827 = vperm.slane %v822, %v826
  %829 = vset.pattern.permute.xlu0 0
  %830 = vperm.xlu0 %829, %v748
  %v831 = vpop.permute.xlu0 %830
  %v834 = vunpack.c.l.s4 839922192
  %v835 = vunpack.c.0.s8 %v834
  %v836 = vperm.slane %v831, %v835
  %838 = vset.pattern.permute.xlu0 0
  %839 = vperm.xlu0 %838, %v749
  %v840 = vpop.permute.xlu0 %839
  %v843 = vunpack.c.l.s4 839922192
  %v844 = vunpack.c.0.s8 %v843
  %v845 = vperm.slane %v840, %v844
  %847 = vset.pattern.permute.xlu0 0
  %848 = vperm.xlu0 %847, %v750
  %v849 = vpop.permute.xlu0 %848
  %v852 = vunpack.c.l.s4 839922192
  %v853 = vunpack.c.0.s8 %v852
  %v854 = vperm.slane %v849, %v853
  %856 = vset.pattern.permute.xlu0 0
  %857 = vperm.xlu0 %856, %v751
  %v858 = vpop.permute.xlu0 %857
  %v861 = vunpack.c.l.s4 839922192
  %v862 = vunpack.c.0.s8 %v861
  %v863 = vperm.slane %v858, %v862
  %865 = vset.pattern.permute.xlu0 0
  %866 = vperm.xlu0 %865, %v752
  %v867 = vpop.permute.xlu0 %866
  %v870 = vunpack.c.l.s4 839922192
  %v871 = vunpack.c.0.s8 %v870
  %v872 = vperm.slane %v867, %v871
  %874 = vset.pattern.permute.xlu0 0
  %875 = vperm.xlu0 %874, %v753
  %v876 = vpop.permute.xlu0 %875
  %v879 = vunpack.c.l.s4 839922192
  %v880 = vunpack.c.0.s8 %v879
  %v881 = vperm.slane %v876, %v880
  %883 = vset.pattern.permute.xlu0 0
  %884 = vperm.xlu0 %883, %v754
  %v885 = vpop.permute.xlu0 %884
  %v888 = vunpack.c.l.s4 839922192
  %v889 = vunpack.c.0.s8 %v888
  %v890 = vperm.slane %v885, %v889
  %892 = vset.pattern.permute.xlu0 0
  %893 = vperm.xlu0 %892, %v755
  %v894 = vpop.permute.xlu0 %893
  %v897 = vunpack.c.l.s4 839922192
  %v898 = vunpack.c.0.s8 %v897
  %v899 = vperm.slane %v894, %v898
  %v900 = vunpack.c.l.bf16 %v724
  %v901 = vunpack.c.l.bf16 %v725
  %v902 = vunpack.c.l.bf16 %v726
  %v903 = vunpack.c.l.bf16 %v727
  %v904 = vunpack.c.l.bf16 %v728
  %v905 = vunpack.c.l.bf16 %v729
  %v906 = vunpack.c.l.bf16 %v730
  %v907 = vunpack.c.l.bf16 %v731
  %v908 = vunpack.c.l.bf16 %v732
  %v909 = vunpack.c.l.bf16 %v733
  %v910 = vunpack.c.l.bf16 %v734
  %v911 = vunpack.c.l.bf16 %v735
  %v912 = vunpack.c.l.bf16 %v736
  %v913 = vunpack.c.l.bf16 %v737
  %v914 = vunpack.c.l.bf16 %v738
  %v915 = vunpack.c.l.bf16 %v739
  %v916 = vunpack.c.l.bf16 %v764
  %v917 = vunpack.c.l.bf16 %v773
  %v918 = vunpack.c.l.bf16 %v782
  %v919 = vunpack.c.l.bf16 %v791
  %v920 = vunpack.c.l.bf16 %v800
  %v921 = vunpack.c.l.bf16 %v809
  %v922 = vunpack.c.l.bf16 %v818
  %v923 = vunpack.c.l.bf16 %v827
  %v924 = vunpack.c.l.bf16 %v836
  %v925 = vunpack.c.l.bf16 %v845
  %v926 = vunpack.c.l.bf16 %v854
  %v927 = vunpack.c.l.bf16 %v863
  %v928 = vunpack.c.l.bf16 %v872
  %v929 = vunpack.c.l.bf16 %v881
  %v930 = vunpack.c.l.bf16 %v890
  %v931 = vunpack.c.l.bf16 %v899
  %v932 = vmul.f32 %v900, %v916
  %v933 = vmul.f32 %v901, %v917
  %v934 = vmul.f32 %v902, %v918
  %v935 = vmul.f32 %v903, %v919
  %v936 = vmul.f32 %v904, %v920
  %v937 = vmul.f32 %v905, %v921
  %v938 = vmul.f32 %v906, %v922
  %v939 = vmul.f32 %v907, %v923
  %v940 = vmul.f32 %v908, %v924
  %v941 = vmul.f32 %v909, %v925
  %v942 = vmul.f32 %v910, %v926
  %v943 = vmul.f32 %v911, %v927
  %v944 = vmul.f32 %v912, %v928
  %v945 = vmul.f32 %v913, %v929
  %v946 = vmul.f32 %v914, %v930
  %v947 = vmul.f32 %v915, %v931
  %v948 = vpack.c.bf16 %v932, %v932
  %v949 = vpack.c.bf16 %v933, %v933
  %v950 = vpack.c.bf16 %v934, %v934
  %v951 = vpack.c.bf16 %v935, %v935
  %v952 = vpack.c.bf16 %v936, %v936
  %v953 = vpack.c.bf16 %v937, %v937
  %v954 = vpack.c.bf16 %v938, %v938
  %v955 = vpack.c.bf16 %v939, %v939
  %v956 = vpack.c.bf16 %v940, %v940
  %v957 = vpack.c.bf16 %v941, %v941
  %v958 = vpack.c.bf16 %v942, %v942
  %v959 = vpack.c.bf16 %v943, %v943
  %v960 = vpack.c.bf16 %v944, %v944
  %v961 = vpack.c.bf16 %v945, %v945
  %v962 = vpack.c.bf16 %v946, %v946
  %v963 = vpack.c.bf16 %v947, %v947
  %v964 = vpack.c.bf16 %v708, %v708
  %v965 = vpack.c.bf16 %v709, %v709
  %v966 = vpack.c.bf16 %v710, %v710
  %v967 = vpack.c.bf16 %v711, %v711
  %v968 = vpack.c.bf16 %v712, %v712
  %v969 = vpack.c.bf16 %v713, %v713
  %v970 = vpack.c.bf16 %v714, %v714
  %v971 = vpack.c.bf16 %v715, %v715
  %v972 = vpack.c.bf16 %v716, %v716
  %v973 = vpack.c.bf16 %v717, %v717
  %v974 = vpack.c.bf16 %v718, %v718
  %v975 = vpack.c.bf16 %v719, %v719
  %v976 = vpack.c.bf16 %v720, %v720
  %v977 = vpack.c.bf16 %v721, %v721
  %v978 = vpack.c.bf16 %v722, %v722
  %v979 = vpack.c.bf16 %v723, %v723
  %981 = vset.pattern.permute.xlu0 0
  %982 = vperm.xlu0 %981, %v964
  %v983 = vpop.permute.xlu0 %982
  %v986 = vunpack.c.l.s4 839922192
  %v987 = vunpack.c.0.s8 %v986
  %v988 = vperm.slane %v983, %v987
  %990 = vset.pattern.permute.xlu0 0
  %991 = vperm.xlu0 %990, %v965
  %v992 = vpop.permute.xlu0 %991
  %v995 = vunpack.c.l.s4 839922192
  %v996 = vunpack.c.0.s8 %v995
  %v997 = vperm.slane %v992, %v996
  %999 = vset.pattern.permute.xlu0 0
  %1000 = vperm.xlu0 %999, %v966
  %v1001 = vpop.permute.xlu0 %1000
  %v1004 = vunpack.c.l.s4 839922192
  %v1005 = vunpack.c.0.s8 %v1004
  %v1006 = vperm.slane %v1001, %v1005
  %1008 = vset.pattern.permute.xlu0 0
  %1009 = vperm.xlu0 %1008, %v967
  %v1010 = vpop.permute.xlu0 %1009
  %v1013 = vunpack.c.l.s4 839922192
  %v1014 = vunpack.c.0.s8 %v1013
  %v1015 = vperm.slane %v1010, %v1014
  %1017 = vset.pattern.permute.xlu0 0
  %1018 = vperm.xlu0 %1017, %v968
  %v1019 = vpop.permute.xlu0 %1018
  %v1022 = vunpack.c.l.s4 839922192
  %v1023 = vunpack.c.0.s8 %v1022
  %v1024 = vperm.slane %v1019, %v1023
  %1026 = vset.pattern.permute.xlu0 0
  %1027 = vperm.xlu0 %1026, %v969
  %v1028 = vpop.permute.xlu0 %1027
  %v1031 = vunpack.c.l.s4 839922192
  %v1032 = vunpack.c.0.s8 %v1031
  %v1033 = vperm.slane %v1028, %v1032
  %1035 = vset.pattern.permute.xlu0 0
  %1036 = vperm.xlu0 %1035, %v970
  %v1037 = vpop.permute.xlu0 %1036
  %v1040 = vunpack.c.l.s4 839922192
  %v1041 = vunpack.c.0.s8 %v1040
  %v1042 = vperm.slane %v1037, %v1041
  %1044 = vset.pattern.permute.xlu0 0
  %1045 = vperm.xlu0 %1044, %v971
  %v1046 = vpop.permute.xlu0 %1045
  %v1049 = vunpack.c.l.s4 839922192
  %v1050 = vunpack.c.0.s8 %v1049
  %v1051 = vperm.slane %v1046, %v1050
  %1053 = vset.pattern.permute.xlu0 0
  %1054 = vperm.xlu0 %1053, %v972
  %v1055 = vpop.permute.xlu0 %1054
  %v1058 = vunpack.c.l.s4 839922192
  %v1059 = vunpack.c.0.s8 %v1058
  %v1060 = vperm.slane %v1055, %v1059
  %1062 = vset.pattern.permute.xlu0 0
  %1063 = vperm.xlu0 %1062, %v973
  %v1064 = vpop.permute.xlu0 %1063
  %v1067 = vunpack.c.l.s4 839922192
  %v1068 = vunpack.c.0.s8 %v1067
  %v1069 = vperm.slane %v1064, %v1068
  %1071 = vset.pattern.permute.xlu0 0
  %1072 = vperm.xlu0 %1071, %v974
  %v1073 = vpop.permute.xlu0 %1072
  %v1076 = vunpack.c.l.s4 839922192
  %v1077 = vunpack.c.0.s8 %v1076
  %v1078 = vperm.slane %v1073, %v1077
  %1080 = vset.pattern.permute.xlu0 0
  %1081 = vperm.xlu0 %1080, %v975
  %v1082 = vpop.permute.xlu0 %1081
  %v1085 = vunpack.c.l.s4 839922192
  %v1086 = vunpack.c.0.s8 %v1085
  %v1087 = vperm.slane %v1082, %v1086
  %1089 = vset.pattern.permute.xlu0 0
  %1090 = vperm.xlu0 %1089, %v976
  %v1091 = vpop.permute.xlu0 %1090
  %v1094 = vunpack.c.l.s4 839922192
  %v1095 = vunpack.c.0.s8 %v1094
  %v1096 = vperm.slane %v1091, %v1095
  %1098 = vset.pattern.permute.xlu0 0
  %1099 = vperm.xlu0 %1098, %v977
  %v1100 = vpop.permute.xlu0 %1099
  %v1103 = vunpack.c.l.s4 839922192
  %v1104 = vunpack.c.0.s8 %v1103
  %v1105 = vperm.slane %v1100, %v1104
  %1107 = vset.pattern.permute.xlu0 0
  %1108 = vperm.xlu0 %1107, %v978
  %v1109 = vpop.permute.xlu0 %1108
  %v1112 = vunpack.c.l.s4 839922192
  %v1113 = vunpack.c.0.s8 %v1112
  %v1114 = vperm.slane %v1109, %v1113
  %1116 = vset.pattern.permute.xlu0 0
  %1117 = vperm.xlu0 %1116, %v979
  %v1118 = vpop.permute.xlu0 %1117
  %v1121 = vunpack.c.l.s4 839922192
  %v1122 = vunpack.c.0.s8 %v1121
  %v1123 = vperm.slane %v1118, %v1122
  %v1124 = vunpack.c.l.bf16 %v948
  %v1125 = vunpack.c.l.bf16 %v949
  %v1126 = vunpack.c.l.bf16 %v950
  %v1127 = vunpack.c.l.bf16 %v951
  %v1128 = vunpack.c.l.bf16 %v952
  %v1129 = vunpack.c.l.bf16 %v953
  %v1130 = vunpack.c.l.bf16 %v954
  %v1131 = vunpack.c.l.bf16 %v955
  %v1132 = vunpack.c.l.bf16 %v956
  %v1133 = vunpack.c.l.bf16 %v957
  %v1134 = vunpack.c.l.bf16 %v958
  %v1135 = vunpack.c.l.bf16 %v959
  %v1136 = vunpack.c.l.bf16 %v960
  %v1137 = vunpack.c.l.bf16 %v961
  %v1138 = vunpack.c.l.bf16 %v962
  %v1139 = vunpack.c.l.bf16 %v963
  %v1140 = vunpack.c.l.bf16 %v988
  %v1141 = vunpack.c.l.bf16 %v997
  %v1142 = vunpack.c.l.bf16 %v1006
  %v1143 = vunpack.c.l.bf16 %v1015
  %v1144 = vunpack.c.l.bf16 %v1024
  %v1145 = vunpack.c.l.bf16 %v1033
  %v1146 = vunpack.c.l.bf16 %v1042
  %v1147 = vunpack.c.l.bf16 %v1051
  %v1148 = vunpack.c.l.bf16 %v1060
  %v1149 = vunpack.c.l.bf16 %v1069
  %v1150 = vunpack.c.l.bf16 %v1078
  %v1151 = vunpack.c.l.bf16 %v1087
  %v1152 = vunpack.c.l.bf16 %v1096
  %v1153 = vunpack.c.l.bf16 %v1105
  %v1154 = vunpack.c.l.bf16 %v1114
  %v1155 = vunpack.c.l.bf16 %v1123
  %v1156 = vadd.f32 %v1124, %v1140
  %v1157 = vadd.f32 %v1125, %v1141
  %v1158 = vadd.f32 %v1126, %v1142
  %v1159 = vadd.f32 %v1127, %v1143
  %v1160 = vadd.f32 %v1128, %v1144
  %v1161 = vadd.f32 %v1129, %v1145
  %v1162 = vadd.f32 %v1130, %v1146
  %v1163 = vadd.f32 %v1131, %v1147
  %v1164 = vadd.f32 %v1132, %v1148
  %v1165 = vadd.f32 %v1133, %v1149
  %v1166 = vadd.f32 %v1134, %v1150
  %v1167 = vadd.f32 %v1135, %v1151
  %v1168 = vadd.f32 %v1136, %v1152
  %v1169 = vadd.f32 %v1137, %v1153
  %v1170 = vadd.f32 %v1138, %v1154
  %v1171 = vadd.f32 %v1139, %v1155
  %v1172 = vpack.c.bf16 %v1156, %v1156
  %v1173 = vpack.c.bf16 %v1157, %v1157
  %v1174 = vpack.c.bf16 %v1158, %v1158
  %v1175 = vpack.c.bf16 %v1159, %v1159
  %v1176 = vpack.c.bf16 %v1160, %v1160
  %v1177 = vpack.c.bf16 %v1161, %v1161
  %v1178 = vpack.c.bf16 %v1162, %v1162
  %v1179 = vpack.c.bf16 %v1163, %v1163
  %v1180 = vpack.c.bf16 %v1164, %v1164
  %v1181 = vpack.c.bf16 %v1165, %v1165
  %v1182 = vpack.c.bf16 %v1166, %v1166
  %v1183 = vpack.c.bf16 %v1167, %v1167
  %v1184 = vpack.c.bf16 %v1168, %v1168
  %v1185 = vpack.c.bf16 %v1169, %v1169
  %v1186 = vpack.c.bf16 %v1170, %v1170
  %v1187 = vpack.c.bf16 %v1171, %v1171
  %v1188 = vunpack.c.l.bf16 %v1172
  %v1189 = vunpack.c.l.bf16 %v1173
  %v1190 = vunpack.c.l.bf16 %v1174
  %v1191 = vunpack.c.l.bf16 %v1175
  %v1192 = vunpack.c.l.bf16 %v1176
  %v1193 = vunpack.c.l.bf16 %v1177
  %v1194 = vunpack.c.l.bf16 %v1178
  %v1195 = vunpack.c.l.bf16 %v1179
  %v1196 = vunpack.c.l.bf16 %v1180
  %v1197 = vunpack.c.l.bf16 %v1181
  %v1198 = vunpack.c.l.bf16 %v1182
  %v1199 = vunpack.c.l.bf16 %v1183
  %v1200 = vunpack.c.l.bf16 %v1184
  %v1201 = vunpack.c.l.bf16 %v1185
  %v1202 = vunpack.c.l.bf16 %v1186
  %v1203 = vunpack.c.l.bf16 %v1187
  %v1204 = vmax.f32 %v1188, 0.0
  %v1205 = vmax.f32 %v1189, 0.0
  %v1206 = vmax.f32 %v1190, 0.0
  %v1207 = vmax.f32 %v1191, 0.0
  %v1208 = vmax.f32 %v1192, 0.0
  %v1209 = vmax.f32 %v1193, 0.0
  %v1210 = vmax.f32 %v1194, 0.0
  %v1211 = vmax.f32 %v1195, 0.0
  %v1212 = vmax.f32 %v1196, 0.0
  %v1213 = vmax.f32 %v1197, 0.0
  %v1214 = vmax.f32 %v1198, 0.0
  %v1215 = vmax.f32 %v1199, 0.0
  %v1216 = vmax.f32 %v1200, 0.0
  %v1217 = vmax.f32 %v1201, 0.0
  %v1218 = vmax.f32 %v1202, 0.0
  %v1219 = vmax.f32 %v1203, 0.0
  %v1220 = vpack.c.bf16 %v1205, %v1204
  %v1221 = vpack.c.bf16 %v1207, %v1206
  %v1222 = vpack.c.bf16 %v1209, %v1208
  %v1223 = vpack.c.bf16 %v1211, %v1210
  %v1224 = vpack.c.bf16 %v1213, %v1212
  %v1225 = vpack.c.bf16 %v1215, %v1214
  %v1226 = vpack.c.bf16 %v1217, %v1216
  %v1227 = vpack.c.bf16 %v1219, %v1218
  %v1228 = vld [vmem:[%s4] sm:$0xf]
  %v1229 = vld [vmem:[%s4 + $0x4] sm:$0xf]
  %v1230 = vld [vmem:[%s4 + $0x8] sm:$0xf]
  %v1231 = vld [vmem:[%s4 + $0xc] sm:$0xf]
  %v1232 = vld [vmem:[%s4 + $0x10] sm:$0xf]
  %v1233 = vld [vmem:[%s4 + $0x14] sm:$0xf]
  %v1234 = vld [vmem:[%s4 + $0x18] sm:$0xf]
  %v1235 = vld [vmem:[%s4 + $0x1c] sm:$0xf]
  %v1244 = vunpack.c.l.b16 %v1228
  %v1245 = vunpack.c.l.b16 %v1229
  %v1246 = vunpack.c.l.b16 %v1230
  %v1247 = vunpack.c.l.b16 %v1231
  %v1248 = vunpack.c.l.b16 %v1232
  %v1249 = vunpack.c.l.b16 %v1233
  %v1250 = vunpack.c.l.b16 %v1234
  %v1251 = vunpack.c.l.b16 %v1235
  %v1252 = vpack.c.b16 %v1245, %v1244
  %v1253 = vpack.c.b16 %v1247, %v1246
  %v1254 = vpack.c.b16 %v1249, %v1248
  %v1255 = vpack.c.b16 %v1251, %v1250
  %1260 = vmatpush.bf16.msra.mxu0 %v1227
  %1261 = vmatpush.bf16.msra.mxu0 %v1226
  %1262 = vmatpush.bf16.msra.mxu0 %v1225
  %1263 = vmatpush.bf16.msra.mxu0 %v1224
  %1264 = vmatpush.bf16.msra.mxu0 %v1223
  %1265 = vmatpush.bf16.msra.mxu0 %v1222
  %1266 = vmatpush.bf16.msra.mxu0 %v1221
  %1267 = vmatpush.bf16.msra.mxu0 %v1220
  %1268 = vmatmul.bf16.gmra.mxu0 %v1252
  %v1269 = vpop.f32.mrf.mxu0
  %v1270 = vadd.f32 0.0, %v1269
  %v1271 = vpop.f32.mrf.mxu0
  %v1272 = vadd.f32 0.0, %v1271
  %1273 = vmatmul.bf16.gmra.mxu0 %v1253
  %v1274 = vpop.f32.mrf.mxu0
  %v1275 = vadd.f32 0.0, %v1274
  %v1276 = vpop.f32.mrf.mxu0
  %v1277 = vadd.f32 0.0, %v1276
  %1278 = vmatmul.bf16.gmra.mxu0 %v1254
  %v1279 = vpop.f32.mrf.mxu0
  %v1280 = vadd.f32 0.0, %v1279
  %v1281 = vpop.f32.mrf.mxu0
  %v1282 = vadd.f32 0.0, %v1281
  %1283 = vmatmul.bf16.gmra.mxu0 %v1255
  %v1284 = vpop.f32.mrf.mxu0
  %v1285 = vadd.f32 0.0, %v1284
  %v1286 = vpop.f32.mrf.mxu0
  %v1287 = vadd.f32 0.0, %v1286
  %1288 = vdwg.mxu0
  %v1289 = vsel %vm275, %v1270, 0.0
  %1290 = vadd.xlane.f32.xlu0 %v1289
  %v1291 = vpop.xlane.xlu0 %1290
  %v1292 = vsel %vm275, %v1272, 0.0
  %1293 = vadd.xlane.f32.xlu0 %v1292
  %v1294 = vpop.xlane.xlu0 %1293
  %v1295 = vsel %vm275, %v1275, 0.0
  %1296 = vadd.xlane.f32.xlu0 %v1295
  %v1297 = vpop.xlane.xlu0 %1296
  %v1298 = vsel %vm275, %v1277, 0.0
  %1299 = vadd.xlane.f32.xlu0 %v1298
  %v1300 = vpop.xlane.xlu0 %1299
  %v1301 = vsel %vm275, %v1280, 0.0
  %1302 = vadd.xlane.f32.xlu0 %v1301
  %v1303 = vpop.xlane.xlu0 %1302
  %v1304 = vsel %vm275, %v1282, 0.0
  %1305 = vadd.xlane.f32.xlu0 %v1304
  %v1306 = vpop.xlane.xlu0 %1305
  %v1307 = vsel %vm275, %v1285, 0.0
  %1308 = vadd.xlane.f32.xlu0 %v1307
  %v1309 = vpop.xlane.xlu0 %1308
  %v1310 = vsel %vm275, %v1287, 0.0
  %1311 = vadd.xlane.f32.xlu0 %v1310
  %v1312 = vpop.xlane.xlu0 %1311
  %v1313 = vmul.f32 %v1291, 0.125
  %v1314 = vmul.f32 %v1294, 0.125
  %v1315 = vmul.f32 %v1297, 0.125
  %v1316 = vmul.f32 %v1300, 0.125
  %v1317 = vmul.f32 %v1303, 0.125
  %v1318 = vmul.f32 %v1306, 0.125
  %v1319 = vmul.f32 %v1309, 0.125
  %v1320 = vmul.f32 %v1312, 0.125
  %v1321 = vmul.f32 %v1270, %v1270
  %v1322 = vmul.f32 %v1272, %v1272
  %v1323 = vmul.f32 %v1275, %v1275
  %v1324 = vmul.f32 %v1277, %v1277
  %v1325 = vmul.f32 %v1280, %v1280
  %v1326 = vmul.f32 %v1282, %v1282
  %v1327 = vmul.f32 %v1285, %v1285
  %v1328 = vmul.f32 %v1287, %v1287
  %v1329 = vsel %vm275, %v1321, 0.0
  %1330 = vadd.xlane.f32.xlu0 %v1329
  %v1331 = vpop.xlane.xlu0 %1330
  %v1332 = vsel %vm275, %v1322, 0.0
  %1333 = vadd.xlane.f32.xlu0 %v1332
  %v1334 = vpop.xlane.xlu0 %1333
  %v1335 = vsel %vm275, %v1323, 0.0
  %1336 = vadd.xlane.f32.xlu0 %v1335
  %v1337 = vpop.xlane.xlu0 %1336
  %v1338 = vsel %vm275, %v1324, 0.0
  %1339 = vadd.xlane.f32.xlu0 %v1338
  %v1340 = vpop.xlane.xlu0 %1339
  %v1341 = vsel %vm275, %v1325, 0.0
  %1342 = vadd.xlane.f32.xlu0 %v1341
  %v1343 = vpop.xlane.xlu0 %1342
  %v1344 = vsel %vm275, %v1326, 0.0
  %1345 = vadd.xlane.f32.xlu0 %v1344
  %v1346 = vpop.xlane.xlu0 %1345
  %v1347 = vsel %vm275, %v1327, 0.0
  %1348 = vadd.xlane.f32.xlu0 %v1347
  %v1349 = vpop.xlane.xlu0 %1348
  %v1350 = vsel %vm275, %v1328, 0.0
  %1351 = vadd.xlane.f32.xlu0 %v1350
  %v1352 = vpop.xlane.xlu0 %1351
  %v1353 = vmul.f32 %v1331, 0.125
  %v1354 = vmul.f32 %v1334, 0.125
  %v1355 = vmul.f32 %v1337, 0.125
  %v1356 = vmul.f32 %v1340, 0.125
  %v1357 = vmul.f32 %v1343, 0.125
  %v1358 = vmul.f32 %v1346, 0.125
  %v1359 = vmul.f32 %v1349, 0.125
  %v1360 = vmul.f32 %v1352, 0.125
  %v1361 = vmul.f32 %v1313, %v1313
  %v1362 = vmul.f32 %v1314, %v1314
  %v1363 = vmul.f32 %v1315, %v1315
  %v1364 = vmul.f32 %v1316, %v1316
  %v1365 = vmul.f32 %v1317, %v1317
  %v1366 = vmul.f32 %v1318, %v1318
  %v1367 = vmul.f32 %v1319, %v1319
  %v1368 = vmul.f32 %v1320, %v1320
  %v1369 = vsub.f32 %v1353, %v1361
  %v1370 = vsub.f32 %v1354, %v1362
  %v1371 = vsub.f32 %v1355, %v1363
  %v1372 = vsub.f32 %v1356, %v1364
  %v1373 = vsub.f32 %v1357, %v1365
  %v1374 = vsub.f32 %v1358, %v1366
  %v1375 = vsub.f32 %v1359, %v1367
  %v1376 = vsub.f32 %v1360, %v1368
  %v1377 = vmax.f32 %v1369, 0.0
  %v1378 = vmax.f32 %v1370, 0.0
  %v1379 = vmax.f32 %v1371, 0.0
  %v1380 = vmax.f32 %v1372, 0.0
  %v1381 = vmax.f32 %v1373, 0.0
  %v1382 = vmax.f32 %v1374, 0.0
  %v1383 = vmax.f32 %v1375, 0.0
  %v1384 = vmax.f32 %v1376, 0.0
  %v1385 = vld [vmem:[%s5] sm:$0xff]
  %v1386 = vld [vmem:[%s5 + $0x8] sm:$0xff]
  %v1387 = vld [vmem:[%s5 + $0x10] sm:$0xff]
  %v1388 = vld [vmem:[%s5 + $0x18] sm:$0xff]
  %v1389 = vld [vmem:[%s5 + $0x20] sm:$0xff]
  %v1390 = vld [vmem:[%s5 + $0x28] sm:$0xff]
  %v1391 = vld [vmem:[%s5 + $0x30] sm:$0xff]
  %v1392 = vld [vmem:[%s5 + $0x38] sm:$0xff]
  %v1393 = vadd.f32 %v1377, 1e-05
  %v1394 = vadd.f32 %v1378, 1e-05
  %v1395 = vadd.f32 %v1379, 1e-05
  %v1396 = vadd.f32 %v1380, 1e-05
  %v1397 = vadd.f32 %v1381, 1e-05
  %v1398 = vadd.f32 %v1382, 1e-05
  %v1399 = vadd.f32 %v1383, 1e-05
  %v1400 = vadd.f32 %v1384, 1e-05
  %v1401 = vrsqrt.pop %v1393
  %v1402 = vmul.f32 %v1401, %v1393
  %v1403 = vmul.f32 %v1402, %v1401
  %v1404 = vmul.f32 0.5, %v1403
  %v1405 = vsub.f32 1.5, %v1404
  %v1406 = vmul.f32 %v1401, %v1405
  %vm1407 = vweird.f32 %v1393
  %vm1408 = vweird.f32 %v1401
  %vm1409 = vmor %vm1407, %vm1408
  %v1410 = vsel %vm1409, %v1401, %v1406
  %v1411 = vrsqrt.pop %v1394
  %v1412 = vmul.f32 %v1411, %v1394
  %v1413 = vmul.f32 %v1412, %v1411
  %v1414 = vmul.f32 0.5, %v1413
  %v1415 = vsub.f32 1.5, %v1414
  %v1416 = vmul.f32 %v1411, %v1415
  %vm1417 = vweird.f32 %v1394
  %vm1418 = vweird.f32 %v1411
  %vm1419 = vmor %vm1417, %vm1418
  %v1420 = vsel %vm1419, %v1411, %v1416
  %v1421 = vrsqrt.pop %v1395
  %v1422 = vmul.f32 %v1421, %v1395
  %v1423 = vmul.f32 %v1422, %v1421
  %v1424 = vmul.f32 0.5, %v1423
  %v1425 = vsub.f32 1.5, %v1424
  %v1426 = vmul.f32 %v1421, %v1425
  %vm1427 = vweird.f32 %v1395
  %vm1428 = vweird.f32 %v1421
  %vm1429 = vmor %vm1427, %vm1428
  %v1430 = vsel %vm1429, %v1421, %v1426
  %v1431 = vrsqrt.pop %v1396
  %v1432 = vmul.f32 %v1431, %v1396
  %v1433 = vmul.f32 %v1432, %v1431
  %v1434 = vmul.f32 0.5, %v1433
  %v1435 = vsub.f32 1.5, %v1434
  %v1436 = vmul.f32 %v1431, %v1435
  %vm1437 = vweird.f32 %v1396
  %vm1438 = vweird.f32 %v1431
  %vm1439 = vmor %vm1437, %vm1438
  %v1440 = vsel %vm1439, %v1431, %v1436
  %v1441 = vrsqrt.pop %v1397
  %v1442 = vmul.f32 %v1441, %v1397
  %v1443 = vmul.f32 %v1442, %v1441
  %v1444 = vmul.f32 0.5, %v1443
  %v1445 = vsub.f32 1.5, %v1444
  %v1446 = vmul.f32 %v1441, %v1445
  %vm1447 = vweird.f32 %v1397
  %vm1448 = vweird.f32 %v1441
  %vm1449 = vmor %vm1447, %vm1448
  %v1450 = vsel %vm1449, %v1441, %v1446
  %v1451 = vrsqrt.pop %v1398
  %v1452 = vmul.f32 %v1451, %v1398
  %v1453 = vmul.f32 %v1452, %v1451
  %v1454 = vmul.f32 0.5, %v1453
  %v1455 = vsub.f32 1.5, %v1454
  %v1456 = vmul.f32 %v1451, %v1455
  %vm1457 = vweird.f32 %v1398
  %vm1458 = vweird.f32 %v1451
  %vm1459 = vmor %vm1457, %vm1458
  %v1460 = vsel %vm1459, %v1451, %v1456
  %v1461 = vrsqrt.pop %v1399
  %v1462 = vmul.f32 %v1461, %v1399
  %v1463 = vmul.f32 %v1462, %v1461
  %v1464 = vmul.f32 0.5, %v1463
  %v1465 = vsub.f32 1.5, %v1464
  %v1466 = vmul.f32 %v1461, %v1465
  %vm1467 = vweird.f32 %v1399
  %vm1468 = vweird.f32 %v1461
  %vm1469 = vmor %vm1467, %vm1468
  %v1470 = vsel %vm1469, %v1461, %v1466
  %v1471 = vrsqrt.pop %v1400
  %v1472 = vmul.f32 %v1471, %v1400
  %v1473 = vmul.f32 %v1472, %v1471
  %v1474 = vmul.f32 0.5, %v1473
  %v1475 = vsub.f32 1.5, %v1474
  %v1476 = vmul.f32 %v1471, %v1475
  %vm1477 = vweird.f32 %v1400
  %vm1478 = vweird.f32 %v1471
  %vm1479 = vmor %vm1477, %vm1478
  %v1480 = vsel %vm1479, %v1471, %v1476
  %v1481 = vmul.f32 %v1385, %v1410
  %v1482 = vmul.f32 %v1386, %v1420
  %v1483 = vmul.f32 %v1387, %v1430
  %v1484 = vmul.f32 %v1388, %v1440
  %v1485 = vmul.f32 %v1389, %v1450
  %v1486 = vmul.f32 %v1390, %v1460
  %v1487 = vmul.f32 %v1391, %v1470
  %v1488 = vmul.f32 %v1392, %v1480
  %v1489 = vld [vmem:[%s6] sm:$0xff]
  %v1490 = vld [vmem:[%s6 + $0x8] sm:$0xff]
  %v1491 = vld [vmem:[%s6 + $0x10] sm:$0xff]
  %v1492 = vld [vmem:[%s6 + $0x18] sm:$0xff]
  %v1493 = vld [vmem:[%s6 + $0x20] sm:$0xff]
  %v1494 = vld [vmem:[%s6 + $0x28] sm:$0xff]
  %v1495 = vld [vmem:[%s6 + $0x30] sm:$0xff]
  %v1496 = vld [vmem:[%s6 + $0x38] sm:$0xff]
  %v1497 = vmul.f32 %v1313, %v1481
  %v1498 = vmul.f32 %v1314, %v1482
  %v1499 = vmul.f32 %v1315, %v1483
  %v1500 = vmul.f32 %v1316, %v1484
  %v1501 = vmul.f32 %v1317, %v1485
  %v1502 = vmul.f32 %v1318, %v1486
  %v1503 = vmul.f32 %v1319, %v1487
  %v1504 = vmul.f32 %v1320, %v1488
  %v1505 = vsub.f32 %v1489, %v1497
  %v1506 = vsub.f32 %v1490, %v1498
  %v1507 = vsub.f32 %v1491, %v1499
  %v1508 = vsub.f32 %v1492, %v1500
  %v1509 = vsub.f32 %v1493, %v1501
  %v1510 = vsub.f32 %v1494, %v1502
  %v1511 = vsub.f32 %v1495, %v1503
  %v1512 = vsub.f32 %v1496, %v1504
  %v1513 = vpack.c.bf16 %v1270, %v1270
  %v1514 = vpack.c.bf16 %v1272, %v1272
  %v1515 = vpack.c.bf16 %v1275, %v1275
  %v1516 = vpack.c.bf16 %v1277, %v1277
  %v1517 = vpack.c.bf16 %v1280, %v1280
  %v1518 = vpack.c.bf16 %v1282, %v1282
  %v1519 = vpack.c.bf16 %v1285, %v1285
  %v1520 = vpack.c.bf16 %v1287, %v1287
  %v1521 = vpack.c.bf16 %v1481, %v1481
  %v1522 = vpack.c.bf16 %v1482, %v1482
  %v1523 = vpack.c.bf16 %v1483, %v1483
  %v1524 = vpack.c.bf16 %v1484, %v1484
  %v1525 = vpack.c.bf16 %v1485, %v1485
  %v1526 = vpack.c.bf16 %v1486, %v1486
  %v1527 = vpack.c.bf16 %v1487, %v1487
  %v1528 = vpack.c.bf16 %v1488, %v1488
  %1530 = vset.pattern.permute.xlu0 0
  %1531 = vperm.xlu0 %1530, %v1521
  %v1532 = vpop.permute.xlu0 %1531
  %v1535 = vunpack.c.l.s4 839922192
  %v1536 = vunpack.c.0.s8 %v1535
  %v1537 = vperm.slane %v1532, %v1536
  %1539 = vset.pattern.permute.xlu0 0
  %1540 = vperm.xlu0 %1539, %v1522
  %v1541 = vpop.permute.xlu0 %1540
  %v1544 = vunpack.c.l.s4 839922192
  %v1545 = vunpack.c.0.s8 %v1544
  %v1546 = vperm.slane %v1541, %v1545
  %1548 = vset.pattern.permute.xlu0 0
  %1549 = vperm.xlu0 %1548, %v1523
  %v1550 = vpop.permute.xlu0 %1549
  %v1553 = vunpack.c.l.s4 839922192
  %v1554 = vunpack.c.0.s8 %v1553
  %v1555 = vperm.slane %v1550, %v1554
  %1557 = vset.pattern.permute.xlu0 0
  %1558 = vperm.xlu0 %1557, %v1524
  %v1559 = vpop.permute.xlu0 %1558
  %v1562 = vunpack.c.l.s4 839922192
  %v1563 = vunpack.c.0.s8 %v1562
  %v1564 = vperm.slane %v1559, %v1563
  %1566 = vset.pattern.permute.xlu0 0
  %1567 = vperm.xlu0 %1566, %v1525
  %v1568 = vpop.permute.xlu0 %1567
  %v1571 = vunpack.c.l.s4 839922192
  %v1572 = vunpack.c.0.s8 %v1571
  %v1573 = vperm.slane %v1568, %v1572
  %1575 = vset.pattern.permute.xlu0 0
  %1576 = vperm.xlu0 %1575, %v1526
  %v1577 = vpop.permute.xlu0 %1576
  %v1580 = vunpack.c.l.s4 839922192
  %v1581 = vunpack.c.0.s8 %v1580
  %v1582 = vperm.slane %v1577, %v1581
  %1584 = vset.pattern.permute.xlu0 0
  %1585 = vperm.xlu0 %1584, %v1527
  %v1586 = vpop.permute.xlu0 %1585
  %v1589 = vunpack.c.l.s4 839922192
  %v1590 = vunpack.c.0.s8 %v1589
  %v1591 = vperm.slane %v1586, %v1590
  %1593 = vset.pattern.permute.xlu0 0
  %1594 = vperm.xlu0 %1593, %v1528
  %v1595 = vpop.permute.xlu0 %1594
  %v1598 = vunpack.c.l.s4 839922192
  %v1599 = vunpack.c.0.s8 %v1598
  %v1600 = vperm.slane %v1595, %v1599
  %v1601 = vunpack.c.l.bf16 %v1513
  %v1602 = vunpack.c.l.bf16 %v1514
  %v1603 = vunpack.c.l.bf16 %v1515
  %v1604 = vunpack.c.l.bf16 %v1516
  %v1605 = vunpack.c.l.bf16 %v1517
  %v1606 = vunpack.c.l.bf16 %v1518
  %v1607 = vunpack.c.l.bf16 %v1519
  %v1608 = vunpack.c.l.bf16 %v1520
  %v1609 = vunpack.c.l.bf16 %v1537
  %v1610 = vunpack.c.l.bf16 %v1546
  %v1611 = vunpack.c.l.bf16 %v1555
  %v1612 = vunpack.c.l.bf16 %v1564
  %v1613 = vunpack.c.l.bf16 %v1573
  %v1614 = vunpack.c.l.bf16 %v1582
  %v1615 = vunpack.c.l.bf16 %v1591
  %v1616 = vunpack.c.l.bf16 %v1600
  %v1617 = vmul.f32 %v1601, %v1609
  %v1618 = vmul.f32 %v1602, %v1610
  %v1619 = vmul.f32 %v1603, %v1611
  %v1620 = vmul.f32 %v1604, %v1612
  %v1621 = vmul.f32 %v1605, %v1613
  %v1622 = vmul.f32 %v1606, %v1614
  %v1623 = vmul.f32 %v1607, %v1615
  %v1624 = vmul.f32 %v1608, %v1616
  %v1625 = vpack.c.bf16 %v1617, %v1617
  %v1626 = vpack.c.bf16 %v1618, %v1618
  %v1627 = vpack.c.bf16 %v1619, %v1619
  %v1628 = vpack.c.bf16 %v1620, %v1620
  %v1629 = vpack.c.bf16 %v1621, %v1621
  %v1630 = vpack.c.bf16 %v1622, %v1622
  %v1631 = vpack.c.bf16 %v1623, %v1623
  %v1632 = vpack.c.bf16 %v1624, %v1624
  %v1633 = vpack.c.bf16 %v1505, %v1505
  %v1634 = vpack.c.bf16 %v1506, %v1506
  %v1635 = vpack.c.bf16 %v1507, %v1507
  %v1636 = vpack.c.bf16 %v1508, %v1508
  %v1637 = vpack.c.bf16 %v1509, %v1509
  %v1638 = vpack.c.bf16 %v1510, %v1510
  %v1639 = vpack.c.bf16 %v1511, %v1511
  %v1640 = vpack.c.bf16 %v1512, %v1512
  %1642 = vset.pattern.permute.xlu0 0
  %1643 = vperm.xlu0 %1642, %v1633
  %v1644 = vpop.permute.xlu0 %1643
  %v1647 = vunpack.c.l.s4 839922192
  %v1648 = vunpack.c.0.s8 %v1647
  %v1649 = vperm.slane %v1644, %v1648
  %1651 = vset.pattern.permute.xlu0 0
  %1652 = vperm.xlu0 %1651, %v1634
  %v1653 = vpop.permute.xlu0 %1652
  %v1656 = vunpack.c.l.s4 839922192
  %v1657 = vunpack.c.0.s8 %v1656
  %v1658 = vperm.slane %v1653, %v1657
  %1660 = vset.pattern.permute.xlu0 0
  %1661 = vperm.xlu0 %1660, %v1635
  %v1662 = vpop.permute.xlu0 %1661
  %v1665 = vunpack.c.l.s4 839922192
  %v1666 = vunpack.c.0.s8 %v1665
  %v1667 = vperm.slane %v1662, %v1666
  %1669 = vset.pattern.permute.xlu0 0
  %1670 = vperm.xlu0 %1669, %v1636
  %v1671 = vpop.permute.xlu0 %1670
  %v1674 = vunpack.c.l.s4 839922192
  %v1675 = vunpack.c.0.s8 %v1674
  %v1676 = vperm.slane %v1671, %v1675
  %1678 = vset.pattern.permute.xlu0 0
  %1679 = vperm.xlu0 %1678, %v1637
  %v1680 = vpop.permute.xlu0 %1679
  %v1683 = vunpack.c.l.s4 839922192
  %v1684 = vunpack.c.0.s8 %v1683
  %v1685 = vperm.slane %v1680, %v1684
  %1687 = vset.pattern.permute.xlu0 0
  %1688 = vperm.xlu0 %1687, %v1638
  %v1689 = vpop.permute.xlu0 %1688
  %v1692 = vunpack.c.l.s4 839922192
  %v1693 = vunpack.c.0.s8 %v1692
  %v1694 = vperm.slane %v1689, %v1693
  %1696 = vset.pattern.permute.xlu0 0
  %1697 = vperm.xlu0 %1696, %v1639
  %v1698 = vpop.permute.xlu0 %1697
  %v1701 = vunpack.c.l.s4 839922192
  %v1702 = vunpack.c.0.s8 %v1701
  %v1703 = vperm.slane %v1698, %v1702
  %1705 = vset.pattern.permute.xlu0 0
  %1706 = vperm.xlu0 %1705, %v1640
  %v1707 = vpop.permute.xlu0 %1706
  %v1710 = vunpack.c.l.s4 839922192
  %v1711 = vunpack.c.0.s8 %v1710
  %v1712 = vperm.slane %v1707, %v1711
  %v1713 = vunpack.c.l.bf16 %v1625
  %v1714 = vunpack.c.l.bf16 %v1626
  %v1715 = vunpack.c.l.bf16 %v1627
  %v1716 = vunpack.c.l.bf16 %v1628
  %v1717 = vunpack.c.l.bf16 %v1629
  %v1718 = vunpack.c.l.bf16 %v1630
  %v1719 = vunpack.c.l.bf16 %v1631
  %v1720 = vunpack.c.l.bf16 %v1632
  %v1721 = vunpack.c.l.bf16 %v1649
  %v1722 = vunpack.c.l.bf16 %v1658
  %v1723 = vunpack.c.l.bf16 %v1667
  %v1724 = vunpack.c.l.bf16 %v1676
  %v1725 = vunpack.c.l.bf16 %v1685
  %v1726 = vunpack.c.l.bf16 %v1694
  %v1727 = vunpack.c.l.bf16 %v1703
  %v1728 = vunpack.c.l.bf16 %v1712
  %v1729 = vadd.f32 %v1713, %v1721
  %v1730 = vadd.f32 %v1714, %v1722
  %v1731 = vadd.f32 %v1715, %v1723
  %v1732 = vadd.f32 %v1716, %v1724
  %v1733 = vadd.f32 %v1717, %v1725
  %v1734 = vadd.f32 %v1718, %v1726
  %v1735 = vadd.f32 %v1719, %v1727
  %v1736 = vadd.f32 %v1720, %v1728
  %v1737 = vpack.c.bf16 %v1729, %v1729
  %v1738 = vpack.c.bf16 %v1730, %v1730
  %v1739 = vpack.c.bf16 %v1731, %v1731
  %v1740 = vpack.c.bf16 %v1732, %v1732
  %v1741 = vpack.c.bf16 %v1733, %v1733
  %v1742 = vpack.c.bf16 %v1734, %v1734
  %v1743 = vpack.c.bf16 %v1735, %v1735
  %v1744 = vpack.c.bf16 %v1736, %v1736
  %v1745 = vunpack.c.l.bf16 %v1737
  %v1746 = vunpack.c.l.bf16 %v1738
  %v1747 = vunpack.c.l.bf16 %v1739
  %v1748 = vunpack.c.l.bf16 %v1740
  %v1749 = vunpack.c.l.bf16 %v1741
  %v1750 = vunpack.c.l.bf16 %v1742
  %v1751 = vunpack.c.l.bf16 %v1743
  %v1752 = vunpack.c.l.bf16 %v1744
  %v1753 = vmax.f32 %v1745, 0.0
  %v1754 = vmax.f32 %v1746, 0.0
  %v1755 = vmax.f32 %v1747, 0.0
  %v1756 = vmax.f32 %v1748, 0.0
  %v1757 = vmax.f32 %v1749, 0.0
  %v1758 = vmax.f32 %v1750, 0.0
  %v1759 = vmax.f32 %v1751, 0.0
  %v1760 = vmax.f32 %v1752, 0.0
  %v1761 = vpack.c.bf16 %v1754, %v1753
  %v1762 = vpack.c.bf16 %v1756, %v1755
  %v1763 = vpack.c.bf16 %v1758, %v1757
  %v1764 = vpack.c.bf16 %v1760, %v1759
  %v1765 = vld [vmem:[%s7] sm:$0xf]
  %v1766 = vld [vmem:[%s7 + $0x4] sm:$0xf]
  %v1767 = vld [vmem:[%s8] sm:$0xff]
  %v1768 = vld [vmem:[%s8 + $0x8] sm:$0xff]
  %1770 = vset.pattern.permute.xlu0 0
  %1771 = vperm.xlu0 %1770, %v1767
  %v1772 = vpop.permute.xlu0 %1771
  %1775 = vset.pattern.permute.xlu0 0
  %1776 = vperm.xlu0 %1775, %v1768
  %v1777 = vpop.permute.xlu0 %1776
  %v1781 = vunpack.c.l.b16 %v1765
  %v1782 = vunpack.c.l.b16 %v1766
  %v1783 = vpack.c.b16 %v1782, %v1781
  %vm1784 = vcmask 523264
  %v1786 = vsel %vm1784, %v1783, 0
  %1788 = vmatpush.bf16.msra.mxu0 0
  %1789 = vmatpush.bf16.msra.mxu0 0
  %1790 = vmatpush.bf16.msra.mxu0 0
  %1791 = vmatpush.bf16.msra.mxu0 0
  %1792 = vmatpush.bf16.msra.mxu0 %v1764
  %1793 = vmatpush.bf16.msra.mxu0 %v1763
  %1794 = vmatpush.bf16.msra.mxu0 %v1762
  %1795 = vmatpush.bf16.msra.mxu0 %v1761
  %1796 = vmatmul.bf16.gmra.mxu0 %v1786
  %v1797 = vpop.f32.mrf.mxu0
  %v1798 = vadd.f32 %v1772, %v1797
  %v1799 = vpop.f32.mrf.mxu0
  %v1800 = vadd.f32 %v1777, %v1799
  %1801 = vdwg.mxu0
  %1802 = vst.msk [vmem:[%s9] sm:$0xff] %vm275, %v1798
  %1803 = vst.msk [vmem:[%s9 + $0x8] sm:$0xff] %vm275, %v1800
  // Predicated region
  $region38: #{transform_net_forward.9} parent=0 // pred_check
    _
  $region39: #{transform_net_forward.9} parent=0 // pred_check_branch
    %1805 = sbr.rel (0) target = $region41
  $region40: #{transform_net_forward.9} parent=0 // pred_region
    _
  $region41: #{transform_net_forward.9} parent=0 // pred_fallthru
    _
  // Predicated region
  $region42: #{transform_net_forward.9} parent=0 // pred_check
    _
  $region43: #{transform_net_forward.9} parent=0 // pred_check_branch
    %1807 = sbr.rel (0) target = $region45
  $region44: #{transform_net_forward.9} parent=0 // pred_region
    _
  $region45: #{transform_net_forward.9} parent=0 // pred_fallthru
    _

</llo_original>
